<compile_context>
chip_gen: v5e
topology: v5e:2x2
jax: 0.10.0
libtpu: 0.0.40
codegen_flags: <defaults>
</compile_context>

<pallas_src>
import functools

import jax
import jax.numpy as jnp
import numpy as np
from jax import lax
from jax.experimental import pallas as pl
from jax.experimental.pallas import tpu as pltpu


def _round_up(v, m):
    return ((v + m - 1) // m) * m


# --------------------------------------------------------------------------
# Fused Pallas kernel: encoder -> residual VQ -> decoder (one batch tile)
# --------------------------------------------------------------------------
def _fused_rqvae_kernel(x_ref, *refs, n_enc, n_dec, out_dim, e_dim):
    pos = 0
    enc_w = refs[pos:pos + n_enc]; pos += n_enc
    enc_b = refs[pos:pos + n_enc]; pos += n_enc
    cb_ref = refs[pos]; pos += 1
    dec_w = refs[pos:pos + n_dec]; pos += n_dec
    dec_b = refs[pos:pos + n_dec]; pos += n_dec
    slab_ref, idx_ref = refs[pos], refs[pos + 1]

    L, K, D = cb_ref.shape
    tb = x_ref.shape[0]
    # f32 + HIGHEST matches the reference (indices depend on it at larger K/D).
    # TODO(synk): for production (MXU-bound) sizes cast the MLP matmuls to
    # bf16 with f32 accumulation; keep the distance dot at HIGHEST.
    hi = lax.Precision.HIGHEST

    # ---------------- encoder MLP ----------------
    h = x_ref[...]
    for i in range(n_enc):
        h = jnp.dot(h, enc_w[i][...], precision=hi,
                    preferred_element_type=jnp.float32) + enc_b[i][...]
        if i < n_enc - 1:
            h = jnp.maximum(h, 0.0)
    x_e = h

    # ---------------- residual vector quantizer ----------------
    # ||c_k||^2 for ALL stages hoisted out of the stage loop: one VPU multiply
    # plus one XLU reduce instead of L tiny dependent MXU pushes per tile.
    cb_all = cb_ref[...]                                    # (L, K, D)
    cbsq_all = jnp.sum(cb_all * cb_all, axis=-1)            # (L, K)

    kiota = lax.broadcasted_iota(jnp.int32, (tb, K), 1)     # hoisted (no CSE)
    lane_l = lax.broadcasted_iota(jnp.int32, (tb, L), 1)

    residual = x_e
    x_q = jnp.zeros_like(x_e)
    sq_acc = jnp.zeros_like(x_e)       # elementwise squared-residual accum
    idx_acc = jnp.zeros((tb, L), jnp.int32)

    for l in range(L):                 # code_length small & static -> unrolled
        cb = cb_ref[l]                                                  # (K, D)
        dots = lax.dot_general(residual, cb, (((1,), (1,)), ((), ())),
                               precision=hi,
                               preferred_element_type=jnp.float32)      # (tb,K)
        # +||r||^2 is constant per row -> argmin-invariant, omitted; d is only
        # used for the argmin below (not a true squared distance).
        d = cbsq_all[l:l + 1, :] - 2.0 * dots                           # (tb,K)
        # Exact argmin with smallest-index tie-break (matches jnp/torch argmin).
        # A single packed-key reduce would halve XLU reductions but can flip
        # near-tie indices, so the exact two-reduce form is kept.
        dmin = jnp.min(d, axis=1, keepdims=True)
        idx = jnp.min(jnp.where(d <= dmin, kiota, K),
                      axis=1, keepdims=True)                            # (tb,1)
        onehot = jnp.where(kiota == idx, 1.0, 0.0)                      # (tb,K)
        q = lax.dot_general(onehot, cb, (((1,), (0,)), ((), ())),
                            precision=hi,
                            preferred_element_type=jnp.float32)         # (tb,D)
        # new residual == -(q - old residual): accumulate its square on the VPU
        # and defer the cross-lane SSE reduce to one sum after the loop.
        residual = residual - q
        sq_acc = sq_acc + residual * residual
        x_q = x_q + q
        idx_acc = jnp.where(lane_l == l, idx, idx_acc)

    sse_rows = jnp.sum(sq_acc, axis=1, keepdims=True)                   # (tb,1)

    # ---------------- decoder MLP ----------------
    h = x_q
    for i in range(n_dec):
        h = jnp.dot(h, dec_w[i][...], precision=hi,
                    preferred_element_type=jnp.float32) + dec_b[i][...]
        if i < n_dec - 1:
            h = jnp.maximum(h, 0.0)

    # ---------------- lane-dense packed store ----------------
    # All float outputs leave as ONE (tb, multiple-of-128) slab so the output
    # path uses unmasked full-lane stores and whole-line DMAs.
    pad = slab_ref.shape[1] - (out_dim + e_dim + 1)
    parts = [h, x_e, sse_rows]
    if pad > 0:
        parts.append(jnp.zeros((tb, pad), jnp.float32))
    slab_ref[...] = jnp.concatenate(parts, axis=1)
    idx_ref[...] = idx_acc             # single (tb, L) int32 store, all stages


# --------------------------------------------------------------------------
# Tiling / spec helpers
# --------------------------------------------------------------------------
_TILE_CANDIDATES = (1024, 512, 256, 128, 64, 32, 16, 8)
_VMEM_TILE_BUDGET = 40 * 1024 * 1024   # conservative: fits v7x's 64 MiB VMEM


def _pick_tile_b(B, row_bytes, const_bytes):
    """Largest batch tile that fits VMEM and still yields >= 2 grid steps."""
    if B <= 8:
        return B
    budget = max(_VMEM_TILE_BUDGET - const_bytes, 4 << 20)
    for t in _TILE_CANDIDATES:
        if t > B // 2 or B % t != 0:
            continue                     # >=2 steps: pipelining + v7x 2-TC sharding
        if 2 * t * row_bytes <= budget:  # batch-row tiles are double-buffered
            return t
    return B                             # whole-array block is always legal


def _const_spec(shape):
    zeros = (0,) * len(shape)
    # Constant block index -> single-buffer it (double-buffering a block that
    # never changes just doubles resident VMEM; matters on v7x's 64 MiB).
    return pl.BlockSpec(shape, lambda i, _z=zeros: _z,
                        pipeline_mode=pl.Buffered(1))


def _row_spec(tile_b, feat):
    return pl.BlockSpec((tile_b, feat), lambda i: (i, 0))


# --------------------------------------------------------------------------
# Wrapper
# --------------------------------------------------------------------------
def rqvae_forward(x, enc_w, enc_b, codebooks, dec_w, dec_b, beta=0.25,
                  tile_b=None):
    """Fused RQ-VAE forward. Returns (out, rq_loss, indices, x_encoded)."""
    B, in_dim = x.shape
    L, K, D = codebooks.shape
    n_enc, n_dec = len(enc_w), len(dec_w)
    e_dim = enc_w[-1].shape[1]
    out_dim = dec_w[-1].shape[1]
    slab_w = _round_up(out_dim + e_dim + 1, 128)

    # VMEM accounting: constants single-buffered, batch-row tiles double-
    # buffered, plus a per-row estimate for in-kernel intermediates.
    const_bytes = 4 * (sum(int(np.prod(a.shape)) for a in enc_w)
                       + sum(int(np.prod(a.shape)) for a in enc_b)
                       + int(np.prod(codebooks.shape))
                       + sum(int(np.prod(a.shape)) for a in dec_w)
                       + sum(int(np.prod(a.shape)) for a in dec_b))
    widest = max([in_dim, out_dim, e_dim]
                 + [w.shape[1] for w in enc_w] + [w.shape[1] for w in dec_w])
    row_bytes = 4 * (in_dim + slab_w + L + 6 * e_dim + 2 * K + 2 * widest)

    if tile_b is None:
        tile_b = _pick_tile_b(B, row_bytes, const_bytes)
    if B % tile_b != 0 or (tile_b != B and tile_b % 8 != 0):
        tile_b = B
    num_tiles = B // tile_b

    # Explicit VMEM budget: scoped defaults are only 16 MiB (v5e) / 32 MiB
    # (v6e, v7x); a generous limit costs nothing if unused.
    vmem_limit = int(min(max(const_bytes + 2 * tile_b * row_bytes + (8 << 20),
                             32 << 20), 128 << 20))

    in_specs = ([_row_spec(tile_b, in_dim)]
                + [_const_spec(a.shape) for a in enc_w]
                + [_const_spec(a.shape) for a in enc_b]
                + [_const_spec(codebooks.shape)]
                + [_const_spec(a.shape) for a in dec_w]
                + [_const_spec(a.shape) for a in dec_b])

    out_shape = (jax.ShapeDtypeStruct((B, slab_w), jnp.float32),  # packed floats
                 jax.ShapeDtypeStruct((B, L), jnp.int32))         # code indices
    out_specs = (_row_spec(tile_b, slab_w), _row_spec(tile_b, L))

    kernel = functools.partial(_fused_rqvae_kernel, n_enc=n_enc, n_dec=n_dec,
                               out_dim=out_dim, e_dim=e_dim)

    # TODO(synk): for production sizes (hidden >= ~2048 / e_dim >= ~512) stream
    # the large encoder/decoder weights over a K-tiled "arbitrary" grid axis
    # instead of full-array resident blocks (v7x has only 64 MiB VMEM).
    slab, indices = pl.pallas_call(
        kernel,
        out_shape=out_shape,
        grid=(num_tiles,),
        in_specs=in_specs,
        out_specs=out_specs,
        compiler_params=pltpu.CompilerParams(
            dimension_semantics=("parallel",),
            vmem_limit_bytes=vmem_limit),
    )(x, *enc_w, *enc_b, codebooks, *dec_w, *dec_b)

    out = slab[:, :out_dim]
    x_encoded = slab[:, out_dim:out_dim + e_dim]
    sse_rows = slab[:, out_dim + e_dim:out_dim + e_dim + 1]
    # rq_loss = mean over stages of (1+beta)*mse(q, r) over the full batch.
    rq_loss = (1.0 + beta) * jnp.sum(sse_rows) / (B * D * L)
    return out, rq_loss, indices, x_encoded


# --------------------------------------------------------------------------
# Parameter setup (PyTorch-Linear-style init; weights stored as (in, out))
# --------------------------------------------------------------------------
def init_mlp(key, dims):
    ws, bs = [], []
    for din, dout in zip(dims[:-1], dims[1:]):
        key, kw, kb = jax.random.split(key, 3)
        scale = 1.0 / np.sqrt(din)
        ws.append(jax.random.uniform(kw, (din, dout), jnp.float32, -scale, scale))
        bs.append(jax.random.uniform(kb, (1, dout), jnp.float32, -scale, scale))
    return ws, bs


# --------------------------------------------------------------------------
# Pure-JAX reference (for verification)
# --------------------------------------------------------------------------
def reference_forward(x, enc_w, enc_b, codebooks, dec_w, dec_b, beta=0.25):
    def mlp(h, ws, bs):
        n = len(ws)
        for i, (w, b) in enumerate(zip(ws, bs)):
            h = jnp.dot(h, w, precision=lax.Precision.HIGHEST) + b
            if i < n - 1:
                h = jnp.maximum(h, 0.0)
        return h

    x_e = mlp(x, enc_w, enc_b)
    residual = x_e
    x_q = jnp.zeros_like(x_e)
    losses, idxs = [], []
    for l in range(codebooks.shape[0]):
        cb = codebooks[l]
        d = (jnp.sum(residual ** 2, axis=1, keepdims=True)
             + jnp.sum(cb ** 2, axis=1)[None, :]
             - 2.0 * jnp.dot(residual, cb.T, precision=lax.Precision.HIGHEST))
        idx = jnp.argmin(d, axis=1)
        q = cb[idx]
        losses.append((1.0 + beta) * jnp.mean((q - residual) ** 2))
        idxs.append(idx.astype(jnp.int32))
        residual = residual - q
        x_q = x_q + q
    rq_loss = jnp.mean(jnp.stack(losses))
    indices = jnp.stack(idxs, axis=1)
    out = mlp(x_q, dec_w, dec_b)
    return out, rq_loss, indices, x_e


# --------------------------------------------------------------------------
if __name__ == "__main__":
    # Small shapes consistent with RQVAE(in_dim, layers, e_dim, code_length,
    # num_emb_list): in_dim=32, layers=[16], e_dim=8, code_length=4, K=16.
    B, in_dim, e_dim, code_length, K = 64, 32, 8, 4, 16
    layers = [16]
    beta = 0.25

    key = jax.random.PRNGKey(0)
    k_x, k_enc, k_dec, k_cb = jax.random.split(key, 4)

    x = jax.random.normal(k_x, (B, in_dim), jnp.float32)
    enc_dims = [in_dim] + layers + [e_dim]
    dec_dims = enc_dims[::-1]
    enc_w, enc_b = init_mlp(k_enc, enc_dims)
    dec_w, dec_b = init_mlp(k_dec, dec_dims)
    # TODO(synk): kmeans_init of codebooks is a training-time procedure; here
    # codebooks are deterministic random parameters, as in kmeans_init=False.
    codebooks = jax.random.normal(k_cb, (code_length, K, e_dim), jnp.float32)

    # tile_b=None exercises the VMEM-aware heuristic (-> 2 batch tiles here).
    out, rq_loss, indices, x_encoded = rqvae_forward(
        x, enc_w, enc_b, codebooks, dec_w, dec_b, beta=beta)
    jax.block_until_ready((out, rq_loss, indices, x_encoded))

    r_out, r_loss, r_idx, r_xe = reference_forward(
        x, enc_w, enc_b, codebooks, dec_w, dec_b, beta)

    np.testing.assert_allclose(np.asarray(x_encoded), np.asarray(r_xe),
                               atol=1e-4, rtol=1e-4)
    np.testing.assert_array_equal(np.asarray(indices), np.asarray(r_idx))
    np.testing.assert_allclose(np.asarray(out), np.asarray(r_out),
                               atol=1e-4, rtol=1e-4)
    np.testing.assert_allclose(float(rq_loss), float(r_loss),
                               atol=1e-4, rtol=1e-4)

    print("KERNEL_OK")
</pallas_src>

<mosaic_0001>
module attributes {stable_mosaic.version = 11 : i64} {
  func.func @_fused_rqvae_kernel(%arg0: i32, %arg1: memref<32x32xf32, #tpu.memory_space<vmem>>, %arg2: memref<32x16xf32, #tpu.memory_space<vmem>>, %arg3: memref<16x8xf32, #tpu.memory_space<vmem>>, %arg4: memref<1x16xf32, #tpu.memory_space<vmem>>, %arg5: memref<1x8xf32, #tpu.memory_space<vmem>>, %arg6: memref<4x16x8xf32, #tpu.memory_space<vmem>>, %arg7: memref<8x16xf32, #tpu.memory_space<vmem>>, %arg8: memref<16x32xf32, #tpu.memory_space<vmem>>, %arg9: memref<1x16xf32, #tpu.memory_space<vmem>>, %arg10: memref<1x32xf32, #tpu.memory_space<vmem>>, %arg11: memref<32x128xf32, #tpu.memory_space<vmem>>, %arg12: memref<32x4xi32, #tpu.memory_space<vmem>>) attributes {dimension_semantics = [#tpu.dimension_semantics<parallel>], iteration_bounds = array<i64: 2>, scalar_prefetch = 0 : i64, scratch_operands = 0 : i64, tpu.core_type = #tpu.core_type<tc>, window_params = [{transform_indices = @transform_0, window_bounds = array<i64: 32, 32>}, {pipeline_mode = #tpu.pipeline_mode<synchronous>, transform_indices = @transform_1, window_bounds = array<i64: 32, 16>}, {pipeline_mode = #tpu.pipeline_mode<synchronous>, transform_indices = @transform_2, window_bounds = array<i64: 16, 8>}, {pipeline_mode = #tpu.pipeline_mode<synchronous>, transform_indices = @transform_3, window_bounds = array<i64: 1, 16>}, {pipeline_mode = #tpu.pipeline_mode<synchronous>, transform_indices = @transform_4, window_bounds = array<i64: 1, 8>}, {pipeline_mode = #tpu.pipeline_mode<synchronous>, transform_indices = @transform_5, window_bounds = array<i64: 4, 16, 8>}, {pipeline_mode = #tpu.pipeline_mode<synchronous>, transform_indices = @transform_6, window_bounds = array<i64: 8, 16>}, {pipeline_mode = #tpu.pipeline_mode<synchronous>, transform_indices = @transform_7, window_bounds = array<i64: 16, 32>}, {pipeline_mode = #tpu.pipeline_mode<synchronous>, transform_indices = @transform_8, window_bounds = array<i64: 1, 16>}, {pipeline_mode = #tpu.pipeline_mode<synchronous>, transform_indices = @transform_9, window_bounds = array<i64: 1, 32>}, {transform_indices = @transform_10, window_bounds = array<i64: 32, 128>}, {transform_indices = @transform_11, window_bounds = array<i64: 32, 4>}]} {
    %c0 = arith.constant 0 : index
    %c0_0 = arith.constant 0 : index
    %0 = vector.load %arg1[%c0, %c0_0] : memref<32x32xf32, #tpu.memory_space<vmem>>, vector<32x32xf32>
    %c0_1 = arith.constant 0 : index
    %c0_2 = arith.constant 0 : index
    %1 = vector.load %arg2[%c0_1, %c0_2] : memref<32x16xf32, #tpu.memory_space<vmem>>, vector<32x16xf32>
    %cst = arith.constant dense<0.000000e+00> : vector<32x16xf32>
    %2 = tpu.matmul %0, %1, %cst {dimension_numbers = #tpu.dot_dimension_numbers<[1], [0], [0], [1], [0, 0, 1, 1], [], []>, precision = #tpu.contract_precision<fp32>} : vector<32x32xf32>, vector<32x16xf32>, vector<32x16xf32> -> vector<32x16xf32>
    %c0_3 = arith.constant 0 : index
    %c0_4 = arith.constant 0 : index
    %3 = vector.load %arg4[%c0_3, %c0_4] : memref<1x16xf32, #tpu.memory_space<vmem>>, vector<1x16xf32>
    %4 = vector.broadcast %3 : vector<1x16xf32> to vector<32x16xf32>
    %5 = arith.addf %2, %4 : vector<32x16xf32>
    %cst_5 = arith.constant 0.000000e+00 : f32
    %6 = vector.broadcast %cst_5 : f32 to vector<32x16xf32>
    %7 = arith.maximumf %5, %6 : vector<32x16xf32>
    %c0_6 = arith.constant 0 : index
    %c0_7 = arith.constant 0 : index
    %8 = vector.load %arg3[%c0_6, %c0_7] : memref<16x8xf32, #tpu.memory_space<vmem>>, vector<16x8xf32>
    %cst_8 = arith.constant dense<0.000000e+00> : vector<32x8xf32>
    %9 = tpu.matmul %7, %8, %cst_8 {dimension_numbers = #tpu.dot_dimension_numbers<[1], [0], [0], [1], [0, 0, 1, 1], [], []>, precision = #tpu.contract_precision<fp32>} : vector<32x16xf32>, vector<16x8xf32>, vector<32x8xf32> -> vector<32x8xf32>
    %c0_9 = arith.constant 0 : index
    %c0_10 = arith.constant 0 : index
    %10 = vector.load %arg5[%c0_9, %c0_10] : memref<1x8xf32, #tpu.memory_space<vmem>>, vector<1x8xf32>
    %11 = vector.broadcast %10 : vector<1x8xf32> to vector<32x8xf32>
    %12 = arith.addf %9, %11 : vector<32x8xf32>
    %c0_11 = arith.constant 0 : index
    %c0_12 = arith.constant 0 : index
    %c0_13 = arith.constant 0 : index
    %13 = vector.load %arg6[%c0_11, %c0_12, %c0_13] : memref<4x16x8xf32, #tpu.memory_space<vmem>>, vector<4x16x8xf32>
    %14 = arith.mulf %13, %13 : vector<4x16x8xf32>
    %cst_14 = arith.constant dense<0.000000e+00> : vector<4x16xf32>
    %15 = vector.multi_reduction <add>, %14, %cst_14 [2] : vector<4x16x8xf32> to vector<4x16xf32>
    %16 = tpu.iota {dimensions = array<i32: 1>} : vector<32x16xi32>
    %17 = tpu.iota {dimensions = array<i32: 1>} : vector<32x4xi32>
    %cst_15 = arith.constant 0.000000e+00 : f32
    %18 = vector.broadcast %cst_15 : f32 to vector<32x8xf32>
    %cst_16 = arith.constant 0.000000e+00 : f32
    %19 = vector.broadcast %cst_16 : f32 to vector<32x8xf32>
    %c0_i32 = arith.constant 0 : i32
    %20 = vector.broadcast %c0_i32 : i32 to vector<32x4xi32>
    %c0_17 = arith.constant 0 : index
    %c0_18 = arith.constant 0 : index
    %c0_19 = arith.constant 0 : index
    %21 = vector.load %arg6[%c0_17, %c0_18, %c0_19] : memref<4x16x8xf32, #tpu.memory_space<vmem>>, vector<1x16x8xf32>
    %22 = vector.shape_cast %21 : vector<1x16x8xf32> to vector<16x8xf32>
    %cst_20 = arith.constant dense<0.000000e+00> : vector<32x16xf32>
    %23 = tpu.matmul %12, %22, %cst_20 {dimension_numbers = #tpu.dot_dimension_numbers<[1], [1], [0], [0], [0, 0, 1, 0], [], []>, precision = #tpu.contract_precision<fp32>} : vector<32x8xf32>, vector<16x8xf32>, vector<32x16xf32> -> vector<32x16xf32>
    %24 = vector.extract_strided_slice %15 {offsets = [0, 0], sizes = [1, 16], strides = [1, 1]} : vector<4x16xf32> to vector<1x16xf32>
    %cst_21 = arith.constant 2.000000e+00 : f32
    %25 = vector.broadcast %cst_21 : f32 to vector<32x16xf32>
    %26 = arith.mulf %25, %23 : vector<32x16xf32>
    %27 = vector.broadcast %24 : vector<1x16xf32> to vector<32x16xf32>
    %28 = arith.subf %27, %26 : vector<32x16xf32>
    %cst_22 = arith.constant dense<0x7F800000> : vector<32xf32>
    %29 = vector.multi_reduction <minimumf>, %28, %cst_22 [1] : vector<32x16xf32> to vector<32xf32>
    %30 = vector.shape_cast %29 : vector<32xf32> to vector<32x1xf32>
    %31 = vector.broadcast %30 : vector<32x1xf32> to vector<32x16xf32>
    %32 = arith.cmpf ole, %28, %31 : vector<32x16xf32>
    %c16_i32 = arith.constant 16 : i32
    %33 = vector.broadcast %c16_i32 : i32 to vector<32x16xi32>
    %34 = arith.select %32, %16, %33 : vector<32x16xi1>, vector<32x16xi32>
    %cst_23 = arith.constant dense<2147483647> : vector<32xi32>
    %35 = vector.multi_reduction <minsi>, %34, %cst_23 [1] : vector<32x16xi32> to vector<32xi32>
    %36 = vector.shape_cast %35 : vector<32xi32> to vector<32x1xi32>
    %37 = vector.broadcast %36 : vector<32x1xi32> to vector<32x16xi32>
    %38 = arith.cmpi eq, %16, %37 : vector<32x16xi32>
    %cst_24 = arith.constant 1.000000e+00 : f32
    %cst_25 = arith.constant 0.000000e+00 : f32
    %39 = vector.broadcast %cst_24 : f32 to vector<32x16xf32>
    %40 = vector.broadcast %cst_25 : f32 to vector<32x16xf32>
    %41 = arith.select %38, %39, %40 : vector<32x16xi1>, vector<32x16xf32>
    %cst_26 = arith.constant dense<0.000000e+00> : vector<32x8xf32>
    %42 = tpu.matmul %41, %22, %cst_26 {dimension_numbers = #tpu.dot_dimension_numbers<[1], [0], [0], [1], [0, 0, 1, 1], [], []>, precision = #tpu.contract_precision<fp32>} : vector<32x16xf32>, vector<16x8xf32>, vector<32x8xf32> -> vector<32x8xf32>
    %43 = arith.subf %12, %42 : vector<32x8xf32>
    %44 = arith.mulf %43, %43 : vector<32x8xf32>
    %45 = arith.addf %19, %44 : vector<32x8xf32>
    %46 = arith.addf %18, %42 : vector<32x8xf32>
    %c0_i32_27 = arith.constant 0 : i32
    %47 = vector.broadcast %c0_i32_27 : i32 to vector<32x4xi32>
    %48 = arith.cmpi eq, %17, %47 : vector<32x4xi32>
    %49 = vector.shape_cast %36 : vector<32x1xi32> to vector<32x1xi32>
    %50 = vector.broadcast %49 : vector<32x1xi32> to vector<32x4xi32>
    %51 = arith.select %48, %50, %20 : vector<32x4xi1>, vector<32x4xi32>
    %c1 = arith.constant 1 : index
    %c0_28 = arith.constant 0 : index
    %c0_29 = arith.constant 0 : index
    %52 = vector.load %arg6[%c1, %c0_28, %c0_29] : memref<4x16x8xf32, #tpu.memory_space<vmem>>, vector<1x16x8xf32>
    %53 = vector.shape_cast %52 : vector<1x16x8xf32> to vector<16x8xf32>
    %cst_30 = arith.constant dense<0.000000e+00> : vector<32x16xf32>
    %54 = tpu.matmul %43, %53, %cst_30 {dimension_numbers = #tpu.dot_dimension_numbers<[1], [1], [0], [0], [0, 0, 1, 0], [], []>, precision = #tpu.contract_precision<fp32>} : vector<32x8xf32>, vector<16x8xf32>, vector<32x16xf32> -> vector<32x16xf32>
    %55 = vector.extract_strided_slice %15 {offsets = [1, 0], sizes = [1, 16], strides = [1, 1]} : vector<4x16xf32> to vector<1x16xf32>
    %cst_31 = arith.constant 2.000000e+00 : f32
    %56 = vector.broadcast %cst_31 : f32 to vector<32x16xf32>
    %57 = arith.mulf %56, %54 : vector<32x16xf32>
    %58 = vector.broadcast %55 : vector<1x16xf32> to vector<32x16xf32>
    %59 = arith.subf %58, %57 : vector<32x16xf32>
    %cst_32 = arith.constant dense<0x7F800000> : vector<32xf32>
    %60 = vector.multi_reduction <minimumf>, %59, %cst_32 [1] : vector<32x16xf32> to vector<32xf32>
    %61 = vector.shape_cast %60 : vector<32xf32> to vector<32x1xf32>
    %62 = vector.broadcast %61 : vector<32x1xf32> to vector<32x16xf32>
    %63 = arith.cmpf ole, %59, %62 : vector<32x16xf32>
    %c16_i32_33 = arith.constant 16 : i32
    %64 = vector.broadcast %c16_i32_33 : i32 to vector<32x16xi32>
    %65 = arith.select %63, %16, %64 : vector<32x16xi1>, vector<32x16xi32>
    %cst_34 = arith.constant dense<2147483647> : vector<32xi32>
    %66 = vector.multi_reduction <minsi>, %65, %cst_34 [1] : vector<32x16xi32> to vector<32xi32>
    %67 = vector.shape_cast %66 : vector<32xi32> to vector<32x1xi32>
    %68 = vector.broadcast %67 : vector<32x1xi32> to vector<32x16xi32>
    %69 = arith.cmpi eq, %16, %68 : vector<32x16xi32>
    %cst_35 = arith.constant 1.000000e+00 : f32
    %cst_36 = arith.constant 0.000000e+00 : f32
    %70 = vector.broadcast %cst_35 : f32 to vector<32x16xf32>
    %71 = vector.broadcast %cst_36 : f32 to vector<32x16xf32>
    %72 = arith.select %69, %70, %71 : vector<32x16xi1>, vector<32x16xf32>
    %cst_37 = arith.constant dense<0.000000e+00> : vector<32x8xf32>
    %73 = tpu.matmul %72, %53, %cst_37 {dimension_numbers = #tpu.dot_dimension_numbers<[1], [0], [0], [1], [0, 0, 1, 1], [], []>, precision = #tpu.contract_precision<fp32>} : vector<32x16xf32>, vector<16x8xf32>, vector<32x8xf32> -> vector<32x8xf32>
    %74 = arith.subf %43, %73 : vector<32x8xf32>
    %75 = arith.mulf %74, %74 : vector<32x8xf32>
    %76 = arith.addf %45, %75 : vector<32x8xf32>
    %77 = arith.addf %46, %73 : vector<32x8xf32>
    %c1_i32 = arith.constant 1 : i32
    %78 = vector.broadcast %c1_i32 : i32 to vector<32x4xi32>
    %79 = arith.cmpi eq, %17, %78 : vector<32x4xi32>
    %80 = vector.shape_cast %67 : vector<32x1xi32> to vector<32x1xi32>
    %81 = vector.broadcast %80 : vector<32x1xi32> to vector<32x4xi32>
    %82 = arith.select %79, %81, %51 : vector<32x4xi1>, vector<32x4xi32>
    %c2 = arith.constant 2 : index
    %c0_38 = arith.constant 0 : index
    %c0_39 = arith.constant 0 : index
    %83 = vector.load %arg6[%c2, %c0_38, %c0_39] : memref<4x16x8xf32, #tpu.memory_space<vmem>>, vector<1x16x8xf32>
    %84 = vector.shape_cast %83 : vector<1x16x8xf32> to vector<16x8xf32>
    %cst_40 = arith.constant dense<0.000000e+00> : vector<32x16xf32>
    %85 = tpu.matmul %74, %84, %cst_40 {dimension_numbers = #tpu.dot_dimension_numbers<[1], [1], [0], [0], [0, 0, 1, 0], [], []>, precision = #tpu.contract_precision<fp32>} : vector<32x8xf32>, vector<16x8xf32>, vector<32x16xf32> -> vector<32x16xf32>
    %86 = vector.extract_strided_slice %15 {offsets = [2, 0], sizes = [1, 16], strides = [1, 1]} : vector<4x16xf32> to vector<1x16xf32>
    %cst_41 = arith.constant 2.000000e+00 : f32
    %87 = vector.broadcast %cst_41 : f32 to vector<32x16xf32>
    %88 = arith.mulf %87, %85 : vector<32x16xf32>
    %89 = vector.broadcast %86 : vector<1x16xf32> to vector<32x16xf32>
    %90 = arith.subf %89, %88 : vector<32x16xf32>
    %cst_42 = arith.constant dense<0x7F800000> : vector<32xf32>
    %91 = vector.multi_reduction <minimumf>, %90, %cst_42 [1] : vector<32x16xf32> to vector<32xf32>
    %92 = vector.shape_cast %91 : vector<32xf32> to vector<32x1xf32>
    %93 = vector.broadcast %92 : vector<32x1xf32> to vector<32x16xf32>
    %94 = arith.cmpf ole, %90, %93 : vector<32x16xf32>
    %c16_i32_43 = arith.constant 16 : i32
    %95 = vector.broadcast %c16_i32_43 : i32 to vector<32x16xi32>
    %96 = arith.select %94, %16, %95 : vector<32x16xi1>, vector<32x16xi32>
    %cst_44 = arith.constant dense<2147483647> : vector<32xi32>
    %97 = vector.multi_reduction <minsi>, %96, %cst_44 [1] : vector<32x16xi32> to vector<32xi32>
    %98 = vector.shape_cast %97 : vector<32xi32> to vector<32x1xi32>
    %99 = vector.broadcast %98 : vector<32x1xi32> to vector<32x16xi32>
    %100 = arith.cmpi eq, %16, %99 : vector<32x16xi32>
    %cst_45 = arith.constant 1.000000e+00 : f32
    %cst_46 = arith.constant 0.000000e+00 : f32
    %101 = vector.broadcast %cst_45 : f32 to vector<32x16xf32>
    %102 = vector.broadcast %cst_46 : f32 to vector<32x16xf32>
    %103 = arith.select %100, %101, %102 : vector<32x16xi1>, vector<32x16xf32>
    %cst_47 = arith.constant dense<0.000000e+00> : vector<32x8xf32>
    %104 = tpu.matmul %103, %84, %cst_47 {dimension_numbers = #tpu.dot_dimension_numbers<[1], [0], [0], [1], [0, 0, 1, 1], [], []>, precision = #tpu.contract_precision<fp32>} : vector<32x16xf32>, vector<16x8xf32>, vector<32x8xf32> -> vector<32x8xf32>
    %105 = arith.subf %74, %104 : vector<32x8xf32>
    %106 = arith.mulf %105, %105 : vector<32x8xf32>
    %107 = arith.addf %76, %106 : vector<32x8xf32>
    %108 = arith.addf %77, %104 : vector<32x8xf32>
    %c2_i32 = arith.constant 2 : i32
    %109 = vector.broadcast %c2_i32 : i32 to vector<32x4xi32>
    %110 = arith.cmpi eq, %17, %109 : vector<32x4xi32>
    %111 = vector.shape_cast %98 : vector<32x1xi32> to vector<32x1xi32>
    %112 = vector.broadcast %111 : vector<32x1xi32> to vector<32x4xi32>
    %113 = arith.select %110, %112, %82 : vector<32x4xi1>, vector<32x4xi32>
    %c3 = arith.constant 3 : index
    %c0_48 = arith.constant 0 : index
    %c0_49 = arith.constant 0 : index
    %114 = vector.load %arg6[%c3, %c0_48, %c0_49] : memref<4x16x8xf32, #tpu.memory_space<vmem>>, vector<1x16x8xf32>
    %115 = vector.shape_cast %114 : vector<1x16x8xf32> to vector<16x8xf32>
    %cst_50 = arith.constant dense<0.000000e+00> : vector<32x16xf32>
    %116 = tpu.matmul %105, %115, %cst_50 {dimension_numbers = #tpu.dot_dimension_numbers<[1], [1], [0], [0], [0, 0, 1, 0], [], []>, precision = #tpu.contract_precision<fp32>} : vector<32x8xf32>, vector<16x8xf32>, vector<32x16xf32> -> vector<32x16xf32>
    %117 = vector.extract_strided_slice %15 {offsets = [3, 0], sizes = [1, 16], strides = [1, 1]} : vector<4x16xf32> to vector<1x16xf32>
    %cst_51 = arith.constant 2.000000e+00 : f32
    %118 = vector.broadcast %cst_51 : f32 to vector<32x16xf32>
    %119 = arith.mulf %118, %116 : vector<32x16xf32>
    %120 = vector.broadcast %117 : vector<1x16xf32> to vector<32x16xf32>
    %121 = arith.subf %120, %119 : vector<32x16xf32>
    %cst_52 = arith.constant dense<0x7F800000> : vector<32xf32>
    %122 = vector.multi_reduction <minimumf>, %121, %cst_52 [1] : vector<32x16xf32> to vector<32xf32>
    %123 = vector.shape_cast %122 : vector<32xf32> to vector<32x1xf32>
    %124 = vector.broadcast %123 : vector<32x1xf32> to vector<32x16xf32>
    %125 = arith.cmpf ole, %121, %124 : vector<32x16xf32>
    %c16_i32_53 = arith.constant 16 : i32
    %126 = vector.broadcast %c16_i32_53 : i32 to vector<32x16xi32>
    %127 = arith.select %125, %16, %126 : vector<32x16xi1>, vector<32x16xi32>
    %cst_54 = arith.constant dense<2147483647> : vector<32xi32>
    %128 = vector.multi_reduction <minsi>, %127, %cst_54 [1] : vector<32x16xi32> to vector<32xi32>
    %129 = vector.shape_cast %128 : vector<32xi32> to vector<32x1xi32>
    %130 = vector.broadcast %129 : vector<32x1xi32> to vector<32x16xi32>
    %131 = arith.cmpi eq, %16, %130 : vector<32x16xi32>
    %cst_55 = arith.constant 1.000000e+00 : f32
    %cst_56 = arith.constant 0.000000e+00 : f32
    %132 = vector.broadcast %cst_55 : f32 to vector<32x16xf32>
    %133 = vector.broadcast %cst_56 : f32 to vector<32x16xf32>
    %134 = arith.select %131, %132, %133 : vector<32x16xi1>, vector<32x16xf32>
    %cst_57 = arith.constant dense<0.000000e+00> : vector<32x8xf32>
    %135 = tpu.matmul %134, %115, %cst_57 {dimension_numbers = #tpu.dot_dimension_numbers<[1], [0], [0], [1], [0, 0, 1, 1], [], []>, precision = #tpu.contract_precision<fp32>} : vector<32x16xf32>, vector<16x8xf32>, vector<32x8xf32> -> vector<32x8xf32>
    %136 = arith.subf %105, %135 : vector<32x8xf32>
    %137 = arith.mulf %136, %136 : vector<32x8xf32>
    %138 = arith.addf %107, %137 : vector<32x8xf32>
    %139 = arith.addf %108, %135 : vector<32x8xf32>
    %c3_i32 = arith.constant 3 : i32
    %140 = vector.broadcast %c3_i32 : i32 to vector<32x4xi32>
    %141 = arith.cmpi eq, %17, %140 : vector<32x4xi32>
    %142 = vector.shape_cast %129 : vector<32x1xi32> to vector<32x1xi32>
    %143 = vector.broadcast %142 : vector<32x1xi32> to vector<32x4xi32>
    %144 = arith.select %141, %143, %113 : vector<32x4xi1>, vector<32x4xi32>
    %cst_58 = arith.constant dense<0.000000e+00> : vector<32xf32>
    %145 = vector.multi_reduction <add>, %138, %cst_58 [1] : vector<32x8xf32> to vector<32xf32>
    %146 = vector.shape_cast %145 : vector<32xf32> to vector<32x1xf32>
    %c0_59 = arith.constant 0 : index
    %c0_60 = arith.constant 0 : index
    %147 = vector.load %arg7[%c0_59, %c0_60] : memref<8x16xf32, #tpu.memory_space<vmem>>, vector<8x16xf32>
    %cst_61 = arith.constant dense<0.000000e+00> : vector<32x16xf32>
    %148 = tpu.matmul %139, %147, %cst_61 {dimension_numbers = #tpu.dot_dimension_numbers<[1], [0], [0], [1], [0, 0, 1, 1], [], []>, precision = #tpu.contract_precision<fp32>} : vector<32x8xf32>, vector<8x16xf32>, vector<32x16xf32> -> vector<32x16xf32>
    %c0_62 = arith.constant 0 : index
    %c0_63 = arith.constant 0 : index
    %149 = vector.load %arg9[%c0_62, %c0_63] : memref<1x16xf32, #tpu.memory_space<vmem>>, vector<1x16xf32>
    %150 = vector.broadcast %149 : vector<1x16xf32> to vector<32x16xf32>
    %151 = arith.addf %148, %150 : vector<32x16xf32>
    %cst_64 = arith.constant 0.000000e+00 : f32
    %152 = vector.broadcast %cst_64 : f32 to vector<32x16xf32>
    %153 = arith.maximumf %151, %152 : vector<32x16xf32>
    %c0_65 = arith.constant 0 : index
    %c0_66 = arith.constant 0 : index
    %154 = vector.load %arg8[%c0_65, %c0_66] : memref<16x32xf32, #tpu.memory_space<vmem>>, vector<16x32xf32>
    %cst_67 = arith.constant dense<0.000000e+00> : vector<32x32xf32>
    %155 = tpu.matmul %153, %154, %cst_67 {dimension_numbers = #tpu.dot_dimension_numbers<[1], [0], [0], [1], [0, 0, 1, 1], [], []>, precision = #tpu.contract_precision<fp32>} : vector<32x16xf32>, vector<16x32xf32>, vector<32x32xf32> -> vector<32x32xf32>
    %c0_68 = arith.constant 0 : index
    %c0_69 = arith.constant 0 : index
    %156 = vector.load %arg10[%c0_68, %c0_69] : memref<1x32xf32, #tpu.memory_space<vmem>>, vector<1x32xf32>
    %157 = vector.broadcast %156 : vector<1x32xf32> to vector<32x32xf32>
    %158 = arith.addf %155, %157 : vector<32x32xf32>
    %cst_70 = arith.constant 0.000000e+00 : f32
    %159 = vector.broadcast %cst_70 : f32 to vector<32x87xf32>
    %160 = tpu.concatenate %158, %12, %146, %159 in 1 : vector<32x32xf32>, vector<32x8xf32>, vector<32x1xf32>, vector<32x87xf32> -> vector<32x128xf32>
    %c0_71 = arith.constant 0 : index
    %c0_72 = arith.constant 0 : index
    %161 = vector.load %arg11[%c0_71, %c0_72] : memref<32x128xf32, #tpu.memory_space<vmem>>, vector<32x128xf32>
    tpu.vector_store %arg11[%c0_71, %c0_72], %160 {strides = array<i32>} : memref<32x128xf32, #tpu.memory_space<vmem>>, vector<32x128xf32>,
    %c0_73 = arith.constant 0 : index
    %c0_74 = arith.constant 0 : index
    %162 = vector.load %arg12[%c0_73, %c0_74] : memref<32x4xi32, #tpu.memory_space<vmem>>, vector<32x4xi32>
    tpu.vector_store %arg12[%c0_73, %c0_74], %144 {strides = array<i32>} : memref<32x4xi32, #tpu.memory_space<vmem>>, vector<32x4xi32>,
    return
  }
  func.func @transform_0(%arg0: i32) -> (i32, i32) {
    %c0_i32 = arith.constant 0 : i32
    %c0_i32_0 = arith.constant 0 : i32
    return %arg0, %c0_i32 : i32, i32
  }
  func.func @transform_1(%arg0: i32) -> (i32, i32) {
    %c0_i32 = arith.constant 0 : i32
    %c0_i32_0 = arith.constant 0 : i32
    %c0_i32_1 = arith.constant 0 : i32
    return %c0_i32, %c0_i32_0 : i32, i32
  }
  func.func @transform_2(%arg0: i32) -> (i32, i32) {
    %c0_i32 = arith.constant 0 : i32
    %c0_i32_0 = arith.constant 0 : i32
    %c0_i32_1 = arith.constant 0 : i32
    return %c0_i32, %c0_i32_0 : i32, i32
  }
  func.func @transform_3(%arg0: i32) -> (i32, i32) {
    %c0_i32 = arith.constant 0 : i32
    %c0_i32_0 = arith.constant 0 : i32
    %c0_i32_1 = arith.constant 0 : i32
    return %c0_i32, %c0_i32_0 : i32, i32
  }
  func.func @transform_4(%arg0: i32) -> (i32, i32) {
    %c0_i32 = arith.constant 0 : i32
    %c0_i32_0 = arith.constant 0 : i32
    %c0_i32_1 = arith.constant 0 : i32
    return %c0_i32, %c0_i32_0 : i32, i32
  }
  func.func @transform_5(%arg0: i32) -> (i32, i32, i32) {
    %c0_i32 = arith.constant 0 : i32
    %c0_i32_0 = arith.constant 0 : i32
    %c0_i32_1 = arith.constant 0 : i32
    %c0_i32_2 = arith.constant 0 : i32
    return %c0_i32, %c0_i32_0, %c0_i32_1 : i32, i32, i32
  }
  func.func @transform_6(%arg0: i32) -> (i32, i32) {
    %c0_i32 = arith.constant 0 : i32
    %c0_i32_0 = arith.constant 0 : i32
    %c0_i32_1 = arith.constant 0 : i32
    return %c0_i32, %c0_i32_0 : i32, i32
  }
  func.func @transform_7(%arg0: i32) -> (i32, i32) {
    %c0_i32 = arith.constant 0 : i32
    %c0_i32_0 = arith.constant 0 : i32
    %c0_i32_1 = arith.constant 0 : i32
    return %c0_i32, %c0_i32_0 : i32, i32
  }
  func.func @transform_8(%arg0: i32) -> (i32, i32) {
    %c0_i32 = arith.constant 0 : i32
    %c0_i32_0 = arith.constant 0 : i32
    %c0_i32_1 = arith.constant 0 : i32
    return %c0_i32, %c0_i32_0 : i32, i32
  }
  func.func @transform_9(%arg0: i32) -> (i32, i32) {
    %c0_i32 = arith.constant 0 : i32
    %c0_i32_0 = arith.constant 0 : i32
    %c0_i32_1 = arith.constant 0 : i32
    return %c0_i32, %c0_i32_0 : i32, i32
  }
  func.func @transform_10(%arg0: i32) -> (i32, i32) {
    %c0_i32 = arith.constant 0 : i32
    %c0_i32_0 = arith.constant 0 : i32
    return %arg0, %c0_i32 : i32, i32
  }
  func.func @transform_11(%arg0: i32) -> (i32, i32) {
    %c0_i32 = arith.constant 0 : i32
    %c0_i32_0 = arith.constant 0 : i32
    return %arg0, %c0_i32 : i32, i32
  }
}

</mosaic_0001>

<llo_original>
// kernel: tpu_custom_call.1
$region0: #{tpu_custom_call.1}
  #allocation0 [shape = 'u32[]', space=smem, size = 0x4, offset = 0x4, fixed_abs, tag = 'smem constant byte address 0x4 - core index']
  #allocation1 [shape = 'u32[72,128]{1,0:T(1,128)}', space=vmem, size = 0x9000, scoped, tag = 'internal scratch']
  %s0 = inlined_call_operand.vmem [shape: f32[64,32], index: 0, kind: input, shape index: {}]
  %s1 = inlined_call_operand.vmem [shape: f32[32,16], index: 1, kind: input, shape index: {}]
  %s2 = inlined_call_operand.vmem [shape: f32[16,8], index: 2, kind: input, shape index: {}]
  %s3 = inlined_call_operand.vmem [shape: f32[1,16], index: 3, kind: input, shape index: {}]
  %s4 = inlined_call_operand.vmem [shape: f32[1,8], index: 4, kind: input, shape index: {}]
  %s5 = inlined_call_operand.vmem [shape: f32[4,16,8], index: 5, kind: input, shape index: {}]
  %s6 = inlined_call_operand.vmem [shape: f32[8,16], index: 6, kind: input, shape index: {}]
  %s7 = inlined_call_operand.vmem [shape: f32[16,32], index: 7, kind: input, shape index: {}]
  %s8 = inlined_call_operand.vmem [shape: f32[1,16], index: 8, kind: input, shape index: {}]
  %s9 = inlined_call_operand.vmem [shape: f32[1,32], index: 9, kind: input, shape index: {}]
  %s10 = inlined_call_operand.hbm [shape: f32[64,128], index: 10, kind: output, shape index: {0}]
  %s11 = inlined_call_operand.vmem [shape: s32[64,4], index: 11, kind: output, shape index: {1}]
  %12 = xla_tuple %s10, %s11
  %s13 = sld [smem:[#allocation0]]
  $region81: #{tpu_custom_call.1} parent=0
    _
  %s15 = ssub.s32 1, %s13
  %s16 = scalar_select 0, %s15, %s13
  $region1: #{tpu_custom_call.1} parent=0
    #allocation2 [shape = 'u8[32768]{0}', space=vmem, size = 0x8000, scoped, tag = 'output window, operand 0']
    #allocation3 [shape = 's32[2]{0}', space=sflag, size = 0x8, scoped, tag = 'scoped memory for tpu_custom_call.1']
    %17 = vsyncpa [#allocation3], 0
    %s18 = scalar_lea.sflag [#allocation3], 1
    %19 = vsyncpa %s18, 0
    loop: start=0, step=1, limit=4
    $region2: #{tpu_custom_call.1} parent=1 // loop_pre_header
      _
    $region3: #{tpu_custom_call.1} parent=1 // loop_header
      %s21 = sphi 0, %s25
      %p22 = scmp.ge.s32.totalorder %s21, 4
      %s31 = sphi 0, %s33
      %s34 = sphi 0, %s31
      %s35 = sphi 0, %s34
      %s51 = sphi 0, %s35
      %s55 = sphi 0, %s55
      %s57 = sphi 0, %s55
      %s58 = sphi 0, %s57
      %s72 = sphi 0, %s58
      %s76 = sphi 0, %s76
      %s78 = sphi 0, %s76
      %s79 = sphi 0, %s78
      %s93 = sphi 0, %s79
      %s97 = sphi 0, %s97
      %s99 = sphi 0, %s97
      %s100 = sphi 0, %s99
      %s114 = sphi 0, %s100
      %s118 = sphi 0, %s118
      %s120 = sphi 0, %s118
      %s121 = sphi 0, %s120
      %s135 = sphi 0, %s121
      %s139 = sphi 0, %s139
      %s141 = sphi 0, %s139
      %s142 = sphi 0, %s141
      %s156 = sphi 0, %s142
      %s160 = sphi 0, %s160
      %s162 = sphi 0, %s160
      %s163 = sphi 0, %s162
      %s177 = sphi 0, %s163
      %s181 = sphi 0, %s181
      %s183 = sphi 0, %s181
      %s184 = sphi 0, %s183
      %s198 = sphi 0, %s184
      %s202 = sphi 0, %s202
      %s204 = sphi 0, %s202
      %s205 = sphi 0, %s204
      %s219 = sphi 0, %s205
      %s223 = sphi 0, %s223
      %s225 = sphi 0, %s223
      %s226 = sphi 0, %s225
      %s240 = sphi 0, %s226
      %s246 = sphi 0, %s248
      %s249 = sphi 0, %s246
      %s250 = sphi 0, %s249
      %s266 = sphi 0, %s250
      %s272 = sphi 0, %s274
      %s275 = sphi 0, %s272
      %s276 = sphi 0, %s275
      %s292 = sphi 0, %s276
    $region4: #{tpu_custom_call.1} parent=1 // loop_header_branch
      %24 = sbr.rel (%p22) target = $region8
    $region5: #{tpu_custom_call.1} parent=1 // loop_body
      %s26 = ssub.s32 %s21, 1
      %s27 = ssub.s32 %s21, 2
      %s28 = sadd.s32 %s21, 1
      %s29 = ssub.s32 %s21, %s28
      %p30 = scmp.eq.s32.totalorder %s29, 0
      %s32 = sadd.s32 %s31, 1
      %s33 = scalar_select %p30, %s31, %s32
      %p36 = pneg %p30
      %p37 = scmp.eq.s32.totalorder %s21, 1
      %p38 = por %p36, %p37
      %p39 = scmp.ne.s32.totalorder %s31, %s34
      %p40 = scmp.eq.s32.totalorder %s21, 0
      %p41 = por %p39, %p40
      %p42 = scmp.ne.s32.totalorder %s31, %s34
      %p43 = scmp.eq.s32.totalorder %s26, 1
      %p44 = por %p42, %p43
      %p45 = scmp.ne.s32.totalorder %s34, %s35
      %p46 = scmp.eq.s32.totalorder %s26, 0
      %p47 = por %p45, %p46
      %p48 = scmp.ne.s32.totalorder %s34, %s35
      %p49 = scmp.eq.s32.totalorder %s27, 1
      %p50 = por %p48, %p49
      %p52 = scmp.ne.s32.totalorder %s35, %s51
      %p53 = scmp.eq.s32.totalorder %s27, 0
      %p54 = por %p52, %p53
      %s56 = sadd.s32 %s55, 1
      %p59 = scmp.eq.s32.totalorder %s21, 1
      %p60 = scmp.ne.s32.totalorder %s55, %s57
      %p61 = scmp.eq.s32.totalorder %s21, 0
      %p62 = por %p60, %p61
      %p63 = scmp.ne.s32.totalorder %s55, %s57
      %p64 = scmp.eq.s32.totalorder %s26, 1
      %p65 = por %p63, %p64
      %p66 = scmp.ne.s32.totalorder %s57, %s58
      %p67 = scmp.eq.s32.totalorder %s26, 0
      %p68 = por %p66, %p67
      %p69 = scmp.ne.s32.totalorder %s57, %s58
      %p70 = scmp.eq.s32.totalorder %s27, 1
      %p71 = por %p69, %p70
      %p73 = scmp.ne.s32.totalorder %s58, %s72
      %p74 = scmp.eq.s32.totalorder %s27, 0
      %p75 = por %p73, %p74
      %s77 = sadd.s32 %s76, 1
      %p80 = scmp.eq.s32.totalorder %s21, 1
      %p81 = scmp.ne.s32.totalorder %s76, %s78
      %p82 = scmp.eq.s32.totalorder %s21, 0
      %p83 = por %p81, %p82
      %p84 = scmp.ne.s32.totalorder %s76, %s78
      %p85 = scmp.eq.s32.totalorder %s26, 1
      %p86 = por %p84, %p85
      %p87 = scmp.ne.s32.totalorder %s78, %s79
      %p88 = scmp.eq.s32.totalorder %s26, 0
      %p89 = por %p87, %p88
      %p90 = scmp.ne.s32.totalorder %s78, %s79
      %p91 = scmp.eq.s32.totalorder %s27, 1
      %p92 = por %p90, %p91
      %p94 = scmp.ne.s32.totalorder %s79, %s93
      %p95 = scmp.eq.s32.totalorder %s27, 0
      %p96 = por %p94, %p95
      %s98 = sadd.s32 %s97, 1
      %p101 = scmp.eq.s32.totalorder %s21, 1
      %p102 = scmp.ne.s32.totalorder %s97, %s99
      %p103 = scmp.eq.s32.totalorder %s21, 0
      %p104 = por %p102, %p103
      %p105 = scmp.ne.s32.totalorder %s97, %s99
      %p106 = scmp.eq.s32.totalorder %s26, 1
      %p107 = por %p105, %p106
      %p108 = scmp.ne.s32.totalorder %s99, %s100
      %p109 = scmp.eq.s32.totalorder %s26, 0
      %p110 = por %p108, %p109
      %p111 = scmp.ne.s32.totalorder %s99, %s100
      %p112 = scmp.eq.s32.totalorder %s27, 1
      %p113 = por %p111, %p112
      %p115 = scmp.ne.s32.totalorder %s100, %s114
      %p116 = scmp.eq.s32.totalorder %s27, 0
      %p117 = por %p115, %p116
      %s119 = sadd.s32 %s118, 1
      %p122 = scmp.eq.s32.totalorder %s21, 1
      %p123 = scmp.ne.s32.totalorder %s118, %s120
      %p124 = scmp.eq.s32.totalorder %s21, 0
      %p125 = por %p123, %p124
      %p126 = scmp.ne.s32.totalorder %s118, %s120
      %p127 = scmp.eq.s32.totalorder %s26, 1
      %p128 = por %p126, %p127
      %p129 = scmp.ne.s32.totalorder %s120, %s121
      %p130 = scmp.eq.s32.totalorder %s26, 0
      %p131 = por %p129, %p130
      %p132 = scmp.ne.s32.totalorder %s120, %s121
      %p133 = scmp.eq.s32.totalorder %s27, 1
      %p134 = por %p132, %p133
      %p136 = scmp.ne.s32.totalorder %s121, %s135
      %p137 = scmp.eq.s32.totalorder %s27, 0
      %p138 = por %p136, %p137
      %s140 = sadd.s32 %s139, 1
      %p143 = scmp.eq.s32.totalorder %s21, 1
      %p144 = scmp.ne.s32.totalorder %s139, %s141
      %p145 = scmp.eq.s32.totalorder %s21, 0
      %p146 = por %p144, %p145
      %p147 = scmp.ne.s32.totalorder %s139, %s141
      %p148 = scmp.eq.s32.totalorder %s26, 1
      %p149 = por %p147, %p148
      %p150 = scmp.ne.s32.totalorder %s141, %s142
      %p151 = scmp.eq.s32.totalorder %s26, 0
      %p152 = por %p150, %p151
      %p153 = scmp.ne.s32.totalorder %s141, %s142
      %p154 = scmp.eq.s32.totalorder %s27, 1
      %p155 = por %p153, %p154
      %p157 = scmp.ne.s32.totalorder %s142, %s156
      %p158 = scmp.eq.s32.totalorder %s27, 0
      %p159 = por %p157, %p158
      %s161 = sadd.s32 %s160, 1
      %p164 = scmp.eq.s32.totalorder %s21, 1
      %p165 = scmp.ne.s32.totalorder %s160, %s162
      %p166 = scmp.eq.s32.totalorder %s21, 0
      %p167 = por %p165, %p166
      %p168 = scmp.ne.s32.totalorder %s160, %s162
      %p169 = scmp.eq.s32.totalorder %s26, 1
      %p170 = por %p168, %p169
      %p171 = scmp.ne.s32.totalorder %s162, %s163
      %p172 = scmp.eq.s32.totalorder %s26, 0
      %p173 = por %p171, %p172
      %p174 = scmp.ne.s32.totalorder %s162, %s163
      %p175 = scmp.eq.s32.totalorder %s27, 1
      %p176 = por %p174, %p175
      %p178 = scmp.ne.s32.totalorder %s163, %s177
      %p179 = scmp.eq.s32.totalorder %s27, 0
      %p180 = por %p178, %p179
      %s182 = sadd.s32 %s181, 1
      %p185 = scmp.eq.s32.totalorder %s21, 1
      %p186 = scmp.ne.s32.totalorder %s181, %s183
      %p187 = scmp.eq.s32.totalorder %s21, 0
      %p188 = por %p186, %p187
      %p189 = scmp.ne.s32.totalorder %s181, %s183
      %p190 = scmp.eq.s32.totalorder %s26, 1
      %p191 = por %p189, %p190
      %p192 = scmp.ne.s32.totalorder %s183, %s184
      %p193 = scmp.eq.s32.totalorder %s26, 0
      %p194 = por %p192, %p193
      %p195 = scmp.ne.s32.totalorder %s183, %s184
      %p196 = scmp.eq.s32.totalorder %s27, 1
      %p197 = por %p195, %p196
      %p199 = scmp.ne.s32.totalorder %s184, %s198
      %p200 = scmp.eq.s32.totalorder %s27, 0
      %p201 = por %p199, %p200
      %s203 = sadd.s32 %s202, 1
      %p206 = scmp.eq.s32.totalorder %s21, 1
      %p207 = scmp.ne.s32.totalorder %s202, %s204
      %p208 = scmp.eq.s32.totalorder %s21, 0
      %p209 = por %p207, %p208
      %p210 = scmp.ne.s32.totalorder %s202, %s204
      %p211 = scmp.eq.s32.totalorder %s26, 1
      %p212 = por %p210, %p211
      %p213 = scmp.ne.s32.totalorder %s204, %s205
      %p214 = scmp.eq.s32.totalorder %s26, 0
      %p215 = por %p213, %p214
      %p216 = scmp.ne.s32.totalorder %s204, %s205
      %p217 = scmp.eq.s32.totalorder %s27, 1
      %p218 = por %p216, %p217
      %p220 = scmp.ne.s32.totalorder %s205, %s219
      %p221 = scmp.eq.s32.totalorder %s27, 0
      %p222 = por %p220, %p221
      %s224 = sadd.s32 %s223, 1
      %p227 = scmp.eq.s32.totalorder %s21, 1
      %p228 = scmp.ne.s32.totalorder %s223, %s225
      %p229 = scmp.eq.s32.totalorder %s21, 0
      %p230 = por %p228, %p229
      %p231 = scmp.ne.s32.totalorder %s223, %s225
      %p232 = scmp.eq.s32.totalorder %s26, 1
      %p233 = por %p231, %p232
      %p234 = scmp.ne.s32.totalorder %s225, %s226
      %p235 = scmp.eq.s32.totalorder %s26, 0
      %p236 = por %p234, %p235
      %p237 = scmp.ne.s32.totalorder %s225, %s226
      %p238 = scmp.eq.s32.totalorder %s27, 1
      %p239 = por %p237, %p238
      %p241 = scmp.ne.s32.totalorder %s226, %s240
      %p242 = scmp.eq.s32.totalorder %s27, 0
      %p243 = por %p241, %p242
      %s244 = ssub.s32 %s21, %s28
      %p245 = scmp.eq.s32.totalorder %s244, 0
      %s247 = sadd.s32 %s246, 1
      %s248 = scalar_select %p245, %s246, %s247
      %p251 = pneg %p245
      %p252 = scmp.eq.s32.totalorder %s21, 1
      %p253 = por %p251, %p252
      %p254 = scmp.ne.s32.totalorder %s246, %s249
      %p255 = scmp.eq.s32.totalorder %s21, 0
      %p256 = por %p254, %p255
      %p257 = scmp.ne.s32.totalorder %s246, %s249
      %p258 = scmp.eq.s32.totalorder %s26, 1
      %p259 = por %p257, %p258
      %p260 = scmp.ne.s32.totalorder %s249, %s250
      %p261 = scmp.eq.s32.totalorder %s26, 0
      %p262 = por %p260, %p261
      %p263 = scmp.ne.s32.totalorder %s249, %s250
      %p264 = scmp.eq.s32.totalorder %s27, 1
      %p265 = por %p263, %p264
      %p267 = scmp.ne.s32.totalorder %s250, %s266
      %p268 = scmp.eq.s32.totalorder %s27, 0
      %p269 = por %p267, %p268
      %s270 = ssub.s32 %s21, %s28
      %p271 = scmp.eq.s32.totalorder %s270, 0
      %s273 = sadd.s32 %s272, 1
      %s274 = scalar_select %p271, %s272, %s273
      %p277 = pneg %p271
      %p278 = scmp.eq.s32.totalorder %s21, 1
      %p279 = por %p277, %p278
      %p280 = scmp.ne.s32.totalorder %s272, %s275
      %p281 = scmp.eq.s32.totalorder %s21, 0
      %p282 = por %p280, %p281
      %p283 = scmp.ne.s32.totalorder %s272, %s275
      %p284 = scmp.eq.s32.totalorder %s26, 1
      %p285 = por %p283, %p284
      %p286 = scmp.ne.s32.totalorder %s275, %s276
      %p287 = scmp.eq.s32.totalorder %s26, 0
      %p288 = por %p286, %p287
      %p289 = scmp.ne.s32.totalorder %s275, %s276
      %p290 = scmp.eq.s32.totalorder %s27, 1
      %p291 = por %p289, %p290
      %p293 = scmp.ne.s32.totalorder %s276, %s292
      %p294 = scmp.eq.s32.totalorder %s27, 0
      %p295 = por %p293, %p294
      %p296 = scmp.le.s32.totalorder 1, %s21
      %p297 = scmp.lt.s32.totalorder %s21, 3
      %p298 = pnand %p296, %p297
      %p299 = pneg %p298
      // Predicated region
      $region9: #{tpu_custom_call.1} parent=5 // pred_check
        _
      $region10: #{tpu_custom_call.1} parent=5 // pred_check_branch
        %301 = sbr.rel (%p298) target = $region12
      $region11: #{tpu_custom_call.1} parent=5 // pred_region
        %s302 = ssub.s32 %s21, 1
        // Predicated region
        $region13: #{tpu_custom_call.1} parent=11 // pred_check
          %p303 = pneg %p68
        $region14: #{tpu_custom_call.1} parent=11 // pred_check_branch
          %305 = sbr.rel (%p303) target = $region16
        $region15: #{tpu_custom_call.1} parent=11 // pred_region
          _
        $region16: #{tpu_custom_call.1} parent=11 // pred_fallthru
          _
        // Predicated region
        $region17: #{tpu_custom_call.1} parent=11 // pred_check
          %p306 = pneg %p89
        $region18: #{tpu_custom_call.1} parent=11 // pred_check_branch
          %308 = sbr.rel (%p306) target = $region20
        $region19: #{tpu_custom_call.1} parent=11 // pred_region
          _
        $region20: #{tpu_custom_call.1} parent=11 // pred_fallthru
          _
        // Predicated region
        $region21: #{tpu_custom_call.1} parent=11 // pred_check
          %p309 = pneg %p110
        $region22: #{tpu_custom_call.1} parent=11 // pred_check_branch
          %311 = sbr.rel (%p309) target = $region24
        $region23: #{tpu_custom_call.1} parent=11 // pred_region
          _
        $region24: #{tpu_custom_call.1} parent=11 // pred_fallthru
          _
        // Predicated region
        $region25: #{tpu_custom_call.1} parent=11 // pred_check
          %p312 = pneg %p131
        $region26: #{tpu_custom_call.1} parent=11 // pred_check_branch
          %314 = sbr.rel (%p312) target = $region28
        $region27: #{tpu_custom_call.1} parent=11 // pred_region
          _
        $region28: #{tpu_custom_call.1} parent=11 // pred_fallthru
          _
        // Predicated region
        $region29: #{tpu_custom_call.1} parent=11 // pred_check
          %p315 = pneg %p152
        $region30: #{tpu_custom_call.1} parent=11 // pred_check_branch
          %317 = sbr.rel (%p315) target = $region32
        $region31: #{tpu_custom_call.1} parent=11 // pred_region
          _
        $region32: #{tpu_custom_call.1} parent=11 // pred_fallthru
          _
        // Predicated region
        $region33: #{tpu_custom_call.1} parent=11 // pred_check
          %p318 = pneg %p173
        $region34: #{tpu_custom_call.1} parent=11 // pred_check_branch
          %320 = sbr.rel (%p318) target = $region36
        $region35: #{tpu_custom_call.1} parent=11 // pred_region
          _
        $region36: #{tpu_custom_call.1} parent=11 // pred_fallthru
          _
        // Predicated region
        $region37: #{tpu_custom_call.1} parent=11 // pred_check
          %p321 = pneg %p194
        $region38: #{tpu_custom_call.1} parent=11 // pred_check_branch
          %323 = sbr.rel (%p321) target = $region40
        $region39: #{tpu_custom_call.1} parent=11 // pred_region
          _
        $region40: #{tpu_custom_call.1} parent=11 // pred_fallthru
          _
        // Predicated region
        $region41: #{tpu_custom_call.1} parent=11 // pred_check
          %p324 = pneg %p215
        $region42: #{tpu_custom_call.1} parent=11 // pred_check_branch
          %326 = sbr.rel (%p324) target = $region44
        $region43: #{tpu_custom_call.1} parent=11 // pred_region
          _
        $region44: #{tpu_custom_call.1} parent=11 // pred_fallthru
          _
        // Predicated region
        $region45: #{tpu_custom_call.1} parent=11 // pred_check
          %p327 = pneg %p236
        $region46: #{tpu_custom_call.1} parent=11 // pred_check_branch
          %329 = sbr.rel (%p327) target = $region48
        $region47: #{tpu_custom_call.1} parent=11 // pred_region
          _
        $region48: #{tpu_custom_call.1} parent=11 // pred_fallthru
          _
      $region12: #{tpu_custom_call.1} parent=5 // pred_fallthru
        _
      %p330 = scmp.lt.s32.totalorder %s21, 2
      // Predicated region
      $region49: #{tpu_custom_call.1} parent=5 // pred_check
        %p331 = pneg %p330
      $region50: #{tpu_custom_call.1} parent=5 // pred_check_branch
        %333 = sbr.rel (%p331) target = $region52
      $region51: #{tpu_custom_call.1} parent=5 // pred_region
        // Predicated region
        $region53: #{tpu_custom_call.1} parent=51 // pred_check
          %p334 = pneg %p41
        $region54: #{tpu_custom_call.1} parent=51 // pred_check_branch
          %336 = sbr.rel (%p334) target = $region56
        $region55: #{tpu_custom_call.1} parent=51 // pred_region
          %s337 = smul.u32 4, %s21
          %p338 = scmp.lt.s32.totalorder %s337, 7
          %s339 = scalar_select %p338, %s337, 7
          %s340 = smul.addr %s339, 8
          %s341 = scalar_lea.vmem %s0, %s340
          %s342 = smul.u32 4, %s21
        $region56: #{tpu_custom_call.1} parent=51 // pred_fallthru
          _
      $region52: #{tpu_custom_call.1} parent=5 // pred_fallthru
        _
      %p343 = scmp.le.s32.totalorder 1, %s21
      %p344 = scmp.lt.s32.totalorder %s21, 3
      %p345 = pnand %p343, %p344
      %p346 = pneg %p345
      // Predicated region
      $region57: #{tpu_custom_call.1} parent=5 // pred_check
        _
      $region58: #{tpu_custom_call.1} parent=5 // pred_check_branch
        %348 = sbr.rel (%p345) target = $region60
      $region59: #{tpu_custom_call.1} parent=5 // pred_region
        %s349 = ssub.s32 %s21, 1
        %s350 = smul.u32 4, %s26
        %p351 = scmp.lt.s32.totalorder %s350, 7
        %s352 = scalar_select %p351, %s350, 7
        %s353 = smul.addr %s352, 8
        %s354 = scalar_lea.vmem %s0, %s353
        %p355 = pneg %p47
        %p356 = pneg %p44
        %p357 = pneg %p68
        %p358 = pneg %p65
        %p359 = pneg %p89
        %p360 = pneg %p86
        %p361 = pneg %p110
        %p362 = pneg %p107
        %p363 = pneg %p131
        %p364 = pneg %p128
        %p365 = pneg %p152
        %p366 = pneg %p149
        %p367 = pneg %p173
        %p368 = pneg %p170
        %p369 = pneg %p194
        %p370 = pneg %p191
        %p371 = pneg %p215
        %p372 = pneg %p212
        %p373 = pneg %p236
        %p374 = pneg %p233
        %p375 = pneg %p262
        %p376 = pneg %p259
        %s377 = sand.u32 %s249, 1
        %s378 = scalar_lea.sflag [#allocation3], %s377
        %s379 = sand.u32 %s249, 1
        %s380 = smul.addr %s379, 32
        %s381 = scalar_lea.vmem [#allocation2], %s380
        %p382 = pneg %p288
        %p383 = pneg %p285
        %s384 = smul.u32 4, %s26
        %p385 = scmp.lt.s32.totalorder %s384, 7
        %s386 = scalar_select %p385, %s384, 7
        %s387 = smul.addr %s386, 8
        %s388 = scalar_lea.vmem %s11, %s387
        %s389 = smul.u32 4, %s26
        %p390 = scmp.lt.s32.totalorder %s389, 7
        %s391 = scalar_select %p390, %s389, 7
        %s392 = smul.addr %s391, 8
        %s393 = scalar_lea.vmem %s0, %s392
        %s394 = smul.u32 4, %s26
        %s395 = smul.u32 4, %s26
        %s396 = smul.u32 4, %s26
        %p397 = scmp.lt.s32.totalorder %s396, 7
        %s398 = scalar_select %p397, %s396, 7
        %s399 = smul.addr %s398, 8
        %s400 = scalar_lea.vmem %s11, %s399
        %s401 = smul.u32 4, %s26
        %v402 = vld [vmem:[%s393] sm:$0xff]
        %v403 = vld [vmem:[%s393 + $0x8] sm:$0xff]
        %v404 = vld [vmem:[%s393 + $0x10] sm:$0xff]
        %v405 = vld [vmem:[%s393 + $0x18] sm:$0xff]
        %v406 = vld [vmem:[%s1] sm:$0xff]
        %v407 = vld [vmem:[%s1 + $0x8] sm:$0xff]
        %v408 = vld [vmem:[%s1 + $0x10] sm:$0xff]
        %v409 = vld [vmem:[%s1 + $0x18] sm:$0xff]
        %v410 = vld [vmem:[%s3] sm:$0x1]
        %v412 = vperm.slane %v410, 0
        %vm414 = vcmask 261120
        %v416 = vsel %vm414, %v402, 0
        %v419 = vsel %vm414, %v403, 0
        %v422 = vsel %vm414, %v404, 0
        %v425 = vsel %vm414, %v405, 0
        %427 = vmatpush.msra.mxu0 0.0
        %428 = vmatpush.msra.mxu0 0.0
        %429 = vmatpush.msra.mxu0 0.0
        %430 = vmatpush.msra.mxu0 0.0
        %431 = vmatpush.msra.mxu0 0.0
        %432 = vmatpush.msra.mxu0 0.0
        %433 = vmatpush.msra.mxu0 0.0
        %434 = vmatpush.msra.mxu0 0.0
        %435 = vmatpush.msra.mxu0 0.0
        %436 = vmatpush.msra.mxu0 0.0
        %437 = vmatpush.msra.mxu0 0.0
        %438 = vmatpush.msra.mxu0 0.0
        %v439 = vand.u32 %v409, 4294901760
        %440 = vmatpush.msra.mxu0 %v439
        %v441 = vand.u32 %v408, 4294901760
        %442 = vmatpush.msra.mxu0 %v441
        %v443 = vand.u32 %v407, 4294901760
        %444 = vmatpush.msra.mxu0 %v443
        %v445 = vand.u32 %v406, 4294901760
        %446 = vmatpush.msra.mxu0 %v445
        %v447 = vand.u32 %v416, 4294901760
        %v448 = vsub.f32 %v416, %v447
        %v449 = vand.u32 %v448, 4294901760
        %v450 = vsub.f32 %v448, %v449
        %v451 = vand.u32 %v450, 4294901760
        %452 = vmatmul.f32.gmra.mxu0 %v451
        %v453 = vpop.f32.mrf.mxu0
        %v454 = vadd.f32 %v412, %v453
        %v455 = vand.u32 %v419, 4294901760
        %v456 = vsub.f32 %v419, %v455
        %v457 = vand.u32 %v456, 4294901760
        %v458 = vsub.f32 %v456, %v457
        %v459 = vand.u32 %v458, 4294901760
        %460 = vmatmul.f32.gmra.mxu0 %v459
        %v461 = vpop.f32.mrf.mxu0
        %v462 = vadd.f32 %v412, %v461
        %v463 = vand.u32 %v422, 4294901760
        %v464 = vsub.f32 %v422, %v463
        %v465 = vand.u32 %v464, 4294901760
        %v466 = vsub.f32 %v464, %v465
        %v467 = vand.u32 %v466, 4294901760
        %468 = vmatmul.f32.gmra.mxu0 %v467
        %v469 = vpop.f32.mrf.mxu0
        %v470 = vadd.f32 %v412, %v469
        %v471 = vand.u32 %v425, 4294901760
        %v472 = vsub.f32 %v425, %v471
        %v473 = vand.u32 %v472, 4294901760
        %v474 = vsub.f32 %v472, %v473
        %v475 = vand.u32 %v474, 4294901760
        %476 = vmatmul.f32.gmra.mxu0 %v475
        %v477 = vpop.f32.mrf.mxu0
        %v478 = vadd.f32 %v412, %v477
        %479 = vdwg.mxu0
        %480 = vmatpush.msra.mxu0 0.0
        %481 = vmatpush.msra.mxu0 0.0
        %482 = vmatpush.msra.mxu0 0.0
        %483 = vmatpush.msra.mxu0 0.0
        %484 = vmatpush.msra.mxu0 0.0
        %485 = vmatpush.msra.mxu0 0.0
        %486 = vmatpush.msra.mxu0 0.0
        %487 = vmatpush.msra.mxu0 0.0
        %488 = vmatpush.msra.mxu0 0.0
        %489 = vmatpush.msra.mxu0 0.0
        %490 = vmatpush.msra.mxu0 0.0
        %491 = vmatpush.msra.mxu0 0.0
        %v492 = vand.u32 %v409, 4294901760
        %v493 = vsub.f32 %v409, %v492
        %v494 = vand.u32 %v493, 4294901760
        %v495 = vsub.f32 %v493, %v494
        %v496 = vand.u32 %v495, 4294901760
        %497 = vmatpush.msra.mxu0 %v496
        %v498 = vand.u32 %v408, 4294901760
        %v499 = vsub.f32 %v408, %v498
        %v500 = vand.u32 %v499, 4294901760
        %v501 = vsub.f32 %v499, %v500
        %v502 = vand.u32 %v501, 4294901760
        %503 = vmatpush.msra.mxu0 %v502
        %v504 = vand.u32 %v407, 4294901760
        %v505 = vsub.f32 %v407, %v504
        %v506 = vand.u32 %v505, 4294901760
        %v507 = vsub.f32 %v505, %v506
        %v508 = vand.u32 %v507, 4294901760
        %509 = vmatpush.msra.mxu0 %v508
        %v510 = vand.u32 %v406, 4294901760
        %v511 = vsub.f32 %v406, %v510
        %v512 = vand.u32 %v511, 4294901760
        %v513 = vsub.f32 %v511, %v512
        %v514 = vand.u32 %v513, 4294901760
        %515 = vmatpush.msra.mxu0 %v514
        %v516 = vand.u32 %v416, 4294901760
        %517 = vmatmul.f32.gmra.mxu0 %v516
        %v518 = vpop.f32.mrf.mxu0
        %v519 = vadd.f32 %v454, %v518
        %v520 = vand.u32 %v419, 4294901760
        %521 = vmatmul.f32.gmra.mxu0 %v520
        %v522 = vpop.f32.mrf.mxu0
        %v523 = vadd.f32 %v462, %v522
        %v524 = vand.u32 %v422, 4294901760
        %525 = vmatmul.f32.gmra.mxu0 %v524
        %v526 = vpop.f32.mrf.mxu0
        %v527 = vadd.f32 %v470, %v526
        %v528 = vand.u32 %v425, 4294901760
        %529 = vmatmul.f32.gmra.mxu0 %v528
        %v530 = vpop.f32.mrf.mxu0
        %v531 = vadd.f32 %v478, %v530
        %532 = vdwg.mxu0
        %533 = vmatpush.msra.mxu0 0.0
        %534 = vmatpush.msra.mxu0 0.0
        %535 = vmatpush.msra.mxu0 0.0
        %536 = vmatpush.msra.mxu0 0.0
        %537 = vmatpush.msra.mxu0 0.0
        %538 = vmatpush.msra.mxu0 0.0
        %539 = vmatpush.msra.mxu0 0.0
        %540 = vmatpush.msra.mxu0 0.0
        %541 = vmatpush.msra.mxu0 0.0
        %542 = vmatpush.msra.mxu0 0.0
        %543 = vmatpush.msra.mxu0 0.0
        %544 = vmatpush.msra.mxu0 0.0
        %v545 = vand.u32 %v409, 4294901760
        %v546 = vsub.f32 %v409, %v545
        %547 = vmatpush.msra.mxu0 %v546
        %v548 = vand.u32 %v408, 4294901760
        %v549 = vsub.f32 %v408, %v548
        %550 = vmatpush.msra.mxu0 %v549
        %v551 = vand.u32 %v407, 4294901760
        %v552 = vsub.f32 %v407, %v551
        %553 = vmatpush.msra.mxu0 %v552
        %v554 = vand.u32 %v406, 4294901760
        %v555 = vsub.f32 %v406, %v554
        %556 = vmatpush.msra.mxu0 %v555
        %v557 = vand.u32 %v416, 4294901760
        %v558 = vsub.f32 %v416, %v557
        %559 = vmatmul.f32.gmra.mxu0 %v558
        %v560 = vpop.f32.mrf.mxu0
        %v561 = vadd.f32 %v519, %v560
        %v562 = vand.u32 %v419, 4294901760
        %v563 = vsub.f32 %v419, %v562
        %564 = vmatmul.f32.gmra.mxu0 %v563
        %v565 = vpop.f32.mrf.mxu0
        %v566 = vadd.f32 %v523, %v565
        %v567 = vand.u32 %v422, 4294901760
        %v568 = vsub.f32 %v422, %v567
        %569 = vmatmul.f32.gmra.mxu0 %v568
        %v570 = vpop.f32.mrf.mxu0
        %v571 = vadd.f32 %v527, %v570
        %v572 = vand.u32 %v425, 4294901760
        %v573 = vsub.f32 %v425, %v572
        %574 = vmatmul.f32.gmra.mxu0 %v573
        %v575 = vpop.f32.mrf.mxu0
        %v576 = vadd.f32 %v531, %v575
        %577 = vdwg.mxu0
        %578 = vmatpush.msra.mxu0 0.0
        %579 = vmatpush.msra.mxu0 0.0
        %580 = vmatpush.msra.mxu0 0.0
        %581 = vmatpush.msra.mxu0 0.0
        %582 = vmatpush.msra.mxu0 0.0
        %583 = vmatpush.msra.mxu0 0.0
        %584 = vmatpush.msra.mxu0 0.0
        %585 = vmatpush.msra.mxu0 0.0
        %586 = vmatpush.msra.mxu0 0.0
        %587 = vmatpush.msra.mxu0 0.0
        %588 = vmatpush.msra.mxu0 0.0
        %589 = vmatpush.msra.mxu0 0.0
        %v590 = vand.u32 %v409, 4294901760
        %591 = vmatpush.msra.mxu0 %v590
        %v592 = vand.u32 %v408, 4294901760
        %593 = vmatpush.msra.mxu0 %v592
        %v594 = vand.u32 %v407, 4294901760
        %595 = vmatpush.msra.mxu0 %v594
        %v596 = vand.u32 %v406, 4294901760
        %597 = vmatpush.msra.mxu0 %v596
        %v598 = vand.u32 %v416, 4294901760
        %v599 = vsub.f32 %v416, %v598
        %v600 = vand.u32 %v599, 4294901760
        %601 = vmatmul.f32.gmra.mxu0 %v600
        %v602 = vpop.f32.mrf.mxu0
        %v603 = vadd.f32 %v561, %v602
        %v604 = vand.u32 %v419, 4294901760
        %v605 = vsub.f32 %v419, %v604
        %v606 = vand.u32 %v605, 4294901760
        %607 = vmatmul.f32.gmra.mxu0 %v606
        %v608 = vpop.f32.mrf.mxu0
        %v609 = vadd.f32 %v566, %v608
        %v610 = vand.u32 %v422, 4294901760
        %v611 = vsub.f32 %v422, %v610
        %v612 = vand.u32 %v611, 4294901760
        %613 = vmatmul.f32.gmra.mxu0 %v612
        %v614 = vpop.f32.mrf.mxu0
        %v615 = vadd.f32 %v571, %v614
        %v616 = vand.u32 %v425, 4294901760
        %v617 = vsub.f32 %v425, %v616
        %v618 = vand.u32 %v617, 4294901760
        %619 = vmatmul.f32.gmra.mxu0 %v618
        %v620 = vpop.f32.mrf.mxu0
        %v621 = vadd.f32 %v576, %v620
        %622 = vdwg.mxu0
        %623 = vmatpush.msra.mxu0 0.0
        %624 = vmatpush.msra.mxu0 0.0
        %625 = vmatpush.msra.mxu0 0.0
        %626 = vmatpush.msra.mxu0 0.0
        %627 = vmatpush.msra.mxu0 0.0
        %628 = vmatpush.msra.mxu0 0.0
        %629 = vmatpush.msra.mxu0 0.0
        %630 = vmatpush.msra.mxu0 0.0
        %631 = vmatpush.msra.mxu0 0.0
        %632 = vmatpush.msra.mxu0 0.0
        %633 = vmatpush.msra.mxu0 0.0
        %634 = vmatpush.msra.mxu0 0.0
        %v635 = vand.u32 %v409, 4294901760
        %v636 = vsub.f32 %v409, %v635
        %v637 = vand.u32 %v636, 4294901760
        %638 = vmatpush.msra.mxu0 %v637
        %v639 = vand.u32 %v408, 4294901760
        %v640 = vsub.f32 %v408, %v639
        %v641 = vand.u32 %v640, 4294901760
        %642 = vmatpush.msra.mxu0 %v641
        %v643 = vand.u32 %v407, 4294901760
        %v644 = vsub.f32 %v407, %v643
        %v645 = vand.u32 %v644, 4294901760
        %646 = vmatpush.msra.mxu0 %v645
        %v647 = vand.u32 %v406, 4294901760
        %v648 = vsub.f32 %v406, %v647
        %v649 = vand.u32 %v648, 4294901760
        %650 = vmatpush.msra.mxu0 %v649
        %v651 = vand.u32 %v416, 4294901760
        %652 = vmatmul.f32.gmra.mxu0 %v651
        %v653 = vpop.f32.mrf.mxu0
        %v654 = vadd.f32 %v603, %v653
        %v655 = vand.u32 %v419, 4294901760
        %656 = vmatmul.f32.gmra.mxu0 %v655
        %v657 = vpop.f32.mrf.mxu0
        %v658 = vadd.f32 %v609, %v657
        %v659 = vand.u32 %v422, 4294901760
        %660 = vmatmul.f32.gmra.mxu0 %v659
        %v661 = vpop.f32.mrf.mxu0
        %v662 = vadd.f32 %v615, %v661
        %v663 = vand.u32 %v425, 4294901760
        %664 = vmatmul.f32.gmra.mxu0 %v663
        %v665 = vpop.f32.mrf.mxu0
        %v666 = vadd.f32 %v621, %v665
        %667 = vdwg.mxu0
        %668 = vmatpush.msra.mxu0 0.0
        %669 = vmatpush.msra.mxu0 0.0
        %670 = vmatpush.msra.mxu0 0.0
        %671 = vmatpush.msra.mxu0 0.0
        %672 = vmatpush.msra.mxu0 0.0
        %673 = vmatpush.msra.mxu0 0.0
        %674 = vmatpush.msra.mxu0 0.0
        %675 = vmatpush.msra.mxu0 0.0
        %676 = vmatpush.msra.mxu0 0.0
        %677 = vmatpush.msra.mxu0 0.0
        %678 = vmatpush.msra.mxu0 0.0
        %679 = vmatpush.msra.mxu0 0.0
        %v680 = vand.u32 %v409, 4294901760
        %681 = vmatpush.msra.mxu0 %v680
        %v682 = vand.u32 %v408, 4294901760
        %683 = vmatpush.msra.mxu0 %v682
        %v684 = vand.u32 %v407, 4294901760
        %685 = vmatpush.msra.mxu0 %v684
        %v686 = vand.u32 %v406, 4294901760
        %687 = vmatpush.msra.mxu0 %v686
        %v688 = vand.u32 %v416, 4294901760
        %689 = vmatmul.f32.gmra.mxu0 %v688
        %v690 = vpop.f32.mrf.mxu0
        %v691 = vadd.f32 %v654, %v690
        %v692 = vand.u32 %v419, 4294901760
        %693 = vmatmul.f32.gmra.mxu0 %v692
        %v694 = vpop.f32.mrf.mxu0
        %v695 = vadd.f32 %v658, %v694
        %v696 = vand.u32 %v422, 4294901760
        %697 = vmatmul.f32.gmra.mxu0 %v696
        %v698 = vpop.f32.mrf.mxu0
        %v699 = vadd.f32 %v662, %v698
        %v700 = vand.u32 %v425, 4294901760
        %701 = vmatmul.f32.gmra.mxu0 %v700
        %v702 = vpop.f32.mrf.mxu0
        %v703 = vadd.f32 %v666, %v702
        %704 = vdwg.mxu0
        %v705 = vmax.f32 %v691, 0.0
        %v706 = vmax.f32 %v695, 0.0
        %v707 = vmax.f32 %v699, 0.0
        %v708 = vmax.f32 %v703, 0.0
        %v709 = vld [vmem:[%s2] sm:$0xff]
        %v710 = vld [vmem:[%s2 + $0x8] sm:$0xff]
        %v711 = vld [vmem:[%s4] sm:$0x1]
        %v713 = vperm.slane %v711, 0
        %vm715 = vcmask 130048
        %v717 = vsel %vm715, %v705, 0
        %v720 = vsel %vm715, %v706, 0
        %v723 = vsel %vm715, %v707, 0
        %v726 = vsel %vm715, %v708, 0
        %728 = vmatpush.msra.mxu0 0.0
        %729 = vmatpush.msra.mxu0 0.0
        %730 = vmatpush.msra.mxu0 0.0
        %731 = vmatpush.msra.mxu0 0.0
        %732 = vmatpush.msra.mxu0 0.0
        %733 = vmatpush.msra.mxu0 0.0
        %734 = vmatpush.msra.mxu0 0.0
        %735 = vmatpush.msra.mxu0 0.0
        %736 = vmatpush.msra.mxu0 0.0
        %737 = vmatpush.msra.mxu0 0.0
        %738 = vmatpush.msra.mxu0 0.0
        %739 = vmatpush.msra.mxu0 0.0
        %740 = vmatpush.msra.mxu0 0.0
        %741 = vmatpush.msra.mxu0 0.0
        %v742 = vand.u32 %v710, 4294901760
        %743 = vmatpush.msra.mxu0 %v742
        %v744 = vand.u32 %v709, 4294901760
        %745 = vmatpush.msra.mxu0 %v744
        %v746 = vand.u32 %v717, 4294901760
        %v747 = vsub.f32 %v717, %v746
        %v748 = vand.u32 %v747, 4294901760
        %v749 = vsub.f32 %v747, %v748
        %v750 = vand.u32 %v749, 4294901760
        %751 = vmatmul.f32.gmra.mxu0 %v750
        %v752 = vpop.f32.mrf.mxu0
        %v753 = vadd.f32 %v713, %v752
        %v754 = vand.u32 %v720, 4294901760
        %v755 = vsub.f32 %v720, %v754
        %v756 = vand.u32 %v755, 4294901760
        %v757 = vsub.f32 %v755, %v756
        %v758 = vand.u32 %v757, 4294901760
        %759 = vmatmul.f32.gmra.mxu0 %v758
        %v760 = vpop.f32.mrf.mxu0
        %v761 = vadd.f32 %v713, %v760
        %v762 = vand.u32 %v723, 4294901760
        %v763 = vsub.f32 %v723, %v762
        %v764 = vand.u32 %v763, 4294901760
        %v765 = vsub.f32 %v763, %v764
        %v766 = vand.u32 %v765, 4294901760
        %767 = vmatmul.f32.gmra.mxu0 %v766
        %v768 = vpop.f32.mrf.mxu0
        %v769 = vadd.f32 %v713, %v768
        %v770 = vand.u32 %v726, 4294901760
        %v771 = vsub.f32 %v726, %v770
        %v772 = vand.u32 %v771, 4294901760
        %v773 = vsub.f32 %v771, %v772
        %v774 = vand.u32 %v773, 4294901760
        %775 = vmatmul.f32.gmra.mxu0 %v774
        %v776 = vpop.f32.mrf.mxu0
        %v777 = vadd.f32 %v713, %v776
        %778 = vdwg.mxu0
        %779 = vmatpush.msra.mxu0 0.0
        %780 = vmatpush.msra.mxu0 0.0
        %781 = vmatpush.msra.mxu0 0.0
        %782 = vmatpush.msra.mxu0 0.0
        %783 = vmatpush.msra.mxu0 0.0
        %784 = vmatpush.msra.mxu0 0.0
        %785 = vmatpush.msra.mxu0 0.0
        %786 = vmatpush.msra.mxu0 0.0
        %787 = vmatpush.msra.mxu0 0.0
        %788 = vmatpush.msra.mxu0 0.0
        %789 = vmatpush.msra.mxu0 0.0
        %790 = vmatpush.msra.mxu0 0.0
        %791 = vmatpush.msra.mxu0 0.0
        %792 = vmatpush.msra.mxu0 0.0
        %v793 = vand.u32 %v710, 4294901760
        %v794 = vsub.f32 %v710, %v793
        %v795 = vand.u32 %v794, 4294901760
        %v796 = vsub.f32 %v794, %v795
        %v797 = vand.u32 %v796, 4294901760
        %798 = vmatpush.msra.mxu0 %v797
        %v799 = vand.u32 %v709, 4294901760
        %v800 = vsub.f32 %v709, %v799
        %v801 = vand.u32 %v800, 4294901760
        %v802 = vsub.f32 %v800, %v801
        %v803 = vand.u32 %v802, 4294901760
        %804 = vmatpush.msra.mxu0 %v803
        %v805 = vand.u32 %v717, 4294901760
        %806 = vmatmul.f32.gmra.mxu0 %v805
        %v807 = vpop.f32.mrf.mxu0
        %v808 = vadd.f32 %v753, %v807
        %v809 = vand.u32 %v720, 4294901760
        %810 = vmatmul.f32.gmra.mxu0 %v809
        %v811 = vpop.f32.mrf.mxu0
        %v812 = vadd.f32 %v761, %v811
        %v813 = vand.u32 %v723, 4294901760
        %814 = vmatmul.f32.gmra.mxu0 %v813
        %v815 = vpop.f32.mrf.mxu0
        %v816 = vadd.f32 %v769, %v815
        %v817 = vand.u32 %v726, 4294901760
        %818 = vmatmul.f32.gmra.mxu0 %v817
        %v819 = vpop.f32.mrf.mxu0
        %v820 = vadd.f32 %v777, %v819
        %821 = vdwg.mxu0
        %822 = vmatpush.msra.mxu0 0.0
        %823 = vmatpush.msra.mxu0 0.0
        %824 = vmatpush.msra.mxu0 0.0
        %825 = vmatpush.msra.mxu0 0.0
        %826 = vmatpush.msra.mxu0 0.0
        %827 = vmatpush.msra.mxu0 0.0
        %828 = vmatpush.msra.mxu0 0.0
        %829 = vmatpush.msra.mxu0 0.0
        %830 = vmatpush.msra.mxu0 0.0
        %831 = vmatpush.msra.mxu0 0.0
        %832 = vmatpush.msra.mxu0 0.0
        %833 = vmatpush.msra.mxu0 0.0
        %834 = vmatpush.msra.mxu0 0.0
        %835 = vmatpush.msra.mxu0 0.0
        %v836 = vand.u32 %v710, 4294901760
        %v837 = vsub.f32 %v710, %v836
        %838 = vmatpush.msra.mxu0 %v837
        %v839 = vand.u32 %v709, 4294901760
        %v840 = vsub.f32 %v709, %v839
        %841 = vmatpush.msra.mxu0 %v840
        %v842 = vand.u32 %v717, 4294901760
        %v843 = vsub.f32 %v717, %v842
        %844 = vmatmul.f32.gmra.mxu0 %v843
        %v845 = vpop.f32.mrf.mxu0
        %v846 = vadd.f32 %v808, %v845
        %v847 = vand.u32 %v720, 4294901760
        %v848 = vsub.f32 %v720, %v847
        %849 = vmatmul.f32.gmra.mxu0 %v848
        %v850 = vpop.f32.mrf.mxu0
        %v851 = vadd.f32 %v812, %v850
        %v852 = vand.u32 %v723, 4294901760
        %v853 = vsub.f32 %v723, %v852
        %854 = vmatmul.f32.gmra.mxu0 %v853
        %v855 = vpop.f32.mrf.mxu0
        %v856 = vadd.f32 %v816, %v855
        %v857 = vand.u32 %v726, 4294901760
        %v858 = vsub.f32 %v726, %v857
        %859 = vmatmul.f32.gmra.mxu0 %v858
        %v860 = vpop.f32.mrf.mxu0
        %v861 = vadd.f32 %v820, %v860
        %862 = vdwg.mxu0
        %863 = vmatpush.msra.mxu0 0.0
        %864 = vmatpush.msra.mxu0 0.0
        %865 = vmatpush.msra.mxu0 0.0
        %866 = vmatpush.msra.mxu0 0.0
        %867 = vmatpush.msra.mxu0 0.0
        %868 = vmatpush.msra.mxu0 0.0
        %869 = vmatpush.msra.mxu0 0.0
        %870 = vmatpush.msra.mxu0 0.0
        %871 = vmatpush.msra.mxu0 0.0
        %872 = vmatpush.msra.mxu0 0.0
        %873 = vmatpush.msra.mxu0 0.0
        %874 = vmatpush.msra.mxu0 0.0
        %875 = vmatpush.msra.mxu0 0.0
        %876 = vmatpush.msra.mxu0 0.0
        %v877 = vand.u32 %v710, 4294901760
        %878 = vmatpush.msra.mxu0 %v877
        %v879 = vand.u32 %v709, 4294901760
        %880 = vmatpush.msra.mxu0 %v879
        %v881 = vand.u32 %v717, 4294901760
        %v882 = vsub.f32 %v717, %v881
        %v883 = vand.u32 %v882, 4294901760
        %884 = vmatmul.f32.gmra.mxu0 %v883
        %v885 = vpop.f32.mrf.mxu0
        %v886 = vadd.f32 %v846, %v885
        %v887 = vand.u32 %v720, 4294901760
        %v888 = vsub.f32 %v720, %v887
        %v889 = vand.u32 %v888, 4294901760
        %890 = vmatmul.f32.gmra.mxu0 %v889
        %v891 = vpop.f32.mrf.mxu0
        %v892 = vadd.f32 %v851, %v891
        %v893 = vand.u32 %v723, 4294901760
        %v894 = vsub.f32 %v723, %v893
        %v895 = vand.u32 %v894, 4294901760
        %896 = vmatmul.f32.gmra.mxu0 %v895
        %v897 = vpop.f32.mrf.mxu0
        %v898 = vadd.f32 %v856, %v897
        %v899 = vand.u32 %v726, 4294901760
        %v900 = vsub.f32 %v726, %v899
        %v901 = vand.u32 %v900, 4294901760
        %902 = vmatmul.f32.gmra.mxu0 %v901
        %v903 = vpop.f32.mrf.mxu0
        %v904 = vadd.f32 %v861, %v903
        %905 = vdwg.mxu0
        %906 = vmatpush.msra.mxu0 0.0
        %907 = vmatpush.msra.mxu0 0.0
        %908 = vmatpush.msra.mxu0 0.0
        %909 = vmatpush.msra.mxu0 0.0
        %910 = vmatpush.msra.mxu0 0.0
        %911 = vmatpush.msra.mxu0 0.0
        %912 = vmatpush.msra.mxu0 0.0
        %913 = vmatpush.msra.mxu0 0.0
        %914 = vmatpush.msra.mxu0 0.0
        %915 = vmatpush.msra.mxu0 0.0
        %916 = vmatpush.msra.mxu0 0.0
        %917 = vmatpush.msra.mxu0 0.0
        %918 = vmatpush.msra.mxu0 0.0
        %919 = vmatpush.msra.mxu0 0.0
        %v920 = vand.u32 %v710, 4294901760
        %v921 = vsub.f32 %v710, %v920
        %v922 = vand.u32 %v921, 4294901760
        %923 = vmatpush.msra.mxu0 %v922
        %v924 = vand.u32 %v709, 4294901760
        %v925 = vsub.f32 %v709, %v924
        %v926 = vand.u32 %v925, 4294901760
        %927 = vmatpush.msra.mxu0 %v926
        %v928 = vand.u32 %v717, 4294901760
        %929 = vmatmul.f32.gmra.mxu0 %v928
        %v930 = vpop.f32.mrf.mxu0
        %v931 = vadd.f32 %v886, %v930
        %v932 = vand.u32 %v720, 4294901760
        %933 = vmatmul.f32.gmra.mxu0 %v932
        %v934 = vpop.f32.mrf.mxu0
        %v935 = vadd.f32 %v892, %v934
        %v936 = vand.u32 %v723, 4294901760
        %937 = vmatmul.f32.gmra.mxu0 %v936
        %v938 = vpop.f32.mrf.mxu0
        %v939 = vadd.f32 %v898, %v938
        %v940 = vand.u32 %v726, 4294901760
        %941 = vmatmul.f32.gmra.mxu0 %v940
        %v942 = vpop.f32.mrf.mxu0
        %v943 = vadd.f32 %v904, %v942
        %944 = vdwg.mxu0
        %945 = vmatpush.msra.mxu0 0.0
        %946 = vmatpush.msra.mxu0 0.0
        %947 = vmatpush.msra.mxu0 0.0
        %948 = vmatpush.msra.mxu0 0.0
        %949 = vmatpush.msra.mxu0 0.0
        %950 = vmatpush.msra.mxu0 0.0
        %951 = vmatpush.msra.mxu0 0.0
        %952 = vmatpush.msra.mxu0 0.0
        %953 = vmatpush.msra.mxu0 0.0
        %954 = vmatpush.msra.mxu0 0.0
        %955 = vmatpush.msra.mxu0 0.0
        %956 = vmatpush.msra.mxu0 0.0
        %957 = vmatpush.msra.mxu0 0.0
        %958 = vmatpush.msra.mxu0 0.0
        %v959 = vand.u32 %v710, 4294901760
        %960 = vmatpush.msra.mxu0 %v959
        %v961 = vand.u32 %v709, 4294901760
        %962 = vmatpush.msra.mxu0 %v961
        %v963 = vand.u32 %v717, 4294901760
        %964 = vmatmul.f32.gmra.mxu0 %v963
        %v965 = vpop.f32.mrf.mxu0
        %v966 = vadd.f32 %v931, %v965
        %v967 = vand.u32 %v720, 4294901760
        %968 = vmatmul.f32.gmra.mxu0 %v967
        %v969 = vpop.f32.mrf.mxu0
        %v970 = vadd.f32 %v935, %v969
        %v971 = vand.u32 %v723, 4294901760
        %972 = vmatmul.f32.gmra.mxu0 %v971
        %v973 = vpop.f32.mrf.mxu0
        %v974 = vadd.f32 %v939, %v973
        %v975 = vand.u32 %v726, 4294901760
        %976 = vmatmul.f32.gmra.mxu0 %v975
        %v977 = vpop.f32.mrf.mxu0
        %v978 = vadd.f32 %v943, %v977
        %979 = vdwg.mxu0
        %v980 = vld [vmem:[%s5] sm:$0xff]
        %v981 = vld [vmem:[%s5 + $0x8] sm:$0xff]
        %v982 = vld [vmem:[%s5 + $0x10] sm:$0xff]
        %v983 = vld [vmem:[%s5 + $0x18] sm:$0xff]
        %v984 = vld [vmem:[%s5 + $0x20] sm:$0xff]
        %v985 = vld [vmem:[%s5 + $0x28] sm:$0xff]
        %v986 = vld [vmem:[%s5 + $0x30] sm:$0xff]
        %v987 = vld [vmem:[%s5 + $0x38] sm:$0xff]
        %v988 = vmul.f32 %v980, %v980
        %v989 = vmul.f32 %v981, %v981
        %v990 = vmul.f32 %v982, %v982
        %v991 = vmul.f32 %v983, %v983
        %v992 = vmul.f32 %v984, %v984
        %v993 = vmul.f32 %v985, %v985
        %v994 = vmul.f32 %v986, %v986
        %v995 = vmul.f32 %v987, %v987
        %vm996 = vcmask 64512
        %v997 = vsel %vm996, %v988, 0.0
        %998 = vadd.xlane.f32.xlu0 %v997
        %v999 = vpop.xlane.xlu0 %998
        %v1000 = vsel %vm996, %v989, 0.0
        %1001 = vadd.xlane.f32.xlu0 %v1000
        %v1002 = vpop.xlane.xlu0 %1001
        %v1003 = vsel %vm996, %v990, 0.0
        %1004 = vadd.xlane.f32.xlu0 %v1003
        %v1005 = vpop.xlane.xlu0 %1004
        %v1006 = vsel %vm996, %v991, 0.0
        %1007 = vadd.xlane.f32.xlu0 %v1006
        %v1008 = vpop.xlane.xlu0 %1007
        %v1009 = vsel %vm996, %v992, 0.0
        %1010 = vadd.xlane.f32.xlu0 %v1009
        %v1011 = vpop.xlane.xlu0 %1010
        %v1012 = vsel %vm996, %v993, 0.0
        %1013 = vadd.xlane.f32.xlu0 %v1012
        %v1014 = vpop.xlane.xlu0 %1013
        %v1015 = vsel %vm996, %v994, 0.0
        %1016 = vadd.xlane.f32.xlu0 %v1015
        %v1017 = vpop.xlane.xlu0 %1016
        %v1018 = vsel %vm996, %v995, 0.0
        %1019 = vadd.xlane.f32.xlu0 %v1018
        %v1020 = vpop.xlane.xlu0 %1019
        %v1021 = vlaneseq
        %v1022 = vand.u32 %v1021, 127
        %v1023 = vld [vmem:[%s5] sm:$0xff]
        %v1024 = vld [vmem:[%s5 + $0x8] sm:$0xff]
        %v1026 = vsel %vm996, %v966, 0
        %v1029 = vsel %vm996, %v970, 0
        %v1032 = vsel %vm996, %v974, 0
        %v1035 = vsel %vm996, %v978, 0
        %v1038 = vsel %vm996, %v1023, 0
        %v1041 = vsel %vm996, %v1024, 0
        %1043 = vmatpush.xpose.msra.mxu0 0.0
        %1044 = vmatpush.xpose.msra.mxu0 0.0
        %1045 = vmatpush.xpose.msra.mxu0 0.0
        %1046 = vmatpush.xpose.msra.mxu0 0.0
        %1047 = vmatpush.xpose.msra.mxu0 0.0
        %1048 = vmatpush.xpose.msra.mxu0 0.0
        %1049 = vmatpush.xpose.msra.mxu0 0.0
        %1050 = vmatpush.xpose.msra.mxu0 0.0
        %1051 = vmatpush.xpose.msra.mxu0 0.0
        %1052 = vmatpush.xpose.msra.mxu0 0.0
        %1053 = vmatpush.xpose.msra.mxu0 0.0
        %1054 = vmatpush.xpose.msra.mxu0 0.0
        %1055 = vmatpush.xpose.msra.mxu0 0.0
        %1056 = vmatpush.xpose.msra.mxu0 0.0
        %v1057 = vand.u32 %v1041, 4294901760
        %1058 = vmatpush.xpose.msra.mxu0 %v1057
        %v1059 = vand.u32 %v1038, 4294901760
        %1060 = vmatpush.xpose.msra.mxu0 %v1059
        %v1061 = vand.u32 %v1026, 4294901760
        %v1062 = vsub.f32 %v1026, %v1061
        %v1063 = vand.u32 %v1062, 4294901760
        %v1064 = vsub.f32 %v1062, %v1063
        %v1065 = vand.u32 %v1064, 4294901760
        %1066 = vmatmul.f32.gmra.mxu0 %v1065
        %v1067 = vpop.f32.mrf.mxu0
        %v1068 = vadd.f32 0.0, %v1067
        %v1069 = vand.u32 %v1029, 4294901760
        %v1070 = vsub.f32 %v1029, %v1069
        %v1071 = vand.u32 %v1070, 4294901760
        %v1072 = vsub.f32 %v1070, %v1071
        %v1073 = vand.u32 %v1072, 4294901760
        %1074 = vmatmul.f32.gmra.mxu0 %v1073
        %v1075 = vpop.f32.mrf.mxu0
        %v1076 = vadd.f32 0.0, %v1075
        %v1077 = vand.u32 %v1032, 4294901760
        %v1078 = vsub.f32 %v1032, %v1077
        %v1079 = vand.u32 %v1078, 4294901760
        %v1080 = vsub.f32 %v1078, %v1079
        %v1081 = vand.u32 %v1080, 4294901760
        %1082 = vmatmul.f32.gmra.mxu0 %v1081
        %v1083 = vpop.f32.mrf.mxu0
        %v1084 = vadd.f32 0.0, %v1083
        %v1085 = vand.u32 %v1035, 4294901760
        %v1086 = vsub.f32 %v1035, %v1085
        %v1087 = vand.u32 %v1086, 4294901760
        %v1088 = vsub.f32 %v1086, %v1087
        %v1089 = vand.u32 %v1088, 4294901760
        %1090 = vmatmul.f32.gmra.mxu0 %v1089
        %v1091 = vpop.f32.mrf.mxu0
        %v1092 = vadd.f32 0.0, %v1091
        %1093 = vdwg.mxu0
        %1094 = vmatpush.xpose.msra.mxu0 0.0
        %1095 = vmatpush.xpose.msra.mxu0 0.0
        %1096 = vmatpush.xpose.msra.mxu0 0.0
        %1097 = vmatpush.xpose.msra.mxu0 0.0
        %1098 = vmatpush.xpose.msra.mxu0 0.0
        %1099 = vmatpush.xpose.msra.mxu0 0.0
        %1100 = vmatpush.xpose.msra.mxu0 0.0
        %1101 = vmatpush.xpose.msra.mxu0 0.0
        %1102 = vmatpush.xpose.msra.mxu0 0.0
        %1103 = vmatpush.xpose.msra.mxu0 0.0
        %1104 = vmatpush.xpose.msra.mxu0 0.0
        %1105 = vmatpush.xpose.msra.mxu0 0.0
        %1106 = vmatpush.xpose.msra.mxu0 0.0
        %1107 = vmatpush.xpose.msra.mxu0 0.0
        %v1108 = vand.u32 %v1041, 4294901760
        %v1109 = vsub.f32 %v1041, %v1108
        %v1110 = vand.u32 %v1109, 4294901760
        %v1111 = vsub.f32 %v1109, %v1110
        %v1112 = vand.u32 %v1111, 4294901760
        %1113 = vmatpush.xpose.msra.mxu0 %v1112
        %v1114 = vand.u32 %v1038, 4294901760
        %v1115 = vsub.f32 %v1038, %v1114
        %v1116 = vand.u32 %v1115, 4294901760
        %v1117 = vsub.f32 %v1115, %v1116
        %v1118 = vand.u32 %v1117, 4294901760
        %1119 = vmatpush.xpose.msra.mxu0 %v1118
        %v1120 = vand.u32 %v1026, 4294901760
        %1121 = vmatmul.f32.gmra.mxu0 %v1120
        %v1122 = vpop.f32.mrf.mxu0
        %v1123 = vadd.f32 %v1068, %v1122
        %v1124 = vand.u32 %v1029, 4294901760
        %1125 = vmatmul.f32.gmra.mxu0 %v1124
        %v1126 = vpop.f32.mrf.mxu0
        %v1127 = vadd.f32 %v1076, %v1126
        %v1128 = vand.u32 %v1032, 4294901760
        %1129 = vmatmul.f32.gmra.mxu0 %v1128
        %v1130 = vpop.f32.mrf.mxu0
        %v1131 = vadd.f32 %v1084, %v1130
        %v1132 = vand.u32 %v1035, 4294901760
        %1133 = vmatmul.f32.gmra.mxu0 %v1132
        %v1134 = vpop.f32.mrf.mxu0
        %v1135 = vadd.f32 %v1092, %v1134
        %1136 = vdwg.mxu0
        %1137 = vmatpush.xpose.msra.mxu0 0.0
        %1138 = vmatpush.xpose.msra.mxu0 0.0
        %1139 = vmatpush.xpose.msra.mxu0 0.0
        %1140 = vmatpush.xpose.msra.mxu0 0.0
        %1141 = vmatpush.xpose.msra.mxu0 0.0
        %1142 = vmatpush.xpose.msra.mxu0 0.0
        %1143 = vmatpush.xpose.msra.mxu0 0.0
        %1144 = vmatpush.xpose.msra.mxu0 0.0
        %1145 = vmatpush.xpose.msra.mxu0 0.0
        %1146 = vmatpush.xpose.msra.mxu0 0.0
        %1147 = vmatpush.xpose.msra.mxu0 0.0
        %1148 = vmatpush.xpose.msra.mxu0 0.0
        %1149 = vmatpush.xpose.msra.mxu0 0.0
        %1150 = vmatpush.xpose.msra.mxu0 0.0
        %v1151 = vand.u32 %v1041, 4294901760
        %v1152 = vsub.f32 %v1041, %v1151
        %1153 = vmatpush.xpose.msra.mxu0 %v1152
        %v1154 = vand.u32 %v1038, 4294901760
        %v1155 = vsub.f32 %v1038, %v1154
        %1156 = vmatpush.xpose.msra.mxu0 %v1155
        %v1157 = vand.u32 %v1026, 4294901760
        %v1158 = vsub.f32 %v1026, %v1157
        %1159 = vmatmul.f32.gmra.mxu0 %v1158
        %v1160 = vpop.f32.mrf.mxu0
        %v1161 = vadd.f32 %v1123, %v1160
        %v1162 = vand.u32 %v1029, 4294901760
        %v1163 = vsub.f32 %v1029, %v1162
        %1164 = vmatmul.f32.gmra.mxu0 %v1163
        %v1165 = vpop.f32.mrf.mxu0
        %v1166 = vadd.f32 %v1127, %v1165
        %v1167 = vand.u32 %v1032, 4294901760
        %v1168 = vsub.f32 %v1032, %v1167
        %1169 = vmatmul.f32.gmra.mxu0 %v1168
        %v1170 = vpop.f32.mrf.mxu0
        %v1171 = vadd.f32 %v1131, %v1170
        %v1172 = vand.u32 %v1035, 4294901760
        %v1173 = vsub.f32 %v1035, %v1172
        %1174 = vmatmul.f32.gmra.mxu0 %v1173
        %v1175 = vpop.f32.mrf.mxu0
        %v1176 = vadd.f32 %v1135, %v1175
        %1177 = vdwg.mxu0
        %1178 = vmatpush.xpose.msra.mxu0 0.0
        %1179 = vmatpush.xpose.msra.mxu0 0.0
        %1180 = vmatpush.xpose.msra.mxu0 0.0
        %1181 = vmatpush.xpose.msra.mxu0 0.0
        %1182 = vmatpush.xpose.msra.mxu0 0.0
        %1183 = vmatpush.xpose.msra.mxu0 0.0
        %1184 = vmatpush.xpose.msra.mxu0 0.0
        %1185 = vmatpush.xpose.msra.mxu0 0.0
        %1186 = vmatpush.xpose.msra.mxu0 0.0
        %1187 = vmatpush.xpose.msra.mxu0 0.0
        %1188 = vmatpush.xpose.msra.mxu0 0.0
        %1189 = vmatpush.xpose.msra.mxu0 0.0
        %1190 = vmatpush.xpose.msra.mxu0 0.0
        %1191 = vmatpush.xpose.msra.mxu0 0.0
        %v1192 = vand.u32 %v1041, 4294901760
        %1193 = vmatpush.xpose.msra.mxu0 %v1192
        %v1194 = vand.u32 %v1038, 4294901760
        %1195 = vmatpush.xpose.msra.mxu0 %v1194
        %v1196 = vand.u32 %v1026, 4294901760
        %v1197 = vsub.f32 %v1026, %v1196
        %v1198 = vand.u32 %v1197, 4294901760
        %1199 = vmatmul.f32.gmra.mxu0 %v1198
        %v1200 = vpop.f32.mrf.mxu0
        %v1201 = vadd.f32 %v1161, %v1200
        %v1202 = vand.u32 %v1029, 4294901760
        %v1203 = vsub.f32 %v1029, %v1202
        %v1204 = vand.u32 %v1203, 4294901760
        %1205 = vmatmul.f32.gmra.mxu0 %v1204
        %v1206 = vpop.f32.mrf.mxu0
        %v1207 = vadd.f32 %v1166, %v1206
        %v1208 = vand.u32 %v1032, 4294901760
        %v1209 = vsub.f32 %v1032, %v1208
        %v1210 = vand.u32 %v1209, 4294901760
        %1211 = vmatmul.f32.gmra.mxu0 %v1210
        %v1212 = vpop.f32.mrf.mxu0
        %v1213 = vadd.f32 %v1171, %v1212
        %v1214 = vand.u32 %v1035, 4294901760
        %v1215 = vsub.f32 %v1035, %v1214
        %v1216 = vand.u32 %v1215, 4294901760
        %1217 = vmatmul.f32.gmra.mxu0 %v1216
        %v1218 = vpop.f32.mrf.mxu0
        %v1219 = vadd.f32 %v1176, %v1218
        %1220 = vdwg.mxu0
        %1221 = vmatpush.xpose.msra.mxu0 0.0
        %1222 = vmatpush.xpose.msra.mxu0 0.0
        %1223 = vmatpush.xpose.msra.mxu0 0.0
        %1224 = vmatpush.xpose.msra.mxu0 0.0
        %1225 = vmatpush.xpose.msra.mxu0 0.0
        %1226 = vmatpush.xpose.msra.mxu0 0.0
        %1227 = vmatpush.xpose.msra.mxu0 0.0
        %1228 = vmatpush.xpose.msra.mxu0 0.0
        %1229 = vmatpush.xpose.msra.mxu0 0.0
        %1230 = vmatpush.xpose.msra.mxu0 0.0
        %1231 = vmatpush.xpose.msra.mxu0 0.0
        %1232 = vmatpush.xpose.msra.mxu0 0.0
        %1233 = vmatpush.xpose.msra.mxu0 0.0
        %1234 = vmatpush.xpose.msra.mxu0 0.0
        %v1235 = vand.u32 %v1041, 4294901760
        %v1236 = vsub.f32 %v1041, %v1235
        %v1237 = vand.u32 %v1236, 4294901760
        %1238 = vmatpush.xpose.msra.mxu0 %v1237
        %v1239 = vand.u32 %v1038, 4294901760
        %v1240 = vsub.f32 %v1038, %v1239
        %v1241 = vand.u32 %v1240, 4294901760
        %1242 = vmatpush.xpose.msra.mxu0 %v1241
        %v1243 = vand.u32 %v1026, 4294901760
        %1244 = vmatmul.f32.gmra.mxu0 %v1243
        %v1245 = vpop.f32.mrf.mxu0
        %v1246 = vadd.f32 %v1201, %v1245
        %v1247 = vand.u32 %v1029, 4294901760
        %1248 = vmatmul.f32.gmra.mxu0 %v1247
        %v1249 = vpop.f32.mrf.mxu0
        %v1250 = vadd.f32 %v1207, %v1249
        %v1251 = vand.u32 %v1032, 4294901760
        %1252 = vmatmul.f32.gmra.mxu0 %v1251
        %v1253 = vpop.f32.mrf.mxu0
        %v1254 = vadd.f32 %v1213, %v1253
        %v1255 = vand.u32 %v1035, 4294901760
        %1256 = vmatmul.f32.gmra.mxu0 %v1255
        %v1257 = vpop.f32.mrf.mxu0
        %v1258 = vadd.f32 %v1219, %v1257
        %1259 = vdwg.mxu0
        %1260 = vmatpush.xpose.msra.mxu0 0.0
        %1261 = vmatpush.xpose.msra.mxu0 0.0
        %1262 = vmatpush.xpose.msra.mxu0 0.0
        %1263 = vmatpush.xpose.msra.mxu0 0.0
        %1264 = vmatpush.xpose.msra.mxu0 0.0
        %1265 = vmatpush.xpose.msra.mxu0 0.0
        %1266 = vmatpush.xpose.msra.mxu0 0.0
        %1267 = vmatpush.xpose.msra.mxu0 0.0
        %1268 = vmatpush.xpose.msra.mxu0 0.0
        %1269 = vmatpush.xpose.msra.mxu0 0.0
        %1270 = vmatpush.xpose.msra.mxu0 0.0
        %1271 = vmatpush.xpose.msra.mxu0 0.0
        %1272 = vmatpush.xpose.msra.mxu0 0.0
        %1273 = vmatpush.xpose.msra.mxu0 0.0
        %v1274 = vand.u32 %v1041, 4294901760
        %1275 = vmatpush.xpose.msra.mxu0 %v1274
        %v1276 = vand.u32 %v1038, 4294901760
        %1277 = vmatpush.xpose.msra.mxu0 %v1276
        %v1278 = vand.u32 %v1026, 4294901760
        %1279 = vmatmul.f32.gmra.mxu0 %v1278
        %v1280 = vpop.f32.mrf.mxu0
        %v1281 = vadd.f32 %v1246, %v1280
        %v1282 = vand.u32 %v1029, 4294901760
        %1283 = vmatmul.f32.gmra.mxu0 %v1282
        %v1284 = vpop.f32.mrf.mxu0
        %v1285 = vadd.f32 %v1250, %v1284
        %v1286 = vand.u32 %v1032, 4294901760
        %1287 = vmatmul.f32.gmra.mxu0 %v1286
        %v1288 = vpop.f32.mrf.mxu0
        %v1289 = vadd.f32 %v1254, %v1288
        %v1290 = vand.u32 %v1035, 4294901760
        %1291 = vmatmul.f32.gmra.mxu0 %v1290
        %v1292 = vpop.f32.mrf.mxu0
        %v1293 = vadd.f32 %v1258, %v1292
        %1294 = vdwg.mxu0
        %v1295 = vmul.f32 %v1281, 2.0
        %v1296 = vmul.f32 %v1285, 2.0
        %v1297 = vmul.f32 %v1289, 2.0
        %v1298 = vmul.f32 %v1293, 2.0
        %v1303 = vperm.slane %v1295, 0
        %v1304 = vlaneseq
        %v1305 = vshrl.u32 %v1304, 7
        %1307 = vset.pattern.permute.xlu0 %v1305
        %1308 = vperm.xlu0 %1307, %v1303
        %v1309 = vpop.permute.xlu0 %1308
        %v1310 = vlaneseq
        %v1311 = vshrl.u32 %v1310, 7
        %v1312 = vadd.s32 %v1311, 8
        %1313 = vset.pattern.permute.xlu0 %v1312
        %1314 = vperm.xlu0 %1313, %v1303
        %v1315 = vpop.permute.xlu0 %1314
        %v1316 = vperm.slane %v1295, 1
        %v1317 = vlaneseq
        %v1318 = vshrl.u32 %v1317, 7
        %1320 = vset.pattern.permute.xlu0 %v1318
        %1321 = vperm.xlu0 %1320, %v1316
        %v1322 = vpop.permute.xlu0 %1321
        %v1323 = vlaneseq
        %v1324 = vshrl.u32 %v1323, 7
        %v1325 = vadd.s32 %v1324, 8
        %1326 = vset.pattern.permute.xlu0 %v1325
        %1327 = vperm.xlu0 %1326, %v1316
        %v1328 = vpop.permute.xlu0 %1327
        %v1329 = vperm.slane %v1295, 2
        %v1330 = vlaneseq
        %v1331 = vshrl.u32 %v1330, 7
        %1333 = vset.pattern.permute.xlu0 %v1331
        %1334 = vperm.xlu0 %1333, %v1329
        %v1335 = vpop.permute.xlu0 %1334
        %v1336 = vlaneseq
        %v1337 = vshrl.u32 %v1336, 7
        %v1338 = vadd.s32 %v1337, 8
        %1339 = vset.pattern.permute.xlu0 %v1338
        %1340 = vperm.xlu0 %1339, %v1329
        %v1341 = vpop.permute.xlu0 %1340
        %v1342 = vperm.slane %v1295, 3
        %v1343 = vlaneseq
        %v1344 = vshrl.u32 %v1343, 7
        %1346 = vset.pattern.permute.xlu0 %v1344
        %1347 = vperm.xlu0 %1346, %v1342
        %v1348 = vpop.permute.xlu0 %1347
        %v1349 = vlaneseq
        %v1350 = vshrl.u32 %v1349, 7
        %v1351 = vadd.s32 %v1350, 8
        %1352 = vset.pattern.permute.xlu0 %v1351
        %1353 = vperm.xlu0 %1352, %v1342
        %v1354 = vpop.permute.xlu0 %1353
        %v1355 = vperm.slane %v1295, 4
        %v1356 = vlaneseq
        %v1357 = vshrl.u32 %v1356, 7
        %1359 = vset.pattern.permute.xlu0 %v1357
        %1360 = vperm.xlu0 %1359, %v1355
        %v1361 = vpop.permute.xlu0 %1360
        %v1362 = vlaneseq
        %v1363 = vshrl.u32 %v1362, 7
        %v1364 = vadd.s32 %v1363, 8
        %1365 = vset.pattern.permute.xlu0 %v1364
        %1366 = vperm.xlu0 %1365, %v1355
        %v1367 = vpop.permute.xlu0 %1366
        %v1368 = vperm.slane %v1295, 5
        %v1369 = vlaneseq
        %v1370 = vshrl.u32 %v1369, 7
        %1372 = vset.pattern.permute.xlu0 %v1370
        %1373 = vperm.xlu0 %1372, %v1368
        %v1374 = vpop.permute.xlu0 %1373
        %v1375 = vlaneseq
        %v1376 = vshrl.u32 %v1375, 7
        %v1377 = vadd.s32 %v1376, 8
        %1378 = vset.pattern.permute.xlu0 %v1377
        %1379 = vperm.xlu0 %1378, %v1368
        %v1380 = vpop.permute.xlu0 %1379
        %v1381 = vperm.slane %v1295, 6
        %v1382 = vlaneseq
        %v1383 = vshrl.u32 %v1382, 7
        %1385 = vset.pattern.permute.xlu0 %v1383
        %1386 = vperm.xlu0 %1385, %v1381
        %v1387 = vpop.permute.xlu0 %1386
        %v1388 = vlaneseq
        %v1389 = vshrl.u32 %v1388, 7
        %v1390 = vadd.s32 %v1389, 8
        %1391 = vset.pattern.permute.xlu0 %v1390
        %1392 = vperm.xlu0 %1391, %v1381
        %v1393 = vpop.permute.xlu0 %1392
        %v1394 = vperm.slane %v1295, 7
        %v1395 = vlaneseq
        %v1396 = vshrl.u32 %v1395, 7
        %1398 = vset.pattern.permute.xlu0 %v1396
        %1399 = vperm.xlu0 %1398, %v1394
        %v1400 = vpop.permute.xlu0 %1399
        %v1401 = vlaneseq
        %v1402 = vshrl.u32 %v1401, 7
        %v1403 = vadd.s32 %v1402, 8
        %1404 = vset.pattern.permute.xlu0 %v1403
        %1405 = vperm.xlu0 %1404, %v1394
        %v1406 = vpop.permute.xlu0 %1405
        %v1407 = vperm.slane %v1296, 0
        %v1408 = vlaneseq
        %v1409 = vshrl.u32 %v1408, 7
        %1411 = vset.pattern.permute.xlu0 %v1409
        %1412 = vperm.xlu0 %1411, %v1407
        %v1413 = vpop.permute.xlu0 %1412
        %v1414 = vlaneseq
        %v1415 = vshrl.u32 %v1414, 7
        %v1416 = vadd.s32 %v1415, 8
        %1417 = vset.pattern.permute.xlu0 %v1416
        %1418 = vperm.xlu0 %1417, %v1407
        %v1419 = vpop.permute.xlu0 %1418
        %v1420 = vperm.slane %v1296, 1
        %v1421 = vlaneseq
        %v1422 = vshrl.u32 %v1421, 7
        %1424 = vset.pattern.permute.xlu0 %v1422
        %1425 = vperm.xlu0 %1424, %v1420
        %v1426 = vpop.permute.xlu0 %1425
        %v1427 = vlaneseq
        %v1428 = vshrl.u32 %v1427, 7
        %v1429 = vadd.s32 %v1428, 8
        %1430 = vset.pattern.permute.xlu0 %v1429
        %1431 = vperm.xlu0 %1430, %v1420
        %v1432 = vpop.permute.xlu0 %1431
        %v1433 = vperm.slane %v1296, 2
        %v1434 = vlaneseq
        %v1435 = vshrl.u32 %v1434, 7
        %1437 = vset.pattern.permute.xlu0 %v1435
        %1438 = vperm.xlu0 %1437, %v1433
        %v1439 = vpop.permute.xlu0 %1438
        %v1440 = vlaneseq
        %v1441 = vshrl.u32 %v1440, 7
        %v1442 = vadd.s32 %v1441, 8
        %1443 = vset.pattern.permute.xlu0 %v1442
        %1444 = vperm.xlu0 %1443, %v1433
        %v1445 = vpop.permute.xlu0 %1444
        %v1446 = vperm.slane %v1296, 3
        %v1447 = vlaneseq
        %v1448 = vshrl.u32 %v1447, 7
        %1450 = vset.pattern.permute.xlu0 %v1448
        %1451 = vperm.xlu0 %1450, %v1446
        %v1452 = vpop.permute.xlu0 %1451
        %v1453 = vlaneseq
        %v1454 = vshrl.u32 %v1453, 7
        %v1455 = vadd.s32 %v1454, 8
        %1456 = vset.pattern.permute.xlu0 %v1455
        %1457 = vperm.xlu0 %1456, %v1446
        %v1458 = vpop.permute.xlu0 %1457
        %v1459 = vperm.slane %v1296, 4
        %v1460 = vlaneseq
        %v1461 = vshrl.u32 %v1460, 7
        %1463 = vset.pattern.permute.xlu0 %v1461
        %1464 = vperm.xlu0 %1463, %v1459
        %v1465 = vpop.permute.xlu0 %1464
        %v1466 = vlaneseq
        %v1467 = vshrl.u32 %v1466, 7
        %v1468 = vadd.s32 %v1467, 8
        %1469 = vset.pattern.permute.xlu0 %v1468
        %1470 = vperm.xlu0 %1469, %v1459
        %v1471 = vpop.permute.xlu0 %1470
        %v1472 = vperm.slane %v1296, 5
        %v1473 = vlaneseq
        %v1474 = vshrl.u32 %v1473, 7
        %1476 = vset.pattern.permute.xlu0 %v1474
        %1477 = vperm.xlu0 %1476, %v1472
        %v1478 = vpop.permute.xlu0 %1477
        %v1479 = vlaneseq
        %v1480 = vshrl.u32 %v1479, 7
        %v1481 = vadd.s32 %v1480, 8
        %1482 = vset.pattern.permute.xlu0 %v1481
        %1483 = vperm.xlu0 %1482, %v1472
        %v1484 = vpop.permute.xlu0 %1483
        %v1485 = vperm.slane %v1296, 6
        %v1486 = vlaneseq
        %v1487 = vshrl.u32 %v1486, 7
        %1489 = vset.pattern.permute.xlu0 %v1487
        %1490 = vperm.xlu0 %1489, %v1485
        %v1491 = vpop.permute.xlu0 %1490
        %v1492 = vlaneseq
        %v1493 = vshrl.u32 %v1492, 7
        %v1494 = vadd.s32 %v1493, 8
        %1495 = vset.pattern.permute.xlu0 %v1494
        %1496 = vperm.xlu0 %1495, %v1485
        %v1497 = vpop.permute.xlu0 %1496
        %v1498 = vperm.slane %v1296, 7
        %v1499 = vlaneseq
        %v1500 = vshrl.u32 %v1499, 7
        %1502 = vset.pattern.permute.xlu0 %v1500
        %1503 = vperm.xlu0 %1502, %v1498
        %v1504 = vpop.permute.xlu0 %1503
        %v1505 = vlaneseq
        %v1506 = vshrl.u32 %v1505, 7
        %v1507 = vadd.s32 %v1506, 8
        %1508 = vset.pattern.permute.xlu0 %v1507
        %1509 = vperm.xlu0 %1508, %v1498
        %v1510 = vpop.permute.xlu0 %1509
        %v1511 = vperm.slane %v1297, 0
        %v1512 = vlaneseq
        %v1513 = vshrl.u32 %v1512, 7
        %1515 = vset.pattern.permute.xlu0 %v1513
        %1516 = vperm.xlu0 %1515, %v1511
        %v1517 = vpop.permute.xlu0 %1516
        %v1518 = vlaneseq
        %v1519 = vshrl.u32 %v1518, 7
        %v1520 = vadd.s32 %v1519, 8
        %1521 = vset.pattern.permute.xlu0 %v1520
        %1522 = vperm.xlu0 %1521, %v1511
        %v1523 = vpop.permute.xlu0 %1522
        %v1524 = vperm.slane %v1297, 1
        %v1525 = vlaneseq
        %v1526 = vshrl.u32 %v1525, 7
        %1528 = vset.pattern.permute.xlu0 %v1526
        %1529 = vperm.xlu0 %1528, %v1524
        %v1530 = vpop.permute.xlu0 %1529
        %v1531 = vlaneseq
        %v1532 = vshrl.u32 %v1531, 7
        %v1533 = vadd.s32 %v1532, 8
        %1534 = vset.pattern.permute.xlu0 %v1533
        %1535 = vperm.xlu0 %1534, %v1524
        %v1536 = vpop.permute.xlu0 %1535
        %v1537 = vperm.slane %v1297, 2
        %v1538 = vlaneseq
        %v1539 = vshrl.u32 %v1538, 7
        %1541 = vset.pattern.permute.xlu0 %v1539
        %1542 = vperm.xlu0 %1541, %v1537
        %v1543 = vpop.permute.xlu0 %1542
        %v1544 = vlaneseq
        %v1545 = vshrl.u32 %v1544, 7
        %v1546 = vadd.s32 %v1545, 8
        %1547 = vset.pattern.permute.xlu0 %v1546
        %1548 = vperm.xlu0 %1547, %v1537
        %v1549 = vpop.permute.xlu0 %1548
        %v1550 = vperm.slane %v1297, 3
        %v1551 = vlaneseq
        %v1552 = vshrl.u32 %v1551, 7
        %1554 = vset.pattern.permute.xlu0 %v1552
        %1555 = vperm.xlu0 %1554, %v1550
        %v1556 = vpop.permute.xlu0 %1555
        %v1557 = vlaneseq
        %v1558 = vshrl.u32 %v1557, 7
        %v1559 = vadd.s32 %v1558, 8
        %1560 = vset.pattern.permute.xlu0 %v1559
        %1561 = vperm.xlu0 %1560, %v1550
        %v1562 = vpop.permute.xlu0 %1561
        %v1563 = vperm.slane %v1297, 4
        %v1564 = vlaneseq
        %v1565 = vshrl.u32 %v1564, 7
        %1567 = vset.pattern.permute.xlu0 %v1565
        %1568 = vperm.xlu0 %1567, %v1563
        %v1569 = vpop.permute.xlu0 %1568
        %v1570 = vlaneseq
        %v1571 = vshrl.u32 %v1570, 7
        %v1572 = vadd.s32 %v1571, 8
        %1573 = vset.pattern.permute.xlu0 %v1572
        %1574 = vperm.xlu0 %1573, %v1563
        %v1575 = vpop.permute.xlu0 %1574
        %v1576 = vperm.slane %v1297, 5
        %v1577 = vlaneseq
        %v1578 = vshrl.u32 %v1577, 7
        %1580 = vset.pattern.permute.xlu0 %v1578
        %1581 = vperm.xlu0 %1580, %v1576
        %v1582 = vpop.permute.xlu0 %1581
        %v1583 = vlaneseq
        %v1584 = vshrl.u32 %v1583, 7
        %v1585 = vadd.s32 %v1584, 8
        %1586 = vset.pattern.permute.xlu0 %v1585
        %1587 = vperm.xlu0 %1586, %v1576
        %v1588 = vpop.permute.xlu0 %1587
        %v1589 = vperm.slane %v1297, 6
        %v1590 = vlaneseq
        %v1591 = vshrl.u32 %v1590, 7
        %1593 = vset.pattern.permute.xlu0 %v1591
        %1594 = vperm.xlu0 %1593, %v1589
        %v1595 = vpop.permute.xlu0 %1594
        %v1596 = vlaneseq
        %v1597 = vshrl.u32 %v1596, 7
        %v1598 = vadd.s32 %v1597, 8
        %1599 = vset.pattern.permute.xlu0 %v1598
        %1600 = vperm.xlu0 %1599, %v1589
        %v1601 = vpop.permute.xlu0 %1600
        %v1602 = vperm.slane %v1297, 7
        %v1603 = vlaneseq
        %v1604 = vshrl.u32 %v1603, 7
        %1606 = vset.pattern.permute.xlu0 %v1604
        %1607 = vperm.xlu0 %1606, %v1602
        %v1608 = vpop.permute.xlu0 %1607
        %v1609 = vlaneseq
        %v1610 = vshrl.u32 %v1609, 7
        %v1611 = vadd.s32 %v1610, 8
        %1612 = vset.pattern.permute.xlu0 %v1611
        %1613 = vperm.xlu0 %1612, %v1602
        %v1614 = vpop.permute.xlu0 %1613
        %v1615 = vperm.slane %v1298, 0
        %v1616 = vlaneseq
        %v1617 = vshrl.u32 %v1616, 7
        %1619 = vset.pattern.permute.xlu0 %v1617
        %1620 = vperm.xlu0 %1619, %v1615
        %v1621 = vpop.permute.xlu0 %1620
        %v1622 = vlaneseq
        %v1623 = vshrl.u32 %v1622, 7
        %v1624 = vadd.s32 %v1623, 8
        %1625 = vset.pattern.permute.xlu0 %v1624
        %1626 = vperm.xlu0 %1625, %v1615
        %v1627 = vpop.permute.xlu0 %1626
        %v1628 = vperm.slane %v1298, 1
        %v1629 = vlaneseq
        %v1630 = vshrl.u32 %v1629, 7
        %1632 = vset.pattern.permute.xlu0 %v1630
        %1633 = vperm.xlu0 %1632, %v1628
        %v1634 = vpop.permute.xlu0 %1633
        %v1635 = vlaneseq
        %v1636 = vshrl.u32 %v1635, 7
        %v1637 = vadd.s32 %v1636, 8
        %1638 = vset.pattern.permute.xlu0 %v1637
        %1639 = vperm.xlu0 %1638, %v1628
        %v1640 = vpop.permute.xlu0 %1639
        %v1641 = vperm.slane %v1298, 2
        %v1642 = vlaneseq
        %v1643 = vshrl.u32 %v1642, 7
        %1645 = vset.pattern.permute.xlu0 %v1643
        %1646 = vperm.xlu0 %1645, %v1641
        %v1647 = vpop.permute.xlu0 %1646
        %v1648 = vlaneseq
        %v1649 = vshrl.u32 %v1648, 7
        %v1650 = vadd.s32 %v1649, 8
        %1651 = vset.pattern.permute.xlu0 %v1650
        %1652 = vperm.xlu0 %1651, %v1641
        %v1653 = vpop.permute.xlu0 %1652
        %v1654 = vperm.slane %v1298, 3
        %v1655 = vlaneseq
        %v1656 = vshrl.u32 %v1655, 7
        %1658 = vset.pattern.permute.xlu0 %v1656
        %1659 = vperm.xlu0 %1658, %v1654
        %v1660 = vpop.permute.xlu0 %1659
        %v1661 = vlaneseq
        %v1662 = vshrl.u32 %v1661, 7
        %v1663 = vadd.s32 %v1662, 8
        %1664 = vset.pattern.permute.xlu0 %v1663
        %1665 = vperm.xlu0 %1664, %v1654
        %v1666 = vpop.permute.xlu0 %1665
        %v1667 = vperm.slane %v1298, 4
        %v1668 = vlaneseq
        %v1669 = vshrl.u32 %v1668, 7
        %1671 = vset.pattern.permute.xlu0 %v1669
        %1672 = vperm.xlu0 %1671, %v1667
        %v1673 = vpop.permute.xlu0 %1672
        %v1674 = vlaneseq
        %v1675 = vshrl.u32 %v1674, 7
        %v1676 = vadd.s32 %v1675, 8
        %1677 = vset.pattern.permute.xlu0 %v1676
        %1678 = vperm.xlu0 %1677, %v1667
        %v1679 = vpop.permute.xlu0 %1678
        %v1680 = vperm.slane %v1298, 5
        %v1681 = vlaneseq
        %v1682 = vshrl.u32 %v1681, 7
        %1684 = vset.pattern.permute.xlu0 %v1682
        %1685 = vperm.xlu0 %1684, %v1680
        %v1686 = vpop.permute.xlu0 %1685
        %v1687 = vlaneseq
        %v1688 = vshrl.u32 %v1687, 7
        %v1689 = vadd.s32 %v1688, 8
        %1690 = vset.pattern.permute.xlu0 %v1689
        %1691 = vperm.xlu0 %1690, %v1680
        %v1692 = vpop.permute.xlu0 %1691
        %v1693 = vperm.slane %v1298, 6
        %v1694 = vlaneseq
        %v1695 = vshrl.u32 %v1694, 7
        %1697 = vset.pattern.permute.xlu0 %v1695
        %1698 = vperm.xlu0 %1697, %v1693
        %v1699 = vpop.permute.xlu0 %1698
        %v1700 = vlaneseq
        %v1701 = vshrl.u32 %v1700, 7
        %v1702 = vadd.s32 %v1701, 8
        %1703 = vset.pattern.permute.xlu0 %v1702
        %1704 = vperm.xlu0 %1703, %v1693
        %v1705 = vpop.permute.xlu0 %1704
        %v1706 = vperm.slane %v1298, 7
        %v1707 = vlaneseq
        %v1708 = vshrl.u32 %v1707, 7
        %1710 = vset.pattern.permute.xlu0 %v1708
        %1711 = vperm.xlu0 %1710, %v1706
        %v1712 = vpop.permute.xlu0 %1711
        %v1713 = vlaneseq
        %v1714 = vshrl.u32 %v1713, 7
        %v1715 = vadd.s32 %v1714, 8
        %1716 = vset.pattern.permute.xlu0 %v1715
        %1717 = vperm.xlu0 %1716, %v1706
        %v1718 = vpop.permute.xlu0 %1717
        %v1783 = vsub.f32 %v999, %v1309
        %v1784 = vsub.f32 %v1002, %v1315
        %v1785 = vsub.f32 %v999, %v1322
        %v1786 = vsub.f32 %v1002, %v1328
        %v1787 = vsub.f32 %v999, %v1335
        %v1788 = vsub.f32 %v1002, %v1341
        %v1789 = vsub.f32 %v999, %v1348
        %v1790 = vsub.f32 %v1002, %v1354
        %v1791 = vsub.f32 %v999, %v1361
        %v1792 = vsub.f32 %v1002, %v1367
        %v1793 = vsub.f32 %v999, %v1374
        %v1794 = vsub.f32 %v1002, %v1380
        %v1795 = vsub.f32 %v999, %v1387
        %v1796 = vsub.f32 %v1002, %v1393
        %v1797 = vsub.f32 %v999, %v1400
        %v1798 = vsub.f32 %v1002, %v1406
        %v1799 = vsub.f32 %v999, %v1413
        %v1800 = vsub.f32 %v1002, %v1419
        %v1801 = vsub.f32 %v999, %v1426
        %v1802 = vsub.f32 %v1002, %v1432
        %v1803 = vsub.f32 %v999, %v1439
        %v1804 = vsub.f32 %v1002, %v1445
        %v1805 = vsub.f32 %v999, %v1452
        %v1806 = vsub.f32 %v1002, %v1458
        %v1807 = vsub.f32 %v999, %v1465
        %v1808 = vsub.f32 %v1002, %v1471
        %v1809 = vsub.f32 %v999, %v1478
        %v1810 = vsub.f32 %v1002, %v1484
        %v1811 = vsub.f32 %v999, %v1491
        %v1812 = vsub.f32 %v1002, %v1497
        %v1813 = vsub.f32 %v999, %v1504
        %v1814 = vsub.f32 %v1002, %v1510
        %v1815 = vsub.f32 %v999, %v1517
        %v1816 = vsub.f32 %v1002, %v1523
        %v1817 = vsub.f32 %v999, %v1530
        %v1818 = vsub.f32 %v1002, %v1536
        %v1819 = vsub.f32 %v999, %v1543
        %v1820 = vsub.f32 %v1002, %v1549
        %v1821 = vsub.f32 %v999, %v1556
        %v1822 = vsub.f32 %v1002, %v1562
        %v1823 = vsub.f32 %v999, %v1569
        %v1824 = vsub.f32 %v1002, %v1575
        %v1825 = vsub.f32 %v999, %v1582
        %v1826 = vsub.f32 %v1002, %v1588
        %v1827 = vsub.f32 %v999, %v1595
        %v1828 = vsub.f32 %v1002, %v1601
        %v1829 = vsub.f32 %v999, %v1608
        %v1830 = vsub.f32 %v1002, %v1614
        %v1831 = vsub.f32 %v999, %v1621
        %v1832 = vsub.f32 %v1002, %v1627
        %v1833 = vsub.f32 %v999, %v1634
        %v1834 = vsub.f32 %v1002, %v1640
        %v1835 = vsub.f32 %v999, %v1647
        %v1836 = vsub.f32 %v1002, %v1653
        %v1837 = vsub.f32 %v999, %v1660
        %v1838 = vsub.f32 %v1002, %v1666
        %v1839 = vsub.f32 %v999, %v1673
        %v1840 = vsub.f32 %v1002, %v1679
        %v1841 = vsub.f32 %v999, %v1686
        %v1842 = vsub.f32 %v1002, %v1692
        %v1843 = vsub.f32 %v999, %v1699
        %v1844 = vsub.f32 %v1002, %v1705
        %v1845 = vsub.f32 %v999, %v1712
        %v1846 = vsub.f32 %v1002, %v1718
        %1911 = vset.pattern.permute.xlu0 0
        %1912 = vperm.xlu0 %1911, %v1783
        %v1913 = vpop.permute.xlu0 %1912
        %1914 = vset.pattern.permute.xlu0 0
        %1915 = vperm.xlu0 %1914, %v1784
        %v1916 = vpop.permute.xlu0 %1915
        %1917 = vset.pattern.permute.xlu0 0
        %1918 = vperm.xlu0 %1917, %v1785
        %v1919 = vpop.permute.xlu0 %1918
        %1920 = vset.pattern.permute.xlu0 0
        %1921 = vperm.xlu0 %1920, %v1786
        %v1922 = vpop.permute.xlu0 %1921
        %1923 = vset.pattern.permute.xlu0 0
        %1924 = vperm.xlu0 %1923, %v1787
        %v1925 = vpop.permute.xlu0 %1924
        %1926 = vset.pattern.permute.xlu0 0
        %1927 = vperm.xlu0 %1926, %v1788
        %v1928 = vpop.permute.xlu0 %1927
        %1929 = vset.pattern.permute.xlu0 0
        %1930 = vperm.xlu0 %1929, %v1789
        %v1931 = vpop.permute.xlu0 %1930
        %1932 = vset.pattern.permute.xlu0 0
        %1933 = vperm.xlu0 %1932, %v1790
        %v1934 = vpop.permute.xlu0 %1933
        %1935 = vset.pattern.permute.xlu0 0
        %1936 = vperm.xlu0 %1935, %v1791
        %v1937 = vpop.permute.xlu0 %1936
        %1938 = vset.pattern.permute.xlu0 0
        %1939 = vperm.xlu0 %1938, %v1792
        %v1940 = vpop.permute.xlu0 %1939
        %1941 = vset.pattern.permute.xlu0 0
        %1942 = vperm.xlu0 %1941, %v1793
        %v1943 = vpop.permute.xlu0 %1942
        %1944 = vset.pattern.permute.xlu0 0
        %1945 = vperm.xlu0 %1944, %v1794
        %v1946 = vpop.permute.xlu0 %1945
        %1947 = vset.pattern.permute.xlu0 0
        %1948 = vperm.xlu0 %1947, %v1795
        %v1949 = vpop.permute.xlu0 %1948
        %1950 = vset.pattern.permute.xlu0 0
        %1951 = vperm.xlu0 %1950, %v1796
        %v1952 = vpop.permute.xlu0 %1951
        %1953 = vset.pattern.permute.xlu0 0
        %1954 = vperm.xlu0 %1953, %v1797
        %v1955 = vpop.permute.xlu0 %1954
        %1956 = vset.pattern.permute.xlu0 0
        %1957 = vperm.xlu0 %1956, %v1798
        %v1958 = vpop.permute.xlu0 %1957
        %1959 = vset.pattern.permute.xlu0 0
        %1960 = vperm.xlu0 %1959, %v1799
        %v1961 = vpop.permute.xlu0 %1960
        %1962 = vset.pattern.permute.xlu0 0
        %1963 = vperm.xlu0 %1962, %v1800
        %v1964 = vpop.permute.xlu0 %1963
        %1965 = vset.pattern.permute.xlu0 0
        %1966 = vperm.xlu0 %1965, %v1801
        %v1967 = vpop.permute.xlu0 %1966
        %1968 = vset.pattern.permute.xlu0 0
        %1969 = vperm.xlu0 %1968, %v1802
        %v1970 = vpop.permute.xlu0 %1969
        %1971 = vset.pattern.permute.xlu0 0
        %1972 = vperm.xlu0 %1971, %v1803
        %v1973 = vpop.permute.xlu0 %1972
        %1974 = vset.pattern.permute.xlu0 0
        %1975 = vperm.xlu0 %1974, %v1804
        %v1976 = vpop.permute.xlu0 %1975
        %1977 = vset.pattern.permute.xlu0 0
        %1978 = vperm.xlu0 %1977, %v1805
        %v1979 = vpop.permute.xlu0 %1978
        %1980 = vset.pattern.permute.xlu0 0
        %1981 = vperm.xlu0 %1980, %v1806
        %v1982 = vpop.permute.xlu0 %1981
        %1983 = vset.pattern.permute.xlu0 0
        %1984 = vperm.xlu0 %1983, %v1807
        %v1985 = vpop.permute.xlu0 %1984
        %1986 = vset.pattern.permute.xlu0 0
        %1987 = vperm.xlu0 %1986, %v1808
        %v1988 = vpop.permute.xlu0 %1987
        %1989 = vset.pattern.permute.xlu0 0
        %1990 = vperm.xlu0 %1989, %v1809
        %v1991 = vpop.permute.xlu0 %1990
        %1992 = vset.pattern.permute.xlu0 0
        %1993 = vperm.xlu0 %1992, %v1810
        %v1994 = vpop.permute.xlu0 %1993
        %1995 = vset.pattern.permute.xlu0 0
        %1996 = vperm.xlu0 %1995, %v1811
        %v1997 = vpop.permute.xlu0 %1996
        %1998 = vset.pattern.permute.xlu0 0
        %1999 = vperm.xlu0 %1998, %v1812
        %v2000 = vpop.permute.xlu0 %1999
        %2001 = vset.pattern.permute.xlu0 0
        %2002 = vperm.xlu0 %2001, %v1813
        %v2003 = vpop.permute.xlu0 %2002
        %2004 = vset.pattern.permute.xlu0 0
        %2005 = vperm.xlu0 %2004, %v1814
        %v2006 = vpop.permute.xlu0 %2005
        %2007 = vset.pattern.permute.xlu0 0
        %2008 = vperm.xlu0 %2007, %v1815
        %v2009 = vpop.permute.xlu0 %2008
        %2010 = vset.pattern.permute.xlu0 0
        %2011 = vperm.xlu0 %2010, %v1816
        %v2012 = vpop.permute.xlu0 %2011
        %2013 = vset.pattern.permute.xlu0 0
        %2014 = vperm.xlu0 %2013, %v1817
        %v2015 = vpop.permute.xlu0 %2014
        %2016 = vset.pattern.permute.xlu0 0
        %2017 = vperm.xlu0 %2016, %v1818
        %v2018 = vpop.permute.xlu0 %2017
        %2019 = vset.pattern.permute.xlu0 0
        %2020 = vperm.xlu0 %2019, %v1819
        %v2021 = vpop.permute.xlu0 %2020
        %2022 = vset.pattern.permute.xlu0 0
        %2023 = vperm.xlu0 %2022, %v1820
        %v2024 = vpop.permute.xlu0 %2023
        %2025 = vset.pattern.permute.xlu0 0
        %2026 = vperm.xlu0 %2025, %v1821
        %v2027 = vpop.permute.xlu0 %2026
        %2028 = vset.pattern.permute.xlu0 0
        %2029 = vperm.xlu0 %2028, %v1822
        %v2030 = vpop.permute.xlu0 %2029
        %2031 = vset.pattern.permute.xlu0 0
        %2032 = vperm.xlu0 %2031, %v1823
        %v2033 = vpop.permute.xlu0 %2032
        %2034 = vset.pattern.permute.xlu0 0
        %2035 = vperm.xlu0 %2034, %v1824
        %v2036 = vpop.permute.xlu0 %2035
        %2037 = vset.pattern.permute.xlu0 0
        %2038 = vperm.xlu0 %2037, %v1825
        %v2039 = vpop.permute.xlu0 %2038
        %2040 = vset.pattern.permute.xlu0 0
        %2041 = vperm.xlu0 %2040, %v1826
        %v2042 = vpop.permute.xlu0 %2041
        %2043 = vset.pattern.permute.xlu0 0
        %2044 = vperm.xlu0 %2043, %v1827
        %v2045 = vpop.permute.xlu0 %2044
        %2046 = vset.pattern.permute.xlu0 0
        %2047 = vperm.xlu0 %2046, %v1828
        %v2048 = vpop.permute.xlu0 %2047
        %2049 = vset.pattern.permute.xlu0 0
        %2050 = vperm.xlu0 %2049, %v1829
        %v2051 = vpop.permute.xlu0 %2050
        %2052 = vset.pattern.permute.xlu0 0
        %2053 = vperm.xlu0 %2052, %v1830
        %v2054 = vpop.permute.xlu0 %2053
        %2055 = vset.pattern.permute.xlu0 0
        %2056 = vperm.xlu0 %2055, %v1831
        %v2057 = vpop.permute.xlu0 %2056
        %2058 = vset.pattern.permute.xlu0 0
        %2059 = vperm.xlu0 %2058, %v1832
        %v2060 = vpop.permute.xlu0 %2059
        %2061 = vset.pattern.permute.xlu0 0
        %2062 = vperm.xlu0 %2061, %v1833
        %v2063 = vpop.permute.xlu0 %2062
        %2064 = vset.pattern.permute.xlu0 0
        %2065 = vperm.xlu0 %2064, %v1834
        %v2066 = vpop.permute.xlu0 %2065
        %2067 = vset.pattern.permute.xlu0 0
        %2068 = vperm.xlu0 %2067, %v1835
        %v2069 = vpop.permute.xlu0 %2068
        %2070 = vset.pattern.permute.xlu0 0
        %2071 = vperm.xlu0 %2070, %v1836
        %v2072 = vpop.permute.xlu0 %2071
        %2073 = vset.pattern.permute.xlu0 0
        %2074 = vperm.xlu0 %2073, %v1837
        %v2075 = vpop.permute.xlu0 %2074
        %2076 = vset.pattern.permute.xlu0 0
        %2077 = vperm.xlu0 %2076, %v1838
        %v2078 = vpop.permute.xlu0 %2077
        %2079 = vset.pattern.permute.xlu0 0
        %2080 = vperm.xlu0 %2079, %v1839
        %v2081 = vpop.permute.xlu0 %2080
        %2082 = vset.pattern.permute.xlu0 0
        %2083 = vperm.xlu0 %2082, %v1840
        %v2084 = vpop.permute.xlu0 %2083
        %2085 = vset.pattern.permute.xlu0 0
        %2086 = vperm.xlu0 %2085, %v1841
        %v2087 = vpop.permute.xlu0 %2086
        %2088 = vset.pattern.permute.xlu0 0
        %2089 = vperm.xlu0 %2088, %v1842
        %v2090 = vpop.permute.xlu0 %2089
        %2091 = vset.pattern.permute.xlu0 0
        %2092 = vperm.xlu0 %2091, %v1843
        %v2093 = vpop.permute.xlu0 %2092
        %2094 = vset.pattern.permute.xlu0 0
        %2095 = vperm.xlu0 %2094, %v1844
        %v2096 = vpop.permute.xlu0 %2095
        %2097 = vset.pattern.permute.xlu0 0
        %2098 = vperm.xlu0 %2097, %v1845
        %v2099 = vpop.permute.xlu0 %2098
        %2100 = vset.pattern.permute.xlu0 0
        %2101 = vperm.xlu0 %2100, %v1846
        %v2102 = vpop.permute.xlu0 %2101
        %v2103 = vperm.slane %v1913, %v1022
        %v2104 = vadd.s32 %v1022, 4294967288
        %v2105 = vperm.slane %v1916, %v2104
        %vm2106 = vcmask 130112
        %v2107 = vsel %vm2106, %v2105, %v2103
        %v2108 = vperm.slane %v1919, %v1022
        %v2109 = vperm.slane %v1922, %v2104
        %v2110 = vsel %vm2106, %v2109, %v2108
        %v2111 = vperm.slane %v1925, %v1022
        %v2112 = vperm.slane %v1928, %v2104
        %v2113 = vsel %vm2106, %v2112, %v2111
        %v2114 = vperm.slane %v1931, %v1022
        %v2115 = vperm.slane %v1934, %v2104
        %v2116 = vsel %vm2106, %v2115, %v2114
        %v2117 = vperm.slane %v1937, %v1022
        %v2118 = vperm.slane %v1940, %v2104
        %v2119 = vsel %vm2106, %v2118, %v2117
        %v2120 = vperm.slane %v1943, %v1022
        %v2121 = vperm.slane %v1946, %v2104
        %v2122 = vsel %vm2106, %v2121, %v2120
        %v2123 = vperm.slane %v1949, %v1022
        %v2124 = vperm.slane %v1952, %v2104
        %v2125 = vsel %vm2106, %v2124, %v2123
        %v2126 = vperm.slane %v1955, %v1022
        %v2127 = vperm.slane %v1958, %v2104
        %v2128 = vsel %vm2106, %v2127, %v2126
        %v2129 = vperm.slane %v1961, %v1022
        %v2130 = vperm.slane %v1964, %v2104
        %v2131 = vsel %vm2106, %v2130, %v2129
        %v2132 = vperm.slane %v1967, %v1022
        %v2133 = vperm.slane %v1970, %v2104
        %v2134 = vsel %vm2106, %v2133, %v2132
        %v2135 = vperm.slane %v1973, %v1022
        %v2136 = vperm.slane %v1976, %v2104
        %v2137 = vsel %vm2106, %v2136, %v2135
        %v2138 = vperm.slane %v1979, %v1022
        %v2139 = vperm.slane %v1982, %v2104
        %v2140 = vsel %vm2106, %v2139, %v2138
        %v2141 = vperm.slane %v1985, %v1022
        %v2142 = vperm.slane %v1988, %v2104
        %v2143 = vsel %vm2106, %v2142, %v2141
        %v2144 = vperm.slane %v1991, %v1022
        %v2145 = vperm.slane %v1994, %v2104
        %v2146 = vsel %vm2106, %v2145, %v2144
        %v2147 = vperm.slane %v1997, %v1022
        %v2148 = vperm.slane %v2000, %v2104
        %v2149 = vsel %vm2106, %v2148, %v2147
        %v2150 = vperm.slane %v2003, %v1022
        %v2151 = vperm.slane %v2006, %v2104
        %v2152 = vsel %vm2106, %v2151, %v2150
        %v2153 = vperm.slane %v2009, %v1022
        %v2154 = vperm.slane %v2012, %v2104
        %v2155 = vsel %vm2106, %v2154, %v2153
        %v2156 = vperm.slane %v2015, %v1022
        %v2157 = vperm.slane %v2018, %v2104
        %v2158 = vsel %vm2106, %v2157, %v2156
        %v2159 = vperm.slane %v2021, %v1022
        %v2160 = vperm.slane %v2024, %v2104
        %v2161 = vsel %vm2106, %v2160, %v2159
        %v2162 = vperm.slane %v2027, %v1022
        %v2163 = vperm.slane %v2030, %v2104
        %v2164 = vsel %vm2106, %v2163, %v2162
        %v2165 = vperm.slane %v2033, %v1022
        %v2166 = vperm.slane %v2036, %v2104
        %v2167 = vsel %vm2106, %v2166, %v2165
        %v2168 = vperm.slane %v2039, %v1022
        %v2169 = vperm.slane %v2042, %v2104
        %v2170 = vsel %vm2106, %v2169, %v2168
        %v2171 = vperm.slane %v2045, %v1022
        %v2172 = vperm.slane %v2048, %v2104
        %v2173 = vsel %vm2106, %v2172, %v2171
        %v2174 = vperm.slane %v2051, %v1022
        %v2175 = vperm.slane %v2054, %v2104
        %v2176 = vsel %vm2106, %v2175, %v2174
        %v2177 = vperm.slane %v2057, %v1022
        %v2178 = vperm.slane %v2060, %v2104
        %v2179 = vsel %vm2106, %v2178, %v2177
        %v2180 = vperm.slane %v2063, %v1022
        %v2181 = vperm.slane %v2066, %v2104
        %v2182 = vsel %vm2106, %v2181, %v2180
        %v2183 = vperm.slane %v2069, %v1022
        %v2184 = vperm.slane %v2072, %v2104
        %v2185 = vsel %vm2106, %v2184, %v2183
        %v2186 = vperm.slane %v2075, %v1022
        %v2187 = vperm.slane %v2078, %v2104
        %v2188 = vsel %vm2106, %v2187, %v2186
        %v2189 = vperm.slane %v2081, %v1022
        %v2190 = vperm.slane %v2084, %v2104
        %v2191 = vsel %vm2106, %v2190, %v2189
        %v2192 = vperm.slane %v2087, %v1022
        %v2193 = vperm.slane %v2090, %v2104
        %v2194 = vsel %vm2106, %v2193, %v2192
        %v2195 = vperm.slane %v2093, %v1022
        %v2196 = vperm.slane %v2096, %v2104
        %v2197 = vsel %vm2106, %v2196, %v2195
        %v2198 = vperm.slane %v2099, %v1022
        %v2199 = vperm.slane %v2102, %v2104
        %v2200 = vsel %vm2106, %v2199, %v2198
        %vm2201 = vcmask 1041409
        %v2202 = vsel %vm2201, %v2110, %v2107
        %vm2203 = vcmask 1042434
        %v2204 = vsel %vm2203, %v2113, %v2202
        %vm2205 = vcmask 1043459
        %v2206 = vsel %vm2205, %v2116, %v2204
        %vm2207 = vcmask 1044484
        %v2208 = vsel %vm2207, %v2119, %v2206
        %vm2209 = vcmask 1045509
        %v2210 = vsel %vm2209, %v2122, %v2208
        %vm2211 = vcmask 1046534
        %v2212 = vsel %vm2211, %v2125, %v2210
        %vm2213 = vcmask 1047559
        %v2214 = vsel %vm2213, %v2128, %v2212
        %v2215 = vsel %vm2201, %v2134, %v2131
        %v2216 = vsel %vm2203, %v2137, %v2215
        %v2217 = vsel %vm2205, %v2140, %v2216
        %v2218 = vsel %vm2207, %v2143, %v2217
        %v2219 = vsel %vm2209, %v2146, %v2218
        %v2220 = vsel %vm2211, %v2149, %v2219
        %v2221 = vsel %vm2213, %v2152, %v2220
        %v2222 = vsel %vm2201, %v2158, %v2155
        %v2223 = vsel %vm2203, %v2161, %v2222
        %v2224 = vsel %vm2205, %v2164, %v2223
        %v2225 = vsel %vm2207, %v2167, %v2224
        %v2226 = vsel %vm2209, %v2170, %v2225
        %v2227 = vsel %vm2211, %v2173, %v2226
        %v2228 = vsel %vm2213, %v2176, %v2227
        %v2229 = vsel %vm2201, %v2182, %v2179
        %v2230 = vsel %vm2203, %v2185, %v2229
        %v2231 = vsel %vm2205, %v2188, %v2230
        %v2232 = vsel %vm2207, %v2191, %v2231
        %v2233 = vsel %vm2209, %v2194, %v2232
        %v2234 = vsel %vm2211, %v2197, %v2233
        %v2235 = vsel %vm2213, %v2200, %v2234
        %v2240 = vsel %vm715, %v2214, inf
        %2241 = vmin.xlane.f32.xlu0 %v2240
        %v2242 = vpop.xlane.xlu0 %2241
        %v2243 = vsel %vm715, %v2221, inf
        %2244 = vmin.xlane.f32.xlu0 %v2243
        %v2245 = vpop.xlane.xlu0 %2244
        %v2246 = vsel %vm715, %v2228, inf
        %2247 = vmin.xlane.f32.xlu0 %v2246
        %v2248 = vpop.xlane.xlu0 %2247
        %v2249 = vsel %vm715, %v2235, inf
        %2250 = vmin.xlane.f32.xlu0 %v2249
        %v2251 = vpop.xlane.xlu0 %2250
        %v2256 = vperm.slane %v2242, 0
        %v2257 = vperm.slane %v2242, 1
        %v2258 = vperm.slane %v2242, 2
        %v2259 = vperm.slane %v2242, 3
        %v2260 = vperm.slane %v2242, 4
        %v2261 = vperm.slane %v2242, 5
        %v2262 = vperm.slane %v2242, 6
        %v2263 = vperm.slane %v2242, 7
        %v2264 = vperm.slane %v2245, 0
        %v2265 = vperm.slane %v2245, 1
        %v2266 = vperm.slane %v2245, 2
        %v2267 = vperm.slane %v2245, 3
        %v2268 = vperm.slane %v2245, 4
        %v2269 = vperm.slane %v2245, 5
        %v2270 = vperm.slane %v2245, 6
        %v2271 = vperm.slane %v2245, 7
        %v2272 = vperm.slane %v2248, 0
        %v2273 = vperm.slane %v2248, 1
        %v2274 = vperm.slane %v2248, 2
        %v2275 = vperm.slane %v2248, 3
        %v2276 = vperm.slane %v2248, 4
        %v2277 = vperm.slane %v2248, 5
        %v2278 = vperm.slane %v2248, 6
        %v2279 = vperm.slane %v2248, 7
        %v2280 = vperm.slane %v2251, 0
        %v2281 = vperm.slane %v2251, 1
        %v2282 = vperm.slane %v2251, 2
        %v2283 = vperm.slane %v2251, 3
        %v2284 = vperm.slane %v2251, 4
        %v2285 = vperm.slane %v2251, 5
        %v2286 = vperm.slane %v2251, 6
        %v2287 = vperm.slane %v2251, 7
        %vm2320 = vcmp.le.f32.partialorder %v1783, %v2256
        %vm2321 = vcmp.le.f32.partialorder %v1784, %v2256
        %vm2322 = vcmp.le.f32.partialorder %v1785, %v2257
        %vm2323 = vcmp.le.f32.partialorder %v1786, %v2257
        %vm2324 = vcmp.le.f32.partialorder %v1787, %v2258
        %vm2325 = vcmp.le.f32.partialorder %v1788, %v2258
        %vm2326 = vcmp.le.f32.partialorder %v1789, %v2259
        %vm2327 = vcmp.le.f32.partialorder %v1790, %v2259
        %vm2328 = vcmp.le.f32.partialorder %v1791, %v2260
        %vm2329 = vcmp.le.f32.partialorder %v1792, %v2260
        %vm2330 = vcmp.le.f32.partialorder %v1793, %v2261
        %vm2331 = vcmp.le.f32.partialorder %v1794, %v2261
        %vm2332 = vcmp.le.f32.partialorder %v1795, %v2262
        %vm2333 = vcmp.le.f32.partialorder %v1796, %v2262
        %vm2334 = vcmp.le.f32.partialorder %v1797, %v2263
        %vm2335 = vcmp.le.f32.partialorder %v1798, %v2263
        %vm2336 = vcmp.le.f32.partialorder %v1799, %v2264
        %vm2337 = vcmp.le.f32.partialorder %v1800, %v2264
        %vm2338 = vcmp.le.f32.partialorder %v1801, %v2265
        %vm2339 = vcmp.le.f32.partialorder %v1802, %v2265
        %vm2340 = vcmp.le.f32.partialorder %v1803, %v2266
        %vm2341 = vcmp.le.f32.partialorder %v1804, %v2266
        %vm2342 = vcmp.le.f32.partialorder %v1805, %v2267
        %vm2343 = vcmp.le.f32.partialorder %v1806, %v2267
        %vm2344 = vcmp.le.f32.partialorder %v1807, %v2268
        %vm2345 = vcmp.le.f32.partialorder %v1808, %v2268
        %vm2346 = vcmp.le.f32.partialorder %v1809, %v2269
        %vm2347 = vcmp.le.f32.partialorder %v1810, %v2269
        %vm2348 = vcmp.le.f32.partialorder %v1811, %v2270
        %vm2349 = vcmp.le.f32.partialorder %v1812, %v2270
        %vm2350 = vcmp.le.f32.partialorder %v1813, %v2271
        %vm2351 = vcmp.le.f32.partialorder %v1814, %v2271
        %vm2352 = vcmp.le.f32.partialorder %v1815, %v2272
        %vm2353 = vcmp.le.f32.partialorder %v1816, %v2272
        %vm2354 = vcmp.le.f32.partialorder %v1817, %v2273
        %vm2355 = vcmp.le.f32.partialorder %v1818, %v2273
        %vm2356 = vcmp.le.f32.partialorder %v1819, %v2274
        %vm2357 = vcmp.le.f32.partialorder %v1820, %v2274
        %vm2358 = vcmp.le.f32.partialorder %v1821, %v2275
        %vm2359 = vcmp.le.f32.partialorder %v1822, %v2275
        %vm2360 = vcmp.le.f32.partialorder %v1823, %v2276
        %vm2361 = vcmp.le.f32.partialorder %v1824, %v2276
        %vm2362 = vcmp.le.f32.partialorder %v1825, %v2277
        %vm2363 = vcmp.le.f32.partialorder %v1826, %v2277
        %vm2364 = vcmp.le.f32.partialorder %v1827, %v2278
        %vm2365 = vcmp.le.f32.partialorder %v1828, %v2278
        %vm2366 = vcmp.le.f32.partialorder %v1829, %v2279
        %vm2367 = vcmp.le.f32.partialorder %v1830, %v2279
        %vm2368 = vcmp.le.f32.partialorder %v1831, %v2280
        %vm2369 = vcmp.le.f32.partialorder %v1832, %v2280
        %vm2370 = vcmp.le.f32.partialorder %v1833, %v2281
        %vm2371 = vcmp.le.f32.partialorder %v1834, %v2281
        %vm2372 = vcmp.le.f32.partialorder %v1835, %v2282
        %vm2373 = vcmp.le.f32.partialorder %v1836, %v2282
        %vm2374 = vcmp.le.f32.partialorder %v1837, %v2283
        %vm2375 = vcmp.le.f32.partialorder %v1838, %v2283
        %vm2376 = vcmp.le.f32.partialorder %v1839, %v2284
        %vm2377 = vcmp.le.f32.partialorder %v1840, %v2284
        %vm2378 = vcmp.le.f32.partialorder %v1841, %v2285
        %vm2379 = vcmp.le.f32.partialorder %v1842, %v2285
        %vm2380 = vcmp.le.f32.partialorder %v1843, %v2286
        %vm2381 = vcmp.le.f32.partialorder %v1844, %v2286
        %vm2382 = vcmp.le.f32.partialorder %v1845, %v2287
        %vm2383 = vcmp.le.f32.partialorder %v1846, %v2287
        %v2384 = vlaneseq
        %v2385 = vshrl.u32 %v2384, 7
        %2387 = vset.pattern.permute.xlu0 %v2385
        %2388 = vperm.xlu0 %2387, %v1022
        %v2389 = vpop.permute.xlu0 %2388
        %v2390 = vlaneseq
        %v2391 = vshrl.u32 %v2390, 7
        %v2392 = vadd.s32 %v2391, 8
        %2393 = vset.pattern.permute.xlu0 %v2392
        %2394 = vperm.xlu0 %2393, %v1022
        %v2395 = vpop.permute.xlu0 %2394
        %v2396 = vsel %vm2320, %v2389, 16
        %v2397 = vsel %vm2321, %v2395, 16
        %v2398 = vsel %vm2322, %v2389, 16
        %v2399 = vsel %vm2323, %v2395, 16
        %v2400 = vsel %vm2324, %v2389, 16
        %v2401 = vsel %vm2325, %v2395, 16
        %v2402 = vsel %vm2326, %v2389, 16
        %v2403 = vsel %vm2327, %v2395, 16
        %v2404 = vsel %vm2328, %v2389, 16
        %v2405 = vsel %vm2329, %v2395, 16
        %v2406 = vsel %vm2330, %v2389, 16
        %v2407 = vsel %vm2331, %v2395, 16
        %v2408 = vsel %vm2332, %v2389, 16
        %v2409 = vsel %vm2333, %v2395, 16
        %v2410 = vsel %vm2334, %v2389, 16
        %v2411 = vsel %vm2335, %v2395, 16
        %v2412 = vsel %vm2336, %v2389, 16
        %v2413 = vsel %vm2337, %v2395, 16
        %v2414 = vsel %vm2338, %v2389, 16
        %v2415 = vsel %vm2339, %v2395, 16
        %v2416 = vsel %vm2340, %v2389, 16
        %v2417 = vsel %vm2341, %v2395, 16
        %v2418 = vsel %vm2342, %v2389, 16
        %v2419 = vsel %vm2343, %v2395, 16
        %v2420 = vsel %vm2344, %v2389, 16
        %v2421 = vsel %vm2345, %v2395, 16
        %v2422 = vsel %vm2346, %v2389, 16
        %v2423 = vsel %vm2347, %v2395, 16
        %v2424 = vsel %vm2348, %v2389, 16
        %v2425 = vsel %vm2349, %v2395, 16
        %v2426 = vsel %vm2350, %v2389, 16
        %v2427 = vsel %vm2351, %v2395, 16
        %v2428 = vsel %vm2352, %v2389, 16
        %v2429 = vsel %vm2353, %v2395, 16
        %v2430 = vsel %vm2354, %v2389, 16
        %v2431 = vsel %vm2355, %v2395, 16
        %v2432 = vsel %vm2356, %v2389, 16
        %v2433 = vsel %vm2357, %v2395, 16
        %v2434 = vsel %vm2358, %v2389, 16
        %v2435 = vsel %vm2359, %v2395, 16
        %v2436 = vsel %vm2360, %v2389, 16
        %v2437 = vsel %vm2361, %v2395, 16
        %v2438 = vsel %vm2362, %v2389, 16
        %v2439 = vsel %vm2363, %v2395, 16
        %v2440 = vsel %vm2364, %v2389, 16
        %v2441 = vsel %vm2365, %v2395, 16
        %v2442 = vsel %vm2366, %v2389, 16
        %v2443 = vsel %vm2367, %v2395, 16
        %v2444 = vsel %vm2368, %v2389, 16
        %v2445 = vsel %vm2369, %v2395, 16
        %v2446 = vsel %vm2370, %v2389, 16
        %v2447 = vsel %vm2371, %v2395, 16
        %v2448 = vsel %vm2372, %v2389, 16
        %v2449 = vsel %vm2373, %v2395, 16
        %v2450 = vsel %vm2374, %v2389, 16
        %v2451 = vsel %vm2375, %v2395, 16
        %v2452 = vsel %vm2376, %v2389, 16
        %v2453 = vsel %vm2377, %v2395, 16
        %v2454 = vsel %vm2378, %v2389, 16
        %v2455 = vsel %vm2379, %v2395, 16
        %v2456 = vsel %vm2380, %v2389, 16
        %v2457 = vsel %vm2381, %v2395, 16
        %v2458 = vsel %vm2382, %v2389, 16
        %v2459 = vsel %vm2383, %v2395, 16
        %2460 = vset.pattern.permute.xlu0 0
        %2461 = vperm.xlu0 %2460, %v2396
        %v2462 = vpop.permute.xlu0 %2461
        %2463 = vset.pattern.permute.xlu0 0
        %2464 = vperm.xlu0 %2463, %v2397
        %v2465 = vpop.permute.xlu0 %2464
        %2466 = vset.pattern.permute.xlu0 0
        %2467 = vperm.xlu0 %2466, %v2398
        %v2468 = vpop.permute.xlu0 %2467
        %2469 = vset.pattern.permute.xlu0 0
        %2470 = vperm.xlu0 %2469, %v2399
        %v2471 = vpop.permute.xlu0 %2470
        %2472 = vset.pattern.permute.xlu0 0
        %2473 = vperm.xlu0 %2472, %v2400
        %v2474 = vpop.permute.xlu0 %2473
        %2475 = vset.pattern.permute.xlu0 0
        %2476 = vperm.xlu0 %2475, %v2401
        %v2477 = vpop.permute.xlu0 %2476
        %2478 = vset.pattern.permute.xlu0 0
        %2479 = vperm.xlu0 %2478, %v2402
        %v2480 = vpop.permute.xlu0 %2479
        %2481 = vset.pattern.permute.xlu0 0
        %2482 = vperm.xlu0 %2481, %v2403
        %v2483 = vpop.permute.xlu0 %2482
        %2484 = vset.pattern.permute.xlu0 0
        %2485 = vperm.xlu0 %2484, %v2404
        %v2486 = vpop.permute.xlu0 %2485
        %2487 = vset.pattern.permute.xlu0 0
        %2488 = vperm.xlu0 %2487, %v2405
        %v2489 = vpop.permute.xlu0 %2488
        %2490 = vset.pattern.permute.xlu0 0
        %2491 = vperm.xlu0 %2490, %v2406
        %v2492 = vpop.permute.xlu0 %2491
        %2493 = vset.pattern.permute.xlu0 0
        %2494 = vperm.xlu0 %2493, %v2407
        %v2495 = vpop.permute.xlu0 %2494
        %2496 = vset.pattern.permute.xlu0 0
        %2497 = vperm.xlu0 %2496, %v2408
        %v2498 = vpop.permute.xlu0 %2497
        %2499 = vset.pattern.permute.xlu0 0
        %2500 = vperm.xlu0 %2499, %v2409
        %v2501 = vpop.permute.xlu0 %2500
        %2502 = vset.pattern.permute.xlu0 0
        %2503 = vperm.xlu0 %2502, %v2410
        %v2504 = vpop.permute.xlu0 %2503
        %2505 = vset.pattern.permute.xlu0 0
        %2506 = vperm.xlu0 %2505, %v2411
        %v2507 = vpop.permute.xlu0 %2506
        %2508 = vset.pattern.permute.xlu0 0
        %2509 = vperm.xlu0 %2508, %v2412
        %v2510 = vpop.permute.xlu0 %2509
        %2511 = vset.pattern.permute.xlu0 0
        %2512 = vperm.xlu0 %2511, %v2413
        %v2513 = vpop.permute.xlu0 %2512
        %2514 = vset.pattern.permute.xlu0 0
        %2515 = vperm.xlu0 %2514, %v2414
        %v2516 = vpop.permute.xlu0 %2515
        %2517 = vset.pattern.permute.xlu0 0
        %2518 = vperm.xlu0 %2517, %v2415
        %v2519 = vpop.permute.xlu0 %2518
        %2520 = vset.pattern.permute.xlu0 0
        %2521 = vperm.xlu0 %2520, %v2416
        %v2522 = vpop.permute.xlu0 %2521
        %2523 = vset.pattern.permute.xlu0 0
        %2524 = vperm.xlu0 %2523, %v2417
        %v2525 = vpop.permute.xlu0 %2524
        %2526 = vset.pattern.permute.xlu0 0
        %2527 = vperm.xlu0 %2526, %v2418
        %v2528 = vpop.permute.xlu0 %2527
        %2529 = vset.pattern.permute.xlu0 0
        %2530 = vperm.xlu0 %2529, %v2419
        %v2531 = vpop.permute.xlu0 %2530
        %2532 = vset.pattern.permute.xlu0 0
        %2533 = vperm.xlu0 %2532, %v2420
        %v2534 = vpop.permute.xlu0 %2533
        %2535 = vset.pattern.permute.xlu0 0
        %2536 = vperm.xlu0 %2535, %v2421
        %v2537 = vpop.permute.xlu0 %2536
        %2538 = vset.pattern.permute.xlu0 0
        %2539 = vperm.xlu0 %2538, %v2422
        %v2540 = vpop.permute.xlu0 %2539
        %2541 = vset.pattern.permute.xlu0 0
        %2542 = vperm.xlu0 %2541, %v2423
        %v2543 = vpop.permute.xlu0 %2542
        %2544 = vset.pattern.permute.xlu0 0
        %2545 = vperm.xlu0 %2544, %v2424
        %v2546 = vpop.permute.xlu0 %2545
        %2547 = vset.pattern.permute.xlu0 0
        %2548 = vperm.xlu0 %2547, %v2425
        %v2549 = vpop.permute.xlu0 %2548
        %2550 = vset.pattern.permute.xlu0 0
        %2551 = vperm.xlu0 %2550, %v2426
        %v2552 = vpop.permute.xlu0 %2551
        %2553 = vset.pattern.permute.xlu0 0
        %2554 = vperm.xlu0 %2553, %v2427
        %v2555 = vpop.permute.xlu0 %2554
        %2556 = vset.pattern.permute.xlu0 0
        %2557 = vperm.xlu0 %2556, %v2428
        %v2558 = vpop.permute.xlu0 %2557
        %2559 = vset.pattern.permute.xlu0 0
        %2560 = vperm.xlu0 %2559, %v2429
        %v2561 = vpop.permute.xlu0 %2560
        %2562 = vset.pattern.permute.xlu0 0
        %2563 = vperm.xlu0 %2562, %v2430
        %v2564 = vpop.permute.xlu0 %2563
        %2565 = vset.pattern.permute.xlu0 0
        %2566 = vperm.xlu0 %2565, %v2431
        %v2567 = vpop.permute.xlu0 %2566
        %2568 = vset.pattern.permute.xlu0 0
        %2569 = vperm.xlu0 %2568, %v2432
        %v2570 = vpop.permute.xlu0 %2569
        %2571 = vset.pattern.permute.xlu0 0
        %2572 = vperm.xlu0 %2571, %v2433
        %v2573 = vpop.permute.xlu0 %2572
        %2574 = vset.pattern.permute.xlu0 0
        %2575 = vperm.xlu0 %2574, %v2434
        %v2576 = vpop.permute.xlu0 %2575
        %2577 = vset.pattern.permute.xlu0 0
        %2578 = vperm.xlu0 %2577, %v2435
        %v2579 = vpop.permute.xlu0 %2578
        %2580 = vset.pattern.permute.xlu0 0
        %2581 = vperm.xlu0 %2580, %v2436
        %v2582 = vpop.permute.xlu0 %2581
        %2583 = vset.pattern.permute.xlu0 0
        %2584 = vperm.xlu0 %2583, %v2437
        %v2585 = vpop.permute.xlu0 %2584
        %2586 = vset.pattern.permute.xlu0 0
        %2587 = vperm.xlu0 %2586, %v2438
        %v2588 = vpop.permute.xlu0 %2587
        %2589 = vset.pattern.permute.xlu0 0
        %2590 = vperm.xlu0 %2589, %v2439
        %v2591 = vpop.permute.xlu0 %2590
        %2592 = vset.pattern.permute.xlu0 0
        %2593 = vperm.xlu0 %2592, %v2440
        %v2594 = vpop.permute.xlu0 %2593
        %2595 = vset.pattern.permute.xlu0 0
        %2596 = vperm.xlu0 %2595, %v2441
        %v2597 = vpop.permute.xlu0 %2596
        %2598 = vset.pattern.permute.xlu0 0
        %2599 = vperm.xlu0 %2598, %v2442
        %v2600 = vpop.permute.xlu0 %2599
        %2601 = vset.pattern.permute.xlu0 0
        %2602 = vperm.xlu0 %2601, %v2443
        %v2603 = vpop.permute.xlu0 %2602
        %2604 = vset.pattern.permute.xlu0 0
        %2605 = vperm.xlu0 %2604, %v2444
        %v2606 = vpop.permute.xlu0 %2605
        %2607 = vset.pattern.permute.xlu0 0
        %2608 = vperm.xlu0 %2607, %v2445
        %v2609 = vpop.permute.xlu0 %2608
        %2610 = vset.pattern.permute.xlu0 0
        %2611 = vperm.xlu0 %2610, %v2446
        %v2612 = vpop.permute.xlu0 %2611
        %2613 = vset.pattern.permute.xlu0 0
        %2614 = vperm.xlu0 %2613, %v2447
        %v2615 = vpop.permute.xlu0 %2614
        %2616 = vset.pattern.permute.xlu0 0
        %2617 = vperm.xlu0 %2616, %v2448
        %v2618 = vpop.permute.xlu0 %2617
        %2619 = vset.pattern.permute.xlu0 0
        %2620 = vperm.xlu0 %2619, %v2449
        %v2621 = vpop.permute.xlu0 %2620
        %2622 = vset.pattern.permute.xlu0 0
        %2623 = vperm.xlu0 %2622, %v2450
        %v2624 = vpop.permute.xlu0 %2623
        %2625 = vset.pattern.permute.xlu0 0
        %2626 = vperm.xlu0 %2625, %v2451
        %v2627 = vpop.permute.xlu0 %2626
        %2628 = vset.pattern.permute.xlu0 0
        %2629 = vperm.xlu0 %2628, %v2452
        %v2630 = vpop.permute.xlu0 %2629
        %2631 = vset.pattern.permute.xlu0 0
        %2632 = vperm.xlu0 %2631, %v2453
        %v2633 = vpop.permute.xlu0 %2632
        %2634 = vset.pattern.permute.xlu0 0
        %2635 = vperm.xlu0 %2634, %v2454
        %v2636 = vpop.permute.xlu0 %2635
        %2637 = vset.pattern.permute.xlu0 0
        %2638 = vperm.xlu0 %2637, %v2455
        %v2639 = vpop.permute.xlu0 %2638
        %2640 = vset.pattern.permute.xlu0 0
        %2641 = vperm.xlu0 %2640, %v2456
        %v2642 = vpop.permute.xlu0 %2641
        %2643 = vset.pattern.permute.xlu0 0
        %2644 = vperm.xlu0 %2643, %v2457
        %v2645 = vpop.permute.xlu0 %2644
        %2646 = vset.pattern.permute.xlu0 0
        %2647 = vperm.xlu0 %2646, %v2458
        %v2648 = vpop.permute.xlu0 %2647
        %2649 = vset.pattern.permute.xlu0 0
        %2650 = vperm.xlu0 %2649, %v2459
        %v2651 = vpop.permute.xlu0 %2650
        %v2652 = vperm.slane %v2462, %v1022
        %v2653 = vperm.slane %v2465, %v2104
        %v2654 = vsel %vm2106, %v2653, %v2652
        %v2655 = vperm.slane %v2468, %v1022
        %v2656 = vperm.slane %v2471, %v2104
        %v2657 = vsel %vm2106, %v2656, %v2655
        %v2658 = vperm.slane %v2474, %v1022
        %v2659 = vperm.slane %v2477, %v2104
        %v2660 = vsel %vm2106, %v2659, %v2658
        %v2661 = vperm.slane %v2480, %v1022
        %v2662 = vperm.slane %v2483, %v2104
        %v2663 = vsel %vm2106, %v2662, %v2661
        %v2664 = vperm.slane %v2486, %v1022
        %v2665 = vperm.slane %v2489, %v2104
        %v2666 = vsel %vm2106, %v2665, %v2664
        %v2667 = vperm.slane %v2492, %v1022
        %v2668 = vperm.slane %v2495, %v2104
        %v2669 = vsel %vm2106, %v2668, %v2667
        %v2670 = vperm.slane %v2498, %v1022
        %v2671 = vperm.slane %v2501, %v2104
        %v2672 = vsel %vm2106, %v2671, %v2670
        %v2673 = vperm.slane %v2504, %v1022
        %v2674 = vperm.slane %v2507, %v2104
        %v2675 = vsel %vm2106, %v2674, %v2673
        %v2676 = vperm.slane %v2510, %v1022
        %v2677 = vperm.slane %v2513, %v2104
        %v2678 = vsel %vm2106, %v2677, %v2676
        %v2679 = vperm.slane %v2516, %v1022
        %v2680 = vperm.slane %v2519, %v2104
        %v2681 = vsel %vm2106, %v2680, %v2679
        %v2682 = vperm.slane %v2522, %v1022
        %v2683 = vperm.slane %v2525, %v2104
        %v2684 = vsel %vm2106, %v2683, %v2682
        %v2685 = vperm.slane %v2528, %v1022
        %v2686 = vperm.slane %v2531, %v2104
        %v2687 = vsel %vm2106, %v2686, %v2685
        %v2688 = vperm.slane %v2534, %v1022
        %v2689 = vperm.slane %v2537, %v2104
        %v2690 = vsel %vm2106, %v2689, %v2688
        %v2691 = vperm.slane %v2540, %v1022
        %v2692 = vperm.slane %v2543, %v2104
        %v2693 = vsel %vm2106, %v2692, %v2691
        %v2694 = vperm.slane %v2546, %v1022
        %v2695 = vperm.slane %v2549, %v2104
        %v2696 = vsel %vm2106, %v2695, %v2694
        %v2697 = vperm.slane %v2552, %v1022
        %v2698 = vperm.slane %v2555, %v2104
        %v2699 = vsel %vm2106, %v2698, %v2697
        %v2700 = vperm.slane %v2558, %v1022
        %v2701 = vperm.slane %v2561, %v2104
        %v2702 = vsel %vm2106, %v2701, %v2700
        %v2703 = vperm.slane %v2564, %v1022
        %v2704 = vperm.slane %v2567, %v2104
        %v2705 = vsel %vm2106, %v2704, %v2703
        %v2706 = vperm.slane %v2570, %v1022
        %v2707 = vperm.slane %v2573, %v2104
        %v2708 = vsel %vm2106, %v2707, %v2706
        %v2709 = vperm.slane %v2576, %v1022
        %v2710 = vperm.slane %v2579, %v2104
        %v2711 = vsel %vm2106, %v2710, %v2709
        %v2712 = vperm.slane %v2582, %v1022
        %v2713 = vperm.slane %v2585, %v2104
        %v2714 = vsel %vm2106, %v2713, %v2712
        %v2715 = vperm.slane %v2588, %v1022
        %v2716 = vperm.slane %v2591, %v2104
        %v2717 = vsel %vm2106, %v2716, %v2715
        %v2718 = vperm.slane %v2594, %v1022
        %v2719 = vperm.slane %v2597, %v2104
        %v2720 = vsel %vm2106, %v2719, %v2718
        %v2721 = vperm.slane %v2600, %v1022
        %v2722 = vperm.slane %v2603, %v2104
        %v2723 = vsel %vm2106, %v2722, %v2721
        %v2724 = vperm.slane %v2606, %v1022
        %v2725 = vperm.slane %v2609, %v2104
        %v2726 = vsel %vm2106, %v2725, %v2724
        %v2727 = vperm.slane %v2612, %v1022
        %v2728 = vperm.slane %v2615, %v2104
        %v2729 = vsel %vm2106, %v2728, %v2727
        %v2730 = vperm.slane %v2618, %v1022
        %v2731 = vperm.slane %v2621, %v2104
        %v2732 = vsel %vm2106, %v2731, %v2730
        %v2733 = vperm.slane %v2624, %v1022
        %v2734 = vperm.slane %v2627, %v2104
        %v2735 = vsel %vm2106, %v2734, %v2733
        %v2736 = vperm.slane %v2630, %v1022
        %v2737 = vperm.slane %v2633, %v2104
        %v2738 = vsel %vm2106, %v2737, %v2736
        %v2739 = vperm.slane %v2636, %v1022
        %v2740 = vperm.slane %v2639, %v2104
        %v2741 = vsel %vm2106, %v2740, %v2739
        %v2742 = vperm.slane %v2642, %v1022
        %v2743 = vperm.slane %v2645, %v2104
        %v2744 = vsel %vm2106, %v2743, %v2742
        %v2745 = vperm.slane %v2648, %v1022
        %v2746 = vperm.slane %v2651, %v2104
        %v2747 = vsel %vm2106, %v2746, %v2745
        %v2748 = vsel %vm2201, %v2657, %v2654
        %v2749 = vsel %vm2203, %v2660, %v2748
        %v2750 = vsel %vm2205, %v2663, %v2749
        %v2751 = vsel %vm2207, %v2666, %v2750
        %v2752 = vsel %vm2209, %v2669, %v2751
        %v2753 = vsel %vm2211, %v2672, %v2752
        %v2754 = vsel %vm2213, %v2675, %v2753
        %v2755 = vsel %vm2201, %v2681, %v2678
        %v2756 = vsel %vm2203, %v2684, %v2755
        %v2757 = vsel %vm2205, %v2687, %v2756
        %v2758 = vsel %vm2207, %v2690, %v2757
        %v2759 = vsel %vm2209, %v2693, %v2758
        %v2760 = vsel %vm2211, %v2696, %v2759
        %v2761 = vsel %vm2213, %v2699, %v2760
        %v2762 = vsel %vm2201, %v2705, %v2702
        %v2763 = vsel %vm2203, %v2708, %v2762
        %v2764 = vsel %vm2205, %v2711, %v2763
        %v2765 = vsel %vm2207, %v2714, %v2764
        %v2766 = vsel %vm2209, %v2717, %v2765
        %v2767 = vsel %vm2211, %v2720, %v2766
        %v2768 = vsel %vm2213, %v2723, %v2767
        %v2769 = vsel %vm2201, %v2729, %v2726
        %v2770 = vsel %vm2203, %v2732, %v2769
        %v2771 = vsel %vm2205, %v2735, %v2770
        %v2772 = vsel %vm2207, %v2738, %v2771
        %v2773 = vsel %vm2209, %v2741, %v2772
        %v2774 = vsel %vm2211, %v2744, %v2773
        %v2775 = vsel %vm2213, %v2747, %v2774
        %v2776 = vsel %vm715, %v2754, 2147483647
        %v2777 = vand.u32 %v2776, 65535
        %v2778 = vshra.s32 %v2776, 16
        %v2779 = vcvt.s32.f32 %v2777
        %v2780 = vcvt.s32.f32 %v2778
        %2781 = vmin.xlane.f32.xlu0 %v2780
        %v2782 = vpop.xlane.xlu0 %2781
        %vm2783 = vcmp.eq.f32.partialorder %v2780, %v2782
        %v2784 = vsel %vm2783, %v2779, inf
        %2785 = vmin.xlane.f32.xlu0 %v2784
        %v2786 = vpop.xlane.xlu0 %2785
        %v2787 = vcvt.f32.s32 %v2786
        %v2788 = vcvt.f32.s32 %v2782
        %v2789 = vshll.u32 %v2788, 16
        %v2790 = vadd.s32 %v2789, %v2787
        %v2791 = vsel %vm715, %v2761, 2147483647
        %v2792 = vand.u32 %v2791, 65535
        %v2793 = vshra.s32 %v2791, 16
        %v2794 = vcvt.s32.f32 %v2792
        %v2795 = vcvt.s32.f32 %v2793
        %2796 = vmin.xlane.f32.xlu0 %v2795
        %v2797 = vpop.xlane.xlu0 %2796
        %vm2798 = vcmp.eq.f32.partialorder %v2795, %v2797
        %v2799 = vsel %vm2798, %v2794, inf
        %2800 = vmin.xlane.f32.xlu0 %v2799
        %v2801 = vpop.xlane.xlu0 %2800
        %v2802 = vcvt.f32.s32 %v2801
        %v2803 = vcvt.f32.s32 %v2797
        %v2804 = vshll.u32 %v2803, 16
        %v2805 = vadd.s32 %v2804, %v2802
        %v2806 = vsel %vm715, %v2768, 2147483647
        %v2807 = vand.u32 %v2806, 65535
        %v2808 = vshra.s32 %v2806, 16
        %v2809 = vcvt.s32.f32 %v2807
        %v2810 = vcvt.s32.f32 %v2808
        %2811 = vmin.xlane.f32.xlu0 %v2810
        %v2812 = vpop.xlane.xlu0 %2811
        %vm2813 = vcmp.eq.f32.partialorder %v2810, %v2812
        %v2814 = vsel %vm2813, %v2809, inf
        %2815 = vmin.xlane.f32.xlu0 %v2814
        %v2816 = vpop.xlane.xlu0 %2815
        %v2817 = vcvt.f32.s32 %v2816
        %v2818 = vcvt.f32.s32 %v2812
        %v2819 = vshll.u32 %v2818, 16
        %v2820 = vadd.s32 %v2819, %v2817
        %v2821 = vsel %vm715, %v2775, 2147483647
        %v2822 = vand.u32 %v2821, 65535
        %v2823 = vshra.s32 %v2821, 16
        %v2824 = vcvt.s32.f32 %v2822
        %v2825 = vcvt.s32.f32 %v2823
        %2826 = vmin.xlane.f32.xlu0 %v2825
        %v2827 = vpop.xlane.xlu0 %2826
        %vm2828 = vcmp.eq.f32.partialorder %v2825, %v2827
        %v2829 = vsel %vm2828, %v2824, inf
        %2830 = vmin.xlane.f32.xlu0 %v2829
        %v2831 = vpop.xlane.xlu0 %2830
        %v2832 = vcvt.f32.s32 %v2831
        %v2833 = vcvt.f32.s32 %v2827
        %v2834 = vshll.u32 %v2833, 16
        %v2835 = vadd.s32 %v2834, %v2832
        %vm2836 = vcmp.eq.s32.totalorder %v1022, %v2790
        %vm2837 = vcmp.eq.s32.totalorder %v1022, %v2805
        %vm2838 = vcmp.eq.s32.totalorder %v1022, %v2820
        %vm2839 = vcmp.eq.s32.totalorder %v1022, %v2835
        %v2840 = vsel %vm2836, 1.0, 0.0
        %v2841 = vsel %vm2837, 1.0, 0.0
        %v2842 = vsel %vm2838, 1.0, 0.0
        %v2843 = vsel %vm2839, 1.0, 0.0
        %v2845 = vsel %vm715, %v2840, 0
        %v2848 = vsel %vm715, %v2841, 0
        %v2851 = vsel %vm715, %v2842, 0
        %v2854 = vsel %vm715, %v2843, 0
        %2856 = vmatpush.msra.mxu0 0.0
        %2857 = vmatpush.msra.mxu0 0.0
        %2858 = vmatpush.msra.mxu0 0.0
        %2859 = vmatpush.msra.mxu0 0.0
        %2860 = vmatpush.msra.mxu0 0.0
        %2861 = vmatpush.msra.mxu0 0.0
        %2862 = vmatpush.msra.mxu0 0.0
        %2863 = vmatpush.msra.mxu0 0.0
        %2864 = vmatpush.msra.mxu0 0.0
        %2865 = vmatpush.msra.mxu0 0.0
        %2866 = vmatpush.msra.mxu0 0.0
        %2867 = vmatpush.msra.mxu0 0.0
        %2868 = vmatpush.msra.mxu0 0.0
        %2869 = vmatpush.msra.mxu0 0.0
        %v2870 = vand.u32 %v1024, 4294901760
        %2871 = vmatpush.msra.mxu0 %v2870
        %v2872 = vand.u32 %v1023, 4294901760
        %2873 = vmatpush.msra.mxu0 %v2872
        %v2874 = vand.u32 %v2845, 4294901760
        %v2875 = vsub.f32 %v2845, %v2874
        %v2876 = vand.u32 %v2875, 4294901760
        %v2877 = vsub.f32 %v2875, %v2876
        %v2878 = vand.u32 %v2877, 4294901760
        %2879 = vmatmul.f32.gmra.mxu0 %v2878
        %v2880 = vpop.f32.mrf.mxu0
        %v2881 = vadd.f32 0.0, %v2880
        %v2882 = vand.u32 %v2848, 4294901760
        %v2883 = vsub.f32 %v2848, %v2882
        %v2884 = vand.u32 %v2883, 4294901760
        %v2885 = vsub.f32 %v2883, %v2884
        %v2886 = vand.u32 %v2885, 4294901760
        %2887 = vmatmul.f32.gmra.mxu0 %v2886
        %v2888 = vpop.f32.mrf.mxu0
        %v2889 = vadd.f32 0.0, %v2888
        %v2890 = vand.u32 %v2851, 4294901760
        %v2891 = vsub.f32 %v2851, %v2890
        %v2892 = vand.u32 %v2891, 4294901760
        %v2893 = vsub.f32 %v2891, %v2892
        %v2894 = vand.u32 %v2893, 4294901760
        %2895 = vmatmul.f32.gmra.mxu0 %v2894
        %v2896 = vpop.f32.mrf.mxu0
        %v2897 = vadd.f32 0.0, %v2896
        %v2898 = vand.u32 %v2854, 4294901760
        %v2899 = vsub.f32 %v2854, %v2898
        %v2900 = vand.u32 %v2899, 4294901760
        %v2901 = vsub.f32 %v2899, %v2900
        %v2902 = vand.u32 %v2901, 4294901760
        %2903 = vmatmul.f32.gmra.mxu0 %v2902
        %v2904 = vpop.f32.mrf.mxu0
        %v2905 = vadd.f32 0.0, %v2904
        %2906 = vdwg.mxu0
        %2907 = vmatpush.msra.mxu0 0.0
        %2908 = vmatpush.msra.mxu0 0.0
        %2909 = vmatpush.msra.mxu0 0.0
        %2910 = vmatpush.msra.mxu0 0.0
        %2911 = vmatpush.msra.mxu0 0.0
        %2912 = vmatpush.msra.mxu0 0.0
        %2913 = vmatpush.msra.mxu0 0.0
        %2914 = vmatpush.msra.mxu0 0.0
        %2915 = vmatpush.msra.mxu0 0.0
        %2916 = vmatpush.msra.mxu0 0.0
        %2917 = vmatpush.msra.mxu0 0.0
        %2918 = vmatpush.msra.mxu0 0.0
        %2919 = vmatpush.msra.mxu0 0.0
        %2920 = vmatpush.msra.mxu0 0.0
        %v2921 = vand.u32 %v1024, 4294901760
        %v2922 = vsub.f32 %v1024, %v2921
        %v2923 = vand.u32 %v2922, 4294901760
        %v2924 = vsub.f32 %v2922, %v2923
        %v2925 = vand.u32 %v2924, 4294901760
        %2926 = vmatpush.msra.mxu0 %v2925
        %v2927 = vand.u32 %v1023, 4294901760
        %v2928 = vsub.f32 %v1023, %v2927
        %v2929 = vand.u32 %v2928, 4294901760
        %v2930 = vsub.f32 %v2928, %v2929
        %v2931 = vand.u32 %v2930, 4294901760
        %2932 = vmatpush.msra.mxu0 %v2931
        %v2933 = vand.u32 %v2845, 4294901760
        %2934 = vmatmul.f32.gmra.mxu0 %v2933
        %v2935 = vpop.f32.mrf.mxu0
        %v2936 = vadd.f32 %v2881, %v2935
        %v2937 = vand.u32 %v2848, 4294901760
        %2938 = vmatmul.f32.gmra.mxu0 %v2937
        %v2939 = vpop.f32.mrf.mxu0
        %v2940 = vadd.f32 %v2889, %v2939
        %v2941 = vand.u32 %v2851, 4294901760
        %2942 = vmatmul.f32.gmra.mxu0 %v2941
        %v2943 = vpop.f32.mrf.mxu0
        %v2944 = vadd.f32 %v2897, %v2943
        %v2945 = vand.u32 %v2854, 4294901760
        %2946 = vmatmul.f32.gmra.mxu0 %v2945
        %v2947 = vpop.f32.mrf.mxu0
        %v2948 = vadd.f32 %v2905, %v2947
        %2949 = vdwg.mxu0
        %2950 = vmatpush.msra.mxu0 0.0
        %2951 = vmatpush.msra.mxu0 0.0
        %2952 = vmatpush.msra.mxu0 0.0
        %2953 = vmatpush.msra.mxu0 0.0
        %2954 = vmatpush.msra.mxu0 0.0
        %2955 = vmatpush.msra.mxu0 0.0
        %2956 = vmatpush.msra.mxu0 0.0
        %2957 = vmatpush.msra.mxu0 0.0
        %2958 = vmatpush.msra.mxu0 0.0
        %2959 = vmatpush.msra.mxu0 0.0
        %2960 = vmatpush.msra.mxu0 0.0
        %2961 = vmatpush.msra.mxu0 0.0
        %2962 = vmatpush.msra.mxu0 0.0
        %2963 = vmatpush.msra.mxu0 0.0
        %v2964 = vand.u32 %v1024, 4294901760
        %v2965 = vsub.f32 %v1024, %v2964
        %2966 = vmatpush.msra.mxu0 %v2965
        %v2967 = vand.u32 %v1023, 4294901760
        %v2968 = vsub.f32 %v1023, %v2967
        %2969 = vmatpush.msra.mxu0 %v2968
        %v2970 = vand.u32 %v2845, 4294901760
        %v2971 = vsub.f32 %v2845, %v2970
        %2972 = vmatmul.f32.gmra.mxu0 %v2971
        %v2973 = vpop.f32.mrf.mxu0
        %v2974 = vadd.f32 %v2936, %v2973
        %v2975 = vand.u32 %v2848, 4294901760
        %v2976 = vsub.f32 %v2848, %v2975
        %2977 = vmatmul.f32.gmra.mxu0 %v2976
        %v2978 = vpop.f32.mrf.mxu0
        %v2979 = vadd.f32 %v2940, %v2978
        %v2980 = vand.u32 %v2851, 4294901760
        %v2981 = vsub.f32 %v2851, %v2980
        %2982 = vmatmul.f32.gmra.mxu0 %v2981
        %v2983 = vpop.f32.mrf.mxu0
        %v2984 = vadd.f32 %v2944, %v2983
        %v2985 = vand.u32 %v2854, 4294901760
        %v2986 = vsub.f32 %v2854, %v2985
        %2987 = vmatmul.f32.gmra.mxu0 %v2986
        %v2988 = vpop.f32.mrf.mxu0
        %v2989 = vadd.f32 %v2948, %v2988
        %2990 = vdwg.mxu0
        %2991 = vmatpush.msra.mxu0 0.0
        %2992 = vmatpush.msra.mxu0 0.0
        %2993 = vmatpush.msra.mxu0 0.0
        %2994 = vmatpush.msra.mxu0 0.0
        %2995 = vmatpush.msra.mxu0 0.0
        %2996 = vmatpush.msra.mxu0 0.0
        %2997 = vmatpush.msra.mxu0 0.0
        %2998 = vmatpush.msra.mxu0 0.0
        %2999 = vmatpush.msra.mxu0 0.0
        %3000 = vmatpush.msra.mxu0 0.0
        %3001 = vmatpush.msra.mxu0 0.0
        %3002 = vmatpush.msra.mxu0 0.0
        %3003 = vmatpush.msra.mxu0 0.0
        %3004 = vmatpush.msra.mxu0 0.0
        %v3005 = vand.u32 %v1024, 4294901760
        %3006 = vmatpush.msra.mxu0 %v3005
        %v3007 = vand.u32 %v1023, 4294901760
        %3008 = vmatpush.msra.mxu0 %v3007
        %v3009 = vand.u32 %v2845, 4294901760
        %v3010 = vsub.f32 %v2845, %v3009
        %v3011 = vand.u32 %v3010, 4294901760
        %3012 = vmatmul.f32.gmra.mxu0 %v3011
        %v3013 = vpop.f32.mrf.mxu0
        %v3014 = vadd.f32 %v2974, %v3013
        %v3015 = vand.u32 %v2848, 4294901760
        %v3016 = vsub.f32 %v2848, %v3015
        %v3017 = vand.u32 %v3016, 4294901760
        %3018 = vmatmul.f32.gmra.mxu0 %v3017
        %v3019 = vpop.f32.mrf.mxu0
        %v3020 = vadd.f32 %v2979, %v3019
        %v3021 = vand.u32 %v2851, 4294901760
        %v3022 = vsub.f32 %v2851, %v3021
        %v3023 = vand.u32 %v3022, 4294901760
        %3024 = vmatmul.f32.gmra.mxu0 %v3023
        %v3025 = vpop.f32.mrf.mxu0
        %v3026 = vadd.f32 %v2984, %v3025
        %v3027 = vand.u32 %v2854, 4294901760
        %v3028 = vsub.f32 %v2854, %v3027
        %v3029 = vand.u32 %v3028, 4294901760
        %3030 = vmatmul.f32.gmra.mxu0 %v3029
        %v3031 = vpop.f32.mrf.mxu0
        %v3032 = vadd.f32 %v2989, %v3031
        %3033 = vdwg.mxu0
        %3034 = vmatpush.msra.mxu0 0.0
        %3035 = vmatpush.msra.mxu0 0.0
        %3036 = vmatpush.msra.mxu0 0.0
        %3037 = vmatpush.msra.mxu0 0.0
        %3038 = vmatpush.msra.mxu0 0.0
        %3039 = vmatpush.msra.mxu0 0.0
        %3040 = vmatpush.msra.mxu0 0.0
        %3041 = vmatpush.msra.mxu0 0.0
        %3042 = vmatpush.msra.mxu0 0.0
        %3043 = vmatpush.msra.mxu0 0.0
        %3044 = vmatpush.msra.mxu0 0.0
        %3045 = vmatpush.msra.mxu0 0.0
        %3046 = vmatpush.msra.mxu0 0.0
        %3047 = vmatpush.msra.mxu0 0.0
        %v3048 = vand.u32 %v1024, 4294901760
        %v3049 = vsub.f32 %v1024, %v3048
        %v3050 = vand.u32 %v3049, 4294901760
        %3051 = vmatpush.msra.mxu0 %v3050
        %v3052 = vand.u32 %v1023, 4294901760
        %v3053 = vsub.f32 %v1023, %v3052
        %v3054 = vand.u32 %v3053, 4294901760
        %3055 = vmatpush.msra.mxu0 %v3054
        %v3056 = vand.u32 %v2845, 4294901760
        %3057 = vmatmul.f32.gmra.mxu0 %v3056
        %v3058 = vpop.f32.mrf.mxu0
        %v3059 = vadd.f32 %v3014, %v3058
        %v3060 = vand.u32 %v2848, 4294901760
        %3061 = vmatmul.f32.gmra.mxu0 %v3060
        %v3062 = vpop.f32.mrf.mxu0
        %v3063 = vadd.f32 %v3020, %v3062
        %v3064 = vand.u32 %v2851, 4294901760
        %3065 = vmatmul.f32.gmra.mxu0 %v3064
        %v3066 = vpop.f32.mrf.mxu0
        %v3067 = vadd.f32 %v3026, %v3066
        %v3068 = vand.u32 %v2854, 4294901760
        %3069 = vmatmul.f32.gmra.mxu0 %v3068
        %v3070 = vpop.f32.mrf.mxu0
        %v3071 = vadd.f32 %v3032, %v3070
        %3072 = vdwg.mxu0
        %3073 = vmatpush.msra.mxu0 0.0
        %3074 = vmatpush.msra.mxu0 0.0
        %3075 = vmatpush.msra.mxu0 0.0
        %3076 = vmatpush.msra.mxu0 0.0
        %3077 = vmatpush.msra.mxu0 0.0
        %3078 = vmatpush.msra.mxu0 0.0
        %3079 = vmatpush.msra.mxu0 0.0
        %3080 = vmatpush.msra.mxu0 0.0
        %3081 = vmatpush.msra.mxu0 0.0
        %3082 = vmatpush.msra.mxu0 0.0
        %3083 = vmatpush.msra.mxu0 0.0
        %3084 = vmatpush.msra.mxu0 0.0
        %3085 = vmatpush.msra.mxu0 0.0
        %3086 = vmatpush.msra.mxu0 0.0
        %v3087 = vand.u32 %v1024, 4294901760
        %3088 = vmatpush.msra.mxu0 %v3087
        %v3089 = vand.u32 %v1023, 4294901760
        %3090 = vmatpush.msra.mxu0 %v3089
        %v3091 = vand.u32 %v2845, 4294901760
        %3092 = vmatmul.f32.gmra.mxu0 %v3091
        %v3093 = vpop.f32.mrf.mxu0
        %v3094 = vadd.f32 %v3059, %v3093
        %v3095 = vand.u32 %v2848, 4294901760
        %3096 = vmatmul.f32.gmra.mxu0 %v3095
        %v3097 = vpop.f32.mrf.mxu0
        %v3098 = vadd.f32 %v3063, %v3097
        %v3099 = vand.u32 %v2851, 4294901760
        %3100 = vmatmul.f32.gmra.mxu0 %v3099
        %v3101 = vpop.f32.mrf.mxu0
        %v3102 = vadd.f32 %v3067, %v3101
        %v3103 = vand.u32 %v2854, 4294901760
        %3104 = vmatmul.f32.gmra.mxu0 %v3103
        %v3105 = vpop.f32.mrf.mxu0
        %v3106 = vadd.f32 %v3071, %v3105
        %3107 = vdwg.mxu0
        %v3108 = vsub.f32 %v966, %v3094
        %v3109 = vsub.f32 %v970, %v3098
        %v3110 = vsub.f32 %v974, %v3102
        %v3111 = vsub.f32 %v978, %v3106
        %v3112 = vmul.f32 %v3108, %v3108
        %v3113 = vmul.f32 %v3109, %v3109
        %v3114 = vmul.f32 %v3110, %v3110
        %v3115 = vmul.f32 %v3111, %v3111
        %v3116 = vadd.f32 %v3112, 0.0
        %v3117 = vadd.f32 %v3113, 0.0
        %v3118 = vadd.f32 %v3114, 0.0
        %v3119 = vadd.f32 %v3115, 0.0
        %v3120 = vadd.f32 %v3094, 0.0
        %v3121 = vadd.f32 %v3098, 0.0
        %v3122 = vadd.f32 %v3102, 0.0
        %v3123 = vadd.f32 %v3106, 0.0
        %vm3124 = vcmp.eq.s32.totalorder %v1022, 0
        %v3125 = vsel %vm3124, %v2790, 0
        %v3126 = vsel %vm3124, %v2805, 0
        %v3127 = vsel %vm3124, %v2820, 0
        %v3128 = vsel %vm3124, %v2835, 0
        %s3129 = scalar_lea.vmem %s5, 16
        %v3130 = vld [vmem:[%s3129] sm:$0xff]
        %v3131 = vld [vmem:[%s3129 + $0x8] sm:$0xff]
        %v3133 = vsel %vm996, %v3108, 0
        %v3136 = vsel %vm996, %v3109, 0
        %v3139 = vsel %vm996, %v3110, 0
        %v3142 = vsel %vm996, %v3111, 0
        %v3145 = vsel %vm996, %v3130, 0
        %v3148 = vsel %vm996, %v3131, 0
        %3150 = vmatpush.xpose.msra.mxu0 0.0
        %3151 = vmatpush.xpose.msra.mxu0 0.0
        %3152 = vmatpush.xpose.msra.mxu0 0.0
        %3153 = vmatpush.xpose.msra.mxu0 0.0
        %3154 = vmatpush.xpose.msra.mxu0 0.0
        %3155 = vmatpush.xpose.msra.mxu0 0.0
        %3156 = vmatpush.xpose.msra.mxu0 0.0
        %3157 = vmatpush.xpose.msra.mxu0 0.0
        %3158 = vmatpush.xpose.msra.mxu0 0.0
        %3159 = vmatpush.xpose.msra.mxu0 0.0
        %3160 = vmatpush.xpose.msra.mxu0 0.0
        %3161 = vmatpush.xpose.msra.mxu0 0.0
        %3162 = vmatpush.xpose.msra.mxu0 0.0
        %3163 = vmatpush.xpose.msra.mxu0 0.0
        %v3164 = vand.u32 %v3148, 4294901760
        %3165 = vmatpush.xpose.msra.mxu0 %v3164
        %v3166 = vand.u32 %v3145, 4294901760
        %3167 = vmatpush.xpose.msra.mxu0 %v3166
        %v3168 = vand.u32 %v3133, 4294901760
        %v3169 = vsub.f32 %v3133, %v3168
        %v3170 = vand.u32 %v3169, 4294901760
        %v3171 = vsub.f32 %v3169, %v3170
        %v3172 = vand.u32 %v3171, 4294901760
        %3173 = vmatmul.f32.gmra.mxu0 %v3172
        %v3174 = vpop.f32.mrf.mxu0
        %v3175 = vadd.f32 0.0, %v3174
        %v3176 = vand.u32 %v3136, 4294901760
        %v3177 = vsub.f32 %v3136, %v3176
        %v3178 = vand.u32 %v3177, 4294901760
        %v3179 = vsub.f32 %v3177, %v3178
        %v3180 = vand.u32 %v3179, 4294901760
        %3181 = vmatmul.f32.gmra.mxu0 %v3180
        %v3182 = vpop.f32.mrf.mxu0
        %v3183 = vadd.f32 0.0, %v3182
        %v3184 = vand.u32 %v3139, 4294901760
        %v3185 = vsub.f32 %v3139, %v3184
        %v3186 = vand.u32 %v3185, 4294901760
        %v3187 = vsub.f32 %v3185, %v3186
        %v3188 = vand.u32 %v3187, 4294901760
        %3189 = vmatmul.f32.gmra.mxu0 %v3188
        %v3190 = vpop.f32.mrf.mxu0
        %v3191 = vadd.f32 0.0, %v3190
        %v3192 = vand.u32 %v3142, 4294901760
        %v3193 = vsub.f32 %v3142, %v3192
        %v3194 = vand.u32 %v3193, 4294901760
        %v3195 = vsub.f32 %v3193, %v3194
        %v3196 = vand.u32 %v3195, 4294901760
        %3197 = vmatmul.f32.gmra.mxu0 %v3196
        %v3198 = vpop.f32.mrf.mxu0
        %v3199 = vadd.f32 0.0, %v3198
        %3200 = vdwg.mxu0
        %3201 = vmatpush.xpose.msra.mxu0 0.0
        %3202 = vmatpush.xpose.msra.mxu0 0.0
        %3203 = vmatpush.xpose.msra.mxu0 0.0
        %3204 = vmatpush.xpose.msra.mxu0 0.0
        %3205 = vmatpush.xpose.msra.mxu0 0.0
        %3206 = vmatpush.xpose.msra.mxu0 0.0
        %3207 = vmatpush.xpose.msra.mxu0 0.0
        %3208 = vmatpush.xpose.msra.mxu0 0.0
        %3209 = vmatpush.xpose.msra.mxu0 0.0
        %3210 = vmatpush.xpose.msra.mxu0 0.0
        %3211 = vmatpush.xpose.msra.mxu0 0.0
        %3212 = vmatpush.xpose.msra.mxu0 0.0
        %3213 = vmatpush.xpose.msra.mxu0 0.0
        %3214 = vmatpush.xpose.msra.mxu0 0.0
        %v3215 = vand.u32 %v3148, 4294901760
        %v3216 = vsub.f32 %v3148, %v3215
        %v3217 = vand.u32 %v3216, 4294901760
        %v3218 = vsub.f32 %v3216, %v3217
        %v3219 = vand.u32 %v3218, 4294901760
        %3220 = vmatpush.xpose.msra.mxu0 %v3219
        %v3221 = vand.u32 %v3145, 4294901760
        %v3222 = vsub.f32 %v3145, %v3221
        %v3223 = vand.u32 %v3222, 4294901760
        %v3224 = vsub.f32 %v3222, %v3223
        %v3225 = vand.u32 %v3224, 4294901760
        %3226 = vmatpush.xpose.msra.mxu0 %v3225
        %v3227 = vand.u32 %v3133, 4294901760
        %3228 = vmatmul.f32.gmra.mxu0 %v3227
        %v3229 = vpop.f32.mrf.mxu0
        %v3230 = vadd.f32 %v3175, %v3229
        %v3231 = vand.u32 %v3136, 4294901760
        %3232 = vmatmul.f32.gmra.mxu0 %v3231
        %v3233 = vpop.f32.mrf.mxu0
        %v3234 = vadd.f32 %v3183, %v3233
        %v3235 = vand.u32 %v3139, 4294901760
        %3236 = vmatmul.f32.gmra.mxu0 %v3235
        %v3237 = vpop.f32.mrf.mxu0
        %v3238 = vadd.f32 %v3191, %v3237
        %v3239 = vand.u32 %v3142, 4294901760
        %3240 = vmatmul.f32.gmra.mxu0 %v3239
        %v3241 = vpop.f32.mrf.mxu0
        %v3242 = vadd.f32 %v3199, %v3241
        %3243 = vdwg.mxu0
        %3244 = vmatpush.xpose.msra.mxu0 0.0
        %3245 = vmatpush.xpose.msra.mxu0 0.0
        %3246 = vmatpush.xpose.msra.mxu0 0.0
        %3247 = vmatpush.xpose.msra.mxu0 0.0
        %3248 = vmatpush.xpose.msra.mxu0 0.0
        %3249 = vmatpush.xpose.msra.mxu0 0.0
        %3250 = vmatpush.xpose.msra.mxu0 0.0
        %3251 = vmatpush.xpose.msra.mxu0 0.0
        %3252 = vmatpush.xpose.msra.mxu0 0.0
        %3253 = vmatpush.xpose.msra.mxu0 0.0
        %3254 = vmatpush.xpose.msra.mxu0 0.0
        %3255 = vmatpush.xpose.msra.mxu0 0.0
        %3256 = vmatpush.xpose.msra.mxu0 0.0
        %3257 = vmatpush.xpose.msra.mxu0 0.0
        %v3258 = vand.u32 %v3148, 4294901760
        %v3259 = vsub.f32 %v3148, %v3258
        %3260 = vmatpush.xpose.msra.mxu0 %v3259
        %v3261 = vand.u32 %v3145, 4294901760
        %v3262 = vsub.f32 %v3145, %v3261
        %3263 = vmatpush.xpose.msra.mxu0 %v3262
        %v3264 = vand.u32 %v3133, 4294901760
        %v3265 = vsub.f32 %v3133, %v3264
        %3266 = vmatmul.f32.gmra.mxu0 %v3265
        %v3267 = vpop.f32.mrf.mxu0
        %v3268 = vadd.f32 %v3230, %v3267
        %v3269 = vand.u32 %v3136, 4294901760
        %v3270 = vsub.f32 %v3136, %v3269
        %3271 = vmatmul.f32.gmra.mxu0 %v3270
        %v3272 = vpop.f32.mrf.mxu0
        %v3273 = vadd.f32 %v3234, %v3272
        %v3274 = vand.u32 %v3139, 4294901760
        %v3275 = vsub.f32 %v3139, %v3274
        %3276 = vmatmul.f32.gmra.mxu0 %v3275
        %v3277 = vpop.f32.mrf.mxu0
        %v3278 = vadd.f32 %v3238, %v3277
        %v3279 = vand.u32 %v3142, 4294901760
        %v3280 = vsub.f32 %v3142, %v3279
        %3281 = vmatmul.f32.gmra.mxu0 %v3280
        %v3282 = vpop.f32.mrf.mxu0
        %v3283 = vadd.f32 %v3242, %v3282
        %3284 = vdwg.mxu0
        %3285 = vmatpush.xpose.msra.mxu0 0.0
        %3286 = vmatpush.xpose.msra.mxu0 0.0
        %3287 = vmatpush.xpose.msra.mxu0 0.0
        %3288 = vmatpush.xpose.msra.mxu0 0.0
        %3289 = vmatpush.xpose.msra.mxu0 0.0
        %3290 = vmatpush.xpose.msra.mxu0 0.0
        %3291 = vmatpush.xpose.msra.mxu0 0.0
        %3292 = vmatpush.xpose.msra.mxu0 0.0
        %3293 = vmatpush.xpose.msra.mxu0 0.0
        %3294 = vmatpush.xpose.msra.mxu0 0.0
        %3295 = vmatpush.xpose.msra.mxu0 0.0
        %3296 = vmatpush.xpose.msra.mxu0 0.0
        %3297 = vmatpush.xpose.msra.mxu0 0.0
        %3298 = vmatpush.xpose.msra.mxu0 0.0
        %v3299 = vand.u32 %v3148, 4294901760
        %3300 = vmatpush.xpose.msra.mxu0 %v3299
        %v3301 = vand.u32 %v3145, 4294901760
        %3302 = vmatpush.xpose.msra.mxu0 %v3301
        %v3303 = vand.u32 %v3133, 4294901760
        %v3304 = vsub.f32 %v3133, %v3303
        %v3305 = vand.u32 %v3304, 4294901760
        %3306 = vmatmul.f32.gmra.mxu0 %v3305
        %v3307 = vpop.f32.mrf.mxu0
        %v3308 = vadd.f32 %v3268, %v3307
        %v3309 = vand.u32 %v3136, 4294901760
        %v3310 = vsub.f32 %v3136, %v3309
        %v3311 = vand.u32 %v3310, 4294901760
        %3312 = vmatmul.f32.gmra.mxu0 %v3311
        %v3313 = vpop.f32.mrf.mxu0
        %v3314 = vadd.f32 %v3273, %v3313
        %v3315 = vand.u32 %v3139, 4294901760
        %v3316 = vsub.f32 %v3139, %v3315
        %v3317 = vand.u32 %v3316, 4294901760
        %3318 = vmatmul.f32.gmra.mxu0 %v3317
        %v3319 = vpop.f32.mrf.mxu0
        %v3320 = vadd.f32 %v3278, %v3319
        %v3321 = vand.u32 %v3142, 4294901760
        %v3322 = vsub.f32 %v3142, %v3321
        %v3323 = vand.u32 %v3322, 4294901760
        %3324 = vmatmul.f32.gmra.mxu0 %v3323
        %v3325 = vpop.f32.mrf.mxu0
        %v3326 = vadd.f32 %v3283, %v3325
        %3327 = vdwg.mxu0
        %3328 = vmatpush.xpose.msra.mxu0 0.0
        %3329 = vmatpush.xpose.msra.mxu0 0.0
        %3330 = vmatpush.xpose.msra.mxu0 0.0
        %3331 = vmatpush.xpose.msra.mxu0 0.0
        %3332 = vmatpush.xpose.msra.mxu0 0.0
        %3333 = vmatpush.xpose.msra.mxu0 0.0
        %3334 = vmatpush.xpose.msra.mxu0 0.0
        %3335 = vmatpush.xpose.msra.mxu0 0.0
        %3336 = vmatpush.xpose.msra.mxu0 0.0
        %3337 = vmatpush.xpose.msra.mxu0 0.0
        %3338 = vmatpush.xpose.msra.mxu0 0.0
        %3339 = vmatpush.xpose.msra.mxu0 0.0
        %3340 = vmatpush.xpose.msra.mxu0 0.0
        %3341 = vmatpush.xpose.msra.mxu0 0.0
        %v3342 = vand.u32 %v3148, 4294901760
        %v3343 = vsub.f32 %v3148, %v3342
        %v3344 = vand.u32 %v3343, 4294901760
        %3345 = vmatpush.xpose.msra.mxu0 %v3344
        %v3346 = vand.u32 %v3145, 4294901760
        %v3347 = vsub.f32 %v3145, %v3346
        %v3348 = vand.u32 %v3347, 4294901760
        %3349 = vmatpush.xpose.msra.mxu0 %v3348
        %v3350 = vand.u32 %v3133, 4294901760
        %3351 = vmatmul.f32.gmra.mxu0 %v3350
        %v3352 = vpop.f32.mrf.mxu0
        %v3353 = vadd.f32 %v3308, %v3352
        %v3354 = vand.u32 %v3136, 4294901760
        %3355 = vmatmul.f32.gmra.mxu0 %v3354
        %v3356 = vpop.f32.mrf.mxu0
        %v3357 = vadd.f32 %v3314, %v3356
        %v3358 = vand.u32 %v3139, 4294901760
        %3359 = vmatmul.f32.gmra.mxu0 %v3358
        %v3360 = vpop.f32.mrf.mxu0
        %v3361 = vadd.f32 %v3320, %v3360
        %v3362 = vand.u32 %v3142, 4294901760
        %3363 = vmatmul.f32.gmra.mxu0 %v3362
        %v3364 = vpop.f32.mrf.mxu0
        %v3365 = vadd.f32 %v3326, %v3364
        %3366 = vdwg.mxu0
        %3367 = vmatpush.xpose.msra.mxu0 0.0
        %3368 = vmatpush.xpose.msra.mxu0 0.0
        %3369 = vmatpush.xpose.msra.mxu0 0.0
        %3370 = vmatpush.xpose.msra.mxu0 0.0
        %3371 = vmatpush.xpose.msra.mxu0 0.0
        %3372 = vmatpush.xpose.msra.mxu0 0.0
        %3373 = vmatpush.xpose.msra.mxu0 0.0
        %3374 = vmatpush.xpose.msra.mxu0 0.0
        %3375 = vmatpush.xpose.msra.mxu0 0.0
        %3376 = vmatpush.xpose.msra.mxu0 0.0
        %3377 = vmatpush.xpose.msra.mxu0 0.0
        %3378 = vmatpush.xpose.msra.mxu0 0.0
        %3379 = vmatpush.xpose.msra.mxu0 0.0
        %3380 = vmatpush.xpose.msra.mxu0 0.0
        %v3381 = vand.u32 %v3148, 4294901760
        %3382 = vmatpush.xpose.msra.mxu0 %v3381
        %v3383 = vand.u32 %v3145, 4294901760
        %3384 = vmatpush.xpose.msra.mxu0 %v3383
        %v3385 = vand.u32 %v3133, 4294901760
        %3386 = vmatmul.f32.gmra.mxu0 %v3385
        %v3387 = vpop.f32.mrf.mxu0
        %v3388 = vadd.f32 %v3353, %v3387
        %v3389 = vand.u32 %v3136, 4294901760
        %3390 = vmatmul.f32.gmra.mxu0 %v3389
        %v3391 = vpop.f32.mrf.mxu0
        %v3392 = vadd.f32 %v3357, %v3391
        %v3393 = vand.u32 %v3139, 4294901760
        %3394 = vmatmul.f32.gmra.mxu0 %v3393
        %v3395 = vpop.f32.mrf.mxu0
        %v3396 = vadd.f32 %v3361, %v3395
        %v3397 = vand.u32 %v3142, 4294901760
        %3398 = vmatmul.f32.gmra.mxu0 %v3397
        %v3399 = vpop.f32.mrf.mxu0
        %v3400 = vadd.f32 %v3365, %v3399
        %3401 = vdwg.mxu0
        %v3402 = vmul.f32 %v3388, 2.0
        %v3403 = vmul.f32 %v3392, 2.0
        %v3404 = vmul.f32 %v3396, 2.0
        %v3405 = vmul.f32 %v3400, 2.0
        %v3410 = vperm.slane %v3402, 0
        %v3411 = vlaneseq
        %v3412 = vshrl.u32 %v3411, 7
        %3414 = vset.pattern.permute.xlu0 %v3412
        %3415 = vperm.xlu0 %3414, %v3410
        %v3416 = vpop.permute.xlu0 %3415
        %v3417 = vlaneseq
        %v3418 = vshrl.u32 %v3417, 7
        %v3419 = vadd.s32 %v3418, 8
        %3420 = vset.pattern.permute.xlu0 %v3419
        %3421 = vperm.xlu0 %3420, %v3410
        %v3422 = vpop.permute.xlu0 %3421
        %v3423 = vperm.slane %v3402, 1
        %v3424 = vlaneseq
        %v3425 = vshrl.u32 %v3424, 7
        %3427 = vset.pattern.permute.xlu0 %v3425
        %3428 = vperm.xlu0 %3427, %v3423
        %v3429 = vpop.permute.xlu0 %3428
        %v3430 = vlaneseq
        %v3431 = vshrl.u32 %v3430, 7
        %v3432 = vadd.s32 %v3431, 8
        %3433 = vset.pattern.permute.xlu0 %v3432
        %3434 = vperm.xlu0 %3433, %v3423
        %v3435 = vpop.permute.xlu0 %3434
        %v3436 = vperm.slane %v3402, 2
        %v3437 = vlaneseq
        %v3438 = vshrl.u32 %v3437, 7
        %3440 = vset.pattern.permute.xlu0 %v3438
        %3441 = vperm.xlu0 %3440, %v3436
        %v3442 = vpop.permute.xlu0 %3441
        %v3443 = vlaneseq
        %v3444 = vshrl.u32 %v3443, 7
        %v3445 = vadd.s32 %v3444, 8
        %3446 = vset.pattern.permute.xlu0 %v3445
        %3447 = vperm.xlu0 %3446, %v3436
        %v3448 = vpop.permute.xlu0 %3447
        %v3449 = vperm.slane %v3402, 3
        %v3450 = vlaneseq
        %v3451 = vshrl.u32 %v3450, 7
        %3453 = vset.pattern.permute.xlu0 %v3451
        %3454 = vperm.xlu0 %3453, %v3449
        %v3455 = vpop.permute.xlu0 %3454
        %v3456 = vlaneseq
        %v3457 = vshrl.u32 %v3456, 7
        %v3458 = vadd.s32 %v3457, 8
        %3459 = vset.pattern.permute.xlu0 %v3458
        %3460 = vperm.xlu0 %3459, %v3449
        %v3461 = vpop.permute.xlu0 %3460
        %v3462 = vperm.slane %v3402, 4
        %v3463 = vlaneseq
        %v3464 = vshrl.u32 %v3463, 7
        %3466 = vset.pattern.permute.xlu0 %v3464
        %3467 = vperm.xlu0 %3466, %v3462
        %v3468 = vpop.permute.xlu0 %3467
        %v3469 = vlaneseq
        %v3470 = vshrl.u32 %v3469, 7
        %v3471 = vadd.s32 %v3470, 8
        %3472 = vset.pattern.permute.xlu0 %v3471
        %3473 = vperm.xlu0 %3472, %v3462
        %v3474 = vpop.permute.xlu0 %3473
        %v3475 = vperm.slane %v3402, 5
        %v3476 = vlaneseq
        %v3477 = vshrl.u32 %v3476, 7
        %3479 = vset.pattern.permute.xlu0 %v3477
        %3480 = vperm.xlu0 %3479, %v3475
        %v3481 = vpop.permute.xlu0 %3480
        %v3482 = vlaneseq
        %v3483 = vshrl.u32 %v3482, 7
        %v3484 = vadd.s32 %v3483, 8
        %3485 = vset.pattern.permute.xlu0 %v3484
        %3486 = vperm.xlu0 %3485, %v3475
        %v3487 = vpop.permute.xlu0 %3486
        %v3488 = vperm.slane %v3402, 6
        %v3489 = vlaneseq
        %v3490 = vshrl.u32 %v3489, 7
        %3492 = vset.pattern.permute.xlu0 %v3490
        %3493 = vperm.xlu0 %3492, %v3488
        %v3494 = vpop.permute.xlu0 %3493
        %v3495 = vlaneseq
        %v3496 = vshrl.u32 %v3495, 7
        %v3497 = vadd.s32 %v3496, 8
        %3498 = vset.pattern.permute.xlu0 %v3497
        %3499 = vperm.xlu0 %3498, %v3488
        %v3500 = vpop.permute.xlu0 %3499
        %v3501 = vperm.slane %v3402, 7
        %v3502 = vlaneseq
        %v3503 = vshrl.u32 %v3502, 7
        %3505 = vset.pattern.permute.xlu0 %v3503
        %3506 = vperm.xlu0 %3505, %v3501
        %v3507 = vpop.permute.xlu0 %3506
        %v3508 = vlaneseq
        %v3509 = vshrl.u32 %v3508, 7
        %v3510 = vadd.s32 %v3509, 8
        %3511 = vset.pattern.permute.xlu0 %v3510
        %3512 = vperm.xlu0 %3511, %v3501
        %v3513 = vpop.permute.xlu0 %3512
        %v3514 = vperm.slane %v3403, 0
        %v3515 = vlaneseq
        %v3516 = vshrl.u32 %v3515, 7
        %3518 = vset.pattern.permute.xlu0 %v3516
        %3519 = vperm.xlu0 %3518, %v3514
        %v3520 = vpop.permute.xlu0 %3519
        %v3521 = vlaneseq
        %v3522 = vshrl.u32 %v3521, 7
        %v3523 = vadd.s32 %v3522, 8
        %3524 = vset.pattern.permute.xlu0 %v3523
        %3525 = vperm.xlu0 %3524, %v3514
        %v3526 = vpop.permute.xlu0 %3525
        %v3527 = vperm.slane %v3403, 1
        %v3528 = vlaneseq
        %v3529 = vshrl.u32 %v3528, 7
        %3531 = vset.pattern.permute.xlu0 %v3529
        %3532 = vperm.xlu0 %3531, %v3527
        %v3533 = vpop.permute.xlu0 %3532
        %v3534 = vlaneseq
        %v3535 = vshrl.u32 %v3534, 7
        %v3536 = vadd.s32 %v3535, 8
        %3537 = vset.pattern.permute.xlu0 %v3536
        %3538 = vperm.xlu0 %3537, %v3527
        %v3539 = vpop.permute.xlu0 %3538
        %v3540 = vperm.slane %v3403, 2
        %v3541 = vlaneseq
        %v3542 = vshrl.u32 %v3541, 7
        %3544 = vset.pattern.permute.xlu0 %v3542
        %3545 = vperm.xlu0 %3544, %v3540
        %v3546 = vpop.permute.xlu0 %3545
        %v3547 = vlaneseq
        %v3548 = vshrl.u32 %v3547, 7
        %v3549 = vadd.s32 %v3548, 8
        %3550 = vset.pattern.permute.xlu0 %v3549
        %3551 = vperm.xlu0 %3550, %v3540
        %v3552 = vpop.permute.xlu0 %3551
        %v3553 = vperm.slane %v3403, 3
        %v3554 = vlaneseq
        %v3555 = vshrl.u32 %v3554, 7
        %3557 = vset.pattern.permute.xlu0 %v3555
        %3558 = vperm.xlu0 %3557, %v3553
        %v3559 = vpop.permute.xlu0 %3558
        %v3560 = vlaneseq
        %v3561 = vshrl.u32 %v3560, 7
        %v3562 = vadd.s32 %v3561, 8
        %3563 = vset.pattern.permute.xlu0 %v3562
        %3564 = vperm.xlu0 %3563, %v3553
        %v3565 = vpop.permute.xlu0 %3564
        %v3566 = vperm.slane %v3403, 4
        %v3567 = vlaneseq
        %v3568 = vshrl.u32 %v3567, 7
        %3570 = vset.pattern.permute.xlu0 %v3568
        %3571 = vperm.xlu0 %3570, %v3566
        %v3572 = vpop.permute.xlu0 %3571
        %v3573 = vlaneseq
        %v3574 = vshrl.u32 %v3573, 7
        %v3575 = vadd.s32 %v3574, 8
        %3576 = vset.pattern.permute.xlu0 %v3575
        %3577 = vperm.xlu0 %3576, %v3566
        %v3578 = vpop.permute.xlu0 %3577
        %v3579 = vperm.slane %v3403, 5
        %v3580 = vlaneseq
        %v3581 = vshrl.u32 %v3580, 7
        %3583 = vset.pattern.permute.xlu0 %v3581
        %3584 = vperm.xlu0 %3583, %v3579
        %v3585 = vpop.permute.xlu0 %3584
        %v3586 = vlaneseq
        %v3587 = vshrl.u32 %v3586, 7
        %v3588 = vadd.s32 %v3587, 8
        %3589 = vset.pattern.permute.xlu0 %v3588
        %3590 = vperm.xlu0 %3589, %v3579
        %v3591 = vpop.permute.xlu0 %3590
        %v3592 = vperm.slane %v3403, 6
        %v3593 = vlaneseq
        %v3594 = vshrl.u32 %v3593, 7
        %3596 = vset.pattern.permute.xlu0 %v3594
        %3597 = vperm.xlu0 %3596, %v3592
        %v3598 = vpop.permute.xlu0 %3597
        %v3599 = vlaneseq
        %v3600 = vshrl.u32 %v3599, 7
        %v3601 = vadd.s32 %v3600, 8
        %3602 = vset.pattern.permute.xlu0 %v3601
        %3603 = vperm.xlu0 %3602, %v3592
        %v3604 = vpop.permute.xlu0 %3603
        %v3605 = vperm.slane %v3403, 7
        %v3606 = vlaneseq
        %v3607 = vshrl.u32 %v3606, 7
        %3609 = vset.pattern.permute.xlu0 %v3607
        %3610 = vperm.xlu0 %3609, %v3605
        %v3611 = vpop.permute.xlu0 %3610
        %v3612 = vlaneseq
        %v3613 = vshrl.u32 %v3612, 7
        %v3614 = vadd.s32 %v3613, 8
        %3615 = vset.pattern.permute.xlu0 %v3614
        %3616 = vperm.xlu0 %3615, %v3605
        %v3617 = vpop.permute.xlu0 %3616
        %v3618 = vperm.slane %v3404, 0
        %v3619 = vlaneseq
        %v3620 = vshrl.u32 %v3619, 7
        %3622 = vset.pattern.permute.xlu0 %v3620
        %3623 = vperm.xlu0 %3622, %v3618
        %v3624 = vpop.permute.xlu0 %3623
        %v3625 = vlaneseq
        %v3626 = vshrl.u32 %v3625, 7
        %v3627 = vadd.s32 %v3626, 8
        %3628 = vset.pattern.permute.xlu0 %v3627
        %3629 = vperm.xlu0 %3628, %v3618
        %v3630 = vpop.permute.xlu0 %3629
        %v3631 = vperm.slane %v3404, 1
        %v3632 = vlaneseq
        %v3633 = vshrl.u32 %v3632, 7
        %3635 = vset.pattern.permute.xlu0 %v3633
        %3636 = vperm.xlu0 %3635, %v3631
        %v3637 = vpop.permute.xlu0 %3636
        %v3638 = vlaneseq
        %v3639 = vshrl.u32 %v3638, 7
        %v3640 = vadd.s32 %v3639, 8
        %3641 = vset.pattern.permute.xlu0 %v3640
        %3642 = vperm.xlu0 %3641, %v3631
        %v3643 = vpop.permute.xlu0 %3642
        %v3644 = vperm.slane %v3404, 2
        %v3645 = vlaneseq
        %v3646 = vshrl.u32 %v3645, 7
        %3648 = vset.pattern.permute.xlu0 %v3646
        %3649 = vperm.xlu0 %3648, %v3644
        %v3650 = vpop.permute.xlu0 %3649
        %v3651 = vlaneseq
        %v3652 = vshrl.u32 %v3651, 7
        %v3653 = vadd.s32 %v3652, 8
        %3654 = vset.pattern.permute.xlu0 %v3653
        %3655 = vperm.xlu0 %3654, %v3644
        %v3656 = vpop.permute.xlu0 %3655
        %v3657 = vperm.slane %v3404, 3
        %v3658 = vlaneseq
        %v3659 = vshrl.u32 %v3658, 7
        %3661 = vset.pattern.permute.xlu0 %v3659
        %3662 = vperm.xlu0 %3661, %v3657
        %v3663 = vpop.permute.xlu0 %3662
        %v3664 = vlaneseq
        %v3665 = vshrl.u32 %v3664, 7
        %v3666 = vadd.s32 %v3665, 8
        %3667 = vset.pattern.permute.xlu0 %v3666
        %3668 = vperm.xlu0 %3667, %v3657
        %v3669 = vpop.permute.xlu0 %3668
        %v3670 = vperm.slane %v3404, 4
        %v3671 = vlaneseq
        %v3672 = vshrl.u32 %v3671, 7
        %3674 = vset.pattern.permute.xlu0 %v3672
        %3675 = vperm.xlu0 %3674, %v3670
        %v3676 = vpop.permute.xlu0 %3675
        %v3677 = vlaneseq
        %v3678 = vshrl.u32 %v3677, 7
        %v3679 = vadd.s32 %v3678, 8
        %3680 = vset.pattern.permute.xlu0 %v3679
        %3681 = vperm.xlu0 %3680, %v3670
        %v3682 = vpop.permute.xlu0 %3681
        %v3683 = vperm.slane %v3404, 5
        %v3684 = vlaneseq
        %v3685 = vshrl.u32 %v3684, 7
        %3687 = vset.pattern.permute.xlu0 %v3685
        %3688 = vperm.xlu0 %3687, %v3683
        %v3689 = vpop.permute.xlu0 %3688
        %v3690 = vlaneseq
        %v3691 = vshrl.u32 %v3690, 7
        %v3692 = vadd.s32 %v3691, 8
        %3693 = vset.pattern.permute.xlu0 %v3692
        %3694 = vperm.xlu0 %3693, %v3683
        %v3695 = vpop.permute.xlu0 %3694
        %v3696 = vperm.slane %v3404, 6
        %v3697 = vlaneseq
        %v3698 = vshrl.u32 %v3697, 7
        %3700 = vset.pattern.permute.xlu0 %v3698
        %3701 = vperm.xlu0 %3700, %v3696
        %v3702 = vpop.permute.xlu0 %3701
        %v3703 = vlaneseq
        %v3704 = vshrl.u32 %v3703, 7
        %v3705 = vadd.s32 %v3704, 8
        %3706 = vset.pattern.permute.xlu0 %v3705
        %3707 = vperm.xlu0 %3706, %v3696
        %v3708 = vpop.permute.xlu0 %3707
        %v3709 = vperm.slane %v3404, 7
        %v3710 = vlaneseq
        %v3711 = vshrl.u32 %v3710, 7
        %3713 = vset.pattern.permute.xlu0 %v3711
        %3714 = vperm.xlu0 %3713, %v3709
        %v3715 = vpop.permute.xlu0 %3714
        %v3716 = vlaneseq
        %v3717 = vshrl.u32 %v3716, 7
        %v3718 = vadd.s32 %v3717, 8
        %3719 = vset.pattern.permute.xlu0 %v3718
        %3720 = vperm.xlu0 %3719, %v3709
        %v3721 = vpop.permute.xlu0 %3720
        %v3722 = vperm.slane %v3405, 0
        %v3723 = vlaneseq
        %v3724 = vshrl.u32 %v3723, 7
        %3726 = vset.pattern.permute.xlu0 %v3724
        %3727 = vperm.xlu0 %3726, %v3722
        %v3728 = vpop.permute.xlu0 %3727
        %v3729 = vlaneseq
        %v3730 = vshrl.u32 %v3729, 7
        %v3731 = vadd.s32 %v3730, 8
        %3732 = vset.pattern.permute.xlu0 %v3731
        %3733 = vperm.xlu0 %3732, %v3722
        %v3734 = vpop.permute.xlu0 %3733
        %v3735 = vperm.slane %v3405, 1
        %v3736 = vlaneseq
        %v3737 = vshrl.u32 %v3736, 7
        %3739 = vset.pattern.permute.xlu0 %v3737
        %3740 = vperm.xlu0 %3739, %v3735
        %v3741 = vpop.permute.xlu0 %3740
        %v3742 = vlaneseq
        %v3743 = vshrl.u32 %v3742, 7
        %v3744 = vadd.s32 %v3743, 8
        %3745 = vset.pattern.permute.xlu0 %v3744
        %3746 = vperm.xlu0 %3745, %v3735
        %v3747 = vpop.permute.xlu0 %3746
        %v3748 = vperm.slane %v3405, 2
        %v3749 = vlaneseq
        %v3750 = vshrl.u32 %v3749, 7
        %3752 = vset.pattern.permute.xlu0 %v3750
        %3753 = vperm.xlu0 %3752, %v3748
        %v3754 = vpop.permute.xlu0 %3753
        %v3755 = vlaneseq
        %v3756 = vshrl.u32 %v3755, 7
        %v3757 = vadd.s32 %v3756, 8
        %3758 = vset.pattern.permute.xlu0 %v3757
        %3759 = vperm.xlu0 %3758, %v3748
        %v3760 = vpop.permute.xlu0 %3759
        %v3761 = vperm.slane %v3405, 3
        %v3762 = vlaneseq
        %v3763 = vshrl.u32 %v3762, 7
        %3765 = vset.pattern.permute.xlu0 %v3763
        %3766 = vperm.xlu0 %3765, %v3761
        %v3767 = vpop.permute.xlu0 %3766
        %v3768 = vlaneseq
        %v3769 = vshrl.u32 %v3768, 7
        %v3770 = vadd.s32 %v3769, 8
        %3771 = vset.pattern.permute.xlu0 %v3770
        %3772 = vperm.xlu0 %3771, %v3761
        %v3773 = vpop.permute.xlu0 %3772
        %v3774 = vperm.slane %v3405, 4
        %v3775 = vlaneseq
        %v3776 = vshrl.u32 %v3775, 7
        %3778 = vset.pattern.permute.xlu0 %v3776
        %3779 = vperm.xlu0 %3778, %v3774
        %v3780 = vpop.permute.xlu0 %3779
        %v3781 = vlaneseq
        %v3782 = vshrl.u32 %v3781, 7
        %v3783 = vadd.s32 %v3782, 8
        %3784 = vset.pattern.permute.xlu0 %v3783
        %3785 = vperm.xlu0 %3784, %v3774
        %v3786 = vpop.permute.xlu0 %3785
        %v3787 = vperm.slane %v3405, 5
        %v3788 = vlaneseq
        %v3789 = vshrl.u32 %v3788, 7
        %3791 = vset.pattern.permute.xlu0 %v3789
        %3792 = vperm.xlu0 %3791, %v3787
        %v3793 = vpop.permute.xlu0 %3792
        %v3794 = vlaneseq
        %v3795 = vshrl.u32 %v3794, 7
        %v3796 = vadd.s32 %v3795, 8
        %3797 = vset.pattern.permute.xlu0 %v3796
        %3798 = vperm.xlu0 %3797, %v3787
        %v3799 = vpop.permute.xlu0 %3798
        %v3800 = vperm.slane %v3405, 6
        %v3801 = vlaneseq
        %v3802 = vshrl.u32 %v3801, 7
        %3804 = vset.pattern.permute.xlu0 %v3802
        %3805 = vperm.xlu0 %3804, %v3800
        %v3806 = vpop.permute.xlu0 %3805
        %v3807 = vlaneseq
        %v3808 = vshrl.u32 %v3807, 7
        %v3809 = vadd.s32 %v3808, 8
        %3810 = vset.pattern.permute.xlu0 %v3809
        %3811 = vperm.xlu0 %3810, %v3800
        %v3812 = vpop.permute.xlu0 %3811
        %v3813 = vperm.slane %v3405, 7
        %v3814 = vlaneseq
        %v3815 = vshrl.u32 %v3814, 7
        %3817 = vset.pattern.permute.xlu0 %v3815
        %3818 = vperm.xlu0 %3817, %v3813
        %v3819 = vpop.permute.xlu0 %3818
        %v3820 = vlaneseq
        %v3821 = vshrl.u32 %v3820, 7
        %v3822 = vadd.s32 %v3821, 8
        %3823 = vset.pattern.permute.xlu0 %v3822
        %3824 = vperm.xlu0 %3823, %v3813
        %v3825 = vpop.permute.xlu0 %3824
        %v3890 = vsub.f32 %v1005, %v3416
        %v3891 = vsub.f32 %v1008, %v3422
        %v3892 = vsub.f32 %v1005, %v3429
        %v3893 = vsub.f32 %v1008, %v3435
        %v3894 = vsub.f32 %v1005, %v3442
        %v3895 = vsub.f32 %v1008, %v3448
        %v3896 = vsub.f32 %v1005, %v3455
        %v3897 = vsub.f32 %v1008, %v3461
        %v3898 = vsub.f32 %v1005, %v3468
        %v3899 = vsub.f32 %v1008, %v3474
        %v3900 = vsub.f32 %v1005, %v3481
        %v3901 = vsub.f32 %v1008, %v3487
        %v3902 = vsub.f32 %v1005, %v3494
        %v3903 = vsub.f32 %v1008, %v3500
        %v3904 = vsub.f32 %v1005, %v3507
        %v3905 = vsub.f32 %v1008, %v3513
        %v3906 = vsub.f32 %v1005, %v3520
        %v3907 = vsub.f32 %v1008, %v3526
        %v3908 = vsub.f32 %v1005, %v3533
        %v3909 = vsub.f32 %v1008, %v3539
        %v3910 = vsub.f32 %v1005, %v3546
        %v3911 = vsub.f32 %v1008, %v3552
        %v3912 = vsub.f32 %v1005, %v3559
        %v3913 = vsub.f32 %v1008, %v3565
        %v3914 = vsub.f32 %v1005, %v3572
        %v3915 = vsub.f32 %v1008, %v3578
        %v3916 = vsub.f32 %v1005, %v3585
        %v3917 = vsub.f32 %v1008, %v3591
        %v3918 = vsub.f32 %v1005, %v3598
        %v3919 = vsub.f32 %v1008, %v3604
        %v3920 = vsub.f32 %v1005, %v3611
        %v3921 = vsub.f32 %v1008, %v3617
        %v3922 = vsub.f32 %v1005, %v3624
        %v3923 = vsub.f32 %v1008, %v3630
        %v3924 = vsub.f32 %v1005, %v3637
        %v3925 = vsub.f32 %v1008, %v3643
        %v3926 = vsub.f32 %v1005, %v3650
        %v3927 = vsub.f32 %v1008, %v3656
        %v3928 = vsub.f32 %v1005, %v3663
        %v3929 = vsub.f32 %v1008, %v3669
        %v3930 = vsub.f32 %v1005, %v3676
        %v3931 = vsub.f32 %v1008, %v3682
        %v3932 = vsub.f32 %v1005, %v3689
        %v3933 = vsub.f32 %v1008, %v3695
        %v3934 = vsub.f32 %v1005, %v3702
        %v3935 = vsub.f32 %v1008, %v3708
        %v3936 = vsub.f32 %v1005, %v3715
        %v3937 = vsub.f32 %v1008, %v3721
        %v3938 = vsub.f32 %v1005, %v3728
        %v3939 = vsub.f32 %v1008, %v3734
        %v3940 = vsub.f32 %v1005, %v3741
        %v3941 = vsub.f32 %v1008, %v3747
        %v3942 = vsub.f32 %v1005, %v3754
        %v3943 = vsub.f32 %v1008, %v3760
        %v3944 = vsub.f32 %v1005, %v3767
        %v3945 = vsub.f32 %v1008, %v3773
        %v3946 = vsub.f32 %v1005, %v3780
        %v3947 = vsub.f32 %v1008, %v3786
        %v3948 = vsub.f32 %v1005, %v3793
        %v3949 = vsub.f32 %v1008, %v3799
        %v3950 = vsub.f32 %v1005, %v3806
        %v3951 = vsub.f32 %v1008, %v3812
        %v3952 = vsub.f32 %v1005, %v3819
        %v3953 = vsub.f32 %v1008, %v3825
        %4018 = vset.pattern.permute.xlu0 0
        %4019 = vperm.xlu0 %4018, %v3890
        %v4020 = vpop.permute.xlu0 %4019
        %4021 = vset.pattern.permute.xlu0 0
        %4022 = vperm.xlu0 %4021, %v3891
        %v4023 = vpop.permute.xlu0 %4022
        %4024 = vset.pattern.permute.xlu0 0
        %4025 = vperm.xlu0 %4024, %v3892
        %v4026 = vpop.permute.xlu0 %4025
        %4027 = vset.pattern.permute.xlu0 0
        %4028 = vperm.xlu0 %4027, %v3893
        %v4029 = vpop.permute.xlu0 %4028
        %4030 = vset.pattern.permute.xlu0 0
        %4031 = vperm.xlu0 %4030, %v3894
        %v4032 = vpop.permute.xlu0 %4031
        %4033 = vset.pattern.permute.xlu0 0
        %4034 = vperm.xlu0 %4033, %v3895
        %v4035 = vpop.permute.xlu0 %4034
        %4036 = vset.pattern.permute.xlu0 0
        %4037 = vperm.xlu0 %4036, %v3896
        %v4038 = vpop.permute.xlu0 %4037
        %4039 = vset.pattern.permute.xlu0 0
        %4040 = vperm.xlu0 %4039, %v3897
        %v4041 = vpop.permute.xlu0 %4040
        %4042 = vset.pattern.permute.xlu0 0
        %4043 = vperm.xlu0 %4042, %v3898
        %v4044 = vpop.permute.xlu0 %4043
        %4045 = vset.pattern.permute.xlu0 0
        %4046 = vperm.xlu0 %4045, %v3899
        %v4047 = vpop.permute.xlu0 %4046
        %4048 = vset.pattern.permute.xlu0 0
        %4049 = vperm.xlu0 %4048, %v3900
        %v4050 = vpop.permute.xlu0 %4049
        %4051 = vset.pattern.permute.xlu0 0
        %4052 = vperm.xlu0 %4051, %v3901
        %v4053 = vpop.permute.xlu0 %4052
        %4054 = vset.pattern.permute.xlu0 0
        %4055 = vperm.xlu0 %4054, %v3902
        %v4056 = vpop.permute.xlu0 %4055
        %4057 = vset.pattern.permute.xlu0 0
        %4058 = vperm.xlu0 %4057, %v3903
        %v4059 = vpop.permute.xlu0 %4058
        %4060 = vset.pattern.permute.xlu0 0
        %4061 = vperm.xlu0 %4060, %v3904
        %v4062 = vpop.permute.xlu0 %4061
        %4063 = vset.pattern.permute.xlu0 0
        %4064 = vperm.xlu0 %4063, %v3905
        %v4065 = vpop.permute.xlu0 %4064
        %4066 = vset.pattern.permute.xlu0 0
        %4067 = vperm.xlu0 %4066, %v3906
        %v4068 = vpop.permute.xlu0 %4067
        %4069 = vset.pattern.permute.xlu0 0
        %4070 = vperm.xlu0 %4069, %v3907
        %v4071 = vpop.permute.xlu0 %4070
        %4072 = vset.pattern.permute.xlu0 0
        %4073 = vperm.xlu0 %4072, %v3908
        %v4074 = vpop.permute.xlu0 %4073
        %4075 = vset.pattern.permute.xlu0 0
        %4076 = vperm.xlu0 %4075, %v3909
        %v4077 = vpop.permute.xlu0 %4076
        %4078 = vset.pattern.permute.xlu0 0
        %4079 = vperm.xlu0 %4078, %v3910
        %v4080 = vpop.permute.xlu0 %4079
        %4081 = vset.pattern.permute.xlu0 0
        %4082 = vperm.xlu0 %4081, %v3911
        %v4083 = vpop.permute.xlu0 %4082
        %4084 = vset.pattern.permute.xlu0 0
        %4085 = vperm.xlu0 %4084, %v3912
        %v4086 = vpop.permute.xlu0 %4085
        %4087 = vset.pattern.permute.xlu0 0
        %4088 = vperm.xlu0 %4087, %v3913
        %v4089 = vpop.permute.xlu0 %4088
        %4090 = vset.pattern.permute.xlu0 0
        %4091 = vperm.xlu0 %4090, %v3914
        %v4092 = vpop.permute.xlu0 %4091
        %4093 = vset.pattern.permute.xlu0 0
        %4094 = vperm.xlu0 %4093, %v3915
        %v4095 = vpop.permute.xlu0 %4094
        %4096 = vset.pattern.permute.xlu0 0
        %4097 = vperm.xlu0 %4096, %v3916
        %v4098 = vpop.permute.xlu0 %4097
        %4099 = vset.pattern.permute.xlu0 0
        %4100 = vperm.xlu0 %4099, %v3917
        %v4101 = vpop.permute.xlu0 %4100
        %4102 = vset.pattern.permute.xlu0 0
        %4103 = vperm.xlu0 %4102, %v3918
        %v4104 = vpop.permute.xlu0 %4103
        %4105 = vset.pattern.permute.xlu0 0
        %4106 = vperm.xlu0 %4105, %v3919
        %v4107 = vpop.permute.xlu0 %4106
        %4108 = vset.pattern.permute.xlu0 0
        %4109 = vperm.xlu0 %4108, %v3920
        %v4110 = vpop.permute.xlu0 %4109
        %4111 = vset.pattern.permute.xlu0 0
        %4112 = vperm.xlu0 %4111, %v3921
        %v4113 = vpop.permute.xlu0 %4112
        %4114 = vset.pattern.permute.xlu0 0
        %4115 = vperm.xlu0 %4114, %v3922
        %v4116 = vpop.permute.xlu0 %4115
        %4117 = vset.pattern.permute.xlu0 0
        %4118 = vperm.xlu0 %4117, %v3923
        %v4119 = vpop.permute.xlu0 %4118
        %4120 = vset.pattern.permute.xlu0 0
        %4121 = vperm.xlu0 %4120, %v3924
        %v4122 = vpop.permute.xlu0 %4121
        %4123 = vset.pattern.permute.xlu0 0
        %4124 = vperm.xlu0 %4123, %v3925
        %v4125 = vpop.permute.xlu0 %4124
        %4126 = vset.pattern.permute.xlu0 0
        %4127 = vperm.xlu0 %4126, %v3926
        %v4128 = vpop.permute.xlu0 %4127
        %4129 = vset.pattern.permute.xlu0 0
        %4130 = vperm.xlu0 %4129, %v3927
        %v4131 = vpop.permute.xlu0 %4130
        %4132 = vset.pattern.permute.xlu0 0
        %4133 = vperm.xlu0 %4132, %v3928
        %v4134 = vpop.permute.xlu0 %4133
        %4135 = vset.pattern.permute.xlu0 0
        %4136 = vperm.xlu0 %4135, %v3929
        %v4137 = vpop.permute.xlu0 %4136
        %4138 = vset.pattern.permute.xlu0 0
        %4139 = vperm.xlu0 %4138, %v3930
        %v4140 = vpop.permute.xlu0 %4139
        %4141 = vset.pattern.permute.xlu0 0
        %4142 = vperm.xlu0 %4141, %v3931
        %v4143 = vpop.permute.xlu0 %4142
        %4144 = vset.pattern.permute.xlu0 0
        %4145 = vperm.xlu0 %4144, %v3932
        %v4146 = vpop.permute.xlu0 %4145
        %4147 = vset.pattern.permute.xlu0 0
        %4148 = vperm.xlu0 %4147, %v3933
        %v4149 = vpop.permute.xlu0 %4148
        %4150 = vset.pattern.permute.xlu0 0
        %4151 = vperm.xlu0 %4150, %v3934
        %v4152 = vpop.permute.xlu0 %4151
        %4153 = vset.pattern.permute.xlu0 0
        %4154 = vperm.xlu0 %4153, %v3935
        %v4155 = vpop.permute.xlu0 %4154
        %4156 = vset.pattern.permute.xlu0 0
        %4157 = vperm.xlu0 %4156, %v3936
        %v4158 = vpop.permute.xlu0 %4157
        %4159 = vset.pattern.permute.xlu0 0
        %4160 = vperm.xlu0 %4159, %v3937
        %v4161 = vpop.permute.xlu0 %4160
        %4162 = vset.pattern.permute.xlu0 0
        %4163 = vperm.xlu0 %4162, %v3938
        %v4164 = vpop.permute.xlu0 %4163
        %4165 = vset.pattern.permute.xlu0 0
        %4166 = vperm.xlu0 %4165, %v3939
        %v4167 = vpop.permute.xlu0 %4166
        %4168 = vset.pattern.permute.xlu0 0
        %4169 = vperm.xlu0 %4168, %v3940
        %v4170 = vpop.permute.xlu0 %4169
        %4171 = vset.pattern.permute.xlu0 0
        %4172 = vperm.xlu0 %4171, %v3941
        %v4173 = vpop.permute.xlu0 %4172
        %4174 = vset.pattern.permute.xlu0 0
        %4175 = vperm.xlu0 %4174, %v3942
        %v4176 = vpop.permute.xlu0 %4175
        %4177 = vset.pattern.permute.xlu0 0
        %4178 = vperm.xlu0 %4177, %v3943
        %v4179 = vpop.permute.xlu0 %4178
        %4180 = vset.pattern.permute.xlu0 0
        %4181 = vperm.xlu0 %4180, %v3944
        %v4182 = vpop.permute.xlu0 %4181
        %4183 = vset.pattern.permute.xlu0 0
        %4184 = vperm.xlu0 %4183, %v3945
        %v4185 = vpop.permute.xlu0 %4184
        %4186 = vset.pattern.permute.xlu0 0
        %4187 = vperm.xlu0 %4186, %v3946
        %v4188 = vpop.permute.xlu0 %4187
        %4189 = vset.pattern.permute.xlu0 0
        %4190 = vperm.xlu0 %4189, %v3947
        %v4191 = vpop.permute.xlu0 %4190
        %4192 = vset.pattern.permute.xlu0 0
        %4193 = vperm.xlu0 %4192, %v3948
        %v4194 = vpop.permute.xlu0 %4193
        %4195 = vset.pattern.permute.xlu0 0
        %4196 = vperm.xlu0 %4195, %v3949
        %v4197 = vpop.permute.xlu0 %4196
        %4198 = vset.pattern.permute.xlu0 0
        %4199 = vperm.xlu0 %4198, %v3950
        %v4200 = vpop.permute.xlu0 %4199
        %4201 = vset.pattern.permute.xlu0 0
        %4202 = vperm.xlu0 %4201, %v3951
        %v4203 = vpop.permute.xlu0 %4202
        %4204 = vset.pattern.permute.xlu0 0
        %4205 = vperm.xlu0 %4204, %v3952
        %v4206 = vpop.permute.xlu0 %4205
        %4207 = vset.pattern.permute.xlu0 0
        %4208 = vperm.xlu0 %4207, %v3953
        %v4209 = vpop.permute.xlu0 %4208
        %v4210 = vperm.slane %v4020, %v1022
        %v4211 = vperm.slane %v4023, %v2104
        %v4212 = vsel %vm2106, %v4211, %v4210
        %v4213 = vperm.slane %v4026, %v1022
        %v4214 = vperm.slane %v4029, %v2104
        %v4215 = vsel %vm2106, %v4214, %v4213
        %v4216 = vperm.slane %v4032, %v1022
        %v4217 = vperm.slane %v4035, %v2104
        %v4218 = vsel %vm2106, %v4217, %v4216
        %v4219 = vperm.slane %v4038, %v1022
        %v4220 = vperm.slane %v4041, %v2104
        %v4221 = vsel %vm2106, %v4220, %v4219
        %v4222 = vperm.slane %v4044, %v1022
        %v4223 = vperm.slane %v4047, %v2104
        %v4224 = vsel %vm2106, %v4223, %v4222
        %v4225 = vperm.slane %v4050, %v1022
        %v4226 = vperm.slane %v4053, %v2104
        %v4227 = vsel %vm2106, %v4226, %v4225
        %v4228 = vperm.slane %v4056, %v1022
        %v4229 = vperm.slane %v4059, %v2104
        %v4230 = vsel %vm2106, %v4229, %v4228
        %v4231 = vperm.slane %v4062, %v1022
        %v4232 = vperm.slane %v4065, %v2104
        %v4233 = vsel %vm2106, %v4232, %v4231
        %v4234 = vperm.slane %v4068, %v1022
        %v4235 = vperm.slane %v4071, %v2104
        %v4236 = vsel %vm2106, %v4235, %v4234
        %v4237 = vperm.slane %v4074, %v1022
        %v4238 = vperm.slane %v4077, %v2104
        %v4239 = vsel %vm2106, %v4238, %v4237
        %v4240 = vperm.slane %v4080, %v1022
        %v4241 = vperm.slane %v4083, %v2104
        %v4242 = vsel %vm2106, %v4241, %v4240
        %v4243 = vperm.slane %v4086, %v1022
        %v4244 = vperm.slane %v4089, %v2104
        %v4245 = vsel %vm2106, %v4244, %v4243
        %v4246 = vperm.slane %v4092, %v1022
        %v4247 = vperm.slane %v4095, %v2104
        %v4248 = vsel %vm2106, %v4247, %v4246
        %v4249 = vperm.slane %v4098, %v1022
        %v4250 = vperm.slane %v4101, %v2104
        %v4251 = vsel %vm2106, %v4250, %v4249
        %v4252 = vperm.slane %v4104, %v1022
        %v4253 = vperm.slane %v4107, %v2104
        %v4254 = vsel %vm2106, %v4253, %v4252
        %v4255 = vperm.slane %v4110, %v1022
        %v4256 = vperm.slane %v4113, %v2104
        %v4257 = vsel %vm2106, %v4256, %v4255
        %v4258 = vperm.slane %v4116, %v1022
        %v4259 = vperm.slane %v4119, %v2104
        %v4260 = vsel %vm2106, %v4259, %v4258
        %v4261 = vperm.slane %v4122, %v1022
        %v4262 = vperm.slane %v4125, %v2104
        %v4263 = vsel %vm2106, %v4262, %v4261
        %v4264 = vperm.slane %v4128, %v1022
        %v4265 = vperm.slane %v4131, %v2104
        %v4266 = vsel %vm2106, %v4265, %v4264
        %v4267 = vperm.slane %v4134, %v1022
        %v4268 = vperm.slane %v4137, %v2104
        %v4269 = vsel %vm2106, %v4268, %v4267
        %v4270 = vperm.slane %v4140, %v1022
        %v4271 = vperm.slane %v4143, %v2104
        %v4272 = vsel %vm2106, %v4271, %v4270
        %v4273 = vperm.slane %v4146, %v1022
        %v4274 = vperm.slane %v4149, %v2104
        %v4275 = vsel %vm2106, %v4274, %v4273
        %v4276 = vperm.slane %v4152, %v1022
        %v4277 = vperm.slane %v4155, %v2104
        %v4278 = vsel %vm2106, %v4277, %v4276
        %v4279 = vperm.slane %v4158, %v1022
        %v4280 = vperm.slane %v4161, %v2104
        %v4281 = vsel %vm2106, %v4280, %v4279
        %v4282 = vperm.slane %v4164, %v1022
        %v4283 = vperm.slane %v4167, %v2104
        %v4284 = vsel %vm2106, %v4283, %v4282
        %v4285 = vperm.slane %v4170, %v1022
        %v4286 = vperm.slane %v4173, %v2104
        %v4287 = vsel %vm2106, %v4286, %v4285
        %v4288 = vperm.slane %v4176, %v1022
        %v4289 = vperm.slane %v4179, %v2104
        %v4290 = vsel %vm2106, %v4289, %v4288
        %v4291 = vperm.slane %v4182, %v1022
        %v4292 = vperm.slane %v4185, %v2104
        %v4293 = vsel %vm2106, %v4292, %v4291
        %v4294 = vperm.slane %v4188, %v1022
        %v4295 = vperm.slane %v4191, %v2104
        %v4296 = vsel %vm2106, %v4295, %v4294
        %v4297 = vperm.slane %v4194, %v1022
        %v4298 = vperm.slane %v4197, %v2104
        %v4299 = vsel %vm2106, %v4298, %v4297
        %v4300 = vperm.slane %v4200, %v1022
        %v4301 = vperm.slane %v4203, %v2104
        %v4302 = vsel %vm2106, %v4301, %v4300
        %v4303 = vperm.slane %v4206, %v1022
        %v4304 = vperm.slane %v4209, %v2104
        %v4305 = vsel %vm2106, %v4304, %v4303
        %v4306 = vsel %vm2201, %v4215, %v4212
        %v4307 = vsel %vm2203, %v4218, %v4306
        %v4308 = vsel %vm2205, %v4221, %v4307
        %v4309 = vsel %vm2207, %v4224, %v4308
        %v4310 = vsel %vm2209, %v4227, %v4309
        %v4311 = vsel %vm2211, %v4230, %v4310
        %v4312 = vsel %vm2213, %v4233, %v4311
        %v4313 = vsel %vm2201, %v4239, %v4236
        %v4314 = vsel %vm2203, %v4242, %v4313
        %v4315 = vsel %vm2205, %v4245, %v4314
        %v4316 = vsel %vm2207, %v4248, %v4315
        %v4317 = vsel %vm2209, %v4251, %v4316
        %v4318 = vsel %vm2211, %v4254, %v4317
        %v4319 = vsel %vm2213, %v4257, %v4318
        %v4320 = vsel %vm2201, %v4263, %v4260
        %v4321 = vsel %vm2203, %v4266, %v4320
        %v4322 = vsel %vm2205, %v4269, %v4321
        %v4323 = vsel %vm2207, %v4272, %v4322
        %v4324 = vsel %vm2209, %v4275, %v4323
        %v4325 = vsel %vm2211, %v4278, %v4324
        %v4326 = vsel %vm2213, %v4281, %v4325
        %v4327 = vsel %vm2201, %v4287, %v4284
        %v4328 = vsel %vm2203, %v4290, %v4327
        %v4329 = vsel %vm2205, %v4293, %v4328
        %v4330 = vsel %vm2207, %v4296, %v4329
        %v4331 = vsel %vm2209, %v4299, %v4330
        %v4332 = vsel %vm2211, %v4302, %v4331
        %v4333 = vsel %vm2213, %v4305, %v4332
        %v4338 = vsel %vm715, %v4312, inf
        %4339 = vmin.xlane.f32.xlu0 %v4338
        %v4340 = vpop.xlane.xlu0 %4339
        %v4341 = vsel %vm715, %v4319, inf
        %4342 = vmin.xlane.f32.xlu0 %v4341
        %v4343 = vpop.xlane.xlu0 %4342
        %v4344 = vsel %vm715, %v4326, inf
        %4345 = vmin.xlane.f32.xlu0 %v4344
        %v4346 = vpop.xlane.xlu0 %4345
        %v4347 = vsel %vm715, %v4333, inf
        %4348 = vmin.xlane.f32.xlu0 %v4347
        %v4349 = vpop.xlane.xlu0 %4348
        %v4354 = vperm.slane %v4340, 0
        %v4355 = vperm.slane %v4340, 1
        %v4356 = vperm.slane %v4340, 2
        %v4357 = vperm.slane %v4340, 3
        %v4358 = vperm.slane %v4340, 4
        %v4359 = vperm.slane %v4340, 5
        %v4360 = vperm.slane %v4340, 6
        %v4361 = vperm.slane %v4340, 7
        %v4362 = vperm.slane %v4343, 0
        %v4363 = vperm.slane %v4343, 1
        %v4364 = vperm.slane %v4343, 2
        %v4365 = vperm.slane %v4343, 3
        %v4366 = vperm.slane %v4343, 4
        %v4367 = vperm.slane %v4343, 5
        %v4368 = vperm.slane %v4343, 6
        %v4369 = vperm.slane %v4343, 7
        %v4370 = vperm.slane %v4346, 0
        %v4371 = vperm.slane %v4346, 1
        %v4372 = vperm.slane %v4346, 2
        %v4373 = vperm.slane %v4346, 3
        %v4374 = vperm.slane %v4346, 4
        %v4375 = vperm.slane %v4346, 5
        %v4376 = vperm.slane %v4346, 6
        %v4377 = vperm.slane %v4346, 7
        %v4378 = vperm.slane %v4349, 0
        %v4379 = vperm.slane %v4349, 1
        %v4380 = vperm.slane %v4349, 2
        %v4381 = vperm.slane %v4349, 3
        %v4382 = vperm.slane %v4349, 4
        %v4383 = vperm.slane %v4349, 5
        %v4384 = vperm.slane %v4349, 6
        %v4385 = vperm.slane %v4349, 7
        %vm4418 = vcmp.le.f32.partialorder %v3890, %v4354
        %vm4419 = vcmp.le.f32.partialorder %v3891, %v4354
        %vm4420 = vcmp.le.f32.partialorder %v3892, %v4355
        %vm4421 = vcmp.le.f32.partialorder %v3893, %v4355
        %vm4422 = vcmp.le.f32.partialorder %v3894, %v4356
        %vm4423 = vcmp.le.f32.partialorder %v3895, %v4356
        %vm4424 = vcmp.le.f32.partialorder %v3896, %v4357
        %vm4425 = vcmp.le.f32.partialorder %v3897, %v4357
        %vm4426 = vcmp.le.f32.partialorder %v3898, %v4358
        %vm4427 = vcmp.le.f32.partialorder %v3899, %v4358
        %vm4428 = vcmp.le.f32.partialorder %v3900, %v4359
        %vm4429 = vcmp.le.f32.partialorder %v3901, %v4359
        %vm4430 = vcmp.le.f32.partialorder %v3902, %v4360
        %vm4431 = vcmp.le.f32.partialorder %v3903, %v4360
        %vm4432 = vcmp.le.f32.partialorder %v3904, %v4361
        %vm4433 = vcmp.le.f32.partialorder %v3905, %v4361
        %vm4434 = vcmp.le.f32.partialorder %v3906, %v4362
        %vm4435 = vcmp.le.f32.partialorder %v3907, %v4362
        %vm4436 = vcmp.le.f32.partialorder %v3908, %v4363
        %vm4437 = vcmp.le.f32.partialorder %v3909, %v4363
        %vm4438 = vcmp.le.f32.partialorder %v3910, %v4364
        %vm4439 = vcmp.le.f32.partialorder %v3911, %v4364
        %vm4440 = vcmp.le.f32.partialorder %v3912, %v4365
        %vm4441 = vcmp.le.f32.partialorder %v3913, %v4365
        %vm4442 = vcmp.le.f32.partialorder %v3914, %v4366
        %vm4443 = vcmp.le.f32.partialorder %v3915, %v4366
        %vm4444 = vcmp.le.f32.partialorder %v3916, %v4367
        %vm4445 = vcmp.le.f32.partialorder %v3917, %v4367
        %vm4446 = vcmp.le.f32.partialorder %v3918, %v4368
        %vm4447 = vcmp.le.f32.partialorder %v3919, %v4368
        %vm4448 = vcmp.le.f32.partialorder %v3920, %v4369
        %vm4449 = vcmp.le.f32.partialorder %v3921, %v4369
        %vm4450 = vcmp.le.f32.partialorder %v3922, %v4370
        %vm4451 = vcmp.le.f32.partialorder %v3923, %v4370
        %vm4452 = vcmp.le.f32.partialorder %v3924, %v4371
        %vm4453 = vcmp.le.f32.partialorder %v3925, %v4371
        %vm4454 = vcmp.le.f32.partialorder %v3926, %v4372
        %vm4455 = vcmp.le.f32.partialorder %v3927, %v4372
        %vm4456 = vcmp.le.f32.partialorder %v3928, %v4373
        %vm4457 = vcmp.le.f32.partialorder %v3929, %v4373
        %vm4458 = vcmp.le.f32.partialorder %v3930, %v4374
        %vm4459 = vcmp.le.f32.partialorder %v3931, %v4374
        %vm4460 = vcmp.le.f32.partialorder %v3932, %v4375
        %vm4461 = vcmp.le.f32.partialorder %v3933, %v4375
        %vm4462 = vcmp.le.f32.partialorder %v3934, %v4376
        %vm4463 = vcmp.le.f32.partialorder %v3935, %v4376
        %vm4464 = vcmp.le.f32.partialorder %v3936, %v4377
        %vm4465 = vcmp.le.f32.partialorder %v3937, %v4377
        %vm4466 = vcmp.le.f32.partialorder %v3938, %v4378
        %vm4467 = vcmp.le.f32.partialorder %v3939, %v4378
        %vm4468 = vcmp.le.f32.partialorder %v3940, %v4379
        %vm4469 = vcmp.le.f32.partialorder %v3941, %v4379
        %vm4470 = vcmp.le.f32.partialorder %v3942, %v4380
        %vm4471 = vcmp.le.f32.partialorder %v3943, %v4380
        %vm4472 = vcmp.le.f32.partialorder %v3944, %v4381
        %vm4473 = vcmp.le.f32.partialorder %v3945, %v4381
        %vm4474 = vcmp.le.f32.partialorder %v3946, %v4382
        %vm4475 = vcmp.le.f32.partialorder %v3947, %v4382
        %vm4476 = vcmp.le.f32.partialorder %v3948, %v4383
        %vm4477 = vcmp.le.f32.partialorder %v3949, %v4383
        %vm4478 = vcmp.le.f32.partialorder %v3950, %v4384
        %vm4479 = vcmp.le.f32.partialorder %v3951, %v4384
        %vm4480 = vcmp.le.f32.partialorder %v3952, %v4385
        %vm4481 = vcmp.le.f32.partialorder %v3953, %v4385
        %v4482 = vsel %vm4418, %v2389, 16
        %v4483 = vsel %vm4419, %v2395, 16
        %v4484 = vsel %vm4420, %v2389, 16
        %v4485 = vsel %vm4421, %v2395, 16
        %v4486 = vsel %vm4422, %v2389, 16
        %v4487 = vsel %vm4423, %v2395, 16
        %v4488 = vsel %vm4424, %v2389, 16
        %v4489 = vsel %vm4425, %v2395, 16
        %v4490 = vsel %vm4426, %v2389, 16
        %v4491 = vsel %vm4427, %v2395, 16
        %v4492 = vsel %vm4428, %v2389, 16
        %v4493 = vsel %vm4429, %v2395, 16
        %v4494 = vsel %vm4430, %v2389, 16
        %v4495 = vsel %vm4431, %v2395, 16
        %v4496 = vsel %vm4432, %v2389, 16
        %v4497 = vsel %vm4433, %v2395, 16
        %v4498 = vsel %vm4434, %v2389, 16
        %v4499 = vsel %vm4435, %v2395, 16
        %v4500 = vsel %vm4436, %v2389, 16
        %v4501 = vsel %vm4437, %v2395, 16
        %v4502 = vsel %vm4438, %v2389, 16
        %v4503 = vsel %vm4439, %v2395, 16
        %v4504 = vsel %vm4440, %v2389, 16
        %v4505 = vsel %vm4441, %v2395, 16
        %v4506 = vsel %vm4442, %v2389, 16
        %v4507 = vsel %vm4443, %v2395, 16
        %v4508 = vsel %vm4444, %v2389, 16
        %v4509 = vsel %vm4445, %v2395, 16
        %v4510 = vsel %vm4446, %v2389, 16
        %v4511 = vsel %vm4447, %v2395, 16
        %v4512 = vsel %vm4448, %v2389, 16
        %v4513 = vsel %vm4449, %v2395, 16
        %v4514 = vsel %vm4450, %v2389, 16
        %v4515 = vsel %vm4451, %v2395, 16
        %v4516 = vsel %vm4452, %v2389, 16
        %v4517 = vsel %vm4453, %v2395, 16
        %v4518 = vsel %vm4454, %v2389, 16
        %v4519 = vsel %vm4455, %v2395, 16
        %v4520 = vsel %vm4456, %v2389, 16
        %v4521 = vsel %vm4457, %v2395, 16
        %v4522 = vsel %vm4458, %v2389, 16
        %v4523 = vsel %vm4459, %v2395, 16
        %v4524 = vsel %vm4460, %v2389, 16
        %v4525 = vsel %vm4461, %v2395, 16
        %v4526 = vsel %vm4462, %v2389, 16
        %v4527 = vsel %vm4463, %v2395, 16
        %v4528 = vsel %vm4464, %v2389, 16
        %v4529 = vsel %vm4465, %v2395, 16
        %v4530 = vsel %vm4466, %v2389, 16
        %v4531 = vsel %vm4467, %v2395, 16
        %v4532 = vsel %vm4468, %v2389, 16
        %v4533 = vsel %vm4469, %v2395, 16
        %v4534 = vsel %vm4470, %v2389, 16
        %v4535 = vsel %vm4471, %v2395, 16
        %v4536 = vsel %vm4472, %v2389, 16
        %v4537 = vsel %vm4473, %v2395, 16
        %v4538 = vsel %vm4474, %v2389, 16
        %v4539 = vsel %vm4475, %v2395, 16
        %v4540 = vsel %vm4476, %v2389, 16
        %v4541 = vsel %vm4477, %v2395, 16
        %v4542 = vsel %vm4478, %v2389, 16
        %v4543 = vsel %vm4479, %v2395, 16
        %v4544 = vsel %vm4480, %v2389, 16
        %v4545 = vsel %vm4481, %v2395, 16
        %4546 = vset.pattern.permute.xlu0 0
        %4547 = vperm.xlu0 %4546, %v4482
        %v4548 = vpop.permute.xlu0 %4547
        %4549 = vset.pattern.permute.xlu0 0
        %4550 = vperm.xlu0 %4549, %v4483
        %v4551 = vpop.permute.xlu0 %4550
        %4552 = vset.pattern.permute.xlu0 0
        %4553 = vperm.xlu0 %4552, %v4484
        %v4554 = vpop.permute.xlu0 %4553
        %4555 = vset.pattern.permute.xlu0 0
        %4556 = vperm.xlu0 %4555, %v4485
        %v4557 = vpop.permute.xlu0 %4556
        %4558 = vset.pattern.permute.xlu0 0
        %4559 = vperm.xlu0 %4558, %v4486
        %v4560 = vpop.permute.xlu0 %4559
        %4561 = vset.pattern.permute.xlu0 0
        %4562 = vperm.xlu0 %4561, %v4487
        %v4563 = vpop.permute.xlu0 %4562
        %4564 = vset.pattern.permute.xlu0 0
        %4565 = vperm.xlu0 %4564, %v4488
        %v4566 = vpop.permute.xlu0 %4565
        %4567 = vset.pattern.permute.xlu0 0
        %4568 = vperm.xlu0 %4567, %v4489
        %v4569 = vpop.permute.xlu0 %4568
        %4570 = vset.pattern.permute.xlu0 0
        %4571 = vperm.xlu0 %4570, %v4490
        %v4572 = vpop.permute.xlu0 %4571
        %4573 = vset.pattern.permute.xlu0 0
        %4574 = vperm.xlu0 %4573, %v4491
        %v4575 = vpop.permute.xlu0 %4574
        %4576 = vset.pattern.permute.xlu0 0
        %4577 = vperm.xlu0 %4576, %v4492
        %v4578 = vpop.permute.xlu0 %4577
        %4579 = vset.pattern.permute.xlu0 0
        %4580 = vperm.xlu0 %4579, %v4493
        %v4581 = vpop.permute.xlu0 %4580
        %4582 = vset.pattern.permute.xlu0 0
        %4583 = vperm.xlu0 %4582, %v4494
        %v4584 = vpop.permute.xlu0 %4583
        %4585 = vset.pattern.permute.xlu0 0
        %4586 = vperm.xlu0 %4585, %v4495
        %v4587 = vpop.permute.xlu0 %4586
        %4588 = vset.pattern.permute.xlu0 0
        %4589 = vperm.xlu0 %4588, %v4496
        %v4590 = vpop.permute.xlu0 %4589
        %4591 = vset.pattern.permute.xlu0 0
        %4592 = vperm.xlu0 %4591, %v4497
        %v4593 = vpop.permute.xlu0 %4592
        %4594 = vset.pattern.permute.xlu0 0
        %4595 = vperm.xlu0 %4594, %v4498
        %v4596 = vpop.permute.xlu0 %4595
        %4597 = vset.pattern.permute.xlu0 0
        %4598 = vperm.xlu0 %4597, %v4499
        %v4599 = vpop.permute.xlu0 %4598
        %4600 = vset.pattern.permute.xlu0 0
        %4601 = vperm.xlu0 %4600, %v4500
        %v4602 = vpop.permute.xlu0 %4601
        %4603 = vset.pattern.permute.xlu0 0
        %4604 = vperm.xlu0 %4603, %v4501
        %v4605 = vpop.permute.xlu0 %4604
        %4606 = vset.pattern.permute.xlu0 0
        %4607 = vperm.xlu0 %4606, %v4502
        %v4608 = vpop.permute.xlu0 %4607
        %4609 = vset.pattern.permute.xlu0 0
        %4610 = vperm.xlu0 %4609, %v4503
        %v4611 = vpop.permute.xlu0 %4610
        %4612 = vset.pattern.permute.xlu0 0
        %4613 = vperm.xlu0 %4612, %v4504
        %v4614 = vpop.permute.xlu0 %4613
        %4615 = vset.pattern.permute.xlu0 0
        %4616 = vperm.xlu0 %4615, %v4505
        %v4617 = vpop.permute.xlu0 %4616
        %4618 = vset.pattern.permute.xlu0 0
        %4619 = vperm.xlu0 %4618, %v4506
        %v4620 = vpop.permute.xlu0 %4619
        %4621 = vset.pattern.permute.xlu0 0
        %4622 = vperm.xlu0 %4621, %v4507
        %v4623 = vpop.permute.xlu0 %4622
        %4624 = vset.pattern.permute.xlu0 0
        %4625 = vperm.xlu0 %4624, %v4508
        %v4626 = vpop.permute.xlu0 %4625
        %4627 = vset.pattern.permute.xlu0 0
        %4628 = vperm.xlu0 %4627, %v4509
        %v4629 = vpop.permute.xlu0 %4628
        %4630 = vset.pattern.permute.xlu0 0
        %4631 = vperm.xlu0 %4630, %v4510
        %v4632 = vpop.permute.xlu0 %4631
        %4633 = vset.pattern.permute.xlu0 0
        %4634 = vperm.xlu0 %4633, %v4511
        %v4635 = vpop.permute.xlu0 %4634
        %4636 = vset.pattern.permute.xlu0 0
        %4637 = vperm.xlu0 %4636, %v4512
        %v4638 = vpop.permute.xlu0 %4637
        %4639 = vset.pattern.permute.xlu0 0
        %4640 = vperm.xlu0 %4639, %v4513
        %v4641 = vpop.permute.xlu0 %4640
        %4642 = vset.pattern.permute.xlu0 0
        %4643 = vperm.xlu0 %4642, %v4514
        %v4644 = vpop.permute.xlu0 %4643
        %4645 = vset.pattern.permute.xlu0 0
        %4646 = vperm.xlu0 %4645, %v4515
        %v4647 = vpop.permute.xlu0 %4646
        %4648 = vset.pattern.permute.xlu0 0
        %4649 = vperm.xlu0 %4648, %v4516
        %v4650 = vpop.permute.xlu0 %4649
        %4651 = vset.pattern.permute.xlu0 0
        %4652 = vperm.xlu0 %4651, %v4517
        %v4653 = vpop.permute.xlu0 %4652
        %4654 = vset.pattern.permute.xlu0 0
        %4655 = vperm.xlu0 %4654, %v4518
        %v4656 = vpop.permute.xlu0 %4655
        %4657 = vset.pattern.permute.xlu0 0
        %4658 = vperm.xlu0 %4657, %v4519
        %v4659 = vpop.permute.xlu0 %4658
        %4660 = vset.pattern.permute.xlu0 0
        %4661 = vperm.xlu0 %4660, %v4520
        %v4662 = vpop.permute.xlu0 %4661
        %4663 = vset.pattern.permute.xlu0 0
        %4664 = vperm.xlu0 %4663, %v4521
        %v4665 = vpop.permute.xlu0 %4664
        %4666 = vset.pattern.permute.xlu0 0
        %4667 = vperm.xlu0 %4666, %v4522
        %v4668 = vpop.permute.xlu0 %4667
        %4669 = vset.pattern.permute.xlu0 0
        %4670 = vperm.xlu0 %4669, %v4523
        %v4671 = vpop.permute.xlu0 %4670
        %4672 = vset.pattern.permute.xlu0 0
        %4673 = vperm.xlu0 %4672, %v4524
        %v4674 = vpop.permute.xlu0 %4673
        %4675 = vset.pattern.permute.xlu0 0
        %4676 = vperm.xlu0 %4675, %v4525
        %v4677 = vpop.permute.xlu0 %4676
        %4678 = vset.pattern.permute.xlu0 0
        %4679 = vperm.xlu0 %4678, %v4526
        %v4680 = vpop.permute.xlu0 %4679
        %4681 = vset.pattern.permute.xlu0 0
        %4682 = vperm.xlu0 %4681, %v4527
        %v4683 = vpop.permute.xlu0 %4682
        %4684 = vset.pattern.permute.xlu0 0
        %4685 = vperm.xlu0 %4684, %v4528
        %v4686 = vpop.permute.xlu0 %4685
        %4687 = vset.pattern.permute.xlu0 0
        %4688 = vperm.xlu0 %4687, %v4529
        %v4689 = vpop.permute.xlu0 %4688
        %4690 = vset.pattern.permute.xlu0 0
        %4691 = vperm.xlu0 %4690, %v4530
        %v4692 = vpop.permute.xlu0 %4691
        %4693 = vset.pattern.permute.xlu0 0
        %4694 = vperm.xlu0 %4693, %v4531
        %v4695 = vpop.permute.xlu0 %4694
        %4696 = vset.pattern.permute.xlu0 0
        %4697 = vperm.xlu0 %4696, %v4532
        %v4698 = vpop.permute.xlu0 %4697
        %4699 = vset.pattern.permute.xlu0 0
        %4700 = vperm.xlu0 %4699, %v4533
        %v4701 = vpop.permute.xlu0 %4700
        %4702 = vset.pattern.permute.xlu0 0
        %4703 = vperm.xlu0 %4702, %v4534
        %v4704 = vpop.permute.xlu0 %4703
        %4705 = vset.pattern.permute.xlu0 0
        %4706 = vperm.xlu0 %4705, %v4535
        %v4707 = vpop.permute.xlu0 %4706
        %4708 = vset.pattern.permute.xlu0 0
        %4709 = vperm.xlu0 %4708, %v4536
        %v4710 = vpop.permute.xlu0 %4709
        %4711 = vset.pattern.permute.xlu0 0
        %4712 = vperm.xlu0 %4711, %v4537
        %v4713 = vpop.permute.xlu0 %4712
        %4714 = vset.pattern.permute.xlu0 0
        %4715 = vperm.xlu0 %4714, %v4538
        %v4716 = vpop.permute.xlu0 %4715
        %4717 = vset.pattern.permute.xlu0 0
        %4718 = vperm.xlu0 %4717, %v4539
        %v4719 = vpop.permute.xlu0 %4718
        %4720 = vset.pattern.permute.xlu0 0
        %4721 = vperm.xlu0 %4720, %v4540
        %v4722 = vpop.permute.xlu0 %4721
        %4723 = vset.pattern.permute.xlu0 0
        %4724 = vperm.xlu0 %4723, %v4541
        %v4725 = vpop.permute.xlu0 %4724
        %4726 = vset.pattern.permute.xlu0 0
        %4727 = vperm.xlu0 %4726, %v4542
        %v4728 = vpop.permute.xlu0 %4727
        %4729 = vset.pattern.permute.xlu0 0
        %4730 = vperm.xlu0 %4729, %v4543
        %v4731 = vpop.permute.xlu0 %4730
        %4732 = vset.pattern.permute.xlu0 0
        %4733 = vperm.xlu0 %4732, %v4544
        %v4734 = vpop.permute.xlu0 %4733
        %4735 = vset.pattern.permute.xlu0 0
        %4736 = vperm.xlu0 %4735, %v4545
        %v4737 = vpop.permute.xlu0 %4736
        %v4738 = vperm.slane %v4548, %v1022
        %v4739 = vperm.slane %v4551, %v2104
        %v4740 = vsel %vm2106, %v4739, %v4738
        %v4741 = vperm.slane %v4554, %v1022
        %v4742 = vperm.slane %v4557, %v2104
        %v4743 = vsel %vm2106, %v4742, %v4741
        %v4744 = vperm.slane %v4560, %v1022
        %v4745 = vperm.slane %v4563, %v2104
        %v4746 = vsel %vm2106, %v4745, %v4744
        %v4747 = vperm.slane %v4566, %v1022
        %v4748 = vperm.slane %v4569, %v2104
        %v4749 = vsel %vm2106, %v4748, %v4747
        %v4750 = vperm.slane %v4572, %v1022
        %v4751 = vperm.slane %v4575, %v2104
        %v4752 = vsel %vm2106, %v4751, %v4750
        %v4753 = vperm.slane %v4578, %v1022
        %v4754 = vperm.slane %v4581, %v2104
        %v4755 = vsel %vm2106, %v4754, %v4753
        %v4756 = vperm.slane %v4584, %v1022
        %v4757 = vperm.slane %v4587, %v2104
        %v4758 = vsel %vm2106, %v4757, %v4756
        %v4759 = vperm.slane %v4590, %v1022
        %v4760 = vperm.slane %v4593, %v2104
        %v4761 = vsel %vm2106, %v4760, %v4759
        %v4762 = vperm.slane %v4596, %v1022
        %v4763 = vperm.slane %v4599, %v2104
        %v4764 = vsel %vm2106, %v4763, %v4762
        %v4765 = vperm.slane %v4602, %v1022
        %v4766 = vperm.slane %v4605, %v2104
        %v4767 = vsel %vm2106, %v4766, %v4765
        %v4768 = vperm.slane %v4608, %v1022
        %v4769 = vperm.slane %v4611, %v2104
        %v4770 = vsel %vm2106, %v4769, %v4768
        %v4771 = vperm.slane %v4614, %v1022
        %v4772 = vperm.slane %v4617, %v2104
        %v4773 = vsel %vm2106, %v4772, %v4771
        %v4774 = vperm.slane %v4620, %v1022
        %v4775 = vperm.slane %v4623, %v2104
        %v4776 = vsel %vm2106, %v4775, %v4774
        %v4777 = vperm.slane %v4626, %v1022
        %v4778 = vperm.slane %v4629, %v2104
        %v4779 = vsel %vm2106, %v4778, %v4777
        %v4780 = vperm.slane %v4632, %v1022
        %v4781 = vperm.slane %v4635, %v2104
        %v4782 = vsel %vm2106, %v4781, %v4780
        %v4783 = vperm.slane %v4638, %v1022
        %v4784 = vperm.slane %v4641, %v2104
        %v4785 = vsel %vm2106, %v4784, %v4783
        %v4786 = vperm.slane %v4644, %v1022
        %v4787 = vperm.slane %v4647, %v2104
        %v4788 = vsel %vm2106, %v4787, %v4786
        %v4789 = vperm.slane %v4650, %v1022
        %v4790 = vperm.slane %v4653, %v2104
        %v4791 = vsel %vm2106, %v4790, %v4789
        %v4792 = vperm.slane %v4656, %v1022
        %v4793 = vperm.slane %v4659, %v2104
        %v4794 = vsel %vm2106, %v4793, %v4792
        %v4795 = vperm.slane %v4662, %v1022
        %v4796 = vperm.slane %v4665, %v2104
        %v4797 = vsel %vm2106, %v4796, %v4795
        %v4798 = vperm.slane %v4668, %v1022
        %v4799 = vperm.slane %v4671, %v2104
        %v4800 = vsel %vm2106, %v4799, %v4798
        %v4801 = vperm.slane %v4674, %v1022
        %v4802 = vperm.slane %v4677, %v2104
        %v4803 = vsel %vm2106, %v4802, %v4801
        %v4804 = vperm.slane %v4680, %v1022
        %v4805 = vperm.slane %v4683, %v2104
        %v4806 = vsel %vm2106, %v4805, %v4804
        %v4807 = vperm.slane %v4686, %v1022
        %v4808 = vperm.slane %v4689, %v2104
        %v4809 = vsel %vm2106, %v4808, %v4807
        %v4810 = vperm.slane %v4692, %v1022
        %v4811 = vperm.slane %v4695, %v2104
        %v4812 = vsel %vm2106, %v4811, %v4810
        %v4813 = vperm.slane %v4698, %v1022
        %v4814 = vperm.slane %v4701, %v2104
        %v4815 = vsel %vm2106, %v4814, %v4813
        %v4816 = vperm.slane %v4704, %v1022
        %v4817 = vperm.slane %v4707, %v2104
        %v4818 = vsel %vm2106, %v4817, %v4816
        %v4819 = vperm.slane %v4710, %v1022
        %v4820 = vperm.slane %v4713, %v2104
        %v4821 = vsel %vm2106, %v4820, %v4819
        %v4822 = vperm.slane %v4716, %v1022
        %v4823 = vperm.slane %v4719, %v2104
        %v4824 = vsel %vm2106, %v4823, %v4822
        %v4825 = vperm.slane %v4722, %v1022
        %v4826 = vperm.slane %v4725, %v2104
        %v4827 = vsel %vm2106, %v4826, %v4825
        %v4828 = vperm.slane %v4728, %v1022
        %v4829 = vperm.slane %v4731, %v2104
        %v4830 = vsel %vm2106, %v4829, %v4828
        %v4831 = vperm.slane %v4734, %v1022
        %v4832 = vperm.slane %v4737, %v2104
        %v4833 = vsel %vm2106, %v4832, %v4831
        %v4834 = vsel %vm2201, %v4743, %v4740
        %v4835 = vsel %vm2203, %v4746, %v4834
        %v4836 = vsel %vm2205, %v4749, %v4835
        %v4837 = vsel %vm2207, %v4752, %v4836
        %v4838 = vsel %vm2209, %v4755, %v4837
        %v4839 = vsel %vm2211, %v4758, %v4838
        %v4840 = vsel %vm2213, %v4761, %v4839
        %v4841 = vsel %vm2201, %v4767, %v4764
        %v4842 = vsel %vm2203, %v4770, %v4841
        %v4843 = vsel %vm2205, %v4773, %v4842
        %v4844 = vsel %vm2207, %v4776, %v4843
        %v4845 = vsel %vm2209, %v4779, %v4844
        %v4846 = vsel %vm2211, %v4782, %v4845
        %v4847 = vsel %vm2213, %v4785, %v4846
        %v4848 = vsel %vm2201, %v4791, %v4788
        %v4849 = vsel %vm2203, %v4794, %v4848
        %v4850 = vsel %vm2205, %v4797, %v4849
        %v4851 = vsel %vm2207, %v4800, %v4850
        %v4852 = vsel %vm2209, %v4803, %v4851
        %v4853 = vsel %vm2211, %v4806, %v4852
        %v4854 = vsel %vm2213, %v4809, %v4853
        %v4855 = vsel %vm2201, %v4815, %v4812
        %v4856 = vsel %vm2203, %v4818, %v4855
        %v4857 = vsel %vm2205, %v4821, %v4856
        %v4858 = vsel %vm2207, %v4824, %v4857
        %v4859 = vsel %vm2209, %v4827, %v4858
        %v4860 = vsel %vm2211, %v4830, %v4859
        %v4861 = vsel %vm2213, %v4833, %v4860
        %v4862 = vsel %vm715, %v4840, 2147483647
        %v4863 = vand.u32 %v4862, 65535
        %v4864 = vshra.s32 %v4862, 16
        %v4865 = vcvt.s32.f32 %v4863
        %v4866 = vcvt.s32.f32 %v4864
        %4867 = vmin.xlane.f32.xlu0 %v4866
        %v4868 = vpop.xlane.xlu0 %4867
        %vm4869 = vcmp.eq.f32.partialorder %v4866, %v4868
        %v4870 = vsel %vm4869, %v4865, inf
        %4871 = vmin.xlane.f32.xlu0 %v4870
        %v4872 = vpop.xlane.xlu0 %4871
        %v4873 = vcvt.f32.s32 %v4872
        %v4874 = vcvt.f32.s32 %v4868
        %v4875 = vshll.u32 %v4874, 16
        %v4876 = vadd.s32 %v4875, %v4873
        %v4877 = vsel %vm715, %v4847, 2147483647
        %v4878 = vand.u32 %v4877, 65535
        %v4879 = vshra.s32 %v4877, 16
        %v4880 = vcvt.s32.f32 %v4878
        %v4881 = vcvt.s32.f32 %v4879
        %4882 = vmin.xlane.f32.xlu0 %v4881
        %v4883 = vpop.xlane.xlu0 %4882
        %vm4884 = vcmp.eq.f32.partialorder %v4881, %v4883
        %v4885 = vsel %vm4884, %v4880, inf
        %4886 = vmin.xlane.f32.xlu0 %v4885
        %v4887 = vpop.xlane.xlu0 %4886
        %v4888 = vcvt.f32.s32 %v4887
        %v4889 = vcvt.f32.s32 %v4883
        %v4890 = vshll.u32 %v4889, 16
        %v4891 = vadd.s32 %v4890, %v4888
        %v4892 = vsel %vm715, %v4854, 2147483647
        %v4893 = vand.u32 %v4892, 65535
        %v4894 = vshra.s32 %v4892, 16
        %v4895 = vcvt.s32.f32 %v4893
        %v4896 = vcvt.s32.f32 %v4894
        %4897 = vmin.xlane.f32.xlu0 %v4896
        %v4898 = vpop.xlane.xlu0 %4897
        %vm4899 = vcmp.eq.f32.partialorder %v4896, %v4898
        %v4900 = vsel %vm4899, %v4895, inf
        %4901 = vmin.xlane.f32.xlu0 %v4900
        %v4902 = vpop.xlane.xlu0 %4901
        %v4903 = vcvt.f32.s32 %v4902
        %v4904 = vcvt.f32.s32 %v4898
        %v4905 = vshll.u32 %v4904, 16
        %v4906 = vadd.s32 %v4905, %v4903
        %v4907 = vsel %vm715, %v4861, 2147483647
        %v4908 = vand.u32 %v4907, 65535
        %v4909 = vshra.s32 %v4907, 16
        %v4910 = vcvt.s32.f32 %v4908
        %v4911 = vcvt.s32.f32 %v4909
        %4912 = vmin.xlane.f32.xlu0 %v4911
        %v4913 = vpop.xlane.xlu0 %4912
        %vm4914 = vcmp.eq.f32.partialorder %v4911, %v4913
        %v4915 = vsel %vm4914, %v4910, inf
        %4916 = vmin.xlane.f32.xlu0 %v4915
        %v4917 = vpop.xlane.xlu0 %4916
        %v4918 = vcvt.f32.s32 %v4917
        %v4919 = vcvt.f32.s32 %v4913
        %v4920 = vshll.u32 %v4919, 16
        %v4921 = vadd.s32 %v4920, %v4918
        %vm4922 = vcmp.eq.s32.totalorder %v1022, %v4876
        %vm4923 = vcmp.eq.s32.totalorder %v1022, %v4891
        %vm4924 = vcmp.eq.s32.totalorder %v1022, %v4906
        %vm4925 = vcmp.eq.s32.totalorder %v1022, %v4921
        %v4926 = vsel %vm4922, 1.0, 0.0
        %v4927 = vsel %vm4923, 1.0, 0.0
        %v4928 = vsel %vm4924, 1.0, 0.0
        %v4929 = vsel %vm4925, 1.0, 0.0
        %v4931 = vsel %vm715, %v4926, 0
        %v4934 = vsel %vm715, %v4927, 0
        %v4937 = vsel %vm715, %v4928, 0
        %v4940 = vsel %vm715, %v4929, 0
        %4942 = vmatpush.msra.mxu0 0.0
        %4943 = vmatpush.msra.mxu0 0.0
        %4944 = vmatpush.msra.mxu0 0.0
        %4945 = vmatpush.msra.mxu0 0.0
        %4946 = vmatpush.msra.mxu0 0.0
        %4947 = vmatpush.msra.mxu0 0.0
        %4948 = vmatpush.msra.mxu0 0.0
        %4949 = vmatpush.msra.mxu0 0.0
        %4950 = vmatpush.msra.mxu0 0.0
        %4951 = vmatpush.msra.mxu0 0.0
        %4952 = vmatpush.msra.mxu0 0.0
        %4953 = vmatpush.msra.mxu0 0.0
        %4954 = vmatpush.msra.mxu0 0.0
        %4955 = vmatpush.msra.mxu0 0.0
        %v4956 = vand.u32 %v3131, 4294901760
        %4957 = vmatpush.msra.mxu0 %v4956
        %v4958 = vand.u32 %v3130, 4294901760
        %4959 = vmatpush.msra.mxu0 %v4958
        %v4960 = vand.u32 %v4931, 4294901760
        %v4961 = vsub.f32 %v4931, %v4960
        %v4962 = vand.u32 %v4961, 4294901760
        %v4963 = vsub.f32 %v4961, %v4962
        %v4964 = vand.u32 %v4963, 4294901760
        %4965 = vmatmul.f32.gmra.mxu0 %v4964
        %v4966 = vpop.f32.mrf.mxu0
        %v4967 = vadd.f32 0.0, %v4966
        %v4968 = vand.u32 %v4934, 4294901760
        %v4969 = vsub.f32 %v4934, %v4968
        %v4970 = vand.u32 %v4969, 4294901760
        %v4971 = vsub.f32 %v4969, %v4970
        %v4972 = vand.u32 %v4971, 4294901760
        %4973 = vmatmul.f32.gmra.mxu0 %v4972
        %v4974 = vpop.f32.mrf.mxu0
        %v4975 = vadd.f32 0.0, %v4974
        %v4976 = vand.u32 %v4937, 4294901760
        %v4977 = vsub.f32 %v4937, %v4976
        %v4978 = vand.u32 %v4977, 4294901760
        %v4979 = vsub.f32 %v4977, %v4978
        %v4980 = vand.u32 %v4979, 4294901760
        %4981 = vmatmul.f32.gmra.mxu0 %v4980
        %v4982 = vpop.f32.mrf.mxu0
        %v4983 = vadd.f32 0.0, %v4982
        %v4984 = vand.u32 %v4940, 4294901760
        %v4985 = vsub.f32 %v4940, %v4984
        %v4986 = vand.u32 %v4985, 4294901760
        %v4987 = vsub.f32 %v4985, %v4986
        %v4988 = vand.u32 %v4987, 4294901760
        %4989 = vmatmul.f32.gmra.mxu0 %v4988
        %v4990 = vpop.f32.mrf.mxu0
        %v4991 = vadd.f32 0.0, %v4990
        %4992 = vdwg.mxu0
        %4993 = vmatpush.msra.mxu0 0.0
        %4994 = vmatpush.msra.mxu0 0.0
        %4995 = vmatpush.msra.mxu0 0.0
        %4996 = vmatpush.msra.mxu0 0.0
        %4997 = vmatpush.msra.mxu0 0.0
        %4998 = vmatpush.msra.mxu0 0.0
        %4999 = vmatpush.msra.mxu0 0.0
        %5000 = vmatpush.msra.mxu0 0.0
        %5001 = vmatpush.msra.mxu0 0.0
        %5002 = vmatpush.msra.mxu0 0.0
        %5003 = vmatpush.msra.mxu0 0.0
        %5004 = vmatpush.msra.mxu0 0.0
        %5005 = vmatpush.msra.mxu0 0.0
        %5006 = vmatpush.msra.mxu0 0.0
        %v5007 = vand.u32 %v3131, 4294901760
        %v5008 = vsub.f32 %v3131, %v5007
        %v5009 = vand.u32 %v5008, 4294901760
        %v5010 = vsub.f32 %v5008, %v5009
        %v5011 = vand.u32 %v5010, 4294901760
        %5012 = vmatpush.msra.mxu0 %v5011
        %v5013 = vand.u32 %v3130, 4294901760
        %v5014 = vsub.f32 %v3130, %v5013
        %v5015 = vand.u32 %v5014, 4294901760
        %v5016 = vsub.f32 %v5014, %v5015
        %v5017 = vand.u32 %v5016, 4294901760
        %5018 = vmatpush.msra.mxu0 %v5017
        %v5019 = vand.u32 %v4931, 4294901760
        %5020 = vmatmul.f32.gmra.mxu0 %v5019
        %v5021 = vpop.f32.mrf.mxu0
        %v5022 = vadd.f32 %v4967, %v5021
        %v5023 = vand.u32 %v4934, 4294901760
        %5024 = vmatmul.f32.gmra.mxu0 %v5023
        %v5025 = vpop.f32.mrf.mxu0
        %v5026 = vadd.f32 %v4975, %v5025
        %v5027 = vand.u32 %v4937, 4294901760
        %5028 = vmatmul.f32.gmra.mxu0 %v5027
        %v5029 = vpop.f32.mrf.mxu0
        %v5030 = vadd.f32 %v4983, %v5029
        %v5031 = vand.u32 %v4940, 4294901760
        %5032 = vmatmul.f32.gmra.mxu0 %v5031
        %v5033 = vpop.f32.mrf.mxu0
        %v5034 = vadd.f32 %v4991, %v5033
        %5035 = vdwg.mxu0
        %5036 = vmatpush.msra.mxu0 0.0
        %5037 = vmatpush.msra.mxu0 0.0
        %5038 = vmatpush.msra.mxu0 0.0
        %5039 = vmatpush.msra.mxu0 0.0
        %5040 = vmatpush.msra.mxu0 0.0
        %5041 = vmatpush.msra.mxu0 0.0
        %5042 = vmatpush.msra.mxu0 0.0
        %5043 = vmatpush.msra.mxu0 0.0
        %5044 = vmatpush.msra.mxu0 0.0
        %5045 = vmatpush.msra.mxu0 0.0
        %5046 = vmatpush.msra.mxu0 0.0
        %5047 = vmatpush.msra.mxu0 0.0
        %5048 = vmatpush.msra.mxu0 0.0
        %5049 = vmatpush.msra.mxu0 0.0
        %v5050 = vand.u32 %v3131, 4294901760
        %v5051 = vsub.f32 %v3131, %v5050
        %5052 = vmatpush.msra.mxu0 %v5051
        %v5053 = vand.u32 %v3130, 4294901760
        %v5054 = vsub.f32 %v3130, %v5053
        %5055 = vmatpush.msra.mxu0 %v5054
        %v5056 = vand.u32 %v4931, 4294901760
        %v5057 = vsub.f32 %v4931, %v5056
        %5058 = vmatmul.f32.gmra.mxu0 %v5057
        %v5059 = vpop.f32.mrf.mxu0
        %v5060 = vadd.f32 %v5022, %v5059
        %v5061 = vand.u32 %v4934, 4294901760
        %v5062 = vsub.f32 %v4934, %v5061
        %5063 = vmatmul.f32.gmra.mxu0 %v5062
        %v5064 = vpop.f32.mrf.mxu0
        %v5065 = vadd.f32 %v5026, %v5064
        %v5066 = vand.u32 %v4937, 4294901760
        %v5067 = vsub.f32 %v4937, %v5066
        %5068 = vmatmul.f32.gmra.mxu0 %v5067
        %v5069 = vpop.f32.mrf.mxu0
        %v5070 = vadd.f32 %v5030, %v5069
        %v5071 = vand.u32 %v4940, 4294901760
        %v5072 = vsub.f32 %v4940, %v5071
        %5073 = vmatmul.f32.gmra.mxu0 %v5072
        %v5074 = vpop.f32.mrf.mxu0
        %v5075 = vadd.f32 %v5034, %v5074
        %5076 = vdwg.mxu0
        %5077 = vmatpush.msra.mxu0 0.0
        %5078 = vmatpush.msra.mxu0 0.0
        %5079 = vmatpush.msra.mxu0 0.0
        %5080 = vmatpush.msra.mxu0 0.0
        %5081 = vmatpush.msra.mxu0 0.0
        %5082 = vmatpush.msra.mxu0 0.0
        %5083 = vmatpush.msra.mxu0 0.0
        %5084 = vmatpush.msra.mxu0 0.0
        %5085 = vmatpush.msra.mxu0 0.0
        %5086 = vmatpush.msra.mxu0 0.0
        %5087 = vmatpush.msra.mxu0 0.0
        %5088 = vmatpush.msra.mxu0 0.0
        %5089 = vmatpush.msra.mxu0 0.0
        %5090 = vmatpush.msra.mxu0 0.0
        %v5091 = vand.u32 %v3131, 4294901760
        %5092 = vmatpush.msra.mxu0 %v5091
        %v5093 = vand.u32 %v3130, 4294901760
        %5094 = vmatpush.msra.mxu0 %v5093
        %v5095 = vand.u32 %v4931, 4294901760
        %v5096 = vsub.f32 %v4931, %v5095
        %v5097 = vand.u32 %v5096, 4294901760
        %5098 = vmatmul.f32.gmra.mxu0 %v5097
        %v5099 = vpop.f32.mrf.mxu0
        %v5100 = vadd.f32 %v5060, %v5099
        %v5101 = vand.u32 %v4934, 4294901760
        %v5102 = vsub.f32 %v4934, %v5101
        %v5103 = vand.u32 %v5102, 4294901760
        %5104 = vmatmul.f32.gmra.mxu0 %v5103
        %v5105 = vpop.f32.mrf.mxu0
        %v5106 = vadd.f32 %v5065, %v5105
        %v5107 = vand.u32 %v4937, 4294901760
        %v5108 = vsub.f32 %v4937, %v5107
        %v5109 = vand.u32 %v5108, 4294901760
        %5110 = vmatmul.f32.gmra.mxu0 %v5109
        %v5111 = vpop.f32.mrf.mxu0
        %v5112 = vadd.f32 %v5070, %v5111
        %v5113 = vand.u32 %v4940, 4294901760
        %v5114 = vsub.f32 %v4940, %v5113
        %v5115 = vand.u32 %v5114, 4294901760
        %5116 = vmatmul.f32.gmra.mxu0 %v5115
        %v5117 = vpop.f32.mrf.mxu0
        %v5118 = vadd.f32 %v5075, %v5117
        %5119 = vdwg.mxu0
        %5120 = vmatpush.msra.mxu0 0.0
        %5121 = vmatpush.msra.mxu0 0.0
        %5122 = vmatpush.msra.mxu0 0.0
        %5123 = vmatpush.msra.mxu0 0.0
        %5124 = vmatpush.msra.mxu0 0.0
        %5125 = vmatpush.msra.mxu0 0.0
        %5126 = vmatpush.msra.mxu0 0.0
        %5127 = vmatpush.msra.mxu0 0.0
        %5128 = vmatpush.msra.mxu0 0.0
        %5129 = vmatpush.msra.mxu0 0.0
        %5130 = vmatpush.msra.mxu0 0.0
        %5131 = vmatpush.msra.mxu0 0.0
        %5132 = vmatpush.msra.mxu0 0.0
        %5133 = vmatpush.msra.mxu0 0.0
        %v5134 = vand.u32 %v3131, 4294901760
        %v5135 = vsub.f32 %v3131, %v5134
        %v5136 = vand.u32 %v5135, 4294901760
        %5137 = vmatpush.msra.mxu0 %v5136
        %v5138 = vand.u32 %v3130, 4294901760
        %v5139 = vsub.f32 %v3130, %v5138
        %v5140 = vand.u32 %v5139, 4294901760
        %5141 = vmatpush.msra.mxu0 %v5140
        %v5142 = vand.u32 %v4931, 4294901760
        %5143 = vmatmul.f32.gmra.mxu0 %v5142
        %v5144 = vpop.f32.mrf.mxu0
        %v5145 = vadd.f32 %v5100, %v5144
        %v5146 = vand.u32 %v4934, 4294901760
        %5147 = vmatmul.f32.gmra.mxu0 %v5146
        %v5148 = vpop.f32.mrf.mxu0
        %v5149 = vadd.f32 %v5106, %v5148
        %v5150 = vand.u32 %v4937, 4294901760
        %5151 = vmatmul.f32.gmra.mxu0 %v5150
        %v5152 = vpop.f32.mrf.mxu0
        %v5153 = vadd.f32 %v5112, %v5152
        %v5154 = vand.u32 %v4940, 4294901760
        %5155 = vmatmul.f32.gmra.mxu0 %v5154
        %v5156 = vpop.f32.mrf.mxu0
        %v5157 = vadd.f32 %v5118, %v5156
        %5158 = vdwg.mxu0
        %5159 = vmatpush.msra.mxu0 0.0
        %5160 = vmatpush.msra.mxu0 0.0
        %5161 = vmatpush.msra.mxu0 0.0
        %5162 = vmatpush.msra.mxu0 0.0
        %5163 = vmatpush.msra.mxu0 0.0
        %5164 = vmatpush.msra.mxu0 0.0
        %5165 = vmatpush.msra.mxu0 0.0
        %5166 = vmatpush.msra.mxu0 0.0
        %5167 = vmatpush.msra.mxu0 0.0
        %5168 = vmatpush.msra.mxu0 0.0
        %5169 = vmatpush.msra.mxu0 0.0
        %5170 = vmatpush.msra.mxu0 0.0
        %5171 = vmatpush.msra.mxu0 0.0
        %5172 = vmatpush.msra.mxu0 0.0
        %v5173 = vand.u32 %v3131, 4294901760
        %5174 = vmatpush.msra.mxu0 %v5173
        %v5175 = vand.u32 %v3130, 4294901760
        %5176 = vmatpush.msra.mxu0 %v5175
        %v5177 = vand.u32 %v4931, 4294901760
        %5178 = vmatmul.f32.gmra.mxu0 %v5177
        %v5179 = vpop.f32.mrf.mxu0
        %v5180 = vadd.f32 %v5145, %v5179
        %v5181 = vand.u32 %v4934, 4294901760
        %5182 = vmatmul.f32.gmra.mxu0 %v5181
        %v5183 = vpop.f32.mrf.mxu0
        %v5184 = vadd.f32 %v5149, %v5183
        %v5185 = vand.u32 %v4937, 4294901760
        %5186 = vmatmul.f32.gmra.mxu0 %v5185
        %v5187 = vpop.f32.mrf.mxu0
        %v5188 = vadd.f32 %v5153, %v5187
        %v5189 = vand.u32 %v4940, 4294901760
        %5190 = vmatmul.f32.gmra.mxu0 %v5189
        %v5191 = vpop.f32.mrf.mxu0
        %v5192 = vadd.f32 %v5157, %v5191
        %5193 = vdwg.mxu0
        %v5194 = vsub.f32 %v3108, %v5180
        %v5195 = vsub.f32 %v3109, %v5184
        %v5196 = vsub.f32 %v3110, %v5188
        %v5197 = vsub.f32 %v3111, %v5192
        %v5198 = vmul.f32 %v5194, %v5194
        %v5199 = vmul.f32 %v5195, %v5195
        %v5200 = vmul.f32 %v5196, %v5196
        %v5201 = vmul.f32 %v5197, %v5197
        %v5202 = vadd.f32 %v3116, %v5198
        %v5203 = vadd.f32 %v3117, %v5199
        %v5204 = vadd.f32 %v3118, %v5200
        %v5205 = vadd.f32 %v3119, %v5201
        %v5206 = vadd.f32 %v3120, %v5180
        %v5207 = vadd.f32 %v3121, %v5184
        %v5208 = vadd.f32 %v3122, %v5188
        %v5209 = vadd.f32 %v3123, %v5192
        %vm5210 = vcmp.eq.s32.totalorder %v1022, 1
        %v5211 = vsel %vm5210, %v4876, %v3125
        %v5212 = vsel %vm5210, %v4891, %v3126
        %v5213 = vsel %vm5210, %v4906, %v3127
        %v5214 = vsel %vm5210, %v4921, %v3128
        %s5215 = scalar_lea.vmem %s5, 32
        %v5216 = vld [vmem:[%s5215] sm:$0xff]
        %v5217 = vld [vmem:[%s5215 + $0x8] sm:$0xff]
        %v5219 = vsel %vm996, %v5194, 0
        %v5222 = vsel %vm996, %v5195, 0
        %v5225 = vsel %vm996, %v5196, 0
        %v5228 = vsel %vm996, %v5197, 0
        %v5231 = vsel %vm996, %v5216, 0
        %v5234 = vsel %vm996, %v5217, 0
        %5236 = vmatpush.xpose.msra.mxu0 0.0
        %5237 = vmatpush.xpose.msra.mxu0 0.0
        %5238 = vmatpush.xpose.msra.mxu0 0.0
        %5239 = vmatpush.xpose.msra.mxu0 0.0
        %5240 = vmatpush.xpose.msra.mxu0 0.0
        %5241 = vmatpush.xpose.msra.mxu0 0.0
        %5242 = vmatpush.xpose.msra.mxu0 0.0
        %5243 = vmatpush.xpose.msra.mxu0 0.0
        %5244 = vmatpush.xpose.msra.mxu0 0.0
        %5245 = vmatpush.xpose.msra.mxu0 0.0
        %5246 = vmatpush.xpose.msra.mxu0 0.0
        %5247 = vmatpush.xpose.msra.mxu0 0.0
        %5248 = vmatpush.xpose.msra.mxu0 0.0
        %5249 = vmatpush.xpose.msra.mxu0 0.0
        %v5250 = vand.u32 %v5234, 4294901760
        %5251 = vmatpush.xpose.msra.mxu0 %v5250
        %v5252 = vand.u32 %v5231, 4294901760
        %5253 = vmatpush.xpose.msra.mxu0 %v5252
        %v5254 = vand.u32 %v5219, 4294901760
        %v5255 = vsub.f32 %v5219, %v5254
        %v5256 = vand.u32 %v5255, 4294901760
        %v5257 = vsub.f32 %v5255, %v5256
        %v5258 = vand.u32 %v5257, 4294901760
        %5259 = vmatmul.f32.gmra.mxu0 %v5258
        %v5260 = vpop.f32.mrf.mxu0
        %v5261 = vadd.f32 0.0, %v5260
        %v5262 = vand.u32 %v5222, 4294901760
        %v5263 = vsub.f32 %v5222, %v5262
        %v5264 = vand.u32 %v5263, 4294901760
        %v5265 = vsub.f32 %v5263, %v5264
        %v5266 = vand.u32 %v5265, 4294901760
        %5267 = vmatmul.f32.gmra.mxu0 %v5266
        %v5268 = vpop.f32.mrf.mxu0
        %v5269 = vadd.f32 0.0, %v5268
        %v5270 = vand.u32 %v5225, 4294901760
        %v5271 = vsub.f32 %v5225, %v5270
        %v5272 = vand.u32 %v5271, 4294901760
        %v5273 = vsub.f32 %v5271, %v5272
        %v5274 = vand.u32 %v5273, 4294901760
        %5275 = vmatmul.f32.gmra.mxu0 %v5274
        %v5276 = vpop.f32.mrf.mxu0
        %v5277 = vadd.f32 0.0, %v5276
        %v5278 = vand.u32 %v5228, 4294901760
        %v5279 = vsub.f32 %v5228, %v5278
        %v5280 = vand.u32 %v5279, 4294901760
        %v5281 = vsub.f32 %v5279, %v5280
        %v5282 = vand.u32 %v5281, 4294901760
        %5283 = vmatmul.f32.gmra.mxu0 %v5282
        %v5284 = vpop.f32.mrf.mxu0
        %v5285 = vadd.f32 0.0, %v5284
        %5286 = vdwg.mxu0
        %5287 = vmatpush.xpose.msra.mxu0 0.0
        %5288 = vmatpush.xpose.msra.mxu0 0.0
        %5289 = vmatpush.xpose.msra.mxu0 0.0
        %5290 = vmatpush.xpose.msra.mxu0 0.0
        %5291 = vmatpush.xpose.msra.mxu0 0.0
        %5292 = vmatpush.xpose.msra.mxu0 0.0
        %5293 = vmatpush.xpose.msra.mxu0 0.0
        %5294 = vmatpush.xpose.msra.mxu0 0.0
        %5295 = vmatpush.xpose.msra.mxu0 0.0
        %5296 = vmatpush.xpose.msra.mxu0 0.0
        %5297 = vmatpush.xpose.msra.mxu0 0.0
        %5298 = vmatpush.xpose.msra.mxu0 0.0
        %5299 = vmatpush.xpose.msra.mxu0 0.0
        %5300 = vmatpush.xpose.msra.mxu0 0.0
        %v5301 = vand.u32 %v5234, 4294901760
        %v5302 = vsub.f32 %v5234, %v5301
        %v5303 = vand.u32 %v5302, 4294901760
        %v5304 = vsub.f32 %v5302, %v5303
        %v5305 = vand.u32 %v5304, 4294901760
        %5306 = vmatpush.xpose.msra.mxu0 %v5305
        %v5307 = vand.u32 %v5231, 4294901760
        %v5308 = vsub.f32 %v5231, %v5307
        %v5309 = vand.u32 %v5308, 4294901760
        %v5310 = vsub.f32 %v5308, %v5309
        %v5311 = vand.u32 %v5310, 4294901760
        %5312 = vmatpush.xpose.msra.mxu0 %v5311
        %v5313 = vand.u32 %v5219, 4294901760
        %5314 = vmatmul.f32.gmra.mxu0 %v5313
        %v5315 = vpop.f32.mrf.mxu0
        %v5316 = vadd.f32 %v5261, %v5315
        %v5317 = vand.u32 %v5222, 4294901760
        %5318 = vmatmul.f32.gmra.mxu0 %v5317
        %v5319 = vpop.f32.mrf.mxu0
        %v5320 = vadd.f32 %v5269, %v5319
        %v5321 = vand.u32 %v5225, 4294901760
        %5322 = vmatmul.f32.gmra.mxu0 %v5321
        %v5323 = vpop.f32.mrf.mxu0
        %v5324 = vadd.f32 %v5277, %v5323
        %v5325 = vand.u32 %v5228, 4294901760
        %5326 = vmatmul.f32.gmra.mxu0 %v5325
        %v5327 = vpop.f32.mrf.mxu0
        %v5328 = vadd.f32 %v5285, %v5327
        %5329 = vdwg.mxu0
        %5330 = vmatpush.xpose.msra.mxu0 0.0
        %5331 = vmatpush.xpose.msra.mxu0 0.0
        %5332 = vmatpush.xpose.msra.mxu0 0.0
        %5333 = vmatpush.xpose.msra.mxu0 0.0
        %5334 = vmatpush.xpose.msra.mxu0 0.0
        %5335 = vmatpush.xpose.msra.mxu0 0.0
        %5336 = vmatpush.xpose.msra.mxu0 0.0
        %5337 = vmatpush.xpose.msra.mxu0 0.0
        %5338 = vmatpush.xpose.msra.mxu0 0.0
        %5339 = vmatpush.xpose.msra.mxu0 0.0
        %5340 = vmatpush.xpose.msra.mxu0 0.0
        %5341 = vmatpush.xpose.msra.mxu0 0.0
        %5342 = vmatpush.xpose.msra.mxu0 0.0
        %5343 = vmatpush.xpose.msra.mxu0 0.0
        %v5344 = vand.u32 %v5234, 4294901760
        %v5345 = vsub.f32 %v5234, %v5344
        %5346 = vmatpush.xpose.msra.mxu0 %v5345
        %v5347 = vand.u32 %v5231, 4294901760
        %v5348 = vsub.f32 %v5231, %v5347
        %5349 = vmatpush.xpose.msra.mxu0 %v5348
        %v5350 = vand.u32 %v5219, 4294901760
        %v5351 = vsub.f32 %v5219, %v5350
        %5352 = vmatmul.f32.gmra.mxu0 %v5351
        %v5353 = vpop.f32.mrf.mxu0
        %v5354 = vadd.f32 %v5316, %v5353
        %v5355 = vand.u32 %v5222, 4294901760
        %v5356 = vsub.f32 %v5222, %v5355
        %5357 = vmatmul.f32.gmra.mxu0 %v5356
        %v5358 = vpop.f32.mrf.mxu0
        %v5359 = vadd.f32 %v5320, %v5358
        %v5360 = vand.u32 %v5225, 4294901760
        %v5361 = vsub.f32 %v5225, %v5360
        %5362 = vmatmul.f32.gmra.mxu0 %v5361
        %v5363 = vpop.f32.mrf.mxu0
        %v5364 = vadd.f32 %v5324, %v5363
        %v5365 = vand.u32 %v5228, 4294901760
        %v5366 = vsub.f32 %v5228, %v5365
        %5367 = vmatmul.f32.gmra.mxu0 %v5366
        %v5368 = vpop.f32.mrf.mxu0
        %v5369 = vadd.f32 %v5328, %v5368
        %5370 = vdwg.mxu0
        %5371 = vmatpush.xpose.msra.mxu0 0.0
        %5372 = vmatpush.xpose.msra.mxu0 0.0
        %5373 = vmatpush.xpose.msra.mxu0 0.0
        %5374 = vmatpush.xpose.msra.mxu0 0.0
        %5375 = vmatpush.xpose.msra.mxu0 0.0
        %5376 = vmatpush.xpose.msra.mxu0 0.0
        %5377 = vmatpush.xpose.msra.mxu0 0.0
        %5378 = vmatpush.xpose.msra.mxu0 0.0
        %5379 = vmatpush.xpose.msra.mxu0 0.0
        %5380 = vmatpush.xpose.msra.mxu0 0.0
        %5381 = vmatpush.xpose.msra.mxu0 0.0
        %5382 = vmatpush.xpose.msra.mxu0 0.0
        %5383 = vmatpush.xpose.msra.mxu0 0.0
        %5384 = vmatpush.xpose.msra.mxu0 0.0
        %v5385 = vand.u32 %v5234, 4294901760
        %5386 = vmatpush.xpose.msra.mxu0 %v5385
        %v5387 = vand.u32 %v5231, 4294901760
        %5388 = vmatpush.xpose.msra.mxu0 %v5387
        %v5389 = vand.u32 %v5219, 4294901760
        %v5390 = vsub.f32 %v5219, %v5389
        %v5391 = vand.u32 %v5390, 4294901760
        %5392 = vmatmul.f32.gmra.mxu0 %v5391
        %v5393 = vpop.f32.mrf.mxu0
        %v5394 = vadd.f32 %v5354, %v5393
        %v5395 = vand.u32 %v5222, 4294901760
        %v5396 = vsub.f32 %v5222, %v5395
        %v5397 = vand.u32 %v5396, 4294901760
        %5398 = vmatmul.f32.gmra.mxu0 %v5397
        %v5399 = vpop.f32.mrf.mxu0
        %v5400 = vadd.f32 %v5359, %v5399
        %v5401 = vand.u32 %v5225, 4294901760
        %v5402 = vsub.f32 %v5225, %v5401
        %v5403 = vand.u32 %v5402, 4294901760
        %5404 = vmatmul.f32.gmra.mxu0 %v5403
        %v5405 = vpop.f32.mrf.mxu0
        %v5406 = vadd.f32 %v5364, %v5405
        %v5407 = vand.u32 %v5228, 4294901760
        %v5408 = vsub.f32 %v5228, %v5407
        %v5409 = vand.u32 %v5408, 4294901760
        %5410 = vmatmul.f32.gmra.mxu0 %v5409
        %v5411 = vpop.f32.mrf.mxu0
        %v5412 = vadd.f32 %v5369, %v5411
        %5413 = vdwg.mxu0
        %5414 = vmatpush.xpose.msra.mxu0 0.0
        %5415 = vmatpush.xpose.msra.mxu0 0.0
        %5416 = vmatpush.xpose.msra.mxu0 0.0
        %5417 = vmatpush.xpose.msra.mxu0 0.0
        %5418 = vmatpush.xpose.msra.mxu0 0.0
        %5419 = vmatpush.xpose.msra.mxu0 0.0
        %5420 = vmatpush.xpose.msra.mxu0 0.0
        %5421 = vmatpush.xpose.msra.mxu0 0.0
        %5422 = vmatpush.xpose.msra.mxu0 0.0
        %5423 = vmatpush.xpose.msra.mxu0 0.0
        %5424 = vmatpush.xpose.msra.mxu0 0.0
        %5425 = vmatpush.xpose.msra.mxu0 0.0
        %5426 = vmatpush.xpose.msra.mxu0 0.0
        %5427 = vmatpush.xpose.msra.mxu0 0.0
        %v5428 = vand.u32 %v5234, 4294901760
        %v5429 = vsub.f32 %v5234, %v5428
        %v5430 = vand.u32 %v5429, 4294901760
        %5431 = vmatpush.xpose.msra.mxu0 %v5430
        %v5432 = vand.u32 %v5231, 4294901760
        %v5433 = vsub.f32 %v5231, %v5432
        %v5434 = vand.u32 %v5433, 4294901760
        %5435 = vmatpush.xpose.msra.mxu0 %v5434
        %v5436 = vand.u32 %v5219, 4294901760
        %5437 = vmatmul.f32.gmra.mxu0 %v5436
        %v5438 = vpop.f32.mrf.mxu0
        %v5439 = vadd.f32 %v5394, %v5438
        %v5440 = vand.u32 %v5222, 4294901760
        %5441 = vmatmul.f32.gmra.mxu0 %v5440
        %v5442 = vpop.f32.mrf.mxu0
        %v5443 = vadd.f32 %v5400, %v5442
        %v5444 = vand.u32 %v5225, 4294901760
        %5445 = vmatmul.f32.gmra.mxu0 %v5444
        %v5446 = vpop.f32.mrf.mxu0
        %v5447 = vadd.f32 %v5406, %v5446
        %v5448 = vand.u32 %v5228, 4294901760
        %5449 = vmatmul.f32.gmra.mxu0 %v5448
        %v5450 = vpop.f32.mrf.mxu0
        %v5451 = vadd.f32 %v5412, %v5450
        %5452 = vdwg.mxu0
        %5453 = vmatpush.xpose.msra.mxu0 0.0
        %5454 = vmatpush.xpose.msra.mxu0 0.0
        %5455 = vmatpush.xpose.msra.mxu0 0.0
        %5456 = vmatpush.xpose.msra.mxu0 0.0
        %5457 = vmatpush.xpose.msra.mxu0 0.0
        %5458 = vmatpush.xpose.msra.mxu0 0.0
        %5459 = vmatpush.xpose.msra.mxu0 0.0
        %5460 = vmatpush.xpose.msra.mxu0 0.0
        %5461 = vmatpush.xpose.msra.mxu0 0.0
        %5462 = vmatpush.xpose.msra.mxu0 0.0
        %5463 = vmatpush.xpose.msra.mxu0 0.0
        %5464 = vmatpush.xpose.msra.mxu0 0.0
        %5465 = vmatpush.xpose.msra.mxu0 0.0
        %5466 = vmatpush.xpose.msra.mxu0 0.0
        %v5467 = vand.u32 %v5234, 4294901760
        %5468 = vmatpush.xpose.msra.mxu0 %v5467
        %v5469 = vand.u32 %v5231, 4294901760
        %5470 = vmatpush.xpose.msra.mxu0 %v5469
        %v5471 = vand.u32 %v5219, 4294901760
        %5472 = vmatmul.f32.gmra.mxu0 %v5471
        %v5473 = vpop.f32.mrf.mxu0
        %v5474 = vadd.f32 %v5439, %v5473
        %v5475 = vand.u32 %v5222, 4294901760
        %5476 = vmatmul.f32.gmra.mxu0 %v5475
        %v5477 = vpop.f32.mrf.mxu0
        %v5478 = vadd.f32 %v5443, %v5477
        %v5479 = vand.u32 %v5225, 4294901760
        %5480 = vmatmul.f32.gmra.mxu0 %v5479
        %v5481 = vpop.f32.mrf.mxu0
        %v5482 = vadd.f32 %v5447, %v5481
        %v5483 = vand.u32 %v5228, 4294901760
        %5484 = vmatmul.f32.gmra.mxu0 %v5483
        %v5485 = vpop.f32.mrf.mxu0
        %v5486 = vadd.f32 %v5451, %v5485
        %5487 = vdwg.mxu0
        %v5488 = vmul.f32 %v5474, 2.0
        %v5489 = vmul.f32 %v5478, 2.0
        %v5490 = vmul.f32 %v5482, 2.0
        %v5491 = vmul.f32 %v5486, 2.0
        %v5496 = vperm.slane %v5488, 0
        %v5497 = vlaneseq
        %v5498 = vshrl.u32 %v5497, 7
        %5500 = vset.pattern.permute.xlu0 %v5498
        %5501 = vperm.xlu0 %5500, %v5496
        %v5502 = vpop.permute.xlu0 %5501
        %v5503 = vlaneseq
        %v5504 = vshrl.u32 %v5503, 7
        %v5505 = vadd.s32 %v5504, 8
        %5506 = vset.pattern.permute.xlu0 %v5505
        %5507 = vperm.xlu0 %5506, %v5496
        %v5508 = vpop.permute.xlu0 %5507
        %v5509 = vperm.slane %v5488, 1
        %v5510 = vlaneseq
        %v5511 = vshrl.u32 %v5510, 7
        %5513 = vset.pattern.permute.xlu0 %v5511
        %5514 = vperm.xlu0 %5513, %v5509
        %v5515 = vpop.permute.xlu0 %5514
        %v5516 = vlaneseq
        %v5517 = vshrl.u32 %v5516, 7
        %v5518 = vadd.s32 %v5517, 8
        %5519 = vset.pattern.permute.xlu0 %v5518
        %5520 = vperm.xlu0 %5519, %v5509
        %v5521 = vpop.permute.xlu0 %5520
        %v5522 = vperm.slane %v5488, 2
        %v5523 = vlaneseq
        %v5524 = vshrl.u32 %v5523, 7
        %5526 = vset.pattern.permute.xlu0 %v5524
        %5527 = vperm.xlu0 %5526, %v5522
        %v5528 = vpop.permute.xlu0 %5527
        %v5529 = vlaneseq
        %v5530 = vshrl.u32 %v5529, 7
        %v5531 = vadd.s32 %v5530, 8
        %5532 = vset.pattern.permute.xlu0 %v5531
        %5533 = vperm.xlu0 %5532, %v5522
        %v5534 = vpop.permute.xlu0 %5533
        %v5535 = vperm.slane %v5488, 3
        %v5536 = vlaneseq
        %v5537 = vshrl.u32 %v5536, 7
        %5539 = vset.pattern.permute.xlu0 %v5537
        %5540 = vperm.xlu0 %5539, %v5535
        %v5541 = vpop.permute.xlu0 %5540
        %v5542 = vlaneseq
        %v5543 = vshrl.u32 %v5542, 7
        %v5544 = vadd.s32 %v5543, 8
        %5545 = vset.pattern.permute.xlu0 %v5544
        %5546 = vperm.xlu0 %5545, %v5535
        %v5547 = vpop.permute.xlu0 %5546
        %v5548 = vperm.slane %v5488, 4
        %v5549 = vlaneseq
        %v5550 = vshrl.u32 %v5549, 7
        %5552 = vset.pattern.permute.xlu0 %v5550
        %5553 = vperm.xlu0 %5552, %v5548
        %v5554 = vpop.permute.xlu0 %5553
        %v5555 = vlaneseq
        %v5556 = vshrl.u32 %v5555, 7
        %v5557 = vadd.s32 %v5556, 8
        %5558 = vset.pattern.permute.xlu0 %v5557
        %5559 = vperm.xlu0 %5558, %v5548
        %v5560 = vpop.permute.xlu0 %5559
        %v5561 = vperm.slane %v5488, 5
        %v5562 = vlaneseq
        %v5563 = vshrl.u32 %v5562, 7
        %5565 = vset.pattern.permute.xlu0 %v5563
        %5566 = vperm.xlu0 %5565, %v5561
        %v5567 = vpop.permute.xlu0 %5566
        %v5568 = vlaneseq
        %v5569 = vshrl.u32 %v5568, 7
        %v5570 = vadd.s32 %v5569, 8
        %5571 = vset.pattern.permute.xlu0 %v5570
        %5572 = vperm.xlu0 %5571, %v5561
        %v5573 = vpop.permute.xlu0 %5572
        %v5574 = vperm.slane %v5488, 6
        %v5575 = vlaneseq
        %v5576 = vshrl.u32 %v5575, 7
        %5578 = vset.pattern.permute.xlu0 %v5576
        %5579 = vperm.xlu0 %5578, %v5574
        %v5580 = vpop.permute.xlu0 %5579
        %v5581 = vlaneseq
        %v5582 = vshrl.u32 %v5581, 7
        %v5583 = vadd.s32 %v5582, 8
        %5584 = vset.pattern.permute.xlu0 %v5583
        %5585 = vperm.xlu0 %5584, %v5574
        %v5586 = vpop.permute.xlu0 %5585
        %v5587 = vperm.slane %v5488, 7
        %v5588 = vlaneseq
        %v5589 = vshrl.u32 %v5588, 7
        %5591 = vset.pattern.permute.xlu0 %v5589
        %5592 = vperm.xlu0 %5591, %v5587
        %v5593 = vpop.permute.xlu0 %5592
        %v5594 = vlaneseq
        %v5595 = vshrl.u32 %v5594, 7
        %v5596 = vadd.s32 %v5595, 8
        %5597 = vset.pattern.permute.xlu0 %v5596
        %5598 = vperm.xlu0 %5597, %v5587
        %v5599 = vpop.permute.xlu0 %5598
        %v5600 = vperm.slane %v5489, 0
        %v5601 = vlaneseq
        %v5602 = vshrl.u32 %v5601, 7
        %5604 = vset.pattern.permute.xlu0 %v5602
        %5605 = vperm.xlu0 %5604, %v5600
        %v5606 = vpop.permute.xlu0 %5605
        %v5607 = vlaneseq
        %v5608 = vshrl.u32 %v5607, 7
        %v5609 = vadd.s32 %v5608, 8
        %5610 = vset.pattern.permute.xlu0 %v5609
        %5611 = vperm.xlu0 %5610, %v5600
        %v5612 = vpop.permute.xlu0 %5611
        %v5613 = vperm.slane %v5489, 1
        %v5614 = vlaneseq
        %v5615 = vshrl.u32 %v5614, 7
        %5617 = vset.pattern.permute.xlu0 %v5615
        %5618 = vperm.xlu0 %5617, %v5613
        %v5619 = vpop.permute.xlu0 %5618
        %v5620 = vlaneseq
        %v5621 = vshrl.u32 %v5620, 7
        %v5622 = vadd.s32 %v5621, 8
        %5623 = vset.pattern.permute.xlu0 %v5622
        %5624 = vperm.xlu0 %5623, %v5613
        %v5625 = vpop.permute.xlu0 %5624
        %v5626 = vperm.slane %v5489, 2
        %v5627 = vlaneseq
        %v5628 = vshrl.u32 %v5627, 7
        %5630 = vset.pattern.permute.xlu0 %v5628
        %5631 = vperm.xlu0 %5630, %v5626
        %v5632 = vpop.permute.xlu0 %5631
        %v5633 = vlaneseq
        %v5634 = vshrl.u32 %v5633, 7
        %v5635 = vadd.s32 %v5634, 8
        %5636 = vset.pattern.permute.xlu0 %v5635
        %5637 = vperm.xlu0 %5636, %v5626
        %v5638 = vpop.permute.xlu0 %5637
        %v5639 = vperm.slane %v5489, 3
        %v5640 = vlaneseq
        %v5641 = vshrl.u32 %v5640, 7
        %5643 = vset.pattern.permute.xlu0 %v5641
        %5644 = vperm.xlu0 %5643, %v5639
        %v5645 = vpop.permute.xlu0 %5644
        %v5646 = vlaneseq
        %v5647 = vshrl.u32 %v5646, 7
        %v5648 = vadd.s32 %v5647, 8
        %5649 = vset.pattern.permute.xlu0 %v5648
        %5650 = vperm.xlu0 %5649, %v5639
        %v5651 = vpop.permute.xlu0 %5650
        %v5652 = vperm.slane %v5489, 4
        %v5653 = vlaneseq
        %v5654 = vshrl.u32 %v5653, 7
        %5656 = vset.pattern.permute.xlu0 %v5654
        %5657 = vperm.xlu0 %5656, %v5652
        %v5658 = vpop.permute.xlu0 %5657
        %v5659 = vlaneseq
        %v5660 = vshrl.u32 %v5659, 7
        %v5661 = vadd.s32 %v5660, 8
        %5662 = vset.pattern.permute.xlu0 %v5661
        %5663 = vperm.xlu0 %5662, %v5652
        %v5664 = vpop.permute.xlu0 %5663
        %v5665 = vperm.slane %v5489, 5
        %v5666 = vlaneseq
        %v5667 = vshrl.u32 %v5666, 7
        %5669 = vset.pattern.permute.xlu0 %v5667
        %5670 = vperm.xlu0 %5669, %v5665
        %v5671 = vpop.permute.xlu0 %5670
        %v5672 = vlaneseq
        %v5673 = vshrl.u32 %v5672, 7
        %v5674 = vadd.s32 %v5673, 8
        %5675 = vset.pattern.permute.xlu0 %v5674
        %5676 = vperm.xlu0 %5675, %v5665
        %v5677 = vpop.permute.xlu0 %5676
        %v5678 = vperm.slane %v5489, 6
        %v5679 = vlaneseq
        %v5680 = vshrl.u32 %v5679, 7
        %5682 = vset.pattern.permute.xlu0 %v5680
        %5683 = vperm.xlu0 %5682, %v5678
        %v5684 = vpop.permute.xlu0 %5683
        %v5685 = vlaneseq
        %v5686 = vshrl.u32 %v5685, 7
        %v5687 = vadd.s32 %v5686, 8
        %5688 = vset.pattern.permute.xlu0 %v5687
        %5689 = vperm.xlu0 %5688, %v5678
        %v5690 = vpop.permute.xlu0 %5689
        %v5691 = vperm.slane %v5489, 7
        %v5692 = vlaneseq
        %v5693 = vshrl.u32 %v5692, 7
        %5695 = vset.pattern.permute.xlu0 %v5693
        %5696 = vperm.xlu0 %5695, %v5691
        %v5697 = vpop.permute.xlu0 %5696
        %v5698 = vlaneseq
        %v5699 = vshrl.u32 %v5698, 7
        %v5700 = vadd.s32 %v5699, 8
        %5701 = vset.pattern.permute.xlu0 %v5700
        %5702 = vperm.xlu0 %5701, %v5691
        %v5703 = vpop.permute.xlu0 %5702
        %v5704 = vperm.slane %v5490, 0
        %v5705 = vlaneseq
        %v5706 = vshrl.u32 %v5705, 7
        %5708 = vset.pattern.permute.xlu0 %v5706
        %5709 = vperm.xlu0 %5708, %v5704
        %v5710 = vpop.permute.xlu0 %5709
        %v5711 = vlaneseq
        %v5712 = vshrl.u32 %v5711, 7
        %v5713 = vadd.s32 %v5712, 8
        %5714 = vset.pattern.permute.xlu0 %v5713
        %5715 = vperm.xlu0 %5714, %v5704
        %v5716 = vpop.permute.xlu0 %5715
        %v5717 = vperm.slane %v5490, 1
        %v5718 = vlaneseq
        %v5719 = vshrl.u32 %v5718, 7
        %5721 = vset.pattern.permute.xlu0 %v5719
        %5722 = vperm.xlu0 %5721, %v5717
        %v5723 = vpop.permute.xlu0 %5722
        %v5724 = vlaneseq
        %v5725 = vshrl.u32 %v5724, 7
        %v5726 = vadd.s32 %v5725, 8
        %5727 = vset.pattern.permute.xlu0 %v5726
        %5728 = vperm.xlu0 %5727, %v5717
        %v5729 = vpop.permute.xlu0 %5728
        %v5730 = vperm.slane %v5490, 2
        %v5731 = vlaneseq
        %v5732 = vshrl.u32 %v5731, 7
        %5734 = vset.pattern.permute.xlu0 %v5732
        %5735 = vperm.xlu0 %5734, %v5730
        %v5736 = vpop.permute.xlu0 %5735
        %v5737 = vlaneseq
        %v5738 = vshrl.u32 %v5737, 7
        %v5739 = vadd.s32 %v5738, 8
        %5740 = vset.pattern.permute.xlu0 %v5739
        %5741 = vperm.xlu0 %5740, %v5730
        %v5742 = vpop.permute.xlu0 %5741
        %v5743 = vperm.slane %v5490, 3
        %v5744 = vlaneseq
        %v5745 = vshrl.u32 %v5744, 7
        %5747 = vset.pattern.permute.xlu0 %v5745
        %5748 = vperm.xlu0 %5747, %v5743
        %v5749 = vpop.permute.xlu0 %5748
        %v5750 = vlaneseq
        %v5751 = vshrl.u32 %v5750, 7
        %v5752 = vadd.s32 %v5751, 8
        %5753 = vset.pattern.permute.xlu0 %v5752
        %5754 = vperm.xlu0 %5753, %v5743
        %v5755 = vpop.permute.xlu0 %5754
        %v5756 = vperm.slane %v5490, 4
        %v5757 = vlaneseq
        %v5758 = vshrl.u32 %v5757, 7
        %5760 = vset.pattern.permute.xlu0 %v5758
        %5761 = vperm.xlu0 %5760, %v5756
        %v5762 = vpop.permute.xlu0 %5761
        %v5763 = vlaneseq
        %v5764 = vshrl.u32 %v5763, 7
        %v5765 = vadd.s32 %v5764, 8
        %5766 = vset.pattern.permute.xlu0 %v5765
        %5767 = vperm.xlu0 %5766, %v5756
        %v5768 = vpop.permute.xlu0 %5767
        %v5769 = vperm.slane %v5490, 5
        %v5770 = vlaneseq
        %v5771 = vshrl.u32 %v5770, 7
        %5773 = vset.pattern.permute.xlu0 %v5771
        %5774 = vperm.xlu0 %5773, %v5769
        %v5775 = vpop.permute.xlu0 %5774
        %v5776 = vlaneseq
        %v5777 = vshrl.u32 %v5776, 7
        %v5778 = vadd.s32 %v5777, 8
        %5779 = vset.pattern.permute.xlu0 %v5778
        %5780 = vperm.xlu0 %5779, %v5769
        %v5781 = vpop.permute.xlu0 %5780
        %v5782 = vperm.slane %v5490, 6
        %v5783 = vlaneseq
        %v5784 = vshrl.u32 %v5783, 7
        %5786 = vset.pattern.permute.xlu0 %v5784
        %5787 = vperm.xlu0 %5786, %v5782
        %v5788 = vpop.permute.xlu0 %5787
        %v5789 = vlaneseq
        %v5790 = vshrl.u32 %v5789, 7
        %v5791 = vadd.s32 %v5790, 8
        %5792 = vset.pattern.permute.xlu0 %v5791
        %5793 = vperm.xlu0 %5792, %v5782
        %v5794 = vpop.permute.xlu0 %5793
        %v5795 = vperm.slane %v5490, 7
        %v5796 = vlaneseq
        %v5797 = vshrl.u32 %v5796, 7
        %5799 = vset.pattern.permute.xlu0 %v5797
        %5800 = vperm.xlu0 %5799, %v5795
        %v5801 = vpop.permute.xlu0 %5800
        %v5802 = vlaneseq
        %v5803 = vshrl.u32 %v5802, 7
        %v5804 = vadd.s32 %v5803, 8
        %5805 = vset.pattern.permute.xlu0 %v5804
        %5806 = vperm.xlu0 %5805, %v5795
        %v5807 = vpop.permute.xlu0 %5806
        %v5808 = vperm.slane %v5491, 0
        %v5809 = vlaneseq
        %v5810 = vshrl.u32 %v5809, 7
        %5812 = vset.pattern.permute.xlu0 %v5810
        %5813 = vperm.xlu0 %5812, %v5808
        %v5814 = vpop.permute.xlu0 %5813
        %v5815 = vlaneseq
        %v5816 = vshrl.u32 %v5815, 7
        %v5817 = vadd.s32 %v5816, 8
        %5818 = vset.pattern.permute.xlu0 %v5817
        %5819 = vperm.xlu0 %5818, %v5808
        %v5820 = vpop.permute.xlu0 %5819
        %v5821 = vperm.slane %v5491, 1
        %v5822 = vlaneseq
        %v5823 = vshrl.u32 %v5822, 7
        %5825 = vset.pattern.permute.xlu0 %v5823
        %5826 = vperm.xlu0 %5825, %v5821
        %v5827 = vpop.permute.xlu0 %5826
        %v5828 = vlaneseq
        %v5829 = vshrl.u32 %v5828, 7
        %v5830 = vadd.s32 %v5829, 8
        %5831 = vset.pattern.permute.xlu0 %v5830
        %5832 = vperm.xlu0 %5831, %v5821
        %v5833 = vpop.permute.xlu0 %5832
        %v5834 = vperm.slane %v5491, 2
        %v5835 = vlaneseq
        %v5836 = vshrl.u32 %v5835, 7
        %5838 = vset.pattern.permute.xlu0 %v5836
        %5839 = vperm.xlu0 %5838, %v5834
        %v5840 = vpop.permute.xlu0 %5839
        %v5841 = vlaneseq
        %v5842 = vshrl.u32 %v5841, 7
        %v5843 = vadd.s32 %v5842, 8
        %5844 = vset.pattern.permute.xlu0 %v5843
        %5845 = vperm.xlu0 %5844, %v5834
        %v5846 = vpop.permute.xlu0 %5845
        %v5847 = vperm.slane %v5491, 3
        %v5848 = vlaneseq
        %v5849 = vshrl.u32 %v5848, 7
        %5851 = vset.pattern.permute.xlu0 %v5849
        %5852 = vperm.xlu0 %5851, %v5847
        %v5853 = vpop.permute.xlu0 %5852
        %v5854 = vlaneseq
        %v5855 = vshrl.u32 %v5854, 7
        %v5856 = vadd.s32 %v5855, 8
        %5857 = vset.pattern.permute.xlu0 %v5856
        %5858 = vperm.xlu0 %5857, %v5847
        %v5859 = vpop.permute.xlu0 %5858
        %v5860 = vperm.slane %v5491, 4
        %v5861 = vlaneseq
        %v5862 = vshrl.u32 %v5861, 7
        %5864 = vset.pattern.permute.xlu0 %v5862
        %5865 = vperm.xlu0 %5864, %v5860
        %v5866 = vpop.permute.xlu0 %5865
        %v5867 = vlaneseq
        %v5868 = vshrl.u32 %v5867, 7
        %v5869 = vadd.s32 %v5868, 8
        %5870 = vset.pattern.permute.xlu0 %v5869
        %5871 = vperm.xlu0 %5870, %v5860
        %v5872 = vpop.permute.xlu0 %5871
        %v5873 = vperm.slane %v5491, 5
        %v5874 = vlaneseq
        %v5875 = vshrl.u32 %v5874, 7
        %5877 = vset.pattern.permute.xlu0 %v5875
        %5878 = vperm.xlu0 %5877, %v5873
        %v5879 = vpop.permute.xlu0 %5878
        %v5880 = vlaneseq
        %v5881 = vshrl.u32 %v5880, 7
        %v5882 = vadd.s32 %v5881, 8
        %5883 = vset.pattern.permute.xlu0 %v5882
        %5884 = vperm.xlu0 %5883, %v5873
        %v5885 = vpop.permute.xlu0 %5884
        %v5886 = vperm.slane %v5491, 6
        %v5887 = vlaneseq
        %v5888 = vshrl.u32 %v5887, 7
        %5890 = vset.pattern.permute.xlu0 %v5888
        %5891 = vperm.xlu0 %5890, %v5886
        %v5892 = vpop.permute.xlu0 %5891
        %v5893 = vlaneseq
        %v5894 = vshrl.u32 %v5893, 7
        %v5895 = vadd.s32 %v5894, 8
        %5896 = vset.pattern.permute.xlu0 %v5895
        %5897 = vperm.xlu0 %5896, %v5886
        %v5898 = vpop.permute.xlu0 %5897
        %v5899 = vperm.slane %v5491, 7
        %v5900 = vlaneseq
        %v5901 = vshrl.u32 %v5900, 7
        %5903 = vset.pattern.permute.xlu0 %v5901
        %5904 = vperm.xlu0 %5903, %v5899
        %v5905 = vpop.permute.xlu0 %5904
        %v5906 = vlaneseq
        %v5907 = vshrl.u32 %v5906, 7
        %v5908 = vadd.s32 %v5907, 8
        %5909 = vset.pattern.permute.xlu0 %v5908
        %5910 = vperm.xlu0 %5909, %v5899
        %v5911 = vpop.permute.xlu0 %5910
        %v5976 = vsub.f32 %v1011, %v5502
        %v5977 = vsub.f32 %v1014, %v5508
        %v5978 = vsub.f32 %v1011, %v5515
        %v5979 = vsub.f32 %v1014, %v5521
        %v5980 = vsub.f32 %v1011, %v5528
        %v5981 = vsub.f32 %v1014, %v5534
        %v5982 = vsub.f32 %v1011, %v5541
        %v5983 = vsub.f32 %v1014, %v5547
        %v5984 = vsub.f32 %v1011, %v5554
        %v5985 = vsub.f32 %v1014, %v5560
        %v5986 = vsub.f32 %v1011, %v5567
        %v5987 = vsub.f32 %v1014, %v5573
        %v5988 = vsub.f32 %v1011, %v5580
        %v5989 = vsub.f32 %v1014, %v5586
        %v5990 = vsub.f32 %v1011, %v5593
        %v5991 = vsub.f32 %v1014, %v5599
        %v5992 = vsub.f32 %v1011, %v5606
        %v5993 = vsub.f32 %v1014, %v5612
        %v5994 = vsub.f32 %v1011, %v5619
        %v5995 = vsub.f32 %v1014, %v5625
        %v5996 = vsub.f32 %v1011, %v5632
        %v5997 = vsub.f32 %v1014, %v5638
        %v5998 = vsub.f32 %v1011, %v5645
        %v5999 = vsub.f32 %v1014, %v5651
        %v6000 = vsub.f32 %v1011, %v5658
        %v6001 = vsub.f32 %v1014, %v5664
        %v6002 = vsub.f32 %v1011, %v5671
        %v6003 = vsub.f32 %v1014, %v5677
        %v6004 = vsub.f32 %v1011, %v5684
        %v6005 = vsub.f32 %v1014, %v5690
        %v6006 = vsub.f32 %v1011, %v5697
        %v6007 = vsub.f32 %v1014, %v5703
        %v6008 = vsub.f32 %v1011, %v5710
        %v6009 = vsub.f32 %v1014, %v5716
        %v6010 = vsub.f32 %v1011, %v5723
        %v6011 = vsub.f32 %v1014, %v5729
        %v6012 = vsub.f32 %v1011, %v5736
        %v6013 = vsub.f32 %v1014, %v5742
        %v6014 = vsub.f32 %v1011, %v5749
        %v6015 = vsub.f32 %v1014, %v5755
        %v6016 = vsub.f32 %v1011, %v5762
        %v6017 = vsub.f32 %v1014, %v5768
        %v6018 = vsub.f32 %v1011, %v5775
        %v6019 = vsub.f32 %v1014, %v5781
        %v6020 = vsub.f32 %v1011, %v5788
        %v6021 = vsub.f32 %v1014, %v5794
        %v6022 = vsub.f32 %v1011, %v5801
        %v6023 = vsub.f32 %v1014, %v5807
        %v6024 = vsub.f32 %v1011, %v5814
        %v6025 = vsub.f32 %v1014, %v5820
        %v6026 = vsub.f32 %v1011, %v5827
        %v6027 = vsub.f32 %v1014, %v5833
        %v6028 = vsub.f32 %v1011, %v5840
        %v6029 = vsub.f32 %v1014, %v5846
        %v6030 = vsub.f32 %v1011, %v5853
        %v6031 = vsub.f32 %v1014, %v5859
        %v6032 = vsub.f32 %v1011, %v5866
        %v6033 = vsub.f32 %v1014, %v5872
        %v6034 = vsub.f32 %v1011, %v5879
        %v6035 = vsub.f32 %v1014, %v5885
        %v6036 = vsub.f32 %v1011, %v5892
        %v6037 = vsub.f32 %v1014, %v5898
        %v6038 = vsub.f32 %v1011, %v5905
        %v6039 = vsub.f32 %v1014, %v5911
        %6104 = vset.pattern.permute.xlu0 0
        %6105 = vperm.xlu0 %6104, %v5976
        %v6106 = vpop.permute.xlu0 %6105
        %6107 = vset.pattern.permute.xlu0 0
        %6108 = vperm.xlu0 %6107, %v5977
        %v6109 = vpop.permute.xlu0 %6108
        %6110 = vset.pattern.permute.xlu0 0
        %6111 = vperm.xlu0 %6110, %v5978
        %v6112 = vpop.permute.xlu0 %6111
        %6113 = vset.pattern.permute.xlu0 0
        %6114 = vperm.xlu0 %6113, %v5979
        %v6115 = vpop.permute.xlu0 %6114
        %6116 = vset.pattern.permute.xlu0 0
        %6117 = vperm.xlu0 %6116, %v5980
        %v6118 = vpop.permute.xlu0 %6117
        %6119 = vset.pattern.permute.xlu0 0
        %6120 = vperm.xlu0 %6119, %v5981
        %v6121 = vpop.permute.xlu0 %6120
        %6122 = vset.pattern.permute.xlu0 0
        %6123 = vperm.xlu0 %6122, %v5982
        %v6124 = vpop.permute.xlu0 %6123
        %6125 = vset.pattern.permute.xlu0 0
        %6126 = vperm.xlu0 %6125, %v5983
        %v6127 = vpop.permute.xlu0 %6126
        %6128 = vset.pattern.permute.xlu0 0
        %6129 = vperm.xlu0 %6128, %v5984
        %v6130 = vpop.permute.xlu0 %6129
        %6131 = vset.pattern.permute.xlu0 0
        %6132 = vperm.xlu0 %6131, %v5985
        %v6133 = vpop.permute.xlu0 %6132
        %6134 = vset.pattern.permute.xlu0 0
        %6135 = vperm.xlu0 %6134, %v5986
        %v6136 = vpop.permute.xlu0 %6135
        %6137 = vset.pattern.permute.xlu0 0
        %6138 = vperm.xlu0 %6137, %v5987
        %v6139 = vpop.permute.xlu0 %6138
        %6140 = vset.pattern.permute.xlu0 0
        %6141 = vperm.xlu0 %6140, %v5988
        %v6142 = vpop.permute.xlu0 %6141
        %6143 = vset.pattern.permute.xlu0 0
        %6144 = vperm.xlu0 %6143, %v5989
        %v6145 = vpop.permute.xlu0 %6144
        %6146 = vset.pattern.permute.xlu0 0
        %6147 = vperm.xlu0 %6146, %v5990
        %v6148 = vpop.permute.xlu0 %6147
        %6149 = vset.pattern.permute.xlu0 0
        %6150 = vperm.xlu0 %6149, %v5991
        %v6151 = vpop.permute.xlu0 %6150
        %6152 = vset.pattern.permute.xlu0 0
        %6153 = vperm.xlu0 %6152, %v5992
        %v6154 = vpop.permute.xlu0 %6153
        %6155 = vset.pattern.permute.xlu0 0
        %6156 = vperm.xlu0 %6155, %v5993
        %v6157 = vpop.permute.xlu0 %6156
        %6158 = vset.pattern.permute.xlu0 0
        %6159 = vperm.xlu0 %6158, %v5994
        %v6160 = vpop.permute.xlu0 %6159
        %6161 = vset.pattern.permute.xlu0 0
        %6162 = vperm.xlu0 %6161, %v5995
        %v6163 = vpop.permute.xlu0 %6162
        %6164 = vset.pattern.permute.xlu0 0
        %6165 = vperm.xlu0 %6164, %v5996
        %v6166 = vpop.permute.xlu0 %6165
        %6167 = vset.pattern.permute.xlu0 0
        %6168 = vperm.xlu0 %6167, %v5997
        %v6169 = vpop.permute.xlu0 %6168
        %6170 = vset.pattern.permute.xlu0 0
        %6171 = vperm.xlu0 %6170, %v5998
        %v6172 = vpop.permute.xlu0 %6171
        %6173 = vset.pattern.permute.xlu0 0
        %6174 = vperm.xlu0 %6173, %v5999
        %v6175 = vpop.permute.xlu0 %6174
        %6176 = vset.pattern.permute.xlu0 0
        %6177 = vperm.xlu0 %6176, %v6000
        %v6178 = vpop.permute.xlu0 %6177
        %6179 = vset.pattern.permute.xlu0 0
        %6180 = vperm.xlu0 %6179, %v6001
        %v6181 = vpop.permute.xlu0 %6180
        %6182 = vset.pattern.permute.xlu0 0
        %6183 = vperm.xlu0 %6182, %v6002
        %v6184 = vpop.permute.xlu0 %6183
        %6185 = vset.pattern.permute.xlu0 0
        %6186 = vperm.xlu0 %6185, %v6003
        %v6187 = vpop.permute.xlu0 %6186
        %6188 = vset.pattern.permute.xlu0 0
        %6189 = vperm.xlu0 %6188, %v6004
        %v6190 = vpop.permute.xlu0 %6189
        %6191 = vset.pattern.permute.xlu0 0
        %6192 = vperm.xlu0 %6191, %v6005
        %v6193 = vpop.permute.xlu0 %6192
        %6194 = vset.pattern.permute.xlu0 0
        %6195 = vperm.xlu0 %6194, %v6006
        %v6196 = vpop.permute.xlu0 %6195
        %6197 = vset.pattern.permute.xlu0 0
        %6198 = vperm.xlu0 %6197, %v6007
        %v6199 = vpop.permute.xlu0 %6198
        %6200 = vset.pattern.permute.xlu0 0
        %6201 = vperm.xlu0 %6200, %v6008
        %v6202 = vpop.permute.xlu0 %6201
        %6203 = vset.pattern.permute.xlu0 0
        %6204 = vperm.xlu0 %6203, %v6009
        %v6205 = vpop.permute.xlu0 %6204
        %6206 = vset.pattern.permute.xlu0 0
        %6207 = vperm.xlu0 %6206, %v6010
        %v6208 = vpop.permute.xlu0 %6207
        %6209 = vset.pattern.permute.xlu0 0
        %6210 = vperm.xlu0 %6209, %v6011
        %v6211 = vpop.permute.xlu0 %6210
        %6212 = vset.pattern.permute.xlu0 0
        %6213 = vperm.xlu0 %6212, %v6012
        %v6214 = vpop.permute.xlu0 %6213
        %6215 = vset.pattern.permute.xlu0 0
        %6216 = vperm.xlu0 %6215, %v6013
        %v6217 = vpop.permute.xlu0 %6216
        %6218 = vset.pattern.permute.xlu0 0
        %6219 = vperm.xlu0 %6218, %v6014
        %v6220 = vpop.permute.xlu0 %6219
        %6221 = vset.pattern.permute.xlu0 0
        %6222 = vperm.xlu0 %6221, %v6015
        %v6223 = vpop.permute.xlu0 %6222
        %6224 = vset.pattern.permute.xlu0 0
        %6225 = vperm.xlu0 %6224, %v6016
        %v6226 = vpop.permute.xlu0 %6225
        %6227 = vset.pattern.permute.xlu0 0
        %6228 = vperm.xlu0 %6227, %v6017
        %v6229 = vpop.permute.xlu0 %6228
        %6230 = vset.pattern.permute.xlu0 0
        %6231 = vperm.xlu0 %6230, %v6018
        %v6232 = vpop.permute.xlu0 %6231
        %6233 = vset.pattern.permute.xlu0 0
        %6234 = vperm.xlu0 %6233, %v6019
        %v6235 = vpop.permute.xlu0 %6234
        %6236 = vset.pattern.permute.xlu0 0
        %6237 = vperm.xlu0 %6236, %v6020
        %v6238 = vpop.permute.xlu0 %6237
        %6239 = vset.pattern.permute.xlu0 0
        %6240 = vperm.xlu0 %6239, %v6021
        %v6241 = vpop.permute.xlu0 %6240
        %6242 = vset.pattern.permute.xlu0 0
        %6243 = vperm.xlu0 %6242, %v6022
        %v6244 = vpop.permute.xlu0 %6243
        %6245 = vset.pattern.permute.xlu0 0
        %6246 = vperm.xlu0 %6245, %v6023
        %v6247 = vpop.permute.xlu0 %6246
        %6248 = vset.pattern.permute.xlu0 0
        %6249 = vperm.xlu0 %6248, %v6024
        %v6250 = vpop.permute.xlu0 %6249
        %6251 = vset.pattern.permute.xlu0 0
        %6252 = vperm.xlu0 %6251, %v6025
        %v6253 = vpop.permute.xlu0 %6252
        %6254 = vset.pattern.permute.xlu0 0
        %6255 = vperm.xlu0 %6254, %v6026
        %v6256 = vpop.permute.xlu0 %6255
        %6257 = vset.pattern.permute.xlu0 0
        %6258 = vperm.xlu0 %6257, %v6027
        %v6259 = vpop.permute.xlu0 %6258
        %6260 = vset.pattern.permute.xlu0 0
        %6261 = vperm.xlu0 %6260, %v6028
        %v6262 = vpop.permute.xlu0 %6261
        %6263 = vset.pattern.permute.xlu0 0
        %6264 = vperm.xlu0 %6263, %v6029
        %v6265 = vpop.permute.xlu0 %6264
        %6266 = vset.pattern.permute.xlu0 0
        %6267 = vperm.xlu0 %6266, %v6030
        %v6268 = vpop.permute.xlu0 %6267
        %6269 = vset.pattern.permute.xlu0 0
        %6270 = vperm.xlu0 %6269, %v6031
        %v6271 = vpop.permute.xlu0 %6270
        %6272 = vset.pattern.permute.xlu0 0
        %6273 = vperm.xlu0 %6272, %v6032
        %v6274 = vpop.permute.xlu0 %6273
        %6275 = vset.pattern.permute.xlu0 0
        %6276 = vperm.xlu0 %6275, %v6033
        %v6277 = vpop.permute.xlu0 %6276
        %6278 = vset.pattern.permute.xlu0 0
        %6279 = vperm.xlu0 %6278, %v6034
        %v6280 = vpop.permute.xlu0 %6279
        %6281 = vset.pattern.permute.xlu0 0
        %6282 = vperm.xlu0 %6281, %v6035
        %v6283 = vpop.permute.xlu0 %6282
        %6284 = vset.pattern.permute.xlu0 0
        %6285 = vperm.xlu0 %6284, %v6036
        %v6286 = vpop.permute.xlu0 %6285
        %6287 = vset.pattern.permute.xlu0 0
        %6288 = vperm.xlu0 %6287, %v6037
        %v6289 = vpop.permute.xlu0 %6288
        %6290 = vset.pattern.permute.xlu0 0
        %6291 = vperm.xlu0 %6290, %v6038
        %v6292 = vpop.permute.xlu0 %6291
        %6293 = vset.pattern.permute.xlu0 0
        %6294 = vperm.xlu0 %6293, %v6039
        %v6295 = vpop.permute.xlu0 %6294
        %v6296 = vperm.slane %v6106, %v1022
        %v6297 = vperm.slane %v6109, %v2104
        %v6298 = vsel %vm2106, %v6297, %v6296
        %v6299 = vperm.slane %v6112, %v1022
        %v6300 = vperm.slane %v6115, %v2104
        %v6301 = vsel %vm2106, %v6300, %v6299
        %v6302 = vperm.slane %v6118, %v1022
        %v6303 = vperm.slane %v6121, %v2104
        %v6304 = vsel %vm2106, %v6303, %v6302
        %v6305 = vperm.slane %v6124, %v1022
        %v6306 = vperm.slane %v6127, %v2104
        %v6307 = vsel %vm2106, %v6306, %v6305
        %v6308 = vperm.slane %v6130, %v1022
        %v6309 = vperm.slane %v6133, %v2104
        %v6310 = vsel %vm2106, %v6309, %v6308
        %v6311 = vperm.slane %v6136, %v1022
        %v6312 = vperm.slane %v6139, %v2104
        %v6313 = vsel %vm2106, %v6312, %v6311
        %v6314 = vperm.slane %v6142, %v1022
        %v6315 = vperm.slane %v6145, %v2104
        %v6316 = vsel %vm2106, %v6315, %v6314
        %v6317 = vperm.slane %v6148, %v1022
        %v6318 = vperm.slane %v6151, %v2104
        %v6319 = vsel %vm2106, %v6318, %v6317
        %v6320 = vperm.slane %v6154, %v1022
        %v6321 = vperm.slane %v6157, %v2104
        %v6322 = vsel %vm2106, %v6321, %v6320
        %v6323 = vperm.slane %v6160, %v1022
        %v6324 = vperm.slane %v6163, %v2104
        %v6325 = vsel %vm2106, %v6324, %v6323
        %v6326 = vperm.slane %v6166, %v1022
        %v6327 = vperm.slane %v6169, %v2104
        %v6328 = vsel %vm2106, %v6327, %v6326
        %v6329 = vperm.slane %v6172, %v1022
        %v6330 = vperm.slane %v6175, %v2104
        %v6331 = vsel %vm2106, %v6330, %v6329
        %v6332 = vperm.slane %v6178, %v1022
        %v6333 = vperm.slane %v6181, %v2104
        %v6334 = vsel %vm2106, %v6333, %v6332
        %v6335 = vperm.slane %v6184, %v1022
        %v6336 = vperm.slane %v6187, %v2104
        %v6337 = vsel %vm2106, %v6336, %v6335
        %v6338 = vperm.slane %v6190, %v1022
        %v6339 = vperm.slane %v6193, %v2104
        %v6340 = vsel %vm2106, %v6339, %v6338
        %v6341 = vperm.slane %v6196, %v1022
        %v6342 = vperm.slane %v6199, %v2104
        %v6343 = vsel %vm2106, %v6342, %v6341
        %v6344 = vperm.slane %v6202, %v1022
        %v6345 = vperm.slane %v6205, %v2104
        %v6346 = vsel %vm2106, %v6345, %v6344
        %v6347 = vperm.slane %v6208, %v1022
        %v6348 = vperm.slane %v6211, %v2104
        %v6349 = vsel %vm2106, %v6348, %v6347
        %v6350 = vperm.slane %v6214, %v1022
        %v6351 = vperm.slane %v6217, %v2104
        %v6352 = vsel %vm2106, %v6351, %v6350
        %v6353 = vperm.slane %v6220, %v1022
        %v6354 = vperm.slane %v6223, %v2104
        %v6355 = vsel %vm2106, %v6354, %v6353
        %v6356 = vperm.slane %v6226, %v1022
        %v6357 = vperm.slane %v6229, %v2104
        %v6358 = vsel %vm2106, %v6357, %v6356
        %v6359 = vperm.slane %v6232, %v1022
        %v6360 = vperm.slane %v6235, %v2104
        %v6361 = vsel %vm2106, %v6360, %v6359
        %v6362 = vperm.slane %v6238, %v1022
        %v6363 = vperm.slane %v6241, %v2104
        %v6364 = vsel %vm2106, %v6363, %v6362
        %v6365 = vperm.slane %v6244, %v1022
        %v6366 = vperm.slane %v6247, %v2104
        %v6367 = vsel %vm2106, %v6366, %v6365
        %v6368 = vperm.slane %v6250, %v1022
        %v6369 = vperm.slane %v6253, %v2104
        %v6370 = vsel %vm2106, %v6369, %v6368
        %v6371 = vperm.slane %v6256, %v1022
        %v6372 = vperm.slane %v6259, %v2104
        %v6373 = vsel %vm2106, %v6372, %v6371
        %v6374 = vperm.slane %v6262, %v1022
        %v6375 = vperm.slane %v6265, %v2104
        %v6376 = vsel %vm2106, %v6375, %v6374
        %v6377 = vperm.slane %v6268, %v1022
        %v6378 = vperm.slane %v6271, %v2104
        %v6379 = vsel %vm2106, %v6378, %v6377
        %v6380 = vperm.slane %v6274, %v1022
        %v6381 = vperm.slane %v6277, %v2104
        %v6382 = vsel %vm2106, %v6381, %v6380
        %v6383 = vperm.slane %v6280, %v1022
        %v6384 = vperm.slane %v6283, %v2104
        %v6385 = vsel %vm2106, %v6384, %v6383
        %v6386 = vperm.slane %v6286, %v1022
        %v6387 = vperm.slane %v6289, %v2104
        %v6388 = vsel %vm2106, %v6387, %v6386
        %v6389 = vperm.slane %v6292, %v1022
        %v6390 = vperm.slane %v6295, %v2104
        %v6391 = vsel %vm2106, %v6390, %v6389
        %v6392 = vsel %vm2201, %v6301, %v6298
        %v6393 = vsel %vm2203, %v6304, %v6392
        %v6394 = vsel %vm2205, %v6307, %v6393
        %v6395 = vsel %vm2207, %v6310, %v6394
        %v6396 = vsel %vm2209, %v6313, %v6395
        %v6397 = vsel %vm2211, %v6316, %v6396
        %v6398 = vsel %vm2213, %v6319, %v6397
        %v6399 = vsel %vm2201, %v6325, %v6322
        %v6400 = vsel %vm2203, %v6328, %v6399
        %v6401 = vsel %vm2205, %v6331, %v6400
        %v6402 = vsel %vm2207, %v6334, %v6401
        %v6403 = vsel %vm2209, %v6337, %v6402
        %v6404 = vsel %vm2211, %v6340, %v6403
        %v6405 = vsel %vm2213, %v6343, %v6404
        %v6406 = vsel %vm2201, %v6349, %v6346
        %v6407 = vsel %vm2203, %v6352, %v6406
        %v6408 = vsel %vm2205, %v6355, %v6407
        %v6409 = vsel %vm2207, %v6358, %v6408
        %v6410 = vsel %vm2209, %v6361, %v6409
        %v6411 = vsel %vm2211, %v6364, %v6410
        %v6412 = vsel %vm2213, %v6367, %v6411
        %v6413 = vsel %vm2201, %v6373, %v6370
        %v6414 = vsel %vm2203, %v6376, %v6413
        %v6415 = vsel %vm2205, %v6379, %v6414
        %v6416 = vsel %vm2207, %v6382, %v6415
        %v6417 = vsel %vm2209, %v6385, %v6416
        %v6418 = vsel %vm2211, %v6388, %v6417
        %v6419 = vsel %vm2213, %v6391, %v6418
        %v6424 = vsel %vm715, %v6398, inf
        %6425 = vmin.xlane.f32.xlu0 %v6424
        %v6426 = vpop.xlane.xlu0 %6425
        %v6427 = vsel %vm715, %v6405, inf
        %6428 = vmin.xlane.f32.xlu0 %v6427
        %v6429 = vpop.xlane.xlu0 %6428
        %v6430 = vsel %vm715, %v6412, inf
        %6431 = vmin.xlane.f32.xlu0 %v6430
        %v6432 = vpop.xlane.xlu0 %6431
        %v6433 = vsel %vm715, %v6419, inf
        %6434 = vmin.xlane.f32.xlu0 %v6433
        %v6435 = vpop.xlane.xlu0 %6434
        %v6440 = vperm.slane %v6426, 0
        %v6441 = vperm.slane %v6426, 1
        %v6442 = vperm.slane %v6426, 2
        %v6443 = vperm.slane %v6426, 3
        %v6444 = vperm.slane %v6426, 4
        %v6445 = vperm.slane %v6426, 5
        %v6446 = vperm.slane %v6426, 6
        %v6447 = vperm.slane %v6426, 7
        %v6448 = vperm.slane %v6429, 0
        %v6449 = vperm.slane %v6429, 1
        %v6450 = vperm.slane %v6429, 2
        %v6451 = vperm.slane %v6429, 3
        %v6452 = vperm.slane %v6429, 4
        %v6453 = vperm.slane %v6429, 5
        %v6454 = vperm.slane %v6429, 6
        %v6455 = vperm.slane %v6429, 7
        %v6456 = vperm.slane %v6432, 0
        %v6457 = vperm.slane %v6432, 1
        %v6458 = vperm.slane %v6432, 2
        %v6459 = vperm.slane %v6432, 3
        %v6460 = vperm.slane %v6432, 4
        %v6461 = vperm.slane %v6432, 5
        %v6462 = vperm.slane %v6432, 6
        %v6463 = vperm.slane %v6432, 7
        %v6464 = vperm.slane %v6435, 0
        %v6465 = vperm.slane %v6435, 1
        %v6466 = vperm.slane %v6435, 2
        %v6467 = vperm.slane %v6435, 3
        %v6468 = vperm.slane %v6435, 4
        %v6469 = vperm.slane %v6435, 5
        %v6470 = vperm.slane %v6435, 6
        %v6471 = vperm.slane %v6435, 7
        %vm6504 = vcmp.le.f32.partialorder %v5976, %v6440
        %vm6505 = vcmp.le.f32.partialorder %v5977, %v6440
        %vm6506 = vcmp.le.f32.partialorder %v5978, %v6441
        %vm6507 = vcmp.le.f32.partialorder %v5979, %v6441
        %vm6508 = vcmp.le.f32.partialorder %v5980, %v6442
        %vm6509 = vcmp.le.f32.partialorder %v5981, %v6442
        %vm6510 = vcmp.le.f32.partialorder %v5982, %v6443
        %vm6511 = vcmp.le.f32.partialorder %v5983, %v6443
        %vm6512 = vcmp.le.f32.partialorder %v5984, %v6444
        %vm6513 = vcmp.le.f32.partialorder %v5985, %v6444
        %vm6514 = vcmp.le.f32.partialorder %v5986, %v6445
        %vm6515 = vcmp.le.f32.partialorder %v5987, %v6445
        %vm6516 = vcmp.le.f32.partialorder %v5988, %v6446
        %vm6517 = vcmp.le.f32.partialorder %v5989, %v6446
        %vm6518 = vcmp.le.f32.partialorder %v5990, %v6447
        %vm6519 = vcmp.le.f32.partialorder %v5991, %v6447
        %vm6520 = vcmp.le.f32.partialorder %v5992, %v6448
        %vm6521 = vcmp.le.f32.partialorder %v5993, %v6448
        %vm6522 = vcmp.le.f32.partialorder %v5994, %v6449
        %vm6523 = vcmp.le.f32.partialorder %v5995, %v6449
        %vm6524 = vcmp.le.f32.partialorder %v5996, %v6450
        %vm6525 = vcmp.le.f32.partialorder %v5997, %v6450
        %vm6526 = vcmp.le.f32.partialorder %v5998, %v6451
        %vm6527 = vcmp.le.f32.partialorder %v5999, %v6451
        %vm6528 = vcmp.le.f32.partialorder %v6000, %v6452
        %vm6529 = vcmp.le.f32.partialorder %v6001, %v6452
        %vm6530 = vcmp.le.f32.partialorder %v6002, %v6453
        %vm6531 = vcmp.le.f32.partialorder %v6003, %v6453
        %vm6532 = vcmp.le.f32.partialorder %v6004, %v6454
        %vm6533 = vcmp.le.f32.partialorder %v6005, %v6454
        %vm6534 = vcmp.le.f32.partialorder %v6006, %v6455
        %vm6535 = vcmp.le.f32.partialorder %v6007, %v6455
        %vm6536 = vcmp.le.f32.partialorder %v6008, %v6456
        %vm6537 = vcmp.le.f32.partialorder %v6009, %v6456
        %vm6538 = vcmp.le.f32.partialorder %v6010, %v6457
        %vm6539 = vcmp.le.f32.partialorder %v6011, %v6457
        %vm6540 = vcmp.le.f32.partialorder %v6012, %v6458
        %vm6541 = vcmp.le.f32.partialorder %v6013, %v6458
        %vm6542 = vcmp.le.f32.partialorder %v6014, %v6459
        %vm6543 = vcmp.le.f32.partialorder %v6015, %v6459
        %vm6544 = vcmp.le.f32.partialorder %v6016, %v6460
        %vm6545 = vcmp.le.f32.partialorder %v6017, %v6460
        %vm6546 = vcmp.le.f32.partialorder %v6018, %v6461
        %vm6547 = vcmp.le.f32.partialorder %v6019, %v6461
        %vm6548 = vcmp.le.f32.partialorder %v6020, %v6462
        %vm6549 = vcmp.le.f32.partialorder %v6021, %v6462
        %vm6550 = vcmp.le.f32.partialorder %v6022, %v6463
        %vm6551 = vcmp.le.f32.partialorder %v6023, %v6463
        %vm6552 = vcmp.le.f32.partialorder %v6024, %v6464
        %vm6553 = vcmp.le.f32.partialorder %v6025, %v6464
        %vm6554 = vcmp.le.f32.partialorder %v6026, %v6465
        %vm6555 = vcmp.le.f32.partialorder %v6027, %v6465
        %vm6556 = vcmp.le.f32.partialorder %v6028, %v6466
        %vm6557 = vcmp.le.f32.partialorder %v6029, %v6466
        %vm6558 = vcmp.le.f32.partialorder %v6030, %v6467
        %vm6559 = vcmp.le.f32.partialorder %v6031, %v6467
        %vm6560 = vcmp.le.f32.partialorder %v6032, %v6468
        %vm6561 = vcmp.le.f32.partialorder %v6033, %v6468
        %vm6562 = vcmp.le.f32.partialorder %v6034, %v6469
        %vm6563 = vcmp.le.f32.partialorder %v6035, %v6469
        %vm6564 = vcmp.le.f32.partialorder %v6036, %v6470
        %vm6565 = vcmp.le.f32.partialorder %v6037, %v6470
        %vm6566 = vcmp.le.f32.partialorder %v6038, %v6471
        %vm6567 = vcmp.le.f32.partialorder %v6039, %v6471
        %v6568 = vsel %vm6504, %v2389, 16
        %v6569 = vsel %vm6505, %v2395, 16
        %v6570 = vsel %vm6506, %v2389, 16
        %v6571 = vsel %vm6507, %v2395, 16
        %v6572 = vsel %vm6508, %v2389, 16
        %v6573 = vsel %vm6509, %v2395, 16
        %v6574 = vsel %vm6510, %v2389, 16
        %v6575 = vsel %vm6511, %v2395, 16
        %v6576 = vsel %vm6512, %v2389, 16
        %v6577 = vsel %vm6513, %v2395, 16
        %v6578 = vsel %vm6514, %v2389, 16
        %v6579 = vsel %vm6515, %v2395, 16
        %v6580 = vsel %vm6516, %v2389, 16
        %v6581 = vsel %vm6517, %v2395, 16
        %v6582 = vsel %vm6518, %v2389, 16
        %v6583 = vsel %vm6519, %v2395, 16
        %v6584 = vsel %vm6520, %v2389, 16
        %v6585 = vsel %vm6521, %v2395, 16
        %v6586 = vsel %vm6522, %v2389, 16
        %v6587 = vsel %vm6523, %v2395, 16
        %v6588 = vsel %vm6524, %v2389, 16
        %v6589 = vsel %vm6525, %v2395, 16
        %v6590 = vsel %vm6526, %v2389, 16
        %v6591 = vsel %vm6527, %v2395, 16
        %v6592 = vsel %vm6528, %v2389, 16
        %v6593 = vsel %vm6529, %v2395, 16
        %v6594 = vsel %vm6530, %v2389, 16
        %v6595 = vsel %vm6531, %v2395, 16
        %v6596 = vsel %vm6532, %v2389, 16
        %v6597 = vsel %vm6533, %v2395, 16
        %v6598 = vsel %vm6534, %v2389, 16
        %v6599 = vsel %vm6535, %v2395, 16
        %v6600 = vsel %vm6536, %v2389, 16
        %v6601 = vsel %vm6537, %v2395, 16
        %v6602 = vsel %vm6538, %v2389, 16
        %v6603 = vsel %vm6539, %v2395, 16
        %v6604 = vsel %vm6540, %v2389, 16
        %v6605 = vsel %vm6541, %v2395, 16
        %v6606 = vsel %vm6542, %v2389, 16
        %v6607 = vsel %vm6543, %v2395, 16
        %v6608 = vsel %vm6544, %v2389, 16
        %v6609 = vsel %vm6545, %v2395, 16
        %v6610 = vsel %vm6546, %v2389, 16
        %v6611 = vsel %vm6547, %v2395, 16
        %v6612 = vsel %vm6548, %v2389, 16
        %v6613 = vsel %vm6549, %v2395, 16
        %v6614 = vsel %vm6550, %v2389, 16
        %v6615 = vsel %vm6551, %v2395, 16
        %v6616 = vsel %vm6552, %v2389, 16
        %v6617 = vsel %vm6553, %v2395, 16
        %v6618 = vsel %vm6554, %v2389, 16
        %v6619 = vsel %vm6555, %v2395, 16
        %v6620 = vsel %vm6556, %v2389, 16
        %v6621 = vsel %vm6557, %v2395, 16
        %v6622 = vsel %vm6558, %v2389, 16
        %v6623 = vsel %vm6559, %v2395, 16
        %v6624 = vsel %vm6560, %v2389, 16
        %v6625 = vsel %vm6561, %v2395, 16
        %v6626 = vsel %vm6562, %v2389, 16
        %v6627 = vsel %vm6563, %v2395, 16
        %v6628 = vsel %vm6564, %v2389, 16
        %v6629 = vsel %vm6565, %v2395, 16
        %v6630 = vsel %vm6566, %v2389, 16
        %v6631 = vsel %vm6567, %v2395, 16
        %6632 = vset.pattern.permute.xlu0 0
        %6633 = vperm.xlu0 %6632, %v6568
        %v6634 = vpop.permute.xlu0 %6633
        %6635 = vset.pattern.permute.xlu0 0
        %6636 = vperm.xlu0 %6635, %v6569
        %v6637 = vpop.permute.xlu0 %6636
        %6638 = vset.pattern.permute.xlu0 0
        %6639 = vperm.xlu0 %6638, %v6570
        %v6640 = vpop.permute.xlu0 %6639
        %6641 = vset.pattern.permute.xlu0 0
        %6642 = vperm.xlu0 %6641, %v6571
        %v6643 = vpop.permute.xlu0 %6642
        %6644 = vset.pattern.permute.xlu0 0
        %6645 = vperm.xlu0 %6644, %v6572
        %v6646 = vpop.permute.xlu0 %6645
        %6647 = vset.pattern.permute.xlu0 0
        %6648 = vperm.xlu0 %6647, %v6573
        %v6649 = vpop.permute.xlu0 %6648
        %6650 = vset.pattern.permute.xlu0 0
        %6651 = vperm.xlu0 %6650, %v6574
        %v6652 = vpop.permute.xlu0 %6651
        %6653 = vset.pattern.permute.xlu0 0
        %6654 = vperm.xlu0 %6653, %v6575
        %v6655 = vpop.permute.xlu0 %6654
        %6656 = vset.pattern.permute.xlu0 0
        %6657 = vperm.xlu0 %6656, %v6576
        %v6658 = vpop.permute.xlu0 %6657
        %6659 = vset.pattern.permute.xlu0 0
        %6660 = vperm.xlu0 %6659, %v6577
        %v6661 = vpop.permute.xlu0 %6660
        %6662 = vset.pattern.permute.xlu0 0
        %6663 = vperm.xlu0 %6662, %v6578
        %v6664 = vpop.permute.xlu0 %6663
        %6665 = vset.pattern.permute.xlu0 0
        %6666 = vperm.xlu0 %6665, %v6579
        %v6667 = vpop.permute.xlu0 %6666
        %6668 = vset.pattern.permute.xlu0 0
        %6669 = vperm.xlu0 %6668, %v6580
        %v6670 = vpop.permute.xlu0 %6669
        %6671 = vset.pattern.permute.xlu0 0
        %6672 = vperm.xlu0 %6671, %v6581
        %v6673 = vpop.permute.xlu0 %6672
        %6674 = vset.pattern.permute.xlu0 0
        %6675 = vperm.xlu0 %6674, %v6582
        %v6676 = vpop.permute.xlu0 %6675
        %6677 = vset.pattern.permute.xlu0 0
        %6678 = vperm.xlu0 %6677, %v6583
        %v6679 = vpop.permute.xlu0 %6678
        %6680 = vset.pattern.permute.xlu0 0
        %6681 = vperm.xlu0 %6680, %v6584
        %v6682 = vpop.permute.xlu0 %6681
        %6683 = vset.pattern.permute.xlu0 0
        %6684 = vperm.xlu0 %6683, %v6585
        %v6685 = vpop.permute.xlu0 %6684
        %6686 = vset.pattern.permute.xlu0 0
        %6687 = vperm.xlu0 %6686, %v6586
        %v6688 = vpop.permute.xlu0 %6687
        %6689 = vset.pattern.permute.xlu0 0
        %6690 = vperm.xlu0 %6689, %v6587
        %v6691 = vpop.permute.xlu0 %6690
        %6692 = vset.pattern.permute.xlu0 0
        %6693 = vperm.xlu0 %6692, %v6588
        %v6694 = vpop.permute.xlu0 %6693
        %6695 = vset.pattern.permute.xlu0 0
        %6696 = vperm.xlu0 %6695, %v6589
        %v6697 = vpop.permute.xlu0 %6696
        %6698 = vset.pattern.permute.xlu0 0
        %6699 = vperm.xlu0 %6698, %v6590
        %v6700 = vpop.permute.xlu0 %6699
        %6701 = vset.pattern.permute.xlu0 0
        %6702 = vperm.xlu0 %6701, %v6591
        %v6703 = vpop.permute.xlu0 %6702
        %6704 = vset.pattern.permute.xlu0 0
        %6705 = vperm.xlu0 %6704, %v6592
        %v6706 = vpop.permute.xlu0 %6705
        %6707 = vset.pattern.permute.xlu0 0
        %6708 = vperm.xlu0 %6707, %v6593
        %v6709 = vpop.permute.xlu0 %6708
        %6710 = vset.pattern.permute.xlu0 0
        %6711 = vperm.xlu0 %6710, %v6594
        %v6712 = vpop.permute.xlu0 %6711
        %6713 = vset.pattern.permute.xlu0 0
        %6714 = vperm.xlu0 %6713, %v6595
        %v6715 = vpop.permute.xlu0 %6714
        %6716 = vset.pattern.permute.xlu0 0
        %6717 = vperm.xlu0 %6716, %v6596
        %v6718 = vpop.permute.xlu0 %6717
        %6719 = vset.pattern.permute.xlu0 0
        %6720 = vperm.xlu0 %6719, %v6597
        %v6721 = vpop.permute.xlu0 %6720
        %6722 = vset.pattern.permute.xlu0 0
        %6723 = vperm.xlu0 %6722, %v6598
        %v6724 = vpop.permute.xlu0 %6723
        %6725 = vset.pattern.permute.xlu0 0
        %6726 = vperm.xlu0 %6725, %v6599
        %v6727 = vpop.permute.xlu0 %6726
        %6728 = vset.pattern.permute.xlu0 0
        %6729 = vperm.xlu0 %6728, %v6600
        %v6730 = vpop.permute.xlu0 %6729
        %6731 = vset.pattern.permute.xlu0 0
        %6732 = vperm.xlu0 %6731, %v6601
        %v6733 = vpop.permute.xlu0 %6732
        %6734 = vset.pattern.permute.xlu0 0
        %6735 = vperm.xlu0 %6734, %v6602
        %v6736 = vpop.permute.xlu0 %6735
        %6737 = vset.pattern.permute.xlu0 0
        %6738 = vperm.xlu0 %6737, %v6603
        %v6739 = vpop.permute.xlu0 %6738
        %6740 = vset.pattern.permute.xlu0 0
        %6741 = vperm.xlu0 %6740, %v6604
        %v6742 = vpop.permute.xlu0 %6741
        %6743 = vset.pattern.permute.xlu0 0
        %6744 = vperm.xlu0 %6743, %v6605
        %v6745 = vpop.permute.xlu0 %6744
        %6746 = vset.pattern.permute.xlu0 0
        %6747 = vperm.xlu0 %6746, %v6606
        %v6748 = vpop.permute.xlu0 %6747
        %6749 = vset.pattern.permute.xlu0 0
        %6750 = vperm.xlu0 %6749, %v6607
        %v6751 = vpop.permute.xlu0 %6750
        %6752 = vset.pattern.permute.xlu0 0
        %6753 = vperm.xlu0 %6752, %v6608
        %v6754 = vpop.permute.xlu0 %6753
        %6755 = vset.pattern.permute.xlu0 0
        %6756 = vperm.xlu0 %6755, %v6609
        %v6757 = vpop.permute.xlu0 %6756
        %6758 = vset.pattern.permute.xlu0 0
        %6759 = vperm.xlu0 %6758, %v6610
        %v6760 = vpop.permute.xlu0 %6759
        %6761 = vset.pattern.permute.xlu0 0
        %6762 = vperm.xlu0 %6761, %v6611
        %v6763 = vpop.permute.xlu0 %6762
        %6764 = vset.pattern.permute.xlu0 0
        %6765 = vperm.xlu0 %6764, %v6612
        %v6766 = vpop.permute.xlu0 %6765
        %6767 = vset.pattern.permute.xlu0 0
        %6768 = vperm.xlu0 %6767, %v6613
        %v6769 = vpop.permute.xlu0 %6768
        %6770 = vset.pattern.permute.xlu0 0
        %6771 = vperm.xlu0 %6770, %v6614
        %v6772 = vpop.permute.xlu0 %6771
        %6773 = vset.pattern.permute.xlu0 0
        %6774 = vperm.xlu0 %6773, %v6615
        %v6775 = vpop.permute.xlu0 %6774
        %6776 = vset.pattern.permute.xlu0 0
        %6777 = vperm.xlu0 %6776, %v6616
        %v6778 = vpop.permute.xlu0 %6777
        %6779 = vset.pattern.permute.xlu0 0
        %6780 = vperm.xlu0 %6779, %v6617
        %v6781 = vpop.permute.xlu0 %6780
        %6782 = vset.pattern.permute.xlu0 0
        %6783 = vperm.xlu0 %6782, %v6618
        %v6784 = vpop.permute.xlu0 %6783
        %6785 = vset.pattern.permute.xlu0 0
        %6786 = vperm.xlu0 %6785, %v6619
        %v6787 = vpop.permute.xlu0 %6786
        %6788 = vset.pattern.permute.xlu0 0
        %6789 = vperm.xlu0 %6788, %v6620
        %v6790 = vpop.permute.xlu0 %6789
        %6791 = vset.pattern.permute.xlu0 0
        %6792 = vperm.xlu0 %6791, %v6621
        %v6793 = vpop.permute.xlu0 %6792
        %6794 = vset.pattern.permute.xlu0 0
        %6795 = vperm.xlu0 %6794, %v6622
        %v6796 = vpop.permute.xlu0 %6795
        %6797 = vset.pattern.permute.xlu0 0
        %6798 = vperm.xlu0 %6797, %v6623
        %v6799 = vpop.permute.xlu0 %6798
        %6800 = vset.pattern.permute.xlu0 0
        %6801 = vperm.xlu0 %6800, %v6624
        %v6802 = vpop.permute.xlu0 %6801
        %6803 = vset.pattern.permute.xlu0 0
        %6804 = vperm.xlu0 %6803, %v6625
        %v6805 = vpop.permute.xlu0 %6804
        %6806 = vset.pattern.permute.xlu0 0
        %6807 = vperm.xlu0 %6806, %v6626
        %v6808 = vpop.permute.xlu0 %6807
        %6809 = vset.pattern.permute.xlu0 0
        %6810 = vperm.xlu0 %6809, %v6627
        %v6811 = vpop.permute.xlu0 %6810
        %6812 = vset.pattern.permute.xlu0 0
        %6813 = vperm.xlu0 %6812, %v6628
        %v6814 = vpop.permute.xlu0 %6813
        %6815 = vset.pattern.permute.xlu0 0
        %6816 = vperm.xlu0 %6815, %v6629
        %v6817 = vpop.permute.xlu0 %6816
        %6818 = vset.pattern.permute.xlu0 0
        %6819 = vperm.xlu0 %6818, %v6630
        %v6820 = vpop.permute.xlu0 %6819
        %6821 = vset.pattern.permute.xlu0 0
        %6822 = vperm.xlu0 %6821, %v6631
        %v6823 = vpop.permute.xlu0 %6822
        %v6824 = vperm.slane %v6634, %v1022
        %v6825 = vperm.slane %v6637, %v2104
        %v6826 = vsel %vm2106, %v6825, %v6824
        %v6827 = vperm.slane %v6640, %v1022
        %v6828 = vperm.slane %v6643, %v2104
        %v6829 = vsel %vm2106, %v6828, %v6827
        %v6830 = vperm.slane %v6646, %v1022
        %v6831 = vperm.slane %v6649, %v2104
        %v6832 = vsel %vm2106, %v6831, %v6830
        %v6833 = vperm.slane %v6652, %v1022
        %v6834 = vperm.slane %v6655, %v2104
        %v6835 = vsel %vm2106, %v6834, %v6833
        %v6836 = vperm.slane %v6658, %v1022
        %v6837 = vperm.slane %v6661, %v2104
        %v6838 = vsel %vm2106, %v6837, %v6836
        %v6839 = vperm.slane %v6664, %v1022
        %v6840 = vperm.slane %v6667, %v2104
        %v6841 = vsel %vm2106, %v6840, %v6839
        %v6842 = vperm.slane %v6670, %v1022
        %v6843 = vperm.slane %v6673, %v2104
        %v6844 = vsel %vm2106, %v6843, %v6842
        %v6845 = vperm.slane %v6676, %v1022
        %v6846 = vperm.slane %v6679, %v2104
        %v6847 = vsel %vm2106, %v6846, %v6845
        %v6848 = vperm.slane %v6682, %v1022
        %v6849 = vperm.slane %v6685, %v2104
        %v6850 = vsel %vm2106, %v6849, %v6848
        %v6851 = vperm.slane %v6688, %v1022
        %v6852 = vperm.slane %v6691, %v2104
        %v6853 = vsel %vm2106, %v6852, %v6851
        %v6854 = vperm.slane %v6694, %v1022
        %v6855 = vperm.slane %v6697, %v2104
        %v6856 = vsel %vm2106, %v6855, %v6854
        %v6857 = vperm.slane %v6700, %v1022
        %v6858 = vperm.slane %v6703, %v2104
        %v6859 = vsel %vm2106, %v6858, %v6857
        %v6860 = vperm.slane %v6706, %v1022
        %v6861 = vperm.slane %v6709, %v2104
        %v6862 = vsel %vm2106, %v6861, %v6860
        %v6863 = vperm.slane %v6712, %v1022
        %v6864 = vperm.slane %v6715, %v2104
        %v6865 = vsel %vm2106, %v6864, %v6863
        %v6866 = vperm.slane %v6718, %v1022
        %v6867 = vperm.slane %v6721, %v2104
        %v6868 = vsel %vm2106, %v6867, %v6866
        %v6869 = vperm.slane %v6724, %v1022
        %v6870 = vperm.slane %v6727, %v2104
        %v6871 = vsel %vm2106, %v6870, %v6869
        %v6872 = vperm.slane %v6730, %v1022
        %v6873 = vperm.slane %v6733, %v2104
        %v6874 = vsel %vm2106, %v6873, %v6872
        %v6875 = vperm.slane %v6736, %v1022
        %v6876 = vperm.slane %v6739, %v2104
        %v6877 = vsel %vm2106, %v6876, %v6875
        %v6878 = vperm.slane %v6742, %v1022
        %v6879 = vperm.slane %v6745, %v2104
        %v6880 = vsel %vm2106, %v6879, %v6878
        %v6881 = vperm.slane %v6748, %v1022
        %v6882 = vperm.slane %v6751, %v2104
        %v6883 = vsel %vm2106, %v6882, %v6881
        %v6884 = vperm.slane %v6754, %v1022
        %v6885 = vperm.slane %v6757, %v2104
        %v6886 = vsel %vm2106, %v6885, %v6884
        %v6887 = vperm.slane %v6760, %v1022
        %v6888 = vperm.slane %v6763, %v2104
        %v6889 = vsel %vm2106, %v6888, %v6887
        %v6890 = vperm.slane %v6766, %v1022
        %v6891 = vperm.slane %v6769, %v2104
        %v6892 = vsel %vm2106, %v6891, %v6890
        %v6893 = vperm.slane %v6772, %v1022
        %v6894 = vperm.slane %v6775, %v2104
        %v6895 = vsel %vm2106, %v6894, %v6893
        %v6896 = vperm.slane %v6778, %v1022
        %v6897 = vperm.slane %v6781, %v2104
        %v6898 = vsel %vm2106, %v6897, %v6896
        %v6899 = vperm.slane %v6784, %v1022
        %v6900 = vperm.slane %v6787, %v2104
        %v6901 = vsel %vm2106, %v6900, %v6899
        %v6902 = vperm.slane %v6790, %v1022
        %v6903 = vperm.slane %v6793, %v2104
        %v6904 = vsel %vm2106, %v6903, %v6902
        %v6905 = vperm.slane %v6796, %v1022
        %v6906 = vperm.slane %v6799, %v2104
        %v6907 = vsel %vm2106, %v6906, %v6905
        %v6908 = vperm.slane %v6802, %v1022
        %v6909 = vperm.slane %v6805, %v2104
        %v6910 = vsel %vm2106, %v6909, %v6908
        %v6911 = vperm.slane %v6808, %v1022
        %v6912 = vperm.slane %v6811, %v2104
        %v6913 = vsel %vm2106, %v6912, %v6911
        %v6914 = vperm.slane %v6814, %v1022
        %v6915 = vperm.slane %v6817, %v2104
        %v6916 = vsel %vm2106, %v6915, %v6914
        %v6917 = vperm.slane %v6820, %v1022
        %v6918 = vperm.slane %v6823, %v2104
        %v6919 = vsel %vm2106, %v6918, %v6917
        %v6920 = vsel %vm2201, %v6829, %v6826
        %v6921 = vsel %vm2203, %v6832, %v6920
        %v6922 = vsel %vm2205, %v6835, %v6921
        %v6923 = vsel %vm2207, %v6838, %v6922
        %v6924 = vsel %vm2209, %v6841, %v6923
        %v6925 = vsel %vm2211, %v6844, %v6924
        %v6926 = vsel %vm2213, %v6847, %v6925
        %v6927 = vsel %vm2201, %v6853, %v6850
        %v6928 = vsel %vm2203, %v6856, %v6927
        %v6929 = vsel %vm2205, %v6859, %v6928
        %v6930 = vsel %vm2207, %v6862, %v6929
        %v6931 = vsel %vm2209, %v6865, %v6930
        %v6932 = vsel %vm2211, %v6868, %v6931
        %v6933 = vsel %vm2213, %v6871, %v6932
        %v6934 = vsel %vm2201, %v6877, %v6874
        %v6935 = vsel %vm2203, %v6880, %v6934
        %v6936 = vsel %vm2205, %v6883, %v6935
        %v6937 = vsel %vm2207, %v6886, %v6936
        %v6938 = vsel %vm2209, %v6889, %v6937
        %v6939 = vsel %vm2211, %v6892, %v6938
        %v6940 = vsel %vm2213, %v6895, %v6939
        %v6941 = vsel %vm2201, %v6901, %v6898
        %v6942 = vsel %vm2203, %v6904, %v6941
        %v6943 = vsel %vm2205, %v6907, %v6942
        %v6944 = vsel %vm2207, %v6910, %v6943
        %v6945 = vsel %vm2209, %v6913, %v6944
        %v6946 = vsel %vm2211, %v6916, %v6945
        %v6947 = vsel %vm2213, %v6919, %v6946
        %v6948 = vsel %vm715, %v6926, 2147483647
        %v6949 = vand.u32 %v6948, 65535
        %v6950 = vshra.s32 %v6948, 16
        %v6951 = vcvt.s32.f32 %v6949
        %v6952 = vcvt.s32.f32 %v6950
        %6953 = vmin.xlane.f32.xlu0 %v6952
        %v6954 = vpop.xlane.xlu0 %6953
        %vm6955 = vcmp.eq.f32.partialorder %v6952, %v6954
        %v6956 = vsel %vm6955, %v6951, inf
        %6957 = vmin.xlane.f32.xlu0 %v6956
        %v6958 = vpop.xlane.xlu0 %6957
        %v6959 = vcvt.f32.s32 %v6958
        %v6960 = vcvt.f32.s32 %v6954
        %v6961 = vshll.u32 %v6960, 16
        %v6962 = vadd.s32 %v6961, %v6959
        %v6963 = vsel %vm715, %v6933, 2147483647
        %v6964 = vand.u32 %v6963, 65535
        %v6965 = vshra.s32 %v6963, 16
        %v6966 = vcvt.s32.f32 %v6964
        %v6967 = vcvt.s32.f32 %v6965
        %6968 = vmin.xlane.f32.xlu0 %v6967
        %v6969 = vpop.xlane.xlu0 %6968
        %vm6970 = vcmp.eq.f32.partialorder %v6967, %v6969
        %v6971 = vsel %vm6970, %v6966, inf
        %6972 = vmin.xlane.f32.xlu0 %v6971
        %v6973 = vpop.xlane.xlu0 %6972
        %v6974 = vcvt.f32.s32 %v6973
        %v6975 = vcvt.f32.s32 %v6969
        %v6976 = vshll.u32 %v6975, 16
        %v6977 = vadd.s32 %v6976, %v6974
        %v6978 = vsel %vm715, %v6940, 2147483647
        %v6979 = vand.u32 %v6978, 65535
        %v6980 = vshra.s32 %v6978, 16
        %v6981 = vcvt.s32.f32 %v6979
        %v6982 = vcvt.s32.f32 %v6980
        %6983 = vmin.xlane.f32.xlu0 %v6982
        %v6984 = vpop.xlane.xlu0 %6983
        %vm6985 = vcmp.eq.f32.partialorder %v6982, %v6984
        %v6986 = vsel %vm6985, %v6981, inf
        %6987 = vmin.xlane.f32.xlu0 %v6986
        %v6988 = vpop.xlane.xlu0 %6987
        %v6989 = vcvt.f32.s32 %v6988
        %v6990 = vcvt.f32.s32 %v6984
        %v6991 = vshll.u32 %v6990, 16
        %v6992 = vadd.s32 %v6991, %v6989
        %v6993 = vsel %vm715, %v6947, 2147483647
        %v6994 = vand.u32 %v6993, 65535
        %v6995 = vshra.s32 %v6993, 16
        %v6996 = vcvt.s32.f32 %v6994
        %v6997 = vcvt.s32.f32 %v6995
        %6998 = vmin.xlane.f32.xlu0 %v6997
        %v6999 = vpop.xlane.xlu0 %6998
        %vm7000 = vcmp.eq.f32.partialorder %v6997, %v6999
        %v7001 = vsel %vm7000, %v6996, inf
        %7002 = vmin.xlane.f32.xlu0 %v7001
        %v7003 = vpop.xlane.xlu0 %7002
        %v7004 = vcvt.f32.s32 %v7003
        %v7005 = vcvt.f32.s32 %v6999
        %v7006 = vshll.u32 %v7005, 16
        %v7007 = vadd.s32 %v7006, %v7004
        %vm7008 = vcmp.eq.s32.totalorder %v1022, %v6962
        %vm7009 = vcmp.eq.s32.totalorder %v1022, %v6977
        %vm7010 = vcmp.eq.s32.totalorder %v1022, %v6992
        %vm7011 = vcmp.eq.s32.totalorder %v1022, %v7007
        %v7012 = vsel %vm7008, 1.0, 0.0
        %v7013 = vsel %vm7009, 1.0, 0.0
        %v7014 = vsel %vm7010, 1.0, 0.0
        %v7015 = vsel %vm7011, 1.0, 0.0
        %v7017 = vsel %vm715, %v7012, 0
        %v7020 = vsel %vm715, %v7013, 0
        %v7023 = vsel %vm715, %v7014, 0
        %v7026 = vsel %vm715, %v7015, 0
        %7028 = vmatpush.msra.mxu0 0.0
        %7029 = vmatpush.msra.mxu0 0.0
        %7030 = vmatpush.msra.mxu0 0.0
        %7031 = vmatpush.msra.mxu0 0.0
        %7032 = vmatpush.msra.mxu0 0.0
        %7033 = vmatpush.msra.mxu0 0.0
        %7034 = vmatpush.msra.mxu0 0.0
        %7035 = vmatpush.msra.mxu0 0.0
        %7036 = vmatpush.msra.mxu0 0.0
        %7037 = vmatpush.msra.mxu0 0.0
        %7038 = vmatpush.msra.mxu0 0.0
        %7039 = vmatpush.msra.mxu0 0.0
        %7040 = vmatpush.msra.mxu0 0.0
        %7041 = vmatpush.msra.mxu0 0.0
        %v7042 = vand.u32 %v5217, 4294901760
        %7043 = vmatpush.msra.mxu0 %v7042
        %v7044 = vand.u32 %v5216, 4294901760
        %7045 = vmatpush.msra.mxu0 %v7044
        %v7046 = vand.u32 %v7017, 4294901760
        %v7047 = vsub.f32 %v7017, %v7046
        %v7048 = vand.u32 %v7047, 4294901760
        %v7049 = vsub.f32 %v7047, %v7048
        %v7050 = vand.u32 %v7049, 4294901760
        %7051 = vmatmul.f32.gmra.mxu0 %v7050
        %v7052 = vpop.f32.mrf.mxu0
        %v7053 = vadd.f32 0.0, %v7052
        %v7054 = vand.u32 %v7020, 4294901760
        %v7055 = vsub.f32 %v7020, %v7054
        %v7056 = vand.u32 %v7055, 4294901760
        %v7057 = vsub.f32 %v7055, %v7056
        %v7058 = vand.u32 %v7057, 4294901760
        %7059 = vmatmul.f32.gmra.mxu0 %v7058
        %v7060 = vpop.f32.mrf.mxu0
        %v7061 = vadd.f32 0.0, %v7060
        %v7062 = vand.u32 %v7023, 4294901760
        %v7063 = vsub.f32 %v7023, %v7062
        %v7064 = vand.u32 %v7063, 4294901760
        %v7065 = vsub.f32 %v7063, %v7064
        %v7066 = vand.u32 %v7065, 4294901760
        %7067 = vmatmul.f32.gmra.mxu0 %v7066
        %v7068 = vpop.f32.mrf.mxu0
        %v7069 = vadd.f32 0.0, %v7068
        %v7070 = vand.u32 %v7026, 4294901760
        %v7071 = vsub.f32 %v7026, %v7070
        %v7072 = vand.u32 %v7071, 4294901760
        %v7073 = vsub.f32 %v7071, %v7072
        %v7074 = vand.u32 %v7073, 4294901760
        %7075 = vmatmul.f32.gmra.mxu0 %v7074
        %v7076 = vpop.f32.mrf.mxu0
        %v7077 = vadd.f32 0.0, %v7076
        %7078 = vdwg.mxu0
        %7079 = vmatpush.msra.mxu0 0.0
        %7080 = vmatpush.msra.mxu0 0.0
        %7081 = vmatpush.msra.mxu0 0.0
        %7082 = vmatpush.msra.mxu0 0.0
        %7083 = vmatpush.msra.mxu0 0.0
        %7084 = vmatpush.msra.mxu0 0.0
        %7085 = vmatpush.msra.mxu0 0.0
        %7086 = vmatpush.msra.mxu0 0.0
        %7087 = vmatpush.msra.mxu0 0.0
        %7088 = vmatpush.msra.mxu0 0.0
        %7089 = vmatpush.msra.mxu0 0.0
        %7090 = vmatpush.msra.mxu0 0.0
        %7091 = vmatpush.msra.mxu0 0.0
        %7092 = vmatpush.msra.mxu0 0.0
        %v7093 = vand.u32 %v5217, 4294901760
        %v7094 = vsub.f32 %v5217, %v7093
        %v7095 = vand.u32 %v7094, 4294901760
        %v7096 = vsub.f32 %v7094, %v7095
        %v7097 = vand.u32 %v7096, 4294901760
        %7098 = vmatpush.msra.mxu0 %v7097
        %v7099 = vand.u32 %v5216, 4294901760
        %v7100 = vsub.f32 %v5216, %v7099
        %v7101 = vand.u32 %v7100, 4294901760
        %v7102 = vsub.f32 %v7100, %v7101
        %v7103 = vand.u32 %v7102, 4294901760
        %7104 = vmatpush.msra.mxu0 %v7103
        %v7105 = vand.u32 %v7017, 4294901760
        %7106 = vmatmul.f32.gmra.mxu0 %v7105
        %v7107 = vpop.f32.mrf.mxu0
        %v7108 = vadd.f32 %v7053, %v7107
        %v7109 = vand.u32 %v7020, 4294901760
        %7110 = vmatmul.f32.gmra.mxu0 %v7109
        %v7111 = vpop.f32.mrf.mxu0
        %v7112 = vadd.f32 %v7061, %v7111
        %v7113 = vand.u32 %v7023, 4294901760
        %7114 = vmatmul.f32.gmra.mxu0 %v7113
        %v7115 = vpop.f32.mrf.mxu0
        %v7116 = vadd.f32 %v7069, %v7115
        %v7117 = vand.u32 %v7026, 4294901760
        %7118 = vmatmul.f32.gmra.mxu0 %v7117
        %v7119 = vpop.f32.mrf.mxu0
        %v7120 = vadd.f32 %v7077, %v7119
        %7121 = vdwg.mxu0
        %7122 = vmatpush.msra.mxu0 0.0
        %7123 = vmatpush.msra.mxu0 0.0
        %7124 = vmatpush.msra.mxu0 0.0
        %7125 = vmatpush.msra.mxu0 0.0
        %7126 = vmatpush.msra.mxu0 0.0
        %7127 = vmatpush.msra.mxu0 0.0
        %7128 = vmatpush.msra.mxu0 0.0
        %7129 = vmatpush.msra.mxu0 0.0
        %7130 = vmatpush.msra.mxu0 0.0
        %7131 = vmatpush.msra.mxu0 0.0
        %7132 = vmatpush.msra.mxu0 0.0
        %7133 = vmatpush.msra.mxu0 0.0
        %7134 = vmatpush.msra.mxu0 0.0
        %7135 = vmatpush.msra.mxu0 0.0
        %v7136 = vand.u32 %v5217, 4294901760
        %v7137 = vsub.f32 %v5217, %v7136
        %7138 = vmatpush.msra.mxu0 %v7137
        %v7139 = vand.u32 %v5216, 4294901760
        %v7140 = vsub.f32 %v5216, %v7139
        %7141 = vmatpush.msra.mxu0 %v7140
        %v7142 = vand.u32 %v7017, 4294901760
        %v7143 = vsub.f32 %v7017, %v7142
        %7144 = vmatmul.f32.gmra.mxu0 %v7143
        %v7145 = vpop.f32.mrf.mxu0
        %v7146 = vadd.f32 %v7108, %v7145
        %v7147 = vand.u32 %v7020, 4294901760
        %v7148 = vsub.f32 %v7020, %v7147
        %7149 = vmatmul.f32.gmra.mxu0 %v7148
        %v7150 = vpop.f32.mrf.mxu0
        %v7151 = vadd.f32 %v7112, %v7150
        %v7152 = vand.u32 %v7023, 4294901760
        %v7153 = vsub.f32 %v7023, %v7152
        %7154 = vmatmul.f32.gmra.mxu0 %v7153
        %v7155 = vpop.f32.mrf.mxu0
        %v7156 = vadd.f32 %v7116, %v7155
        %v7157 = vand.u32 %v7026, 4294901760
        %v7158 = vsub.f32 %v7026, %v7157
        %7159 = vmatmul.f32.gmra.mxu0 %v7158
        %v7160 = vpop.f32.mrf.mxu0
        %v7161 = vadd.f32 %v7120, %v7160
        %7162 = vdwg.mxu0
        %7163 = vmatpush.msra.mxu0 0.0
        %7164 = vmatpush.msra.mxu0 0.0
        %7165 = vmatpush.msra.mxu0 0.0
        %7166 = vmatpush.msra.mxu0 0.0
        %7167 = vmatpush.msra.mxu0 0.0
        %7168 = vmatpush.msra.mxu0 0.0
        %7169 = vmatpush.msra.mxu0 0.0
        %7170 = vmatpush.msra.mxu0 0.0
        %7171 = vmatpush.msra.mxu0 0.0
        %7172 = vmatpush.msra.mxu0 0.0
        %7173 = vmatpush.msra.mxu0 0.0
        %7174 = vmatpush.msra.mxu0 0.0
        %7175 = vmatpush.msra.mxu0 0.0
        %7176 = vmatpush.msra.mxu0 0.0
        %v7177 = vand.u32 %v5217, 4294901760
        %7178 = vmatpush.msra.mxu0 %v7177
        %v7179 = vand.u32 %v5216, 4294901760
        %7180 = vmatpush.msra.mxu0 %v7179
        %v7181 = vand.u32 %v7017, 4294901760
        %v7182 = vsub.f32 %v7017, %v7181
        %v7183 = vand.u32 %v7182, 4294901760
        %7184 = vmatmul.f32.gmra.mxu0 %v7183
        %v7185 = vpop.f32.mrf.mxu0
        %v7186 = vadd.f32 %v7146, %v7185
        %v7187 = vand.u32 %v7020, 4294901760
        %v7188 = vsub.f32 %v7020, %v7187
        %v7189 = vand.u32 %v7188, 4294901760
        %7190 = vmatmul.f32.gmra.mxu0 %v7189
        %v7191 = vpop.f32.mrf.mxu0
        %v7192 = vadd.f32 %v7151, %v7191
        %v7193 = vand.u32 %v7023, 4294901760
        %v7194 = vsub.f32 %v7023, %v7193
        %v7195 = vand.u32 %v7194, 4294901760
        %7196 = vmatmul.f32.gmra.mxu0 %v7195
        %v7197 = vpop.f32.mrf.mxu0
        %v7198 = vadd.f32 %v7156, %v7197
        %v7199 = vand.u32 %v7026, 4294901760
        %v7200 = vsub.f32 %v7026, %v7199
        %v7201 = vand.u32 %v7200, 4294901760
        %7202 = vmatmul.f32.gmra.mxu0 %v7201
        %v7203 = vpop.f32.mrf.mxu0
        %v7204 = vadd.f32 %v7161, %v7203
        %7205 = vdwg.mxu0
        %7206 = vmatpush.msra.mxu0 0.0
        %7207 = vmatpush.msra.mxu0 0.0
        %7208 = vmatpush.msra.mxu0 0.0
        %7209 = vmatpush.msra.mxu0 0.0
        %7210 = vmatpush.msra.mxu0 0.0
        %7211 = vmatpush.msra.mxu0 0.0
        %7212 = vmatpush.msra.mxu0 0.0
        %7213 = vmatpush.msra.mxu0 0.0
        %7214 = vmatpush.msra.mxu0 0.0
        %7215 = vmatpush.msra.mxu0 0.0
        %7216 = vmatpush.msra.mxu0 0.0
        %7217 = vmatpush.msra.mxu0 0.0
        %7218 = vmatpush.msra.mxu0 0.0
        %7219 = vmatpush.msra.mxu0 0.0
        %v7220 = vand.u32 %v5217, 4294901760
        %v7221 = vsub.f32 %v5217, %v7220
        %v7222 = vand.u32 %v7221, 4294901760
        %7223 = vmatpush.msra.mxu0 %v7222
        %v7224 = vand.u32 %v5216, 4294901760
        %v7225 = vsub.f32 %v5216, %v7224
        %v7226 = vand.u32 %v7225, 4294901760
        %7227 = vmatpush.msra.mxu0 %v7226
        %v7228 = vand.u32 %v7017, 4294901760
        %7229 = vmatmul.f32.gmra.mxu0 %v7228
        %v7230 = vpop.f32.mrf.mxu0
        %v7231 = vadd.f32 %v7186, %v7230
        %v7232 = vand.u32 %v7020, 4294901760
        %7233 = vmatmul.f32.gmra.mxu0 %v7232
        %v7234 = vpop.f32.mrf.mxu0
        %v7235 = vadd.f32 %v7192, %v7234
        %v7236 = vand.u32 %v7023, 4294901760
        %7237 = vmatmul.f32.gmra.mxu0 %v7236
        %v7238 = vpop.f32.mrf.mxu0
        %v7239 = vadd.f32 %v7198, %v7238
        %v7240 = vand.u32 %v7026, 4294901760
        %7241 = vmatmul.f32.gmra.mxu0 %v7240
        %v7242 = vpop.f32.mrf.mxu0
        %v7243 = vadd.f32 %v7204, %v7242
        %7244 = vdwg.mxu0
        %7245 = vmatpush.msra.mxu0 0.0
        %7246 = vmatpush.msra.mxu0 0.0
        %7247 = vmatpush.msra.mxu0 0.0
        %7248 = vmatpush.msra.mxu0 0.0
        %7249 = vmatpush.msra.mxu0 0.0
        %7250 = vmatpush.msra.mxu0 0.0
        %7251 = vmatpush.msra.mxu0 0.0
        %7252 = vmatpush.msra.mxu0 0.0
        %7253 = vmatpush.msra.mxu0 0.0
        %7254 = vmatpush.msra.mxu0 0.0
        %7255 = vmatpush.msra.mxu0 0.0
        %7256 = vmatpush.msra.mxu0 0.0
        %7257 = vmatpush.msra.mxu0 0.0
        %7258 = vmatpush.msra.mxu0 0.0
        %v7259 = vand.u32 %v5217, 4294901760
        %7260 = vmatpush.msra.mxu0 %v7259
        %v7261 = vand.u32 %v5216, 4294901760
        %7262 = vmatpush.msra.mxu0 %v7261
        %v7263 = vand.u32 %v7017, 4294901760
        %7264 = vmatmul.f32.gmra.mxu0 %v7263
        %v7265 = vpop.f32.mrf.mxu0
        %v7266 = vadd.f32 %v7231, %v7265
        %v7267 = vand.u32 %v7020, 4294901760
        %7268 = vmatmul.f32.gmra.mxu0 %v7267
        %v7269 = vpop.f32.mrf.mxu0
        %v7270 = vadd.f32 %v7235, %v7269
        %v7271 = vand.u32 %v7023, 4294901760
        %7272 = vmatmul.f32.gmra.mxu0 %v7271
        %v7273 = vpop.f32.mrf.mxu0
        %v7274 = vadd.f32 %v7239, %v7273
        %v7275 = vand.u32 %v7026, 4294901760
        %7276 = vmatmul.f32.gmra.mxu0 %v7275
        %v7277 = vpop.f32.mrf.mxu0
        %v7278 = vadd.f32 %v7243, %v7277
        %7279 = vdwg.mxu0
        %v7280 = vsub.f32 %v5194, %v7266
        %v7281 = vsub.f32 %v5195, %v7270
        %v7282 = vsub.f32 %v5196, %v7274
        %v7283 = vsub.f32 %v5197, %v7278
        %v7284 = vmul.f32 %v7280, %v7280
        %v7285 = vmul.f32 %v7281, %v7281
        %v7286 = vmul.f32 %v7282, %v7282
        %v7287 = vmul.f32 %v7283, %v7283
        %v7288 = vadd.f32 %v5202, %v7284
        %v7289 = vadd.f32 %v5203, %v7285
        %v7290 = vadd.f32 %v5204, %v7286
        %v7291 = vadd.f32 %v5205, %v7287
        %v7292 = vadd.f32 %v5206, %v7266
        %v7293 = vadd.f32 %v5207, %v7270
        %v7294 = vadd.f32 %v5208, %v7274
        %v7295 = vadd.f32 %v5209, %v7278
        %vm7296 = vcmp.eq.s32.totalorder %v1022, 2
        %v7297 = vsel %vm7296, %v6962, %v5211
        %v7298 = vsel %vm7296, %v6977, %v5212
        %v7299 = vsel %vm7296, %v6992, %v5213
        %v7300 = vsel %vm7296, %v7007, %v5214
        %s7301 = scalar_lea.vmem %s5, 48
        %v7302 = vld [vmem:[%s7301] sm:$0xff]
        %v7303 = vld [vmem:[%s7301 + $0x8] sm:$0xff]
        %v7305 = vsel %vm996, %v7280, 0
        %v7308 = vsel %vm996, %v7281, 0
        %v7311 = vsel %vm996, %v7282, 0
        %v7314 = vsel %vm996, %v7283, 0
        %v7317 = vsel %vm996, %v7302, 0
        %v7320 = vsel %vm996, %v7303, 0
        %7322 = vmatpush.xpose.msra.mxu0 0.0
        %7323 = vmatpush.xpose.msra.mxu0 0.0
        %7324 = vmatpush.xpose.msra.mxu0 0.0
        %7325 = vmatpush.xpose.msra.mxu0 0.0
        %7326 = vmatpush.xpose.msra.mxu0 0.0
        %7327 = vmatpush.xpose.msra.mxu0 0.0
        %7328 = vmatpush.xpose.msra.mxu0 0.0
        %7329 = vmatpush.xpose.msra.mxu0 0.0
        %7330 = vmatpush.xpose.msra.mxu0 0.0
        %7331 = vmatpush.xpose.msra.mxu0 0.0
        %7332 = vmatpush.xpose.msra.mxu0 0.0
        %7333 = vmatpush.xpose.msra.mxu0 0.0
        %7334 = vmatpush.xpose.msra.mxu0 0.0
        %7335 = vmatpush.xpose.msra.mxu0 0.0
        %v7336 = vand.u32 %v7320, 4294901760
        %7337 = vmatpush.xpose.msra.mxu0 %v7336
        %v7338 = vand.u32 %v7317, 4294901760
        %7339 = vmatpush.xpose.msra.mxu0 %v7338
        %v7340 = vand.u32 %v7305, 4294901760
        %v7341 = vsub.f32 %v7305, %v7340
        %v7342 = vand.u32 %v7341, 4294901760
        %v7343 = vsub.f32 %v7341, %v7342
        %v7344 = vand.u32 %v7343, 4294901760
        %7345 = vmatmul.f32.gmra.mxu0 %v7344
        %v7346 = vpop.f32.mrf.mxu0
        %v7347 = vadd.f32 0.0, %v7346
        %v7348 = vand.u32 %v7308, 4294901760
        %v7349 = vsub.f32 %v7308, %v7348
        %v7350 = vand.u32 %v7349, 4294901760
        %v7351 = vsub.f32 %v7349, %v7350
        %v7352 = vand.u32 %v7351, 4294901760
        %7353 = vmatmul.f32.gmra.mxu0 %v7352
        %v7354 = vpop.f32.mrf.mxu0
        %v7355 = vadd.f32 0.0, %v7354
        %v7356 = vand.u32 %v7311, 4294901760
        %v7357 = vsub.f32 %v7311, %v7356
        %v7358 = vand.u32 %v7357, 4294901760
        %v7359 = vsub.f32 %v7357, %v7358
        %v7360 = vand.u32 %v7359, 4294901760
        %7361 = vmatmul.f32.gmra.mxu0 %v7360
        %v7362 = vpop.f32.mrf.mxu0
        %v7363 = vadd.f32 0.0, %v7362
        %v7364 = vand.u32 %v7314, 4294901760
        %v7365 = vsub.f32 %v7314, %v7364
        %v7366 = vand.u32 %v7365, 4294901760
        %v7367 = vsub.f32 %v7365, %v7366
        %v7368 = vand.u32 %v7367, 4294901760
        %7369 = vmatmul.f32.gmra.mxu0 %v7368
        %v7370 = vpop.f32.mrf.mxu0
        %v7371 = vadd.f32 0.0, %v7370
        %7372 = vdwg.mxu0
        %7373 = vmatpush.xpose.msra.mxu0 0.0
        %7374 = vmatpush.xpose.msra.mxu0 0.0
        %7375 = vmatpush.xpose.msra.mxu0 0.0
        %7376 = vmatpush.xpose.msra.mxu0 0.0
        %7377 = vmatpush.xpose.msra.mxu0 0.0
        %7378 = vmatpush.xpose.msra.mxu0 0.0
        %7379 = vmatpush.xpose.msra.mxu0 0.0
        %7380 = vmatpush.xpose.msra.mxu0 0.0
        %7381 = vmatpush.xpose.msra.mxu0 0.0
        %7382 = vmatpush.xpose.msra.mxu0 0.0
        %7383 = vmatpush.xpose.msra.mxu0 0.0
        %7384 = vmatpush.xpose.msra.mxu0 0.0
        %7385 = vmatpush.xpose.msra.mxu0 0.0
        %7386 = vmatpush.xpose.msra.mxu0 0.0
        %v7387 = vand.u32 %v7320, 4294901760
        %v7388 = vsub.f32 %v7320, %v7387
        %v7389 = vand.u32 %v7388, 4294901760
        %v7390 = vsub.f32 %v7388, %v7389
        %v7391 = vand.u32 %v7390, 4294901760
        %7392 = vmatpush.xpose.msra.mxu0 %v7391
        %v7393 = vand.u32 %v7317, 4294901760
        %v7394 = vsub.f32 %v7317, %v7393
        %v7395 = vand.u32 %v7394, 4294901760
        %v7396 = vsub.f32 %v7394, %v7395
        %v7397 = vand.u32 %v7396, 4294901760
        %7398 = vmatpush.xpose.msra.mxu0 %v7397
        %v7399 = vand.u32 %v7305, 4294901760
        %7400 = vmatmul.f32.gmra.mxu0 %v7399
        %v7401 = vpop.f32.mrf.mxu0
        %v7402 = vadd.f32 %v7347, %v7401
        %v7403 = vand.u32 %v7308, 4294901760
        %7404 = vmatmul.f32.gmra.mxu0 %v7403
        %v7405 = vpop.f32.mrf.mxu0
        %v7406 = vadd.f32 %v7355, %v7405
        %v7407 = vand.u32 %v7311, 4294901760
        %7408 = vmatmul.f32.gmra.mxu0 %v7407
        %v7409 = vpop.f32.mrf.mxu0
        %v7410 = vadd.f32 %v7363, %v7409
        %v7411 = vand.u32 %v7314, 4294901760
        %7412 = vmatmul.f32.gmra.mxu0 %v7411
        %v7413 = vpop.f32.mrf.mxu0
        %v7414 = vadd.f32 %v7371, %v7413
        %7415 = vdwg.mxu0
        %7416 = vmatpush.xpose.msra.mxu0 0.0
        %7417 = vmatpush.xpose.msra.mxu0 0.0
        %7418 = vmatpush.xpose.msra.mxu0 0.0
        %7419 = vmatpush.xpose.msra.mxu0 0.0
        %7420 = vmatpush.xpose.msra.mxu0 0.0
        %7421 = vmatpush.xpose.msra.mxu0 0.0
        %7422 = vmatpush.xpose.msra.mxu0 0.0
        %7423 = vmatpush.xpose.msra.mxu0 0.0
        %7424 = vmatpush.xpose.msra.mxu0 0.0
        %7425 = vmatpush.xpose.msra.mxu0 0.0
        %7426 = vmatpush.xpose.msra.mxu0 0.0
        %7427 = vmatpush.xpose.msra.mxu0 0.0
        %7428 = vmatpush.xpose.msra.mxu0 0.0
        %7429 = vmatpush.xpose.msra.mxu0 0.0
        %v7430 = vand.u32 %v7320, 4294901760
        %v7431 = vsub.f32 %v7320, %v7430
        %7432 = vmatpush.xpose.msra.mxu0 %v7431
        %v7433 = vand.u32 %v7317, 4294901760
        %v7434 = vsub.f32 %v7317, %v7433
        %7435 = vmatpush.xpose.msra.mxu0 %v7434
        %v7436 = vand.u32 %v7305, 4294901760
        %v7437 = vsub.f32 %v7305, %v7436
        %7438 = vmatmul.f32.gmra.mxu0 %v7437
        %v7439 = vpop.f32.mrf.mxu0
        %v7440 = vadd.f32 %v7402, %v7439
        %v7441 = vand.u32 %v7308, 4294901760
        %v7442 = vsub.f32 %v7308, %v7441
        %7443 = vmatmul.f32.gmra.mxu0 %v7442
        %v7444 = vpop.f32.mrf.mxu0
        %v7445 = vadd.f32 %v7406, %v7444
        %v7446 = vand.u32 %v7311, 4294901760
        %v7447 = vsub.f32 %v7311, %v7446
        %7448 = vmatmul.f32.gmra.mxu0 %v7447
        %v7449 = vpop.f32.mrf.mxu0
        %v7450 = vadd.f32 %v7410, %v7449
        %v7451 = vand.u32 %v7314, 4294901760
        %v7452 = vsub.f32 %v7314, %v7451
        %7453 = vmatmul.f32.gmra.mxu0 %v7452
        %v7454 = vpop.f32.mrf.mxu0
        %v7455 = vadd.f32 %v7414, %v7454
        %7456 = vdwg.mxu0
        %7457 = vmatpush.xpose.msra.mxu0 0.0
        %7458 = vmatpush.xpose.msra.mxu0 0.0
        %7459 = vmatpush.xpose.msra.mxu0 0.0
        %7460 = vmatpush.xpose.msra.mxu0 0.0
        %7461 = vmatpush.xpose.msra.mxu0 0.0
        %7462 = vmatpush.xpose.msra.mxu0 0.0
        %7463 = vmatpush.xpose.msra.mxu0 0.0
        %7464 = vmatpush.xpose.msra.mxu0 0.0
        %7465 = vmatpush.xpose.msra.mxu0 0.0
        %7466 = vmatpush.xpose.msra.mxu0 0.0
        %7467 = vmatpush.xpose.msra.mxu0 0.0
        %7468 = vmatpush.xpose.msra.mxu0 0.0
        %7469 = vmatpush.xpose.msra.mxu0 0.0
        %7470 = vmatpush.xpose.msra.mxu0 0.0
        %v7471 = vand.u32 %v7320, 4294901760
        %7472 = vmatpush.xpose.msra.mxu0 %v7471
        %v7473 = vand.u32 %v7317, 4294901760
        %7474 = vmatpush.xpose.msra.mxu0 %v7473
        %v7475 = vand.u32 %v7305, 4294901760
        %v7476 = vsub.f32 %v7305, %v7475
        %v7477 = vand.u32 %v7476, 4294901760
        %7478 = vmatmul.f32.gmra.mxu0 %v7477
        %v7479 = vpop.f32.mrf.mxu0
        %v7480 = vadd.f32 %v7440, %v7479
        %v7481 = vand.u32 %v7308, 4294901760
        %v7482 = vsub.f32 %v7308, %v7481
        %v7483 = vand.u32 %v7482, 4294901760
        %7484 = vmatmul.f32.gmra.mxu0 %v7483
        %v7485 = vpop.f32.mrf.mxu0
        %v7486 = vadd.f32 %v7445, %v7485
        %v7487 = vand.u32 %v7311, 4294901760
        %v7488 = vsub.f32 %v7311, %v7487
        %v7489 = vand.u32 %v7488, 4294901760
        %7490 = vmatmul.f32.gmra.mxu0 %v7489
        %v7491 = vpop.f32.mrf.mxu0
        %v7492 = vadd.f32 %v7450, %v7491
        %v7493 = vand.u32 %v7314, 4294901760
        %v7494 = vsub.f32 %v7314, %v7493
        %v7495 = vand.u32 %v7494, 4294901760
        %7496 = vmatmul.f32.gmra.mxu0 %v7495
        %v7497 = vpop.f32.mrf.mxu0
        %v7498 = vadd.f32 %v7455, %v7497
        %7499 = vdwg.mxu0
        %7500 = vmatpush.xpose.msra.mxu0 0.0
        %7501 = vmatpush.xpose.msra.mxu0 0.0
        %7502 = vmatpush.xpose.msra.mxu0 0.0
        %7503 = vmatpush.xpose.msra.mxu0 0.0
        %7504 = vmatpush.xpose.msra.mxu0 0.0
        %7505 = vmatpush.xpose.msra.mxu0 0.0
        %7506 = vmatpush.xpose.msra.mxu0 0.0
        %7507 = vmatpush.xpose.msra.mxu0 0.0
        %7508 = vmatpush.xpose.msra.mxu0 0.0
        %7509 = vmatpush.xpose.msra.mxu0 0.0
        %7510 = vmatpush.xpose.msra.mxu0 0.0
        %7511 = vmatpush.xpose.msra.mxu0 0.0
        %7512 = vmatpush.xpose.msra.mxu0 0.0
        %7513 = vmatpush.xpose.msra.mxu0 0.0
        %v7514 = vand.u32 %v7320, 4294901760
        %v7515 = vsub.f32 %v7320, %v7514
        %v7516 = vand.u32 %v7515, 4294901760
        %7517 = vmatpush.xpose.msra.mxu0 %v7516
        %v7518 = vand.u32 %v7317, 4294901760
        %v7519 = vsub.f32 %v7317, %v7518
        %v7520 = vand.u32 %v7519, 4294901760
        %7521 = vmatpush.xpose.msra.mxu0 %v7520
        %v7522 = vand.u32 %v7305, 4294901760
        %7523 = vmatmul.f32.gmra.mxu0 %v7522
        %v7524 = vpop.f32.mrf.mxu0
        %v7525 = vadd.f32 %v7480, %v7524
        %v7526 = vand.u32 %v7308, 4294901760
        %7527 = vmatmul.f32.gmra.mxu0 %v7526
        %v7528 = vpop.f32.mrf.mxu0
        %v7529 = vadd.f32 %v7486, %v7528
        %v7530 = vand.u32 %v7311, 4294901760
        %7531 = vmatmul.f32.gmra.mxu0 %v7530
        %v7532 = vpop.f32.mrf.mxu0
        %v7533 = vadd.f32 %v7492, %v7532
        %v7534 = vand.u32 %v7314, 4294901760
        %7535 = vmatmul.f32.gmra.mxu0 %v7534
        %v7536 = vpop.f32.mrf.mxu0
        %v7537 = vadd.f32 %v7498, %v7536
        %7538 = vdwg.mxu0
        %7539 = vmatpush.xpose.msra.mxu0 0.0
        %7540 = vmatpush.xpose.msra.mxu0 0.0
        %7541 = vmatpush.xpose.msra.mxu0 0.0
        %7542 = vmatpush.xpose.msra.mxu0 0.0
        %7543 = vmatpush.xpose.msra.mxu0 0.0
        %7544 = vmatpush.xpose.msra.mxu0 0.0
        %7545 = vmatpush.xpose.msra.mxu0 0.0
        %7546 = vmatpush.xpose.msra.mxu0 0.0
        %7547 = vmatpush.xpose.msra.mxu0 0.0
        %7548 = vmatpush.xpose.msra.mxu0 0.0
        %7549 = vmatpush.xpose.msra.mxu0 0.0
        %7550 = vmatpush.xpose.msra.mxu0 0.0
        %7551 = vmatpush.xpose.msra.mxu0 0.0
        %7552 = vmatpush.xpose.msra.mxu0 0.0
        %v7553 = vand.u32 %v7320, 4294901760
        %7554 = vmatpush.xpose.msra.mxu0 %v7553
        %v7555 = vand.u32 %v7317, 4294901760
        %7556 = vmatpush.xpose.msra.mxu0 %v7555
        %v7557 = vand.u32 %v7305, 4294901760
        %7558 = vmatmul.f32.gmra.mxu0 %v7557
        %v7559 = vpop.f32.mrf.mxu0
        %v7560 = vadd.f32 %v7525, %v7559
        %v7561 = vand.u32 %v7308, 4294901760
        %7562 = vmatmul.f32.gmra.mxu0 %v7561
        %v7563 = vpop.f32.mrf.mxu0
        %v7564 = vadd.f32 %v7529, %v7563
        %v7565 = vand.u32 %v7311, 4294901760
        %7566 = vmatmul.f32.gmra.mxu0 %v7565
        %v7567 = vpop.f32.mrf.mxu0
        %v7568 = vadd.f32 %v7533, %v7567
        %v7569 = vand.u32 %v7314, 4294901760
        %7570 = vmatmul.f32.gmra.mxu0 %v7569
        %v7571 = vpop.f32.mrf.mxu0
        %v7572 = vadd.f32 %v7537, %v7571
        %7573 = vdwg.mxu0
        %v7574 = vmul.f32 %v7560, 2.0
        %v7575 = vmul.f32 %v7564, 2.0
        %v7576 = vmul.f32 %v7568, 2.0
        %v7577 = vmul.f32 %v7572, 2.0
        %v7582 = vperm.slane %v7574, 0
        %v7583 = vlaneseq
        %v7584 = vshrl.u32 %v7583, 7
        %7586 = vset.pattern.permute.xlu0 %v7584
        %7587 = vperm.xlu0 %7586, %v7582
        %v7588 = vpop.permute.xlu0 %7587
        %v7589 = vlaneseq
        %v7590 = vshrl.u32 %v7589, 7
        %v7591 = vadd.s32 %v7590, 8
        %7592 = vset.pattern.permute.xlu0 %v7591
        %7593 = vperm.xlu0 %7592, %v7582
        %v7594 = vpop.permute.xlu0 %7593
        %v7595 = vperm.slane %v7574, 1
        %v7596 = vlaneseq
        %v7597 = vshrl.u32 %v7596, 7
        %7599 = vset.pattern.permute.xlu0 %v7597
        %7600 = vperm.xlu0 %7599, %v7595
        %v7601 = vpop.permute.xlu0 %7600
        %v7602 = vlaneseq
        %v7603 = vshrl.u32 %v7602, 7
        %v7604 = vadd.s32 %v7603, 8
        %7605 = vset.pattern.permute.xlu0 %v7604
        %7606 = vperm.xlu0 %7605, %v7595
        %v7607 = vpop.permute.xlu0 %7606
        %v7608 = vperm.slane %v7574, 2
        %v7609 = vlaneseq
        %v7610 = vshrl.u32 %v7609, 7
        %7612 = vset.pattern.permute.xlu0 %v7610
        %7613 = vperm.xlu0 %7612, %v7608
        %v7614 = vpop.permute.xlu0 %7613
        %v7615 = vlaneseq
        %v7616 = vshrl.u32 %v7615, 7
        %v7617 = vadd.s32 %v7616, 8
        %7618 = vset.pattern.permute.xlu0 %v7617
        %7619 = vperm.xlu0 %7618, %v7608
        %v7620 = vpop.permute.xlu0 %7619
        %v7621 = vperm.slane %v7574, 3
        %v7622 = vlaneseq
        %v7623 = vshrl.u32 %v7622, 7
        %7625 = vset.pattern.permute.xlu0 %v7623
        %7626 = vperm.xlu0 %7625, %v7621
        %v7627 = vpop.permute.xlu0 %7626
        %v7628 = vlaneseq
        %v7629 = vshrl.u32 %v7628, 7
        %v7630 = vadd.s32 %v7629, 8
        %7631 = vset.pattern.permute.xlu0 %v7630
        %7632 = vperm.xlu0 %7631, %v7621
        %v7633 = vpop.permute.xlu0 %7632
        %v7634 = vperm.slane %v7574, 4
        %v7635 = vlaneseq
        %v7636 = vshrl.u32 %v7635, 7
        %7638 = vset.pattern.permute.xlu0 %v7636
        %7639 = vperm.xlu0 %7638, %v7634
        %v7640 = vpop.permute.xlu0 %7639
        %v7641 = vlaneseq
        %v7642 = vshrl.u32 %v7641, 7
        %v7643 = vadd.s32 %v7642, 8
        %7644 = vset.pattern.permute.xlu0 %v7643
        %7645 = vperm.xlu0 %7644, %v7634
        %v7646 = vpop.permute.xlu0 %7645
        %v7647 = vperm.slane %v7574, 5
        %v7648 = vlaneseq
        %v7649 = vshrl.u32 %v7648, 7
        %7651 = vset.pattern.permute.xlu0 %v7649
        %7652 = vperm.xlu0 %7651, %v7647
        %v7653 = vpop.permute.xlu0 %7652
        %v7654 = vlaneseq
        %v7655 = vshrl.u32 %v7654, 7
        %v7656 = vadd.s32 %v7655, 8
        %7657 = vset.pattern.permute.xlu0 %v7656
        %7658 = vperm.xlu0 %7657, %v7647
        %v7659 = vpop.permute.xlu0 %7658
        %v7660 = vperm.slane %v7574, 6
        %v7661 = vlaneseq
        %v7662 = vshrl.u32 %v7661, 7
        %7664 = vset.pattern.permute.xlu0 %v7662
        %7665 = vperm.xlu0 %7664, %v7660
        %v7666 = vpop.permute.xlu0 %7665
        %v7667 = vlaneseq
        %v7668 = vshrl.u32 %v7667, 7
        %v7669 = vadd.s32 %v7668, 8
        %7670 = vset.pattern.permute.xlu0 %v7669
        %7671 = vperm.xlu0 %7670, %v7660
        %v7672 = vpop.permute.xlu0 %7671
        %v7673 = vperm.slane %v7574, 7
        %v7674 = vlaneseq
        %v7675 = vshrl.u32 %v7674, 7
        %7677 = vset.pattern.permute.xlu0 %v7675
        %7678 = vperm.xlu0 %7677, %v7673
        %v7679 = vpop.permute.xlu0 %7678
        %v7680 = vlaneseq
        %v7681 = vshrl.u32 %v7680, 7
        %v7682 = vadd.s32 %v7681, 8
        %7683 = vset.pattern.permute.xlu0 %v7682
        %7684 = vperm.xlu0 %7683, %v7673
        %v7685 = vpop.permute.xlu0 %7684
        %v7686 = vperm.slane %v7575, 0
        %v7687 = vlaneseq
        %v7688 = vshrl.u32 %v7687, 7
        %7690 = vset.pattern.permute.xlu0 %v7688
        %7691 = vperm.xlu0 %7690, %v7686
        %v7692 = vpop.permute.xlu0 %7691
        %v7693 = vlaneseq
        %v7694 = vshrl.u32 %v7693, 7
        %v7695 = vadd.s32 %v7694, 8
        %7696 = vset.pattern.permute.xlu0 %v7695
        %7697 = vperm.xlu0 %7696, %v7686
        %v7698 = vpop.permute.xlu0 %7697
        %v7699 = vperm.slane %v7575, 1
        %v7700 = vlaneseq
        %v7701 = vshrl.u32 %v7700, 7
        %7703 = vset.pattern.permute.xlu0 %v7701
        %7704 = vperm.xlu0 %7703, %v7699
        %v7705 = vpop.permute.xlu0 %7704
        %v7706 = vlaneseq
        %v7707 = vshrl.u32 %v7706, 7
        %v7708 = vadd.s32 %v7707, 8
        %7709 = vset.pattern.permute.xlu0 %v7708
        %7710 = vperm.xlu0 %7709, %v7699
        %v7711 = vpop.permute.xlu0 %7710
        %v7712 = vperm.slane %v7575, 2
        %v7713 = vlaneseq
        %v7714 = vshrl.u32 %v7713, 7
        %7716 = vset.pattern.permute.xlu0 %v7714
        %7717 = vperm.xlu0 %7716, %v7712
        %v7718 = vpop.permute.xlu0 %7717
        %v7719 = vlaneseq
        %v7720 = vshrl.u32 %v7719, 7
        %v7721 = vadd.s32 %v7720, 8
        %7722 = vset.pattern.permute.xlu0 %v7721
        %7723 = vperm.xlu0 %7722, %v7712
        %v7724 = vpop.permute.xlu0 %7723
        %v7725 = vperm.slane %v7575, 3
        %v7726 = vlaneseq
        %v7727 = vshrl.u32 %v7726, 7
        %7729 = vset.pattern.permute.xlu0 %v7727
        %7730 = vperm.xlu0 %7729, %v7725
        %v7731 = vpop.permute.xlu0 %7730
        %v7732 = vlaneseq
        %v7733 = vshrl.u32 %v7732, 7
        %v7734 = vadd.s32 %v7733, 8
        %7735 = vset.pattern.permute.xlu0 %v7734
        %7736 = vperm.xlu0 %7735, %v7725
        %v7737 = vpop.permute.xlu0 %7736
        %v7738 = vperm.slane %v7575, 4
        %v7739 = vlaneseq
        %v7740 = vshrl.u32 %v7739, 7
        %7742 = vset.pattern.permute.xlu0 %v7740
        %7743 = vperm.xlu0 %7742, %v7738
        %v7744 = vpop.permute.xlu0 %7743
        %v7745 = vlaneseq
        %v7746 = vshrl.u32 %v7745, 7
        %v7747 = vadd.s32 %v7746, 8
        %7748 = vset.pattern.permute.xlu0 %v7747
        %7749 = vperm.xlu0 %7748, %v7738
        %v7750 = vpop.permute.xlu0 %7749
        %v7751 = vperm.slane %v7575, 5
        %v7752 = vlaneseq
        %v7753 = vshrl.u32 %v7752, 7
        %7755 = vset.pattern.permute.xlu0 %v7753
        %7756 = vperm.xlu0 %7755, %v7751
        %v7757 = vpop.permute.xlu0 %7756
        %v7758 = vlaneseq
        %v7759 = vshrl.u32 %v7758, 7
        %v7760 = vadd.s32 %v7759, 8
        %7761 = vset.pattern.permute.xlu0 %v7760
        %7762 = vperm.xlu0 %7761, %v7751
        %v7763 = vpop.permute.xlu0 %7762
        %v7764 = vperm.slane %v7575, 6
        %v7765 = vlaneseq
        %v7766 = vshrl.u32 %v7765, 7
        %7768 = vset.pattern.permute.xlu0 %v7766
        %7769 = vperm.xlu0 %7768, %v7764
        %v7770 = vpop.permute.xlu0 %7769
        %v7771 = vlaneseq
        %v7772 = vshrl.u32 %v7771, 7
        %v7773 = vadd.s32 %v7772, 8
        %7774 = vset.pattern.permute.xlu0 %v7773
        %7775 = vperm.xlu0 %7774, %v7764
        %v7776 = vpop.permute.xlu0 %7775
        %v7777 = vperm.slane %v7575, 7
        %v7778 = vlaneseq
        %v7779 = vshrl.u32 %v7778, 7
        %7781 = vset.pattern.permute.xlu0 %v7779
        %7782 = vperm.xlu0 %7781, %v7777
        %v7783 = vpop.permute.xlu0 %7782
        %v7784 = vlaneseq
        %v7785 = vshrl.u32 %v7784, 7
        %v7786 = vadd.s32 %v7785, 8
        %7787 = vset.pattern.permute.xlu0 %v7786
        %7788 = vperm.xlu0 %7787, %v7777
        %v7789 = vpop.permute.xlu0 %7788
        %v7790 = vperm.slane %v7576, 0
        %v7791 = vlaneseq
        %v7792 = vshrl.u32 %v7791, 7
        %7794 = vset.pattern.permute.xlu0 %v7792
        %7795 = vperm.xlu0 %7794, %v7790
        %v7796 = vpop.permute.xlu0 %7795
        %v7797 = vlaneseq
        %v7798 = vshrl.u32 %v7797, 7
        %v7799 = vadd.s32 %v7798, 8
        %7800 = vset.pattern.permute.xlu0 %v7799
        %7801 = vperm.xlu0 %7800, %v7790
        %v7802 = vpop.permute.xlu0 %7801
        %v7803 = vperm.slane %v7576, 1
        %v7804 = vlaneseq
        %v7805 = vshrl.u32 %v7804, 7
        %7807 = vset.pattern.permute.xlu0 %v7805
        %7808 = vperm.xlu0 %7807, %v7803
        %v7809 = vpop.permute.xlu0 %7808
        %v7810 = vlaneseq
        %v7811 = vshrl.u32 %v7810, 7
        %v7812 = vadd.s32 %v7811, 8
        %7813 = vset.pattern.permute.xlu0 %v7812
        %7814 = vperm.xlu0 %7813, %v7803
        %v7815 = vpop.permute.xlu0 %7814
        %v7816 = vperm.slane %v7576, 2
        %v7817 = vlaneseq
        %v7818 = vshrl.u32 %v7817, 7
        %7820 = vset.pattern.permute.xlu0 %v7818
        %7821 = vperm.xlu0 %7820, %v7816
        %v7822 = vpop.permute.xlu0 %7821
        %v7823 = vlaneseq
        %v7824 = vshrl.u32 %v7823, 7
        %v7825 = vadd.s32 %v7824, 8
        %7826 = vset.pattern.permute.xlu0 %v7825
        %7827 = vperm.xlu0 %7826, %v7816
        %v7828 = vpop.permute.xlu0 %7827
        %v7829 = vperm.slane %v7576, 3
        %v7830 = vlaneseq
        %v7831 = vshrl.u32 %v7830, 7
        %7833 = vset.pattern.permute.xlu0 %v7831
        %7834 = vperm.xlu0 %7833, %v7829
        %v7835 = vpop.permute.xlu0 %7834
        %v7836 = vlaneseq
        %v7837 = vshrl.u32 %v7836, 7
        %v7838 = vadd.s32 %v7837, 8
        %7839 = vset.pattern.permute.xlu0 %v7838
        %7840 = vperm.xlu0 %7839, %v7829
        %v7841 = vpop.permute.xlu0 %7840
        %v7842 = vperm.slane %v7576, 4
        %v7843 = vlaneseq
        %v7844 = vshrl.u32 %v7843, 7
        %7846 = vset.pattern.permute.xlu0 %v7844
        %7847 = vperm.xlu0 %7846, %v7842
        %v7848 = vpop.permute.xlu0 %7847
        %v7849 = vlaneseq
        %v7850 = vshrl.u32 %v7849, 7
        %v7851 = vadd.s32 %v7850, 8
        %7852 = vset.pattern.permute.xlu0 %v7851
        %7853 = vperm.xlu0 %7852, %v7842
        %v7854 = vpop.permute.xlu0 %7853
        %v7855 = vperm.slane %v7576, 5
        %v7856 = vlaneseq
        %v7857 = vshrl.u32 %v7856, 7
        %7859 = vset.pattern.permute.xlu0 %v7857
        %7860 = vperm.xlu0 %7859, %v7855
        %v7861 = vpop.permute.xlu0 %7860
        %v7862 = vlaneseq
        %v7863 = vshrl.u32 %v7862, 7
        %v7864 = vadd.s32 %v7863, 8
        %7865 = vset.pattern.permute.xlu0 %v7864
        %7866 = vperm.xlu0 %7865, %v7855
        %v7867 = vpop.permute.xlu0 %7866
        %v7868 = vperm.slane %v7576, 6
        %v7869 = vlaneseq
        %v7870 = vshrl.u32 %v7869, 7
        %7872 = vset.pattern.permute.xlu0 %v7870
        %7873 = vperm.xlu0 %7872, %v7868
        %v7874 = vpop.permute.xlu0 %7873
        %v7875 = vlaneseq
        %v7876 = vshrl.u32 %v7875, 7
        %v7877 = vadd.s32 %v7876, 8
        %7878 = vset.pattern.permute.xlu0 %v7877
        %7879 = vperm.xlu0 %7878, %v7868
        %v7880 = vpop.permute.xlu0 %7879
        %v7881 = vperm.slane %v7576, 7
        %v7882 = vlaneseq
        %v7883 = vshrl.u32 %v7882, 7
        %7885 = vset.pattern.permute.xlu0 %v7883
        %7886 = vperm.xlu0 %7885, %v7881
        %v7887 = vpop.permute.xlu0 %7886
        %v7888 = vlaneseq
        %v7889 = vshrl.u32 %v7888, 7
        %v7890 = vadd.s32 %v7889, 8
        %7891 = vset.pattern.permute.xlu0 %v7890
        %7892 = vperm.xlu0 %7891, %v7881
        %v7893 = vpop.permute.xlu0 %7892
        %v7894 = vperm.slane %v7577, 0
        %v7895 = vlaneseq
        %v7896 = vshrl.u32 %v7895, 7
        %7898 = vset.pattern.permute.xlu0 %v7896
        %7899 = vperm.xlu0 %7898, %v7894
        %v7900 = vpop.permute.xlu0 %7899
        %v7901 = vlaneseq
        %v7902 = vshrl.u32 %v7901, 7
        %v7903 = vadd.s32 %v7902, 8
        %7904 = vset.pattern.permute.xlu0 %v7903
        %7905 = vperm.xlu0 %7904, %v7894
        %v7906 = vpop.permute.xlu0 %7905
        %v7907 = vperm.slane %v7577, 1
        %v7908 = vlaneseq
        %v7909 = vshrl.u32 %v7908, 7
        %7911 = vset.pattern.permute.xlu0 %v7909
        %7912 = vperm.xlu0 %7911, %v7907
        %v7913 = vpop.permute.xlu0 %7912
        %v7914 = vlaneseq
        %v7915 = vshrl.u32 %v7914, 7
        %v7916 = vadd.s32 %v7915, 8
        %7917 = vset.pattern.permute.xlu0 %v7916
        %7918 = vperm.xlu0 %7917, %v7907
        %v7919 = vpop.permute.xlu0 %7918
        %v7920 = vperm.slane %v7577, 2
        %v7921 = vlaneseq
        %v7922 = vshrl.u32 %v7921, 7
        %7924 = vset.pattern.permute.xlu0 %v7922
        %7925 = vperm.xlu0 %7924, %v7920
        %v7926 = vpop.permute.xlu0 %7925
        %v7927 = vlaneseq
        %v7928 = vshrl.u32 %v7927, 7
        %v7929 = vadd.s32 %v7928, 8
        %7930 = vset.pattern.permute.xlu0 %v7929
        %7931 = vperm.xlu0 %7930, %v7920
        %v7932 = vpop.permute.xlu0 %7931
        %v7933 = vperm.slane %v7577, 3
        %v7934 = vlaneseq
        %v7935 = vshrl.u32 %v7934, 7
        %7937 = vset.pattern.permute.xlu0 %v7935
        %7938 = vperm.xlu0 %7937, %v7933
        %v7939 = vpop.permute.xlu0 %7938
        %v7940 = vlaneseq
        %v7941 = vshrl.u32 %v7940, 7
        %v7942 = vadd.s32 %v7941, 8
        %7943 = vset.pattern.permute.xlu0 %v7942
        %7944 = vperm.xlu0 %7943, %v7933
        %v7945 = vpop.permute.xlu0 %7944
        %v7946 = vperm.slane %v7577, 4
        %v7947 = vlaneseq
        %v7948 = vshrl.u32 %v7947, 7
        %7950 = vset.pattern.permute.xlu0 %v7948
        %7951 = vperm.xlu0 %7950, %v7946
        %v7952 = vpop.permute.xlu0 %7951
        %v7953 = vlaneseq
        %v7954 = vshrl.u32 %v7953, 7
        %v7955 = vadd.s32 %v7954, 8
        %7956 = vset.pattern.permute.xlu0 %v7955
        %7957 = vperm.xlu0 %7956, %v7946
        %v7958 = vpop.permute.xlu0 %7957
        %v7959 = vperm.slane %v7577, 5
        %v7960 = vlaneseq
        %v7961 = vshrl.u32 %v7960, 7
        %7963 = vset.pattern.permute.xlu0 %v7961
        %7964 = vperm.xlu0 %7963, %v7959
        %v7965 = vpop.permute.xlu0 %7964
        %v7966 = vlaneseq
        %v7967 = vshrl.u32 %v7966, 7
        %v7968 = vadd.s32 %v7967, 8
        %7969 = vset.pattern.permute.xlu0 %v7968
        %7970 = vperm.xlu0 %7969, %v7959
        %v7971 = vpop.permute.xlu0 %7970
        %v7972 = vperm.slane %v7577, 6
        %v7973 = vlaneseq
        %v7974 = vshrl.u32 %v7973, 7
        %7976 = vset.pattern.permute.xlu0 %v7974
        %7977 = vperm.xlu0 %7976, %v7972
        %v7978 = vpop.permute.xlu0 %7977
        %v7979 = vlaneseq
        %v7980 = vshrl.u32 %v7979, 7
        %v7981 = vadd.s32 %v7980, 8
        %7982 = vset.pattern.permute.xlu0 %v7981
        %7983 = vperm.xlu0 %7982, %v7972
        %v7984 = vpop.permute.xlu0 %7983
        %v7985 = vperm.slane %v7577, 7
        %v7986 = vlaneseq
        %v7987 = vshrl.u32 %v7986, 7
        %7989 = vset.pattern.permute.xlu0 %v7987
        %7990 = vperm.xlu0 %7989, %v7985
        %v7991 = vpop.permute.xlu0 %7990
        %v7992 = vlaneseq
        %v7993 = vshrl.u32 %v7992, 7
        %v7994 = vadd.s32 %v7993, 8
        %7995 = vset.pattern.permute.xlu0 %v7994
        %7996 = vperm.xlu0 %7995, %v7985
        %v7997 = vpop.permute.xlu0 %7996
        %v8062 = vsub.f32 %v1017, %v7588
        %v8063 = vsub.f32 %v1020, %v7594
        %v8064 = vsub.f32 %v1017, %v7601
        %v8065 = vsub.f32 %v1020, %v7607
        %v8066 = vsub.f32 %v1017, %v7614
        %v8067 = vsub.f32 %v1020, %v7620
        %v8068 = vsub.f32 %v1017, %v7627
        %v8069 = vsub.f32 %v1020, %v7633
        %v8070 = vsub.f32 %v1017, %v7640
        %v8071 = vsub.f32 %v1020, %v7646
        %v8072 = vsub.f32 %v1017, %v7653
        %v8073 = vsub.f32 %v1020, %v7659
        %v8074 = vsub.f32 %v1017, %v7666
        %v8075 = vsub.f32 %v1020, %v7672
        %v8076 = vsub.f32 %v1017, %v7679
        %v8077 = vsub.f32 %v1020, %v7685
        %v8078 = vsub.f32 %v1017, %v7692
        %v8079 = vsub.f32 %v1020, %v7698
        %v8080 = vsub.f32 %v1017, %v7705
        %v8081 = vsub.f32 %v1020, %v7711
        %v8082 = vsub.f32 %v1017, %v7718
        %v8083 = vsub.f32 %v1020, %v7724
        %v8084 = vsub.f32 %v1017, %v7731
        %v8085 = vsub.f32 %v1020, %v7737
        %v8086 = vsub.f32 %v1017, %v7744
        %v8087 = vsub.f32 %v1020, %v7750
        %v8088 = vsub.f32 %v1017, %v7757
        %v8089 = vsub.f32 %v1020, %v7763
        %v8090 = vsub.f32 %v1017, %v7770
        %v8091 = vsub.f32 %v1020, %v7776
        %v8092 = vsub.f32 %v1017, %v7783
        %v8093 = vsub.f32 %v1020, %v7789
        %v8094 = vsub.f32 %v1017, %v7796
        %v8095 = vsub.f32 %v1020, %v7802
        %v8096 = vsub.f32 %v1017, %v7809
        %v8097 = vsub.f32 %v1020, %v7815
        %v8098 = vsub.f32 %v1017, %v7822
        %v8099 = vsub.f32 %v1020, %v7828
        %v8100 = vsub.f32 %v1017, %v7835
        %v8101 = vsub.f32 %v1020, %v7841
        %v8102 = vsub.f32 %v1017, %v7848
        %v8103 = vsub.f32 %v1020, %v7854
        %v8104 = vsub.f32 %v1017, %v7861
        %v8105 = vsub.f32 %v1020, %v7867
        %v8106 = vsub.f32 %v1017, %v7874
        %v8107 = vsub.f32 %v1020, %v7880
        %v8108 = vsub.f32 %v1017, %v7887
        %v8109 = vsub.f32 %v1020, %v7893
        %v8110 = vsub.f32 %v1017, %v7900
        %v8111 = vsub.f32 %v1020, %v7906
        %v8112 = vsub.f32 %v1017, %v7913
        %v8113 = vsub.f32 %v1020, %v7919
        %v8114 = vsub.f32 %v1017, %v7926
        %v8115 = vsub.f32 %v1020, %v7932
        %v8116 = vsub.f32 %v1017, %v7939
        %v8117 = vsub.f32 %v1020, %v7945
        %v8118 = vsub.f32 %v1017, %v7952
        %v8119 = vsub.f32 %v1020, %v7958
        %v8120 = vsub.f32 %v1017, %v7965
        %v8121 = vsub.f32 %v1020, %v7971
        %v8122 = vsub.f32 %v1017, %v7978
        %v8123 = vsub.f32 %v1020, %v7984
        %v8124 = vsub.f32 %v1017, %v7991
        %v8125 = vsub.f32 %v1020, %v7997
        %8190 = vset.pattern.permute.xlu0 0
        %8191 = vperm.xlu0 %8190, %v8062
        %v8192 = vpop.permute.xlu0 %8191
        %8193 = vset.pattern.permute.xlu0 0
        %8194 = vperm.xlu0 %8193, %v8063
        %v8195 = vpop.permute.xlu0 %8194
        %8196 = vset.pattern.permute.xlu0 0
        %8197 = vperm.xlu0 %8196, %v8064
        %v8198 = vpop.permute.xlu0 %8197
        %8199 = vset.pattern.permute.xlu0 0
        %8200 = vperm.xlu0 %8199, %v8065
        %v8201 = vpop.permute.xlu0 %8200
        %8202 = vset.pattern.permute.xlu0 0
        %8203 = vperm.xlu0 %8202, %v8066
        %v8204 = vpop.permute.xlu0 %8203
        %8205 = vset.pattern.permute.xlu0 0
        %8206 = vperm.xlu0 %8205, %v8067
        %v8207 = vpop.permute.xlu0 %8206
        %8208 = vset.pattern.permute.xlu0 0
        %8209 = vperm.xlu0 %8208, %v8068
        %v8210 = vpop.permute.xlu0 %8209
        %8211 = vset.pattern.permute.xlu0 0
        %8212 = vperm.xlu0 %8211, %v8069
        %v8213 = vpop.permute.xlu0 %8212
        %8214 = vset.pattern.permute.xlu0 0
        %8215 = vperm.xlu0 %8214, %v8070
        %v8216 = vpop.permute.xlu0 %8215
        %8217 = vset.pattern.permute.xlu0 0
        %8218 = vperm.xlu0 %8217, %v8071
        %v8219 = vpop.permute.xlu0 %8218
        %8220 = vset.pattern.permute.xlu0 0
        %8221 = vperm.xlu0 %8220, %v8072
        %v8222 = vpop.permute.xlu0 %8221
        %8223 = vset.pattern.permute.xlu0 0
        %8224 = vperm.xlu0 %8223, %v8073
        %v8225 = vpop.permute.xlu0 %8224
        %8226 = vset.pattern.permute.xlu0 0
        %8227 = vperm.xlu0 %8226, %v8074
        %v8228 = vpop.permute.xlu0 %8227
        %8229 = vset.pattern.permute.xlu0 0
        %8230 = vperm.xlu0 %8229, %v8075
        %v8231 = vpop.permute.xlu0 %8230
        %8232 = vset.pattern.permute.xlu0 0
        %8233 = vperm.xlu0 %8232, %v8076
        %v8234 = vpop.permute.xlu0 %8233
        %8235 = vset.pattern.permute.xlu0 0
        %8236 = vperm.xlu0 %8235, %v8077
        %v8237 = vpop.permute.xlu0 %8236
        %8238 = vset.pattern.permute.xlu0 0
        %8239 = vperm.xlu0 %8238, %v8078
        %v8240 = vpop.permute.xlu0 %8239
        %8241 = vset.pattern.permute.xlu0 0
        %8242 = vperm.xlu0 %8241, %v8079
        %v8243 = vpop.permute.xlu0 %8242
        %8244 = vset.pattern.permute.xlu0 0
        %8245 = vperm.xlu0 %8244, %v8080
        %v8246 = vpop.permute.xlu0 %8245
        %8247 = vset.pattern.permute.xlu0 0
        %8248 = vperm.xlu0 %8247, %v8081
        %v8249 = vpop.permute.xlu0 %8248
        %8250 = vset.pattern.permute.xlu0 0
        %8251 = vperm.xlu0 %8250, %v8082
        %v8252 = vpop.permute.xlu0 %8251
        %8253 = vset.pattern.permute.xlu0 0
        %8254 = vperm.xlu0 %8253, %v8083
        %v8255 = vpop.permute.xlu0 %8254
        %8256 = vset.pattern.permute.xlu0 0
        %8257 = vperm.xlu0 %8256, %v8084
        %v8258 = vpop.permute.xlu0 %8257
        %8259 = vset.pattern.permute.xlu0 0
        %8260 = vperm.xlu0 %8259, %v8085
        %v8261 = vpop.permute.xlu0 %8260
        %8262 = vset.pattern.permute.xlu0 0
        %8263 = vperm.xlu0 %8262, %v8086
        %v8264 = vpop.permute.xlu0 %8263
        %8265 = vset.pattern.permute.xlu0 0
        %8266 = vperm.xlu0 %8265, %v8087
        %v8267 = vpop.permute.xlu0 %8266
        %8268 = vset.pattern.permute.xlu0 0
        %8269 = vperm.xlu0 %8268, %v8088
        %v8270 = vpop.permute.xlu0 %8269
        %8271 = vset.pattern.permute.xlu0 0
        %8272 = vperm.xlu0 %8271, %v8089
        %v8273 = vpop.permute.xlu0 %8272
        %8274 = vset.pattern.permute.xlu0 0
        %8275 = vperm.xlu0 %8274, %v8090
        %v8276 = vpop.permute.xlu0 %8275
        %8277 = vset.pattern.permute.xlu0 0
        %8278 = vperm.xlu0 %8277, %v8091
        %v8279 = vpop.permute.xlu0 %8278
        %8280 = vset.pattern.permute.xlu0 0
        %8281 = vperm.xlu0 %8280, %v8092
        %v8282 = vpop.permute.xlu0 %8281
        %8283 = vset.pattern.permute.xlu0 0
        %8284 = vperm.xlu0 %8283, %v8093
        %v8285 = vpop.permute.xlu0 %8284
        %8286 = vset.pattern.permute.xlu0 0
        %8287 = vperm.xlu0 %8286, %v8094
        %v8288 = vpop.permute.xlu0 %8287
        %8289 = vset.pattern.permute.xlu0 0
        %8290 = vperm.xlu0 %8289, %v8095
        %v8291 = vpop.permute.xlu0 %8290
        %8292 = vset.pattern.permute.xlu0 0
        %8293 = vperm.xlu0 %8292, %v8096
        %v8294 = vpop.permute.xlu0 %8293
        %8295 = vset.pattern.permute.xlu0 0
        %8296 = vperm.xlu0 %8295, %v8097
        %v8297 = vpop.permute.xlu0 %8296
        %8298 = vset.pattern.permute.xlu0 0
        %8299 = vperm.xlu0 %8298, %v8098
        %v8300 = vpop.permute.xlu0 %8299
        %8301 = vset.pattern.permute.xlu0 0
        %8302 = vperm.xlu0 %8301, %v8099
        %v8303 = vpop.permute.xlu0 %8302
        %8304 = vset.pattern.permute.xlu0 0
        %8305 = vperm.xlu0 %8304, %v8100
        %v8306 = vpop.permute.xlu0 %8305
        %8307 = vset.pattern.permute.xlu0 0
        %8308 = vperm.xlu0 %8307, %v8101
        %v8309 = vpop.permute.xlu0 %8308
        %8310 = vset.pattern.permute.xlu0 0
        %8311 = vperm.xlu0 %8310, %v8102
        %v8312 = vpop.permute.xlu0 %8311
        %8313 = vset.pattern.permute.xlu0 0
        %8314 = vperm.xlu0 %8313, %v8103
        %v8315 = vpop.permute.xlu0 %8314
        %8316 = vset.pattern.permute.xlu0 0
        %8317 = vperm.xlu0 %8316, %v8104
        %v8318 = vpop.permute.xlu0 %8317
        %8319 = vset.pattern.permute.xlu0 0
        %8320 = vperm.xlu0 %8319, %v8105
        %v8321 = vpop.permute.xlu0 %8320
        %8322 = vset.pattern.permute.xlu0 0
        %8323 = vperm.xlu0 %8322, %v8106
        %v8324 = vpop.permute.xlu0 %8323
        %8325 = vset.pattern.permute.xlu0 0
        %8326 = vperm.xlu0 %8325, %v8107
        %v8327 = vpop.permute.xlu0 %8326
        %8328 = vset.pattern.permute.xlu0 0
        %8329 = vperm.xlu0 %8328, %v8108
        %v8330 = vpop.permute.xlu0 %8329
        %8331 = vset.pattern.permute.xlu0 0
        %8332 = vperm.xlu0 %8331, %v8109
        %v8333 = vpop.permute.xlu0 %8332
        %8334 = vset.pattern.permute.xlu0 0
        %8335 = vperm.xlu0 %8334, %v8110
        %v8336 = vpop.permute.xlu0 %8335
        %8337 = vset.pattern.permute.xlu0 0
        %8338 = vperm.xlu0 %8337, %v8111
        %v8339 = vpop.permute.xlu0 %8338
        %8340 = vset.pattern.permute.xlu0 0
        %8341 = vperm.xlu0 %8340, %v8112
        %v8342 = vpop.permute.xlu0 %8341
        %8343 = vset.pattern.permute.xlu0 0
        %8344 = vperm.xlu0 %8343, %v8113
        %v8345 = vpop.permute.xlu0 %8344
        %8346 = vset.pattern.permute.xlu0 0
        %8347 = vperm.xlu0 %8346, %v8114
        %v8348 = vpop.permute.xlu0 %8347
        %8349 = vset.pattern.permute.xlu0 0
        %8350 = vperm.xlu0 %8349, %v8115
        %v8351 = vpop.permute.xlu0 %8350
        %8352 = vset.pattern.permute.xlu0 0
        %8353 = vperm.xlu0 %8352, %v8116
        %v8354 = vpop.permute.xlu0 %8353
        %8355 = vset.pattern.permute.xlu0 0
        %8356 = vperm.xlu0 %8355, %v8117
        %v8357 = vpop.permute.xlu0 %8356
        %8358 = vset.pattern.permute.xlu0 0
        %8359 = vperm.xlu0 %8358, %v8118
        %v8360 = vpop.permute.xlu0 %8359
        %8361 = vset.pattern.permute.xlu0 0
        %8362 = vperm.xlu0 %8361, %v8119
        %v8363 = vpop.permute.xlu0 %8362
        %8364 = vset.pattern.permute.xlu0 0
        %8365 = vperm.xlu0 %8364, %v8120
        %v8366 = vpop.permute.xlu0 %8365
        %8367 = vset.pattern.permute.xlu0 0
        %8368 = vperm.xlu0 %8367, %v8121
        %v8369 = vpop.permute.xlu0 %8368
        %8370 = vset.pattern.permute.xlu0 0
        %8371 = vperm.xlu0 %8370, %v8122
        %v8372 = vpop.permute.xlu0 %8371
        %8373 = vset.pattern.permute.xlu0 0
        %8374 = vperm.xlu0 %8373, %v8123
        %v8375 = vpop.permute.xlu0 %8374
        %8376 = vset.pattern.permute.xlu0 0
        %8377 = vperm.xlu0 %8376, %v8124
        %v8378 = vpop.permute.xlu0 %8377
        %8379 = vset.pattern.permute.xlu0 0
        %8380 = vperm.xlu0 %8379, %v8125
        %v8381 = vpop.permute.xlu0 %8380
        %v8382 = vperm.slane %v8192, %v1022
        %v8383 = vperm.slane %v8195, %v2104
        %v8384 = vsel %vm2106, %v8383, %v8382
        %v8385 = vperm.slane %v8198, %v1022
        %v8386 = vperm.slane %v8201, %v2104
        %v8387 = vsel %vm2106, %v8386, %v8385
        %v8388 = vperm.slane %v8204, %v1022
        %v8389 = vperm.slane %v8207, %v2104
        %v8390 = vsel %vm2106, %v8389, %v8388
        %v8391 = vperm.slane %v8210, %v1022
        %v8392 = vperm.slane %v8213, %v2104
        %v8393 = vsel %vm2106, %v8392, %v8391
        %v8394 = vperm.slane %v8216, %v1022
        %v8395 = vperm.slane %v8219, %v2104
        %v8396 = vsel %vm2106, %v8395, %v8394
        %v8397 = vperm.slane %v8222, %v1022
        %v8398 = vperm.slane %v8225, %v2104
        %v8399 = vsel %vm2106, %v8398, %v8397
        %v8400 = vperm.slane %v8228, %v1022
        %v8401 = vperm.slane %v8231, %v2104
        %v8402 = vsel %vm2106, %v8401, %v8400
        %v8403 = vperm.slane %v8234, %v1022
        %v8404 = vperm.slane %v8237, %v2104
        %v8405 = vsel %vm2106, %v8404, %v8403
        %v8406 = vperm.slane %v8240, %v1022
        %v8407 = vperm.slane %v8243, %v2104
        %v8408 = vsel %vm2106, %v8407, %v8406
        %v8409 = vperm.slane %v8246, %v1022
        %v8410 = vperm.slane %v8249, %v2104
        %v8411 = vsel %vm2106, %v8410, %v8409
        %v8412 = vperm.slane %v8252, %v1022
        %v8413 = vperm.slane %v8255, %v2104
        %v8414 = vsel %vm2106, %v8413, %v8412
        %v8415 = vperm.slane %v8258, %v1022
        %v8416 = vperm.slane %v8261, %v2104
        %v8417 = vsel %vm2106, %v8416, %v8415
        %v8418 = vperm.slane %v8264, %v1022
        %v8419 = vperm.slane %v8267, %v2104
        %v8420 = vsel %vm2106, %v8419, %v8418
        %v8421 = vperm.slane %v8270, %v1022
        %v8422 = vperm.slane %v8273, %v2104
        %v8423 = vsel %vm2106, %v8422, %v8421
        %v8424 = vperm.slane %v8276, %v1022
        %v8425 = vperm.slane %v8279, %v2104
        %v8426 = vsel %vm2106, %v8425, %v8424
        %v8427 = vperm.slane %v8282, %v1022
        %v8428 = vperm.slane %v8285, %v2104
        %v8429 = vsel %vm2106, %v8428, %v8427
        %v8430 = vperm.slane %v8288, %v1022
        %v8431 = vperm.slane %v8291, %v2104
        %v8432 = vsel %vm2106, %v8431, %v8430
        %v8433 = vperm.slane %v8294, %v1022
        %v8434 = vperm.slane %v8297, %v2104
        %v8435 = vsel %vm2106, %v8434, %v8433
        %v8436 = vperm.slane %v8300, %v1022
        %v8437 = vperm.slane %v8303, %v2104
        %v8438 = vsel %vm2106, %v8437, %v8436
        %v8439 = vperm.slane %v8306, %v1022
        %v8440 = vperm.slane %v8309, %v2104
        %v8441 = vsel %vm2106, %v8440, %v8439
        %v8442 = vperm.slane %v8312, %v1022
        %v8443 = vperm.slane %v8315, %v2104
        %v8444 = vsel %vm2106, %v8443, %v8442
        %v8445 = vperm.slane %v8318, %v1022
        %v8446 = vperm.slane %v8321, %v2104
        %v8447 = vsel %vm2106, %v8446, %v8445
        %v8448 = vperm.slane %v8324, %v1022
        %v8449 = vperm.slane %v8327, %v2104
        %v8450 = vsel %vm2106, %v8449, %v8448
        %v8451 = vperm.slane %v8330, %v1022
        %v8452 = vperm.slane %v8333, %v2104
        %v8453 = vsel %vm2106, %v8452, %v8451
        %v8454 = vperm.slane %v8336, %v1022
        %v8455 = vperm.slane %v8339, %v2104
        %v8456 = vsel %vm2106, %v8455, %v8454
        %v8457 = vperm.slane %v8342, %v1022
        %v8458 = vperm.slane %v8345, %v2104
        %v8459 = vsel %vm2106, %v8458, %v8457
        %v8460 = vperm.slane %v8348, %v1022
        %v8461 = vperm.slane %v8351, %v2104
        %v8462 = vsel %vm2106, %v8461, %v8460
        %v8463 = vperm.slane %v8354, %v1022
        %v8464 = vperm.slane %v8357, %v2104
        %v8465 = vsel %vm2106, %v8464, %v8463
        %v8466 = vperm.slane %v8360, %v1022
        %v8467 = vperm.slane %v8363, %v2104
        %v8468 = vsel %vm2106, %v8467, %v8466
        %v8469 = vperm.slane %v8366, %v1022
        %v8470 = vperm.slane %v8369, %v2104
        %v8471 = vsel %vm2106, %v8470, %v8469
        %v8472 = vperm.slane %v8372, %v1022
        %v8473 = vperm.slane %v8375, %v2104
        %v8474 = vsel %vm2106, %v8473, %v8472
        %v8475 = vperm.slane %v8378, %v1022
        %v8476 = vperm.slane %v8381, %v2104
        %v8477 = vsel %vm2106, %v8476, %v8475
        %v8478 = vsel %vm2201, %v8387, %v8384
        %v8479 = vsel %vm2203, %v8390, %v8478
        %v8480 = vsel %vm2205, %v8393, %v8479
        %v8481 = vsel %vm2207, %v8396, %v8480
        %v8482 = vsel %vm2209, %v8399, %v8481
        %v8483 = vsel %vm2211, %v8402, %v8482
        %v8484 = vsel %vm2213, %v8405, %v8483
        %v8485 = vsel %vm2201, %v8411, %v8408
        %v8486 = vsel %vm2203, %v8414, %v8485
        %v8487 = vsel %vm2205, %v8417, %v8486
        %v8488 = vsel %vm2207, %v8420, %v8487
        %v8489 = vsel %vm2209, %v8423, %v8488
        %v8490 = vsel %vm2211, %v8426, %v8489
        %v8491 = vsel %vm2213, %v8429, %v8490
        %v8492 = vsel %vm2201, %v8435, %v8432
        %v8493 = vsel %vm2203, %v8438, %v8492
        %v8494 = vsel %vm2205, %v8441, %v8493
        %v8495 = vsel %vm2207, %v8444, %v8494
        %v8496 = vsel %vm2209, %v8447, %v8495
        %v8497 = vsel %vm2211, %v8450, %v8496
        %v8498 = vsel %vm2213, %v8453, %v8497
        %v8499 = vsel %vm2201, %v8459, %v8456
        %v8500 = vsel %vm2203, %v8462, %v8499
        %v8501 = vsel %vm2205, %v8465, %v8500
        %v8502 = vsel %vm2207, %v8468, %v8501
        %v8503 = vsel %vm2209, %v8471, %v8502
        %v8504 = vsel %vm2211, %v8474, %v8503
        %v8505 = vsel %vm2213, %v8477, %v8504
        %v8510 = vsel %vm715, %v8484, inf
        %8511 = vmin.xlane.f32.xlu0 %v8510
        %v8512 = vpop.xlane.xlu0 %8511
        %v8513 = vsel %vm715, %v8491, inf
        %8514 = vmin.xlane.f32.xlu0 %v8513
        %v8515 = vpop.xlane.xlu0 %8514
        %v8516 = vsel %vm715, %v8498, inf
        %8517 = vmin.xlane.f32.xlu0 %v8516
        %v8518 = vpop.xlane.xlu0 %8517
        %v8519 = vsel %vm715, %v8505, inf
        %8520 = vmin.xlane.f32.xlu0 %v8519
        %v8521 = vpop.xlane.xlu0 %8520
        %v8526 = vperm.slane %v8512, 0
        %v8527 = vperm.slane %v8512, 1
        %v8528 = vperm.slane %v8512, 2
        %v8529 = vperm.slane %v8512, 3
        %v8530 = vperm.slane %v8512, 4
        %v8531 = vperm.slane %v8512, 5
        %v8532 = vperm.slane %v8512, 6
        %v8533 = vperm.slane %v8512, 7
        %v8534 = vperm.slane %v8515, 0
        %v8535 = vperm.slane %v8515, 1
        %v8536 = vperm.slane %v8515, 2
        %v8537 = vperm.slane %v8515, 3
        %v8538 = vperm.slane %v8515, 4
        %v8539 = vperm.slane %v8515, 5
        %v8540 = vperm.slane %v8515, 6
        %v8541 = vperm.slane %v8515, 7
        %v8542 = vperm.slane %v8518, 0
        %v8543 = vperm.slane %v8518, 1
        %v8544 = vperm.slane %v8518, 2
        %v8545 = vperm.slane %v8518, 3
        %v8546 = vperm.slane %v8518, 4
        %v8547 = vperm.slane %v8518, 5
        %v8548 = vperm.slane %v8518, 6
        %v8549 = vperm.slane %v8518, 7
        %v8550 = vperm.slane %v8521, 0
        %v8551 = vperm.slane %v8521, 1
        %v8552 = vperm.slane %v8521, 2
        %v8553 = vperm.slane %v8521, 3
        %v8554 = vperm.slane %v8521, 4
        %v8555 = vperm.slane %v8521, 5
        %v8556 = vperm.slane %v8521, 6
        %v8557 = vperm.slane %v8521, 7
        %vm8590 = vcmp.le.f32.partialorder %v8062, %v8526
        %vm8591 = vcmp.le.f32.partialorder %v8063, %v8526
        %vm8592 = vcmp.le.f32.partialorder %v8064, %v8527
        %vm8593 = vcmp.le.f32.partialorder %v8065, %v8527
        %vm8594 = vcmp.le.f32.partialorder %v8066, %v8528
        %vm8595 = vcmp.le.f32.partialorder %v8067, %v8528
        %vm8596 = vcmp.le.f32.partialorder %v8068, %v8529
        %vm8597 = vcmp.le.f32.partialorder %v8069, %v8529
        %vm8598 = vcmp.le.f32.partialorder %v8070, %v8530
        %vm8599 = vcmp.le.f32.partialorder %v8071, %v8530
        %vm8600 = vcmp.le.f32.partialorder %v8072, %v8531
        %vm8601 = vcmp.le.f32.partialorder %v8073, %v8531
        %vm8602 = vcmp.le.f32.partialorder %v8074, %v8532
        %vm8603 = vcmp.le.f32.partialorder %v8075, %v8532
        %vm8604 = vcmp.le.f32.partialorder %v8076, %v8533
        %vm8605 = vcmp.le.f32.partialorder %v8077, %v8533
        %vm8606 = vcmp.le.f32.partialorder %v8078, %v8534
        %vm8607 = vcmp.le.f32.partialorder %v8079, %v8534
        %vm8608 = vcmp.le.f32.partialorder %v8080, %v8535
        %vm8609 = vcmp.le.f32.partialorder %v8081, %v8535
        %vm8610 = vcmp.le.f32.partialorder %v8082, %v8536
        %vm8611 = vcmp.le.f32.partialorder %v8083, %v8536
        %vm8612 = vcmp.le.f32.partialorder %v8084, %v8537
        %vm8613 = vcmp.le.f32.partialorder %v8085, %v8537
        %vm8614 = vcmp.le.f32.partialorder %v8086, %v8538
        %vm8615 = vcmp.le.f32.partialorder %v8087, %v8538
        %vm8616 = vcmp.le.f32.partialorder %v8088, %v8539
        %vm8617 = vcmp.le.f32.partialorder %v8089, %v8539
        %vm8618 = vcmp.le.f32.partialorder %v8090, %v8540
        %vm8619 = vcmp.le.f32.partialorder %v8091, %v8540
        %vm8620 = vcmp.le.f32.partialorder %v8092, %v8541
        %vm8621 = vcmp.le.f32.partialorder %v8093, %v8541
        %vm8622 = vcmp.le.f32.partialorder %v8094, %v8542
        %vm8623 = vcmp.le.f32.partialorder %v8095, %v8542
        %vm8624 = vcmp.le.f32.partialorder %v8096, %v8543
        %vm8625 = vcmp.le.f32.partialorder %v8097, %v8543
        %vm8626 = vcmp.le.f32.partialorder %v8098, %v8544
        %vm8627 = vcmp.le.f32.partialorder %v8099, %v8544
        %vm8628 = vcmp.le.f32.partialorder %v8100, %v8545
        %vm8629 = vcmp.le.f32.partialorder %v8101, %v8545
        %vm8630 = vcmp.le.f32.partialorder %v8102, %v8546
        %vm8631 = vcmp.le.f32.partialorder %v8103, %v8546
        %vm8632 = vcmp.le.f32.partialorder %v8104, %v8547
        %vm8633 = vcmp.le.f32.partialorder %v8105, %v8547
        %vm8634 = vcmp.le.f32.partialorder %v8106, %v8548
        %vm8635 = vcmp.le.f32.partialorder %v8107, %v8548
        %vm8636 = vcmp.le.f32.partialorder %v8108, %v8549
        %vm8637 = vcmp.le.f32.partialorder %v8109, %v8549
        %vm8638 = vcmp.le.f32.partialorder %v8110, %v8550
        %vm8639 = vcmp.le.f32.partialorder %v8111, %v8550
        %vm8640 = vcmp.le.f32.partialorder %v8112, %v8551
        %vm8641 = vcmp.le.f32.partialorder %v8113, %v8551
        %vm8642 = vcmp.le.f32.partialorder %v8114, %v8552
        %vm8643 = vcmp.le.f32.partialorder %v8115, %v8552
        %vm8644 = vcmp.le.f32.partialorder %v8116, %v8553
        %vm8645 = vcmp.le.f32.partialorder %v8117, %v8553
        %vm8646 = vcmp.le.f32.partialorder %v8118, %v8554
        %vm8647 = vcmp.le.f32.partialorder %v8119, %v8554
        %vm8648 = vcmp.le.f32.partialorder %v8120, %v8555
        %vm8649 = vcmp.le.f32.partialorder %v8121, %v8555
        %vm8650 = vcmp.le.f32.partialorder %v8122, %v8556
        %vm8651 = vcmp.le.f32.partialorder %v8123, %v8556
        %vm8652 = vcmp.le.f32.partialorder %v8124, %v8557
        %vm8653 = vcmp.le.f32.partialorder %v8125, %v8557
        %v8654 = vsel %vm8590, %v2389, 16
        %v8655 = vsel %vm8591, %v2395, 16
        %v8656 = vsel %vm8592, %v2389, 16
        %v8657 = vsel %vm8593, %v2395, 16
        %v8658 = vsel %vm8594, %v2389, 16
        %v8659 = vsel %vm8595, %v2395, 16
        %v8660 = vsel %vm8596, %v2389, 16
        %v8661 = vsel %vm8597, %v2395, 16
        %v8662 = vsel %vm8598, %v2389, 16
        %v8663 = vsel %vm8599, %v2395, 16
        %v8664 = vsel %vm8600, %v2389, 16
        %v8665 = vsel %vm8601, %v2395, 16
        %v8666 = vsel %vm8602, %v2389, 16
        %v8667 = vsel %vm8603, %v2395, 16
        %v8668 = vsel %vm8604, %v2389, 16
        %v8669 = vsel %vm8605, %v2395, 16
        %v8670 = vsel %vm8606, %v2389, 16
        %v8671 = vsel %vm8607, %v2395, 16
        %v8672 = vsel %vm8608, %v2389, 16
        %v8673 = vsel %vm8609, %v2395, 16
        %v8674 = vsel %vm8610, %v2389, 16
        %v8675 = vsel %vm8611, %v2395, 16
        %v8676 = vsel %vm8612, %v2389, 16
        %v8677 = vsel %vm8613, %v2395, 16
        %v8678 = vsel %vm8614, %v2389, 16
        %v8679 = vsel %vm8615, %v2395, 16
        %v8680 = vsel %vm8616, %v2389, 16
        %v8681 = vsel %vm8617, %v2395, 16
        %v8682 = vsel %vm8618, %v2389, 16
        %v8683 = vsel %vm8619, %v2395, 16
        %v8684 = vsel %vm8620, %v2389, 16
        %v8685 = vsel %vm8621, %v2395, 16
        %v8686 = vsel %vm8622, %v2389, 16
        %v8687 = vsel %vm8623, %v2395, 16
        %v8688 = vsel %vm8624, %v2389, 16
        %v8689 = vsel %vm8625, %v2395, 16
        %v8690 = vsel %vm8626, %v2389, 16
        %v8691 = vsel %vm8627, %v2395, 16
        %v8692 = vsel %vm8628, %v2389, 16
        %v8693 = vsel %vm8629, %v2395, 16
        %v8694 = vsel %vm8630, %v2389, 16
        %v8695 = vsel %vm8631, %v2395, 16
        %v8696 = vsel %vm8632, %v2389, 16
        %v8697 = vsel %vm8633, %v2395, 16
        %v8698 = vsel %vm8634, %v2389, 16
        %v8699 = vsel %vm8635, %v2395, 16
        %v8700 = vsel %vm8636, %v2389, 16
        %v8701 = vsel %vm8637, %v2395, 16
        %v8702 = vsel %vm8638, %v2389, 16
        %v8703 = vsel %vm8639, %v2395, 16
        %v8704 = vsel %vm8640, %v2389, 16
        %v8705 = vsel %vm8641, %v2395, 16
        %v8706 = vsel %vm8642, %v2389, 16
        %v8707 = vsel %vm8643, %v2395, 16
        %v8708 = vsel %vm8644, %v2389, 16
        %v8709 = vsel %vm8645, %v2395, 16
        %v8710 = vsel %vm8646, %v2389, 16
        %v8711 = vsel %vm8647, %v2395, 16
        %v8712 = vsel %vm8648, %v2389, 16
        %v8713 = vsel %vm8649, %v2395, 16
        %v8714 = vsel %vm8650, %v2389, 16
        %v8715 = vsel %vm8651, %v2395, 16
        %v8716 = vsel %vm8652, %v2389, 16
        %v8717 = vsel %vm8653, %v2395, 16
        %8718 = vset.pattern.permute.xlu0 0
        %8719 = vperm.xlu0 %8718, %v8654
        %v8720 = vpop.permute.xlu0 %8719
        %8721 = vset.pattern.permute.xlu0 0
        %8722 = vperm.xlu0 %8721, %v8655
        %v8723 = vpop.permute.xlu0 %8722
        %8724 = vset.pattern.permute.xlu0 0
        %8725 = vperm.xlu0 %8724, %v8656
        %v8726 = vpop.permute.xlu0 %8725
        %8727 = vset.pattern.permute.xlu0 0
        %8728 = vperm.xlu0 %8727, %v8657
        %v8729 = vpop.permute.xlu0 %8728
        %8730 = vset.pattern.permute.xlu0 0
        %8731 = vperm.xlu0 %8730, %v8658
        %v8732 = vpop.permute.xlu0 %8731
        %8733 = vset.pattern.permute.xlu0 0
        %8734 = vperm.xlu0 %8733, %v8659
        %v8735 = vpop.permute.xlu0 %8734
        %8736 = vset.pattern.permute.xlu0 0
        %8737 = vperm.xlu0 %8736, %v8660
        %v8738 = vpop.permute.xlu0 %8737
        %8739 = vset.pattern.permute.xlu0 0
        %8740 = vperm.xlu0 %8739, %v8661
        %v8741 = vpop.permute.xlu0 %8740
        %8742 = vset.pattern.permute.xlu0 0
        %8743 = vperm.xlu0 %8742, %v8662
        %v8744 = vpop.permute.xlu0 %8743
        %8745 = vset.pattern.permute.xlu0 0
        %8746 = vperm.xlu0 %8745, %v8663
        %v8747 = vpop.permute.xlu0 %8746
        %8748 = vset.pattern.permute.xlu0 0
        %8749 = vperm.xlu0 %8748, %v8664
        %v8750 = vpop.permute.xlu0 %8749
        %8751 = vset.pattern.permute.xlu0 0
        %8752 = vperm.xlu0 %8751, %v8665
        %v8753 = vpop.permute.xlu0 %8752
        %8754 = vset.pattern.permute.xlu0 0
        %8755 = vperm.xlu0 %8754, %v8666
        %v8756 = vpop.permute.xlu0 %8755
        %8757 = vset.pattern.permute.xlu0 0
        %8758 = vperm.xlu0 %8757, %v8667
        %v8759 = vpop.permute.xlu0 %8758
        %8760 = vset.pattern.permute.xlu0 0
        %8761 = vperm.xlu0 %8760, %v8668
        %v8762 = vpop.permute.xlu0 %8761
        %8763 = vset.pattern.permute.xlu0 0
        %8764 = vperm.xlu0 %8763, %v8669
        %v8765 = vpop.permute.xlu0 %8764
        %8766 = vset.pattern.permute.xlu0 0
        %8767 = vperm.xlu0 %8766, %v8670
        %v8768 = vpop.permute.xlu0 %8767
        %8769 = vset.pattern.permute.xlu0 0
        %8770 = vperm.xlu0 %8769, %v8671
        %v8771 = vpop.permute.xlu0 %8770
        %8772 = vset.pattern.permute.xlu0 0
        %8773 = vperm.xlu0 %8772, %v8672
        %v8774 = vpop.permute.xlu0 %8773
        %8775 = vset.pattern.permute.xlu0 0
        %8776 = vperm.xlu0 %8775, %v8673
        %v8777 = vpop.permute.xlu0 %8776
        %8778 = vset.pattern.permute.xlu0 0
        %8779 = vperm.xlu0 %8778, %v8674
        %v8780 = vpop.permute.xlu0 %8779
        %8781 = vset.pattern.permute.xlu0 0
        %8782 = vperm.xlu0 %8781, %v8675
        %v8783 = vpop.permute.xlu0 %8782
        %8784 = vset.pattern.permute.xlu0 0
        %8785 = vperm.xlu0 %8784, %v8676
        %v8786 = vpop.permute.xlu0 %8785
        %8787 = vset.pattern.permute.xlu0 0
        %8788 = vperm.xlu0 %8787, %v8677
        %v8789 = vpop.permute.xlu0 %8788
        %8790 = vset.pattern.permute.xlu0 0
        %8791 = vperm.xlu0 %8790, %v8678
        %v8792 = vpop.permute.xlu0 %8791
        %8793 = vset.pattern.permute.xlu0 0
        %8794 = vperm.xlu0 %8793, %v8679
        %v8795 = vpop.permute.xlu0 %8794
        %8796 = vset.pattern.permute.xlu0 0
        %8797 = vperm.xlu0 %8796, %v8680
        %v8798 = vpop.permute.xlu0 %8797
        %8799 = vset.pattern.permute.xlu0 0
        %8800 = vperm.xlu0 %8799, %v8681
        %v8801 = vpop.permute.xlu0 %8800
        %8802 = vset.pattern.permute.xlu0 0
        %8803 = vperm.xlu0 %8802, %v8682
        %v8804 = vpop.permute.xlu0 %8803
        %8805 = vset.pattern.permute.xlu0 0
        %8806 = vperm.xlu0 %8805, %v8683
        %v8807 = vpop.permute.xlu0 %8806
        %8808 = vset.pattern.permute.xlu0 0
        %8809 = vperm.xlu0 %8808, %v8684
        %v8810 = vpop.permute.xlu0 %8809
        %8811 = vset.pattern.permute.xlu0 0
        %8812 = vperm.xlu0 %8811, %v8685
        %v8813 = vpop.permute.xlu0 %8812
        %8814 = vset.pattern.permute.xlu0 0
        %8815 = vperm.xlu0 %8814, %v8686
        %v8816 = vpop.permute.xlu0 %8815
        %8817 = vset.pattern.permute.xlu0 0
        %8818 = vperm.xlu0 %8817, %v8687
        %v8819 = vpop.permute.xlu0 %8818
        %8820 = vset.pattern.permute.xlu0 0
        %8821 = vperm.xlu0 %8820, %v8688
        %v8822 = vpop.permute.xlu0 %8821
        %8823 = vset.pattern.permute.xlu0 0
        %8824 = vperm.xlu0 %8823, %v8689
        %v8825 = vpop.permute.xlu0 %8824
        %8826 = vset.pattern.permute.xlu0 0
        %8827 = vperm.xlu0 %8826, %v8690
        %v8828 = vpop.permute.xlu0 %8827
        %8829 = vset.pattern.permute.xlu0 0
        %8830 = vperm.xlu0 %8829, %v8691
        %v8831 = vpop.permute.xlu0 %8830
        %8832 = vset.pattern.permute.xlu0 0
        %8833 = vperm.xlu0 %8832, %v8692
        %v8834 = vpop.permute.xlu0 %8833
        %8835 = vset.pattern.permute.xlu0 0
        %8836 = vperm.xlu0 %8835, %v8693
        %v8837 = vpop.permute.xlu0 %8836
        %8838 = vset.pattern.permute.xlu0 0
        %8839 = vperm.xlu0 %8838, %v8694
        %v8840 = vpop.permute.xlu0 %8839
        %8841 = vset.pattern.permute.xlu0 0
        %8842 = vperm.xlu0 %8841, %v8695
        %v8843 = vpop.permute.xlu0 %8842
        %8844 = vset.pattern.permute.xlu0 0
        %8845 = vperm.xlu0 %8844, %v8696
        %v8846 = vpop.permute.xlu0 %8845
        %8847 = vset.pattern.permute.xlu0 0
        %8848 = vperm.xlu0 %8847, %v8697
        %v8849 = vpop.permute.xlu0 %8848
        %8850 = vset.pattern.permute.xlu0 0
        %8851 = vperm.xlu0 %8850, %v8698
        %v8852 = vpop.permute.xlu0 %8851
        %8853 = vset.pattern.permute.xlu0 0
        %8854 = vperm.xlu0 %8853, %v8699
        %v8855 = vpop.permute.xlu0 %8854
        %8856 = vset.pattern.permute.xlu0 0
        %8857 = vperm.xlu0 %8856, %v8700
        %v8858 = vpop.permute.xlu0 %8857
        %8859 = vset.pattern.permute.xlu0 0
        %8860 = vperm.xlu0 %8859, %v8701
        %v8861 = vpop.permute.xlu0 %8860
        %8862 = vset.pattern.permute.xlu0 0
        %8863 = vperm.xlu0 %8862, %v8702
        %v8864 = vpop.permute.xlu0 %8863
        %8865 = vset.pattern.permute.xlu0 0
        %8866 = vperm.xlu0 %8865, %v8703
        %v8867 = vpop.permute.xlu0 %8866
        %8868 = vset.pattern.permute.xlu0 0
        %8869 = vperm.xlu0 %8868, %v8704
        %v8870 = vpop.permute.xlu0 %8869
        %8871 = vset.pattern.permute.xlu0 0
        %8872 = vperm.xlu0 %8871, %v8705
        %v8873 = vpop.permute.xlu0 %8872
        %8874 = vset.pattern.permute.xlu0 0
        %8875 = vperm.xlu0 %8874, %v8706
        %v8876 = vpop.permute.xlu0 %8875
        %8877 = vset.pattern.permute.xlu0 0
        %8878 = vperm.xlu0 %8877, %v8707
        %v8879 = vpop.permute.xlu0 %8878
        %8880 = vset.pattern.permute.xlu0 0
        %8881 = vperm.xlu0 %8880, %v8708
        %v8882 = vpop.permute.xlu0 %8881
        %8883 = vset.pattern.permute.xlu0 0
        %8884 = vperm.xlu0 %8883, %v8709
        %v8885 = vpop.permute.xlu0 %8884
        %8886 = vset.pattern.permute.xlu0 0
        %8887 = vperm.xlu0 %8886, %v8710
        %v8888 = vpop.permute.xlu0 %8887
        %8889 = vset.pattern.permute.xlu0 0
        %8890 = vperm.xlu0 %8889, %v8711
        %v8891 = vpop.permute.xlu0 %8890
        %8892 = vset.pattern.permute.xlu0 0
        %8893 = vperm.xlu0 %8892, %v8712
        %v8894 = vpop.permute.xlu0 %8893
        %8895 = vset.pattern.permute.xlu0 0
        %8896 = vperm.xlu0 %8895, %v8713
        %v8897 = vpop.permute.xlu0 %8896
        %8898 = vset.pattern.permute.xlu0 0
        %8899 = vperm.xlu0 %8898, %v8714
        %v8900 = vpop.permute.xlu0 %8899
        %8901 = vset.pattern.permute.xlu0 0
        %8902 = vperm.xlu0 %8901, %v8715
        %v8903 = vpop.permute.xlu0 %8902
        %8904 = vset.pattern.permute.xlu0 0
        %8905 = vperm.xlu0 %8904, %v8716
        %v8906 = vpop.permute.xlu0 %8905
        %8907 = vset.pattern.permute.xlu0 0
        %8908 = vperm.xlu0 %8907, %v8717
        %v8909 = vpop.permute.xlu0 %8908
        %v8910 = vperm.slane %v8720, %v1022
        %v8911 = vperm.slane %v8723, %v2104
        %v8912 = vsel %vm2106, %v8911, %v8910
        %v8913 = vperm.slane %v8726, %v1022
        %v8914 = vperm.slane %v8729, %v2104
        %v8915 = vsel %vm2106, %v8914, %v8913
        %v8916 = vperm.slane %v8732, %v1022
        %v8917 = vperm.slane %v8735, %v2104
        %v8918 = vsel %vm2106, %v8917, %v8916
        %v8919 = vperm.slane %v8738, %v1022
        %v8920 = vperm.slane %v8741, %v2104
        %v8921 = vsel %vm2106, %v8920, %v8919
        %v8922 = vperm.slane %v8744, %v1022
        %v8923 = vperm.slane %v8747, %v2104
        %v8924 = vsel %vm2106, %v8923, %v8922
        %v8925 = vperm.slane %v8750, %v1022
        %v8926 = vperm.slane %v8753, %v2104
        %v8927 = vsel %vm2106, %v8926, %v8925
        %v8928 = vperm.slane %v8756, %v1022
        %v8929 = vperm.slane %v8759, %v2104
        %v8930 = vsel %vm2106, %v8929, %v8928
        %v8931 = vperm.slane %v8762, %v1022
        %v8932 = vperm.slane %v8765, %v2104
        %v8933 = vsel %vm2106, %v8932, %v8931
        %v8934 = vperm.slane %v8768, %v1022
        %v8935 = vperm.slane %v8771, %v2104
        %v8936 = vsel %vm2106, %v8935, %v8934
        %v8937 = vperm.slane %v8774, %v1022
        %v8938 = vperm.slane %v8777, %v2104
        %v8939 = vsel %vm2106, %v8938, %v8937
        %v8940 = vperm.slane %v8780, %v1022
        %v8941 = vperm.slane %v8783, %v2104
        %v8942 = vsel %vm2106, %v8941, %v8940
        %v8943 = vperm.slane %v8786, %v1022
        %v8944 = vperm.slane %v8789, %v2104
        %v8945 = vsel %vm2106, %v8944, %v8943
        %v8946 = vperm.slane %v8792, %v1022
        %v8947 = vperm.slane %v8795, %v2104
        %v8948 = vsel %vm2106, %v8947, %v8946
        %v8949 = vperm.slane %v8798, %v1022
        %v8950 = vperm.slane %v8801, %v2104
        %v8951 = vsel %vm2106, %v8950, %v8949
        %v8952 = vperm.slane %v8804, %v1022
        %v8953 = vperm.slane %v8807, %v2104
        %v8954 = vsel %vm2106, %v8953, %v8952
        %v8955 = vperm.slane %v8810, %v1022
        %v8956 = vperm.slane %v8813, %v2104
        %v8957 = vsel %vm2106, %v8956, %v8955
        %v8958 = vperm.slane %v8816, %v1022
        %v8959 = vperm.slane %v8819, %v2104
        %v8960 = vsel %vm2106, %v8959, %v8958
        %v8961 = vperm.slane %v8822, %v1022
        %v8962 = vperm.slane %v8825, %v2104
        %v8963 = vsel %vm2106, %v8962, %v8961
        %v8964 = vperm.slane %v8828, %v1022
        %v8965 = vperm.slane %v8831, %v2104
        %v8966 = vsel %vm2106, %v8965, %v8964
        %v8967 = vperm.slane %v8834, %v1022
        %v8968 = vperm.slane %v8837, %v2104
        %v8969 = vsel %vm2106, %v8968, %v8967
        %v8970 = vperm.slane %v8840, %v1022
        %v8971 = vperm.slane %v8843, %v2104
        %v8972 = vsel %vm2106, %v8971, %v8970
        %v8973 = vperm.slane %v8846, %v1022
        %v8974 = vperm.slane %v8849, %v2104
        %v8975 = vsel %vm2106, %v8974, %v8973
        %v8976 = vperm.slane %v8852, %v1022
        %v8977 = vperm.slane %v8855, %v2104
        %v8978 = vsel %vm2106, %v8977, %v8976
        %v8979 = vperm.slane %v8858, %v1022
        %v8980 = vperm.slane %v8861, %v2104
        %v8981 = vsel %vm2106, %v8980, %v8979
        %v8982 = vperm.slane %v8864, %v1022
        %v8983 = vperm.slane %v8867, %v2104
        %v8984 = vsel %vm2106, %v8983, %v8982
        %v8985 = vperm.slane %v8870, %v1022
        %v8986 = vperm.slane %v8873, %v2104
        %v8987 = vsel %vm2106, %v8986, %v8985
        %v8988 = vperm.slane %v8876, %v1022
        %v8989 = vperm.slane %v8879, %v2104
        %v8990 = vsel %vm2106, %v8989, %v8988
        %v8991 = vperm.slane %v8882, %v1022
        %v8992 = vperm.slane %v8885, %v2104
        %v8993 = vsel %vm2106, %v8992, %v8991
        %v8994 = vperm.slane %v8888, %v1022
        %v8995 = vperm.slane %v8891, %v2104
        %v8996 = vsel %vm2106, %v8995, %v8994
        %v8997 = vperm.slane %v8894, %v1022
        %v8998 = vperm.slane %v8897, %v2104
        %v8999 = vsel %vm2106, %v8998, %v8997
        %v9000 = vperm.slane %v8900, %v1022
        %v9001 = vperm.slane %v8903, %v2104
        %v9002 = vsel %vm2106, %v9001, %v9000
        %v9003 = vperm.slane %v8906, %v1022
        %v9004 = vperm.slane %v8909, %v2104
        %v9005 = vsel %vm2106, %v9004, %v9003
        %v9006 = vsel %vm2201, %v8915, %v8912
        %v9007 = vsel %vm2203, %v8918, %v9006
        %v9008 = vsel %vm2205, %v8921, %v9007
        %v9009 = vsel %vm2207, %v8924, %v9008
        %v9010 = vsel %vm2209, %v8927, %v9009
        %v9011 = vsel %vm2211, %v8930, %v9010
        %v9012 = vsel %vm2213, %v8933, %v9011
        %v9013 = vsel %vm2201, %v8939, %v8936
        %v9014 = vsel %vm2203, %v8942, %v9013
        %v9015 = vsel %vm2205, %v8945, %v9014
        %v9016 = vsel %vm2207, %v8948, %v9015
        %v9017 = vsel %vm2209, %v8951, %v9016
        %v9018 = vsel %vm2211, %v8954, %v9017
        %v9019 = vsel %vm2213, %v8957, %v9018
        %v9020 = vsel %vm2201, %v8963, %v8960
        %v9021 = vsel %vm2203, %v8966, %v9020
        %v9022 = vsel %vm2205, %v8969, %v9021
        %v9023 = vsel %vm2207, %v8972, %v9022
        %v9024 = vsel %vm2209, %v8975, %v9023
        %v9025 = vsel %vm2211, %v8978, %v9024
        %v9026 = vsel %vm2213, %v8981, %v9025
        %v9027 = vsel %vm2201, %v8987, %v8984
        %v9028 = vsel %vm2203, %v8990, %v9027
        %v9029 = vsel %vm2205, %v8993, %v9028
        %v9030 = vsel %vm2207, %v8996, %v9029
        %v9031 = vsel %vm2209, %v8999, %v9030
        %v9032 = vsel %vm2211, %v9002, %v9031
        %v9033 = vsel %vm2213, %v9005, %v9032
        %v9034 = vsel %vm715, %v9012, 2147483647
        %v9035 = vand.u32 %v9034, 65535
        %v9036 = vshra.s32 %v9034, 16
        %v9037 = vcvt.s32.f32 %v9035
        %v9038 = vcvt.s32.f32 %v9036
        %9039 = vmin.xlane.f32.xlu0 %v9038
        %v9040 = vpop.xlane.xlu0 %9039
        %vm9041 = vcmp.eq.f32.partialorder %v9038, %v9040
        %v9042 = vsel %vm9041, %v9037, inf
        %9043 = vmin.xlane.f32.xlu0 %v9042
        %v9044 = vpop.xlane.xlu0 %9043
        %v9045 = vcvt.f32.s32 %v9044
        %v9046 = vcvt.f32.s32 %v9040
        %v9047 = vshll.u32 %v9046, 16
        %v9048 = vadd.s32 %v9047, %v9045
        %v9049 = vsel %vm715, %v9019, 2147483647
        %v9050 = vand.u32 %v9049, 65535
        %v9051 = vshra.s32 %v9049, 16
        %v9052 = vcvt.s32.f32 %v9050
        %v9053 = vcvt.s32.f32 %v9051
        %9054 = vmin.xlane.f32.xlu0 %v9053
        %v9055 = vpop.xlane.xlu0 %9054
        %vm9056 = vcmp.eq.f32.partialorder %v9053, %v9055
        %v9057 = vsel %vm9056, %v9052, inf
        %9058 = vmin.xlane.f32.xlu0 %v9057
        %v9059 = vpop.xlane.xlu0 %9058
        %v9060 = vcvt.f32.s32 %v9059
        %v9061 = vcvt.f32.s32 %v9055
        %v9062 = vshll.u32 %v9061, 16
        %v9063 = vadd.s32 %v9062, %v9060
        %v9064 = vsel %vm715, %v9026, 2147483647
        %v9065 = vand.u32 %v9064, 65535
        %v9066 = vshra.s32 %v9064, 16
        %v9067 = vcvt.s32.f32 %v9065
        %v9068 = vcvt.s32.f32 %v9066
        %9069 = vmin.xlane.f32.xlu0 %v9068
        %v9070 = vpop.xlane.xlu0 %9069
        %vm9071 = vcmp.eq.f32.partialorder %v9068, %v9070
        %v9072 = vsel %vm9071, %v9067, inf
        %9073 = vmin.xlane.f32.xlu0 %v9072
        %v9074 = vpop.xlane.xlu0 %9073
        %v9075 = vcvt.f32.s32 %v9074
        %v9076 = vcvt.f32.s32 %v9070
        %v9077 = vshll.u32 %v9076, 16
        %v9078 = vadd.s32 %v9077, %v9075
        %v9079 = vsel %vm715, %v9033, 2147483647
        %v9080 = vand.u32 %v9079, 65535
        %v9081 = vshra.s32 %v9079, 16
        %v9082 = vcvt.s32.f32 %v9080
        %v9083 = vcvt.s32.f32 %v9081
        %9084 = vmin.xlane.f32.xlu0 %v9083
        %v9085 = vpop.xlane.xlu0 %9084
        %vm9086 = vcmp.eq.f32.partialorder %v9083, %v9085
        %v9087 = vsel %vm9086, %v9082, inf
        %9088 = vmin.xlane.f32.xlu0 %v9087
        %v9089 = vpop.xlane.xlu0 %9088
        %v9090 = vcvt.f32.s32 %v9089
        %v9091 = vcvt.f32.s32 %v9085
        %v9092 = vshll.u32 %v9091, 16
        %v9093 = vadd.s32 %v9092, %v9090
        %vm9094 = vcmp.eq.s32.totalorder %v1022, %v9048
        %vm9095 = vcmp.eq.s32.totalorder %v1022, %v9063
        %vm9096 = vcmp.eq.s32.totalorder %v1022, %v9078
        %vm9097 = vcmp.eq.s32.totalorder %v1022, %v9093
        %v9098 = vsel %vm9094, 1.0, 0.0
        %v9099 = vsel %vm9095, 1.0, 0.0
        %v9100 = vsel %vm9096, 1.0, 0.0
        %v9101 = vsel %vm9097, 1.0, 0.0
        %v9103 = vsel %vm715, %v9098, 0
        %v9106 = vsel %vm715, %v9099, 0
        %v9109 = vsel %vm715, %v9100, 0
        %v9112 = vsel %vm715, %v9101, 0
        %9114 = vmatpush.msra.mxu0 0.0
        %9115 = vmatpush.msra.mxu0 0.0
        %9116 = vmatpush.msra.mxu0 0.0
        %9117 = vmatpush.msra.mxu0 0.0
        %9118 = vmatpush.msra.mxu0 0.0
        %9119 = vmatpush.msra.mxu0 0.0
        %9120 = vmatpush.msra.mxu0 0.0
        %9121 = vmatpush.msra.mxu0 0.0
        %9122 = vmatpush.msra.mxu0 0.0
        %9123 = vmatpush.msra.mxu0 0.0
        %9124 = vmatpush.msra.mxu0 0.0
        %9125 = vmatpush.msra.mxu0 0.0
        %9126 = vmatpush.msra.mxu0 0.0
        %9127 = vmatpush.msra.mxu0 0.0
        %v9128 = vand.u32 %v7303, 4294901760
        %9129 = vmatpush.msra.mxu0 %v9128
        %v9130 = vand.u32 %v7302, 4294901760
        %9131 = vmatpush.msra.mxu0 %v9130
        %v9132 = vand.u32 %v9103, 4294901760
        %v9133 = vsub.f32 %v9103, %v9132
        %v9134 = vand.u32 %v9133, 4294901760
        %v9135 = vsub.f32 %v9133, %v9134
        %v9136 = vand.u32 %v9135, 4294901760
        %9137 = vmatmul.f32.gmra.mxu0 %v9136
        %v9138 = vpop.f32.mrf.mxu0
        %v9139 = vadd.f32 0.0, %v9138
        %v9140 = vand.u32 %v9106, 4294901760
        %v9141 = vsub.f32 %v9106, %v9140
        %v9142 = vand.u32 %v9141, 4294901760
        %v9143 = vsub.f32 %v9141, %v9142
        %v9144 = vand.u32 %v9143, 4294901760
        %9145 = vmatmul.f32.gmra.mxu0 %v9144
        %v9146 = vpop.f32.mrf.mxu0
        %v9147 = vadd.f32 0.0, %v9146
        %v9148 = vand.u32 %v9109, 4294901760
        %v9149 = vsub.f32 %v9109, %v9148
        %v9150 = vand.u32 %v9149, 4294901760
        %v9151 = vsub.f32 %v9149, %v9150
        %v9152 = vand.u32 %v9151, 4294901760
        %9153 = vmatmul.f32.gmra.mxu0 %v9152
        %v9154 = vpop.f32.mrf.mxu0
        %v9155 = vadd.f32 0.0, %v9154
        %v9156 = vand.u32 %v9112, 4294901760
        %v9157 = vsub.f32 %v9112, %v9156
        %v9158 = vand.u32 %v9157, 4294901760
        %v9159 = vsub.f32 %v9157, %v9158
        %v9160 = vand.u32 %v9159, 4294901760
        %9161 = vmatmul.f32.gmra.mxu0 %v9160
        %v9162 = vpop.f32.mrf.mxu0
        %v9163 = vadd.f32 0.0, %v9162
        %9164 = vdwg.mxu0
        %9165 = vmatpush.msra.mxu0 0.0
        %9166 = vmatpush.msra.mxu0 0.0
        %9167 = vmatpush.msra.mxu0 0.0
        %9168 = vmatpush.msra.mxu0 0.0
        %9169 = vmatpush.msra.mxu0 0.0
        %9170 = vmatpush.msra.mxu0 0.0
        %9171 = vmatpush.msra.mxu0 0.0
        %9172 = vmatpush.msra.mxu0 0.0
        %9173 = vmatpush.msra.mxu0 0.0
        %9174 = vmatpush.msra.mxu0 0.0
        %9175 = vmatpush.msra.mxu0 0.0
        %9176 = vmatpush.msra.mxu0 0.0
        %9177 = vmatpush.msra.mxu0 0.0
        %9178 = vmatpush.msra.mxu0 0.0
        %v9179 = vand.u32 %v7303, 4294901760
        %v9180 = vsub.f32 %v7303, %v9179
        %v9181 = vand.u32 %v9180, 4294901760
        %v9182 = vsub.f32 %v9180, %v9181
        %v9183 = vand.u32 %v9182, 4294901760
        %9184 = vmatpush.msra.mxu0 %v9183
        %v9185 = vand.u32 %v7302, 4294901760
        %v9186 = vsub.f32 %v7302, %v9185
        %v9187 = vand.u32 %v9186, 4294901760
        %v9188 = vsub.f32 %v9186, %v9187
        %v9189 = vand.u32 %v9188, 4294901760
        %9190 = vmatpush.msra.mxu0 %v9189
        %v9191 = vand.u32 %v9103, 4294901760
        %9192 = vmatmul.f32.gmra.mxu0 %v9191
        %v9193 = vpop.f32.mrf.mxu0
        %v9194 = vadd.f32 %v9139, %v9193
        %v9195 = vand.u32 %v9106, 4294901760
        %9196 = vmatmul.f32.gmra.mxu0 %v9195
        %v9197 = vpop.f32.mrf.mxu0
        %v9198 = vadd.f32 %v9147, %v9197
        %v9199 = vand.u32 %v9109, 4294901760
        %9200 = vmatmul.f32.gmra.mxu0 %v9199
        %v9201 = vpop.f32.mrf.mxu0
        %v9202 = vadd.f32 %v9155, %v9201
        %v9203 = vand.u32 %v9112, 4294901760
        %9204 = vmatmul.f32.gmra.mxu0 %v9203
        %v9205 = vpop.f32.mrf.mxu0
        %v9206 = vadd.f32 %v9163, %v9205
        %9207 = vdwg.mxu0
        %9208 = vmatpush.msra.mxu0 0.0
        %9209 = vmatpush.msra.mxu0 0.0
        %9210 = vmatpush.msra.mxu0 0.0
        %9211 = vmatpush.msra.mxu0 0.0
        %9212 = vmatpush.msra.mxu0 0.0
        %9213 = vmatpush.msra.mxu0 0.0
        %9214 = vmatpush.msra.mxu0 0.0
        %9215 = vmatpush.msra.mxu0 0.0
        %9216 = vmatpush.msra.mxu0 0.0
        %9217 = vmatpush.msra.mxu0 0.0
        %9218 = vmatpush.msra.mxu0 0.0
        %9219 = vmatpush.msra.mxu0 0.0
        %9220 = vmatpush.msra.mxu0 0.0
        %9221 = vmatpush.msra.mxu0 0.0
        %v9222 = vand.u32 %v7303, 4294901760
        %v9223 = vsub.f32 %v7303, %v9222
        %9224 = vmatpush.msra.mxu0 %v9223
        %v9225 = vand.u32 %v7302, 4294901760
        %v9226 = vsub.f32 %v7302, %v9225
        %9227 = vmatpush.msra.mxu0 %v9226
        %v9228 = vand.u32 %v9103, 4294901760
        %v9229 = vsub.f32 %v9103, %v9228
        %9230 = vmatmul.f32.gmra.mxu0 %v9229
        %v9231 = vpop.f32.mrf.mxu0
        %v9232 = vadd.f32 %v9194, %v9231
        %v9233 = vand.u32 %v9106, 4294901760
        %v9234 = vsub.f32 %v9106, %v9233
        %9235 = vmatmul.f32.gmra.mxu0 %v9234
        %v9236 = vpop.f32.mrf.mxu0
        %v9237 = vadd.f32 %v9198, %v9236
        %v9238 = vand.u32 %v9109, 4294901760
        %v9239 = vsub.f32 %v9109, %v9238
        %9240 = vmatmul.f32.gmra.mxu0 %v9239
        %v9241 = vpop.f32.mrf.mxu0
        %v9242 = vadd.f32 %v9202, %v9241
        %v9243 = vand.u32 %v9112, 4294901760
        %v9244 = vsub.f32 %v9112, %v9243
        %9245 = vmatmul.f32.gmra.mxu0 %v9244
        %v9246 = vpop.f32.mrf.mxu0
        %v9247 = vadd.f32 %v9206, %v9246
        %9248 = vdwg.mxu0
        %9249 = vmatpush.msra.mxu0 0.0
        %9250 = vmatpush.msra.mxu0 0.0
        %9251 = vmatpush.msra.mxu0 0.0
        %9252 = vmatpush.msra.mxu0 0.0
        %9253 = vmatpush.msra.mxu0 0.0
        %9254 = vmatpush.msra.mxu0 0.0
        %9255 = vmatpush.msra.mxu0 0.0
        %9256 = vmatpush.msra.mxu0 0.0
        %9257 = vmatpush.msra.mxu0 0.0
        %9258 = vmatpush.msra.mxu0 0.0
        %9259 = vmatpush.msra.mxu0 0.0
        %9260 = vmatpush.msra.mxu0 0.0
        %9261 = vmatpush.msra.mxu0 0.0
        %9262 = vmatpush.msra.mxu0 0.0
        %v9263 = vand.u32 %v7303, 4294901760
        %9264 = vmatpush.msra.mxu0 %v9263
        %v9265 = vand.u32 %v7302, 4294901760
        %9266 = vmatpush.msra.mxu0 %v9265
        %v9267 = vand.u32 %v9103, 4294901760
        %v9268 = vsub.f32 %v9103, %v9267
        %v9269 = vand.u32 %v9268, 4294901760
        %9270 = vmatmul.f32.gmra.mxu0 %v9269
        %v9271 = vpop.f32.mrf.mxu0
        %v9272 = vadd.f32 %v9232, %v9271
        %v9273 = vand.u32 %v9106, 4294901760
        %v9274 = vsub.f32 %v9106, %v9273
        %v9275 = vand.u32 %v9274, 4294901760
        %9276 = vmatmul.f32.gmra.mxu0 %v9275
        %v9277 = vpop.f32.mrf.mxu0
        %v9278 = vadd.f32 %v9237, %v9277
        %v9279 = vand.u32 %v9109, 4294901760
        %v9280 = vsub.f32 %v9109, %v9279
        %v9281 = vand.u32 %v9280, 4294901760
        %9282 = vmatmul.f32.gmra.mxu0 %v9281
        %v9283 = vpop.f32.mrf.mxu0
        %v9284 = vadd.f32 %v9242, %v9283
        %v9285 = vand.u32 %v9112, 4294901760
        %v9286 = vsub.f32 %v9112, %v9285
        %v9287 = vand.u32 %v9286, 4294901760
        %9288 = vmatmul.f32.gmra.mxu0 %v9287
        %v9289 = vpop.f32.mrf.mxu0
        %v9290 = vadd.f32 %v9247, %v9289
        %9291 = vdwg.mxu0
        %9292 = vmatpush.msra.mxu0 0.0
        %9293 = vmatpush.msra.mxu0 0.0
        %9294 = vmatpush.msra.mxu0 0.0
        %9295 = vmatpush.msra.mxu0 0.0
        %9296 = vmatpush.msra.mxu0 0.0
        %9297 = vmatpush.msra.mxu0 0.0
        %9298 = vmatpush.msra.mxu0 0.0
        %9299 = vmatpush.msra.mxu0 0.0
        %9300 = vmatpush.msra.mxu0 0.0
        %9301 = vmatpush.msra.mxu0 0.0
        %9302 = vmatpush.msra.mxu0 0.0
        %9303 = vmatpush.msra.mxu0 0.0
        %9304 = vmatpush.msra.mxu0 0.0
        %9305 = vmatpush.msra.mxu0 0.0
        %v9306 = vand.u32 %v7303, 4294901760
        %v9307 = vsub.f32 %v7303, %v9306
        %v9308 = vand.u32 %v9307, 4294901760
        %9309 = vmatpush.msra.mxu0 %v9308
        %v9310 = vand.u32 %v7302, 4294901760
        %v9311 = vsub.f32 %v7302, %v9310
        %v9312 = vand.u32 %v9311, 4294901760
        %9313 = vmatpush.msra.mxu0 %v9312
        %v9314 = vand.u32 %v9103, 4294901760
        %9315 = vmatmul.f32.gmra.mxu0 %v9314
        %v9316 = vpop.f32.mrf.mxu0
        %v9317 = vadd.f32 %v9272, %v9316
        %v9318 = vand.u32 %v9106, 4294901760
        %9319 = vmatmul.f32.gmra.mxu0 %v9318
        %v9320 = vpop.f32.mrf.mxu0
        %v9321 = vadd.f32 %v9278, %v9320
        %v9322 = vand.u32 %v9109, 4294901760
        %9323 = vmatmul.f32.gmra.mxu0 %v9322
        %v9324 = vpop.f32.mrf.mxu0
        %v9325 = vadd.f32 %v9284, %v9324
        %v9326 = vand.u32 %v9112, 4294901760
        %9327 = vmatmul.f32.gmra.mxu0 %v9326
        %v9328 = vpop.f32.mrf.mxu0
        %v9329 = vadd.f32 %v9290, %v9328
        %9330 = vdwg.mxu0
        %9331 = vmatpush.msra.mxu0 0.0
        %9332 = vmatpush.msra.mxu0 0.0
        %9333 = vmatpush.msra.mxu0 0.0
        %9334 = vmatpush.msra.mxu0 0.0
        %9335 = vmatpush.msra.mxu0 0.0
        %9336 = vmatpush.msra.mxu0 0.0
        %9337 = vmatpush.msra.mxu0 0.0
        %9338 = vmatpush.msra.mxu0 0.0
        %9339 = vmatpush.msra.mxu0 0.0
        %9340 = vmatpush.msra.mxu0 0.0
        %9341 = vmatpush.msra.mxu0 0.0
        %9342 = vmatpush.msra.mxu0 0.0
        %9343 = vmatpush.msra.mxu0 0.0
        %9344 = vmatpush.msra.mxu0 0.0
        %v9345 = vand.u32 %v7303, 4294901760
        %9346 = vmatpush.msra.mxu0 %v9345
        %v9347 = vand.u32 %v7302, 4294901760
        %9348 = vmatpush.msra.mxu0 %v9347
        %v9349 = vand.u32 %v9103, 4294901760
        %9350 = vmatmul.f32.gmra.mxu0 %v9349
        %v9351 = vpop.f32.mrf.mxu0
        %v9352 = vadd.f32 %v9317, %v9351
        %v9353 = vand.u32 %v9106, 4294901760
        %9354 = vmatmul.f32.gmra.mxu0 %v9353
        %v9355 = vpop.f32.mrf.mxu0
        %v9356 = vadd.f32 %v9321, %v9355
        %v9357 = vand.u32 %v9109, 4294901760
        %9358 = vmatmul.f32.gmra.mxu0 %v9357
        %v9359 = vpop.f32.mrf.mxu0
        %v9360 = vadd.f32 %v9325, %v9359
        %v9361 = vand.u32 %v9112, 4294901760
        %9362 = vmatmul.f32.gmra.mxu0 %v9361
        %v9363 = vpop.f32.mrf.mxu0
        %v9364 = vadd.f32 %v9329, %v9363
        %9365 = vdwg.mxu0
        %v9366 = vsub.f32 %v7280, %v9352
        %v9367 = vsub.f32 %v7281, %v9356
        %v9368 = vsub.f32 %v7282, %v9360
        %v9369 = vsub.f32 %v7283, %v9364
        %v9370 = vmul.f32 %v9366, %v9366
        %v9371 = vmul.f32 %v9367, %v9367
        %v9372 = vmul.f32 %v9368, %v9368
        %v9373 = vmul.f32 %v9369, %v9369
        %v9374 = vadd.f32 %v7288, %v9370
        %v9375 = vadd.f32 %v7289, %v9371
        %v9376 = vadd.f32 %v7290, %v9372
        %v9377 = vadd.f32 %v7291, %v9373
        %v9378 = vadd.f32 %v7292, %v9352
        %v9379 = vadd.f32 %v7293, %v9356
        %v9380 = vadd.f32 %v7294, %v9360
        %v9381 = vadd.f32 %v7295, %v9364
        %vm9382 = vcmp.eq.s32.totalorder %v1022, 3
        %v9383 = vsel %vm9382, %v9048, %v7297
        %v9384 = vsel %vm9382, %v9063, %v7298
        %v9385 = vsel %vm9382, %v9078, %v7299
        %v9386 = vsel %vm9382, %v9093, %v7300
        %v9387 = vsel %vm996, %v9374, 0.0
        %9388 = vadd.xlane.f32.xlu0 %v9387
        %v9389 = vpop.xlane.xlu0 %9388
        %v9390 = vsel %vm996, %v9375, 0.0
        %9391 = vadd.xlane.f32.xlu0 %v9390
        %v9392 = vpop.xlane.xlu0 %9391
        %v9393 = vsel %vm996, %v9376, 0.0
        %9394 = vadd.xlane.f32.xlu0 %v9393
        %v9395 = vpop.xlane.xlu0 %9394
        %v9396 = vsel %vm996, %v9377, 0.0
        %9397 = vadd.xlane.f32.xlu0 %v9396
        %v9398 = vpop.xlane.xlu0 %9397
        %v9399 = vld [vmem:[%s6] sm:$0xff]
        %v9400 = vld [vmem:[%s8] sm:$0x1]
        %v9402 = vperm.slane %v9400, 0
        %v9405 = vsel %vm996, %v9378, 0
        %v9408 = vsel %vm996, %v9379, 0
        %v9411 = vsel %vm996, %v9380, 0
        %v9414 = vsel %vm996, %v9381, 0
        %9416 = vmatpush.msra.mxu0 0.0
        %9417 = vmatpush.msra.mxu0 0.0
        %9418 = vmatpush.msra.mxu0 0.0
        %9419 = vmatpush.msra.mxu0 0.0
        %9420 = vmatpush.msra.mxu0 0.0
        %9421 = vmatpush.msra.mxu0 0.0
        %9422 = vmatpush.msra.mxu0 0.0
        %9423 = vmatpush.msra.mxu0 0.0
        %9424 = vmatpush.msra.mxu0 0.0
        %9425 = vmatpush.msra.mxu0 0.0
        %9426 = vmatpush.msra.mxu0 0.0
        %9427 = vmatpush.msra.mxu0 0.0
        %9428 = vmatpush.msra.mxu0 0.0
        %9429 = vmatpush.msra.mxu0 0.0
        %9430 = vmatpush.msra.mxu0 0.0
        %v9431 = vand.u32 %v9399, 4294901760
        %9432 = vmatpush.msra.mxu0 %v9431
        %v9433 = vand.u32 %v9405, 4294901760
        %v9434 = vsub.f32 %v9405, %v9433
        %v9435 = vand.u32 %v9434, 4294901760
        %v9436 = vsub.f32 %v9434, %v9435
        %v9437 = vand.u32 %v9436, 4294901760
        %9438 = vmatmul.f32.gmra.mxu0 %v9437
        %v9439 = vpop.f32.mrf.mxu0
        %v9440 = vadd.f32 %v9402, %v9439
        %v9441 = vand.u32 %v9408, 4294901760
        %v9442 = vsub.f32 %v9408, %v9441
        %v9443 = vand.u32 %v9442, 4294901760
        %v9444 = vsub.f32 %v9442, %v9443
        %v9445 = vand.u32 %v9444, 4294901760
        %9446 = vmatmul.f32.gmra.mxu0 %v9445
        %v9447 = vpop.f32.mrf.mxu0
        %v9448 = vadd.f32 %v9402, %v9447
        %v9449 = vand.u32 %v9411, 4294901760
        %v9450 = vsub.f32 %v9411, %v9449
        %v9451 = vand.u32 %v9450, 4294901760
        %v9452 = vsub.f32 %v9450, %v9451
        %v9453 = vand.u32 %v9452, 4294901760
        %9454 = vmatmul.f32.gmra.mxu0 %v9453
        %v9455 = vpop.f32.mrf.mxu0
        %v9456 = vadd.f32 %v9402, %v9455
        %v9457 = vand.u32 %v9414, 4294901760
        %v9458 = vsub.f32 %v9414, %v9457
        %v9459 = vand.u32 %v9458, 4294901760
        %v9460 = vsub.f32 %v9458, %v9459
        %v9461 = vand.u32 %v9460, 4294901760
        %9462 = vmatmul.f32.gmra.mxu0 %v9461
        %v9463 = vpop.f32.mrf.mxu0
        %v9464 = vadd.f32 %v9402, %v9463
        %9465 = vdwg.mxu0
        %9466 = vmatpush.msra.mxu0 0.0
        %9467 = vmatpush.msra.mxu0 0.0
        %9468 = vmatpush.msra.mxu0 0.0
        %9469 = vmatpush.msra.mxu0 0.0
        %9470 = vmatpush.msra.mxu0 0.0
        %9471 = vmatpush.msra.mxu0 0.0
        %9472 = vmatpush.msra.mxu0 0.0
        %9473 = vmatpush.msra.mxu0 0.0
        %9474 = vmatpush.msra.mxu0 0.0
        %9475 = vmatpush.msra.mxu0 0.0
        %9476 = vmatpush.msra.mxu0 0.0
        %9477 = vmatpush.msra.mxu0 0.0
        %9478 = vmatpush.msra.mxu0 0.0
        %9479 = vmatpush.msra.mxu0 0.0
        %9480 = vmatpush.msra.mxu0 0.0
        %v9481 = vand.u32 %v9399, 4294901760
        %v9482 = vsub.f32 %v9399, %v9481
        %v9483 = vand.u32 %v9482, 4294901760
        %v9484 = vsub.f32 %v9482, %v9483
        %v9485 = vand.u32 %v9484, 4294901760
        %9486 = vmatpush.msra.mxu0 %v9485
        %v9487 = vand.u32 %v9405, 4294901760
        %9488 = vmatmul.f32.gmra.mxu0 %v9487
        %v9489 = vpop.f32.mrf.mxu0
        %v9490 = vadd.f32 %v9440, %v9489
        %v9491 = vand.u32 %v9408, 4294901760
        %9492 = vmatmul.f32.gmra.mxu0 %v9491
        %v9493 = vpop.f32.mrf.mxu0
        %v9494 = vadd.f32 %v9448, %v9493
        %v9495 = vand.u32 %v9411, 4294901760
        %9496 = vmatmul.f32.gmra.mxu0 %v9495
        %v9497 = vpop.f32.mrf.mxu0
        %v9498 = vadd.f32 %v9456, %v9497
        %v9499 = vand.u32 %v9414, 4294901760
        %9500 = vmatmul.f32.gmra.mxu0 %v9499
        %v9501 = vpop.f32.mrf.mxu0
        %v9502 = vadd.f32 %v9464, %v9501
        %9503 = vdwg.mxu0
        %9504 = vmatpush.msra.mxu0 0.0
        %9505 = vmatpush.msra.mxu0 0.0
        %9506 = vmatpush.msra.mxu0 0.0
        %9507 = vmatpush.msra.mxu0 0.0
        %9508 = vmatpush.msra.mxu0 0.0
        %9509 = vmatpush.msra.mxu0 0.0
        %9510 = vmatpush.msra.mxu0 0.0
        %9511 = vmatpush.msra.mxu0 0.0
        %9512 = vmatpush.msra.mxu0 0.0
        %9513 = vmatpush.msra.mxu0 0.0
        %9514 = vmatpush.msra.mxu0 0.0
        %9515 = vmatpush.msra.mxu0 0.0
        %9516 = vmatpush.msra.mxu0 0.0
        %9517 = vmatpush.msra.mxu0 0.0
        %9518 = vmatpush.msra.mxu0 0.0
        %v9519 = vand.u32 %v9399, 4294901760
        %v9520 = vsub.f32 %v9399, %v9519
        %9521 = vmatpush.msra.mxu0 %v9520
        %v9522 = vand.u32 %v9405, 4294901760
        %v9523 = vsub.f32 %v9405, %v9522
        %9524 = vmatmul.f32.gmra.mxu0 %v9523
        %v9525 = vpop.f32.mrf.mxu0
        %v9526 = vadd.f32 %v9490, %v9525
        %v9527 = vand.u32 %v9408, 4294901760
        %v9528 = vsub.f32 %v9408, %v9527
        %9529 = vmatmul.f32.gmra.mxu0 %v9528
        %v9530 = vpop.f32.mrf.mxu0
        %v9531 = vadd.f32 %v9494, %v9530
        %v9532 = vand.u32 %v9411, 4294901760
        %v9533 = vsub.f32 %v9411, %v9532
        %9534 = vmatmul.f32.gmra.mxu0 %v9533
        %v9535 = vpop.f32.mrf.mxu0
        %v9536 = vadd.f32 %v9498, %v9535
        %v9537 = vand.u32 %v9414, 4294901760
        %v9538 = vsub.f32 %v9414, %v9537
        %9539 = vmatmul.f32.gmra.mxu0 %v9538
        %v9540 = vpop.f32.mrf.mxu0
        %v9541 = vadd.f32 %v9502, %v9540
        %9542 = vdwg.mxu0
        %9543 = vmatpush.msra.mxu0 0.0
        %9544 = vmatpush.msra.mxu0 0.0
        %9545 = vmatpush.msra.mxu0 0.0
        %9546 = vmatpush.msra.mxu0 0.0
        %9547 = vmatpush.msra.mxu0 0.0
        %9548 = vmatpush.msra.mxu0 0.0
        %9549 = vmatpush.msra.mxu0 0.0
        %9550 = vmatpush.msra.mxu0 0.0
        %9551 = vmatpush.msra.mxu0 0.0
        %9552 = vmatpush.msra.mxu0 0.0
        %9553 = vmatpush.msra.mxu0 0.0
        %9554 = vmatpush.msra.mxu0 0.0
        %9555 = vmatpush.msra.mxu0 0.0
        %9556 = vmatpush.msra.mxu0 0.0
        %9557 = vmatpush.msra.mxu0 0.0
        %v9558 = vand.u32 %v9399, 4294901760
        %9559 = vmatpush.msra.mxu0 %v9558
        %v9560 = vand.u32 %v9405, 4294901760
        %v9561 = vsub.f32 %v9405, %v9560
        %v9562 = vand.u32 %v9561, 4294901760
        %9563 = vmatmul.f32.gmra.mxu0 %v9562
        %v9564 = vpop.f32.mrf.mxu0
        %v9565 = vadd.f32 %v9526, %v9564
        %v9566 = vand.u32 %v9408, 4294901760
        %v9567 = vsub.f32 %v9408, %v9566
        %v9568 = vand.u32 %v9567, 4294901760
        %9569 = vmatmul.f32.gmra.mxu0 %v9568
        %v9570 = vpop.f32.mrf.mxu0
        %v9571 = vadd.f32 %v9531, %v9570
        %v9572 = vand.u32 %v9411, 4294901760
        %v9573 = vsub.f32 %v9411, %v9572
        %v9574 = vand.u32 %v9573, 4294901760
        %9575 = vmatmul.f32.gmra.mxu0 %v9574
        %v9576 = vpop.f32.mrf.mxu0
        %v9577 = vadd.f32 %v9536, %v9576
        %v9578 = vand.u32 %v9414, 4294901760
        %v9579 = vsub.f32 %v9414, %v9578
        %v9580 = vand.u32 %v9579, 4294901760
        %9581 = vmatmul.f32.gmra.mxu0 %v9580
        %v9582 = vpop.f32.mrf.mxu0
        %v9583 = vadd.f32 %v9541, %v9582
        %9584 = vdwg.mxu0
        %9585 = vmatpush.msra.mxu0 0.0
        %9586 = vmatpush.msra.mxu0 0.0
        %9587 = vmatpush.msra.mxu0 0.0
        %9588 = vmatpush.msra.mxu0 0.0
        %9589 = vmatpush.msra.mxu0 0.0
        %9590 = vmatpush.msra.mxu0 0.0
        %9591 = vmatpush.msra.mxu0 0.0
        %9592 = vmatpush.msra.mxu0 0.0
        %9593 = vmatpush.msra.mxu0 0.0
        %9594 = vmatpush.msra.mxu0 0.0
        %9595 = vmatpush.msra.mxu0 0.0
        %9596 = vmatpush.msra.mxu0 0.0
        %9597 = vmatpush.msra.mxu0 0.0
        %9598 = vmatpush.msra.mxu0 0.0
        %9599 = vmatpush.msra.mxu0 0.0
        %v9600 = vand.u32 %v9399, 4294901760
        %v9601 = vsub.f32 %v9399, %v9600
        %v9602 = vand.u32 %v9601, 4294901760
        %9603 = vmatpush.msra.mxu0 %v9602
        %v9604 = vand.u32 %v9405, 4294901760
        %9605 = vmatmul.f32.gmra.mxu0 %v9604
        %v9606 = vpop.f32.mrf.mxu0
        %v9607 = vadd.f32 %v9565, %v9606
        %v9608 = vand.u32 %v9408, 4294901760
        %9609 = vmatmul.f32.gmra.mxu0 %v9608
        %v9610 = vpop.f32.mrf.mxu0
        %v9611 = vadd.f32 %v9571, %v9610
        %v9612 = vand.u32 %v9411, 4294901760
        %9613 = vmatmul.f32.gmra.mxu0 %v9612
        %v9614 = vpop.f32.mrf.mxu0
        %v9615 = vadd.f32 %v9577, %v9614
        %v9616 = vand.u32 %v9414, 4294901760
        %9617 = vmatmul.f32.gmra.mxu0 %v9616
        %v9618 = vpop.f32.mrf.mxu0
        %v9619 = vadd.f32 %v9583, %v9618
        %9620 = vdwg.mxu0
        %9621 = vmatpush.msra.mxu0 0.0
        %9622 = vmatpush.msra.mxu0 0.0
        %9623 = vmatpush.msra.mxu0 0.0
        %9624 = vmatpush.msra.mxu0 0.0
        %9625 = vmatpush.msra.mxu0 0.0
        %9626 = vmatpush.msra.mxu0 0.0
        %9627 = vmatpush.msra.mxu0 0.0
        %9628 = vmatpush.msra.mxu0 0.0
        %9629 = vmatpush.msra.mxu0 0.0
        %9630 = vmatpush.msra.mxu0 0.0
        %9631 = vmatpush.msra.mxu0 0.0
        %9632 = vmatpush.msra.mxu0 0.0
        %9633 = vmatpush.msra.mxu0 0.0
        %9634 = vmatpush.msra.mxu0 0.0
        %9635 = vmatpush.msra.mxu0 0.0
        %v9636 = vand.u32 %v9399, 4294901760
        %9637 = vmatpush.msra.mxu0 %v9636
        %v9638 = vand.u32 %v9405, 4294901760
        %9639 = vmatmul.f32.gmra.mxu0 %v9638
        %v9640 = vpop.f32.mrf.mxu0
        %v9641 = vadd.f32 %v9607, %v9640
        %v9642 = vand.u32 %v9408, 4294901760
        %9643 = vmatmul.f32.gmra.mxu0 %v9642
        %v9644 = vpop.f32.mrf.mxu0
        %v9645 = vadd.f32 %v9611, %v9644
        %v9646 = vand.u32 %v9411, 4294901760
        %9647 = vmatmul.f32.gmra.mxu0 %v9646
        %v9648 = vpop.f32.mrf.mxu0
        %v9649 = vadd.f32 %v9615, %v9648
        %v9650 = vand.u32 %v9414, 4294901760
        %9651 = vmatmul.f32.gmra.mxu0 %v9650
        %v9652 = vpop.f32.mrf.mxu0
        %v9653 = vadd.f32 %v9619, %v9652
        %9654 = vdwg.mxu0
        %v9655 = vmax.f32 %v9641, 0.0
        %v9656 = vmax.f32 %v9645, 0.0
        %v9657 = vmax.f32 %v9649, 0.0
        %v9658 = vmax.f32 %v9653, 0.0
        %v9659 = vld [vmem:[%s7] sm:$0xff]
        %v9660 = vld [vmem:[%s7 + $0x8] sm:$0xff]
        %v9661 = vld [vmem:[%s9] sm:$0x1]
        %v9663 = vperm.slane %v9661, 0
        %v9666 = vsel %vm715, %v9655, 0
        %v9669 = vsel %vm715, %v9656, 0
        %v9672 = vsel %vm715, %v9657, 0
        %v9675 = vsel %vm715, %v9658, 0
        %9677 = vmatpush.msra.mxu0 0.0
        %9678 = vmatpush.msra.mxu0 0.0
        %9679 = vmatpush.msra.mxu0 0.0
        %9680 = vmatpush.msra.mxu0 0.0
        %9681 = vmatpush.msra.mxu0 0.0
        %9682 = vmatpush.msra.mxu0 0.0
        %9683 = vmatpush.msra.mxu0 0.0
        %9684 = vmatpush.msra.mxu0 0.0
        %9685 = vmatpush.msra.mxu0 0.0
        %9686 = vmatpush.msra.mxu0 0.0
        %9687 = vmatpush.msra.mxu0 0.0
        %9688 = vmatpush.msra.mxu0 0.0
        %9689 = vmatpush.msra.mxu0 0.0
        %9690 = vmatpush.msra.mxu0 0.0
        %v9691 = vand.u32 %v9660, 4294901760
        %9692 = vmatpush.msra.mxu0 %v9691
        %v9693 = vand.u32 %v9659, 4294901760
        %9694 = vmatpush.msra.mxu0 %v9693
        %v9695 = vand.u32 %v9666, 4294901760
        %v9696 = vsub.f32 %v9666, %v9695
        %v9697 = vand.u32 %v9696, 4294901760
        %v9698 = vsub.f32 %v9696, %v9697
        %v9699 = vand.u32 %v9698, 4294901760
        %9700 = vmatmul.f32.gmra.mxu0 %v9699
        %v9701 = vpop.f32.mrf.mxu0
        %v9702 = vadd.f32 %v9663, %v9701
        %v9703 = vand.u32 %v9669, 4294901760
        %v9704 = vsub.f32 %v9669, %v9703
        %v9705 = vand.u32 %v9704, 4294901760
        %v9706 = vsub.f32 %v9704, %v9705
        %v9707 = vand.u32 %v9706, 4294901760
        %9708 = vmatmul.f32.gmra.mxu0 %v9707
        %v9709 = vpop.f32.mrf.mxu0
        %v9710 = vadd.f32 %v9663, %v9709
        %v9711 = vand.u32 %v9672, 4294901760
        %v9712 = vsub.f32 %v9672, %v9711
        %v9713 = vand.u32 %v9712, 4294901760
        %v9714 = vsub.f32 %v9712, %v9713
        %v9715 = vand.u32 %v9714, 4294901760
        %9716 = vmatmul.f32.gmra.mxu0 %v9715
        %v9717 = vpop.f32.mrf.mxu0
        %v9718 = vadd.f32 %v9663, %v9717
        %v9719 = vand.u32 %v9675, 4294901760
        %v9720 = vsub.f32 %v9675, %v9719
        %v9721 = vand.u32 %v9720, 4294901760
        %v9722 = vsub.f32 %v9720, %v9721
        %v9723 = vand.u32 %v9722, 4294901760
        %9724 = vmatmul.f32.gmra.mxu0 %v9723
        %v9725 = vpop.f32.mrf.mxu0
        %v9726 = vadd.f32 %v9663, %v9725
        %9727 = vdwg.mxu0
        %9728 = vmatpush.msra.mxu0 0.0
        %9729 = vmatpush.msra.mxu0 0.0
        %9730 = vmatpush.msra.mxu0 0.0
        %9731 = vmatpush.msra.mxu0 0.0
        %9732 = vmatpush.msra.mxu0 0.0
        %9733 = vmatpush.msra.mxu0 0.0
        %9734 = vmatpush.msra.mxu0 0.0
        %9735 = vmatpush.msra.mxu0 0.0
        %9736 = vmatpush.msra.mxu0 0.0
        %9737 = vmatpush.msra.mxu0 0.0
        %9738 = vmatpush.msra.mxu0 0.0
        %9739 = vmatpush.msra.mxu0 0.0
        %9740 = vmatpush.msra.mxu0 0.0
        %9741 = vmatpush.msra.mxu0 0.0
        %v9742 = vand.u32 %v9660, 4294901760
        %v9743 = vsub.f32 %v9660, %v9742
        %v9744 = vand.u32 %v9743, 4294901760
        %v9745 = vsub.f32 %v9743, %v9744
        %v9746 = vand.u32 %v9745, 4294901760
        %9747 = vmatpush.msra.mxu0 %v9746
        %v9748 = vand.u32 %v9659, 4294901760
        %v9749 = vsub.f32 %v9659, %v9748
        %v9750 = vand.u32 %v9749, 4294901760
        %v9751 = vsub.f32 %v9749, %v9750
        %v9752 = vand.u32 %v9751, 4294901760
        %9753 = vmatpush.msra.mxu0 %v9752
        %v9754 = vand.u32 %v9666, 4294901760
        %9755 = vmatmul.f32.gmra.mxu0 %v9754
        %v9756 = vpop.f32.mrf.mxu0
        %v9757 = vadd.f32 %v9702, %v9756
        %v9758 = vand.u32 %v9669, 4294901760
        %9759 = vmatmul.f32.gmra.mxu0 %v9758
        %v9760 = vpop.f32.mrf.mxu0
        %v9761 = vadd.f32 %v9710, %v9760
        %v9762 = vand.u32 %v9672, 4294901760
        %9763 = vmatmul.f32.gmra.mxu0 %v9762
        %v9764 = vpop.f32.mrf.mxu0
        %v9765 = vadd.f32 %v9718, %v9764
        %v9766 = vand.u32 %v9675, 4294901760
        %9767 = vmatmul.f32.gmra.mxu0 %v9766
        %v9768 = vpop.f32.mrf.mxu0
        %v9769 = vadd.f32 %v9726, %v9768
        %9770 = vdwg.mxu0
        %9771 = vmatpush.msra.mxu0 0.0
        %9772 = vmatpush.msra.mxu0 0.0
        %9773 = vmatpush.msra.mxu0 0.0
        %9774 = vmatpush.msra.mxu0 0.0
        %9775 = vmatpush.msra.mxu0 0.0
        %9776 = vmatpush.msra.mxu0 0.0
        %9777 = vmatpush.msra.mxu0 0.0
        %9778 = vmatpush.msra.mxu0 0.0
        %9779 = vmatpush.msra.mxu0 0.0
        %9780 = vmatpush.msra.mxu0 0.0
        %9781 = vmatpush.msra.mxu0 0.0
        %9782 = vmatpush.msra.mxu0 0.0
        %9783 = vmatpush.msra.mxu0 0.0
        %9784 = vmatpush.msra.mxu0 0.0
        %v9785 = vand.u32 %v9660, 4294901760
        %v9786 = vsub.f32 %v9660, %v9785
        %9787 = vmatpush.msra.mxu0 %v9786
        %v9788 = vand.u32 %v9659, 4294901760
        %v9789 = vsub.f32 %v9659, %v9788
        %9790 = vmatpush.msra.mxu0 %v9789
        %v9791 = vand.u32 %v9666, 4294901760
        %v9792 = vsub.f32 %v9666, %v9791
        %9793 = vmatmul.f32.gmra.mxu0 %v9792
        %v9794 = vpop.f32.mrf.mxu0
        %v9795 = vadd.f32 %v9757, %v9794
        %v9796 = vand.u32 %v9669, 4294901760
        %v9797 = vsub.f32 %v9669, %v9796
        %9798 = vmatmul.f32.gmra.mxu0 %v9797
        %v9799 = vpop.f32.mrf.mxu0
        %v9800 = vadd.f32 %v9761, %v9799
        %v9801 = vand.u32 %v9672, 4294901760
        %v9802 = vsub.f32 %v9672, %v9801
        %9803 = vmatmul.f32.gmra.mxu0 %v9802
        %v9804 = vpop.f32.mrf.mxu0
        %v9805 = vadd.f32 %v9765, %v9804
        %v9806 = vand.u32 %v9675, 4294901760
        %v9807 = vsub.f32 %v9675, %v9806
        %9808 = vmatmul.f32.gmra.mxu0 %v9807
        %v9809 = vpop.f32.mrf.mxu0
        %v9810 = vadd.f32 %v9769, %v9809
        %9811 = vdwg.mxu0
        %9812 = vmatpush.msra.mxu0 0.0
        %9813 = vmatpush.msra.mxu0 0.0
        %9814 = vmatpush.msra.mxu0 0.0
        %9815 = vmatpush.msra.mxu0 0.0
        %9816 = vmatpush.msra.mxu0 0.0
        %9817 = vmatpush.msra.mxu0 0.0
        %9818 = vmatpush.msra.mxu0 0.0
        %9819 = vmatpush.msra.mxu0 0.0
        %9820 = vmatpush.msra.mxu0 0.0
        %9821 = vmatpush.msra.mxu0 0.0
        %9822 = vmatpush.msra.mxu0 0.0
        %9823 = vmatpush.msra.mxu0 0.0
        %9824 = vmatpush.msra.mxu0 0.0
        %9825 = vmatpush.msra.mxu0 0.0
        %v9826 = vand.u32 %v9660, 4294901760
        %9827 = vmatpush.msra.mxu0 %v9826
        %v9828 = vand.u32 %v9659, 4294901760
        %9829 = vmatpush.msra.mxu0 %v9828
        %v9830 = vand.u32 %v9666, 4294901760
        %v9831 = vsub.f32 %v9666, %v9830
        %v9832 = vand.u32 %v9831, 4294901760
        %9833 = vmatmul.f32.gmra.mxu0 %v9832
        %v9834 = vpop.f32.mrf.mxu0
        %v9835 = vadd.f32 %v9795, %v9834
        %v9836 = vand.u32 %v9669, 4294901760
        %v9837 = vsub.f32 %v9669, %v9836
        %v9838 = vand.u32 %v9837, 4294901760
        %9839 = vmatmul.f32.gmra.mxu0 %v9838
        %v9840 = vpop.f32.mrf.mxu0
        %v9841 = vadd.f32 %v9800, %v9840
        %v9842 = vand.u32 %v9672, 4294901760
        %v9843 = vsub.f32 %v9672, %v9842
        %v9844 = vand.u32 %v9843, 4294901760
        %9845 = vmatmul.f32.gmra.mxu0 %v9844
        %v9846 = vpop.f32.mrf.mxu0
        %v9847 = vadd.f32 %v9805, %v9846
        %v9848 = vand.u32 %v9675, 4294901760
        %v9849 = vsub.f32 %v9675, %v9848
        %v9850 = vand.u32 %v9849, 4294901760
        %9851 = vmatmul.f32.gmra.mxu0 %v9850
        %v9852 = vpop.f32.mrf.mxu0
        %v9853 = vadd.f32 %v9810, %v9852
        %9854 = vdwg.mxu0
        %9855 = vmatpush.msra.mxu0 0.0
        %9856 = vmatpush.msra.mxu0 0.0
        %9857 = vmatpush.msra.mxu0 0.0
        %9858 = vmatpush.msra.mxu0 0.0
        %9859 = vmatpush.msra.mxu0 0.0
        %9860 = vmatpush.msra.mxu0 0.0
        %9861 = vmatpush.msra.mxu0 0.0
        %9862 = vmatpush.msra.mxu0 0.0
        %9863 = vmatpush.msra.mxu0 0.0
        %9864 = vmatpush.msra.mxu0 0.0
        %9865 = vmatpush.msra.mxu0 0.0
        %9866 = vmatpush.msra.mxu0 0.0
        %9867 = vmatpush.msra.mxu0 0.0
        %9868 = vmatpush.msra.mxu0 0.0
        %v9869 = vand.u32 %v9660, 4294901760
        %v9870 = vsub.f32 %v9660, %v9869
        %v9871 = vand.u32 %v9870, 4294901760
        %9872 = vmatpush.msra.mxu0 %v9871
        %v9873 = vand.u32 %v9659, 4294901760
        %v9874 = vsub.f32 %v9659, %v9873
        %v9875 = vand.u32 %v9874, 4294901760
        %9876 = vmatpush.msra.mxu0 %v9875
        %v9877 = vand.u32 %v9666, 4294901760
        %9878 = vmatmul.f32.gmra.mxu0 %v9877
        %v9879 = vpop.f32.mrf.mxu0
        %v9880 = vadd.f32 %v9835, %v9879
        %v9881 = vand.u32 %v9669, 4294901760
        %9882 = vmatmul.f32.gmra.mxu0 %v9881
        %v9883 = vpop.f32.mrf.mxu0
        %v9884 = vadd.f32 %v9841, %v9883
        %v9885 = vand.u32 %v9672, 4294901760
        %9886 = vmatmul.f32.gmra.mxu0 %v9885
        %v9887 = vpop.f32.mrf.mxu0
        %v9888 = vadd.f32 %v9847, %v9887
        %v9889 = vand.u32 %v9675, 4294901760
        %9890 = vmatmul.f32.gmra.mxu0 %v9889
        %v9891 = vpop.f32.mrf.mxu0
        %v9892 = vadd.f32 %v9853, %v9891
        %9893 = vdwg.mxu0
        %9894 = vmatpush.msra.mxu0 0.0
        %9895 = vmatpush.msra.mxu0 0.0
        %9896 = vmatpush.msra.mxu0 0.0
        %9897 = vmatpush.msra.mxu0 0.0
        %9898 = vmatpush.msra.mxu0 0.0
        %9899 = vmatpush.msra.mxu0 0.0
        %9900 = vmatpush.msra.mxu0 0.0
        %9901 = vmatpush.msra.mxu0 0.0
        %9902 = vmatpush.msra.mxu0 0.0
        %9903 = vmatpush.msra.mxu0 0.0
        %9904 = vmatpush.msra.mxu0 0.0
        %9905 = vmatpush.msra.mxu0 0.0
        %9906 = vmatpush.msra.mxu0 0.0
        %9907 = vmatpush.msra.mxu0 0.0
        %v9908 = vand.u32 %v9660, 4294901760
        %9909 = vmatpush.msra.mxu0 %v9908
        %v9910 = vand.u32 %v9659, 4294901760
        %9911 = vmatpush.msra.mxu0 %v9910
        %v9912 = vand.u32 %v9666, 4294901760
        %9913 = vmatmul.f32.gmra.mxu0 %v9912
        %v9914 = vpop.f32.mrf.mxu0
        %v9915 = vadd.f32 %v9880, %v9914
        %v9916 = vand.u32 %v9669, 4294901760
        %9917 = vmatmul.f32.gmra.mxu0 %v9916
        %v9918 = vpop.f32.mrf.mxu0
        %v9919 = vadd.f32 %v9884, %v9918
        %v9920 = vand.u32 %v9672, 4294901760
        %9921 = vmatmul.f32.gmra.mxu0 %v9920
        %v9922 = vpop.f32.mrf.mxu0
        %v9923 = vadd.f32 %v9888, %v9922
        %v9924 = vand.u32 %v9675, 4294901760
        %9925 = vmatmul.f32.gmra.mxu0 %v9924
        %v9926 = vpop.f32.mrf.mxu0
        %v9927 = vadd.f32 %v9892, %v9926
        %9928 = vdwg.mxu0
        %9929 = vrot.lane.b32.xlu0 %v966, 32
        %v9930 = vpop.permute.xlu0 %9929
        %9931 = vrot.lane.b32.xlu0 %v970, 32
        %v9932 = vpop.permute.xlu0 %9931
        %9933 = vrot.lane.b32.xlu0 %v974, 32
        %v9934 = vpop.permute.xlu0 %9933
        %9935 = vrot.lane.b32.xlu0 %v978, 32
        %v9936 = vpop.permute.xlu0 %9935
        %v9941 = vsel %vm414, %v9915, %v9930
        %v9942 = vsel %vm414, %v9919, %v9932
        %v9943 = vsel %vm414, %v9923, %v9934
        %v9944 = vsel %vm414, %v9927, %v9936
        %vm9945 = vcmask 326656
        %v9946 = vsel %vm9945, %v9941, %v9389
        %v9947 = vsel %vm9945, %v9942, %v9392
        %v9948 = vsel %vm9945, %v9943, %v9395
        %v9949 = vsel %vm9945, %v9944, %v9398
        %vm9950 = vcmask 334848
        %v9951 = vsel %vm9950, %v9946, 0.0
        %v9952 = vsel %vm9950, %v9947, 0.0
        %v9953 = vsel %vm9950, %v9948, 0.0
        %v9954 = vsel %vm9950, %v9949, 0.0
        %9955 = vst [vmem:[%s381] sm:$0xff] %v9951
        %9956 = vst [vmem:[%s381 + $0x8] sm:$0xff] %v9952
        %9957 = vst [vmem:[%s381 + $0x10] sm:$0xff] %v9953
        %9958 = vst [vmem:[%s381 + $0x18] sm:$0xff] %v9954
        %vm9959 = vcmask 31744
        %9960 = vst.msk [vmem:[%s400] sm:$0xff] %vm9959, %v9383
        %9961 = vst.msk [vmem:[%s400 + $0x8] sm:$0xff] %vm9959, %v9384
        %9962 = vst.msk [vmem:[%s400 + $0x10] sm:$0xff] %vm9959, %v9385
        %9963 = vst.msk [vmem:[%s400 + $0x18] sm:$0xff] %vm9959, %v9386
        %s9964 = sand.u32 %s249, 1
        %s9965 = scalar_lea.sflag [#allocation3], %s9964
        %s9966 = sand.u32 %s249, 1
        %s9967 = smul.addr %s9966, 32
        %s9968 = scalar_lea.vmem [#allocation2], %s9967
        %s9969 = smul.u32 4, %s26
        %p9970 = scmp.lt.s32.totalorder %s9969, 7
        %s9971 = scalar_select %p9970, %s9969, 7
        %s9972 = smul.addr %s9971, 8
        %s9973 = scalar_lea.vmem %s11, %s9972
        // Predicated region
        $region61: #{tpu_custom_call.1} parent=59 // pred_check
          %p9974 = pneg %p259
        $region62: #{tpu_custom_call.1} parent=59 // pred_check_branch
          %9976 = sbr.rel (%p9974) target = $region64
        $region63: #{tpu_custom_call.1} parent=59 // pred_region
          %s9977 = smul.u32 4, %s26
          %9979 = vsyncadd %s9965, 0
          %s9980 = smul.addr %s9977, 8
          %s9981 = scalar_lea.hbm %s10, %s9980
          %s9982 = sshll.u32 %s9968, 4
          %s9983 = int_to_ptr.vmem [resolvable:$true] %s9982
          %s9984 = sshll.u32 %s9981, 4
          %s9985 = int_to_ptr.hbm [resolvable:$true] %s9984
          %9990 = dma.vmem_to_hbm [thread:$0]  %s9983, 512, %s9985, %s9965, 128, 128, 8
        $region64: #{tpu_custom_call.1} parent=59 // pred_fallthru
          _
        // Predicated region
        $region65: #{tpu_custom_call.1} parent=59 // pred_check
          %p9991 = pneg %p285
        $region66: #{tpu_custom_call.1} parent=59 // pred_check_branch
          %9993 = sbr.rel (%p9991) target = $region68
        $region67: #{tpu_custom_call.1} parent=59 // pred_region
          %s9994 = smul.u32 4, %s26
        $region68: #{tpu_custom_call.1} parent=59 // pred_fallthru
          _
      $region60: #{tpu_custom_call.1} parent=5 // pred_fallthru
        _
      %p9995 = scmp.le.s32.totalorder 2, %s21
      // Predicated region
      $region69: #{tpu_custom_call.1} parent=5 // pred_check
        %p9996 = pneg %p9995
      $region70: #{tpu_custom_call.1} parent=5 // pred_check_branch
        %9998 = sbr.rel (%p9996) target = $region72
      $region71: #{tpu_custom_call.1} parent=5 // pred_region
        %s9999 = ssub.s32 %s21, 2
        // Predicated region
        $region73: #{tpu_custom_call.1} parent=71 // pred_check
          %p10000 = pneg %p265
        $region74: #{tpu_custom_call.1} parent=71 // pred_check_branch
          %10002 = sbr.rel (%p10000) target = $region76
        $region75: #{tpu_custom_call.1} parent=71 // pred_region
          %s10003 = sand.u32 %s250, 1
          %s10004 = scalar_lea.sflag [#allocation3], %s10003
          %s10005 = sand.u32 %s250, 1
          %s10006 = smul.addr %s10005, 32
          %s10007 = scalar_lea.vmem [#allocation2], %s10006
          %10009 = dma.done %s10004, 512
        $region76: #{tpu_custom_call.1} parent=71 // pred_fallthru
          _
        // Predicated region
        $region77: #{tpu_custom_call.1} parent=71 // pred_check
          %p10010 = pneg %p291
        $region78: #{tpu_custom_call.1} parent=71 // pred_check_branch
          %10012 = sbr.rel (%p10010) target = $region80
        $region79: #{tpu_custom_call.1} parent=71 // pred_region
          %s10013 = smul.u32 4, %s27
          %p10014 = scmp.lt.s32.totalorder %s10013, 7
          %s10015 = scalar_select %p10014, %s10013, 7
          %s10016 = smul.addr %s10015, 8
          %s10017 = scalar_lea.vmem %s11, %s10016
        $region80: #{tpu_custom_call.1} parent=71 // pred_fallthru
          _
      $region72: #{tpu_custom_call.1} parent=5 // pred_fallthru
        _
    $region6: #{tpu_custom_call.1} parent=1 // loop_footer
      %s25 = sadd.s32 1, %s21
    $region7: #{tpu_custom_call.1} parent=1 // loop_footer_branch
      %20 = sbr.rel target = $region3
    $region8: #{tpu_custom_call.1} parent=1 // loop_exit
      _
    %10018 = vsyncpa [#allocation3], 1
    %s10019 = scalar_lea.sflag [#allocation3], 1
    %10020 = vsyncpa %s10019, 1

</llo_original>
